<compile_context>
chip_gen: v6e
topology: v6e:2x2x1
jax: 0.10.0
libtpu: 0.0.40
codegen_flags: <defaults>
</compile_context>

<pallas_src>
import functools

import jax
import jax.numpy as jnp
import numpy as np
from jax.experimental import pallas as pl
from jax.experimental.pallas import tpu as pltpu


# -----------------------------------------------------------------------------
# Fused kernel.  grid = (pass, batch):
#   pass 0: build im2col operand in VMEM, single bf16 MXU matmul, accumulate channel sums.
#   pass 1: (n==0) two-pass variance + fold BN into scale/shift; then per image:
#           BN affine + QuickGELU on the lane-dense view, PixelShuffle via tiny E matmuls,
#           write the final NCHW block.
# -----------------------------------------------------------------------------
def fused_kernel(x_ref, w_ref, gamma_ref, beta_ref, mask_ref, e_ref, o_ref,
                 im2col_ref, conv_buf, sum_ref, scale_ref, shift_ref, act_ref,
                 *, n_batch, cin, cps, r, h, w, eps):
    p = pl.program_id(0)          # 0: conv + batch statistics, 1: normalize + shuffle
    n = pl.program_id(1)          # batch image
    wp = w + 2                    # padded width
    flat = (h + 2) * wp           # flat padded spatial length (matmul lane dim)
    wr = w * r

    # ---------------- pass 0: conv (single bf16 MXU matmul) + channel sums ----------------
    @pl.when(p == 0)
    def _conv_pass():
        # Each 3x3 tap is just a lane-offset window of the flat zero-padded image
        # (the wrapper padded the flat axis so every window read stays in bounds).
        for dy in range(3):
            for dx in range(3):
                t = dy * 3 + dx
                off = dy * wp + dx
                tap = x_ref[0, :, pl.ds(off, flat)]               # (Cin, flat) f32
                im2col_ref[t * cin:(t + 1) * cin, :] = tap

        acc = jnp.dot(w_ref[...], im2col_ref[...].astype(jnp.bfloat16),
                      preferred_element_type=jnp.float32)         # (Cout, flat) f32
        conv_buf[n] = acc                                         # stays resident in VMEM

        @pl.when(n == 0)
        def _():
            sum_ref[...] = jnp.zeros_like(sum_ref)
        # mask zeroes padded / out-of-window lanes so stats only see the valid H*W pixels
        sum_ref[...] += jnp.sum(acc * mask_ref[...], axis=1, keepdims=True)

    # ---------------- pass 1: BatchNorm (batch stats) + QuickGELU + PixelShuffle ----------
    @pl.when(p == 1)
    def _norm_pass():
        @pl.when(n == 0)
        def _():
            inv_count = 1.0 / float(n_batch * h * w)
            mean = sum_ref[...] * inv_count                       # (Cout, 1)
            var = jnp.zeros_like(mean)
            # Two-pass (mean-subtracted) variance: the conv results are already in VMEM,
            # so this second pass is pure VPU work with no extra HBM traffic.
            for nn in range(n_batch):
                d = (conv_buf[nn] - mean) * mask_ref[...]
                var += jnp.sum(d * d, axis=1, keepdims=True)
            var *= inv_count
            scale = gamma_ref[...] * jax.lax.rsqrt(var + eps)
            scale_ref[...] = scale
            shift_ref[...] = beta_ref[...] - mean * scale

        # BN affine + QuickGELU on the lane-dense (Cout, flat) view (scale/shift are (Cout,1)).
        z = conv_buf[n] * scale_ref[...] + shift_ref[...]
        act_ref[...] = z * jax.nn.sigmoid(1.702 * z)              # QuickGELU

        # PixelShuffle: lane interleave via tiny 0/1 E matmuls, row interleave via plain
        # per-row stores into the NCHW output block.  Channels were pre-permuted so group
        # (i, j) occupies kernel channels [(i*r+j)*Cps, (i*r+j+1)*Cps).
        for hh in range(h):
            for i in range(r):
                blk = jnp.zeros((cps, wr), jnp.float32)
                for j in range(r):
                    g = i * r + j
                    piece = act_ref[pl.ds(g * cps, cps), pl.ds(hh * wp, w)]   # (Cps, W)
                    blk += jnp.dot(piece, e_ref[j], preferred_element_type=jnp.float32)
                o_ref[0, :, r * hh + i, :] = blk.astype(o_ref.dtype)


# -----------------------------------------------------------------------------
# Wrapper
# -----------------------------------------------------------------------------
def upsample_block_pixel_shuffle(x_nchw, w_oihw, bias, gamma, beta,
                                 scale_factor=2, eps=1e-5, out_dtype=jnp.float32):
    # Conv bias is dropped: with BatchNorm in training mode (batch statistics) the bias is
    # absorbed by the mean and cancels exactly; the variance is unchanged.
    # TODO(synk): restore the bias if eval-mode BN / running-stat export is ever needed.
    del bias

    N, Cin, H, W = x_nchw.shape
    r = int(scale_factor)
    Cps = Cin
    Cout = Cin * r * r
    Hr, Wr = H * r, W * r
    Wp = W + 2
    flat = (H + 2) * Wp
    flat_in = flat + 2 * Wp + 2          # tail so every 3x3 tap window read is in bounds
    assert w_oihw.shape == (Cout, Cin, 3, 3)

    # Reorder output channels so PixelShuffle groups (i, j) are contiguous:
    # kernel channel (i*r + j)*Cps + c  <->  PyTorch channel c*r*r + i*r + j.
    perm = np.array([c * (r * r) + i * r + j
                     for i in range(r) for j in range(r) for c in range(Cps)],
                    dtype=np.int32)
    w_mat = jnp.transpose(w_oihw[perm], (0, 2, 3, 1)).reshape(Cout, 9 * Cin)
    w_mat = w_mat.astype(jnp.bfloat16)
    gamma_k = gamma[perm].reshape(Cout, 1).astype(jnp.float32)
    beta_k = beta[perm].reshape(Cout, 1).astype(jnp.float32)

    # Zero-pad spatially (~1.3x the input bytes, NOT the 9x of an HBM im2col), flatten the
    # spatial dims (free in HBM), and pad the flat axis so each tap window stays in bounds.
    xp = jnp.pad(x_nchw, ((0, 0), (0, 0), (1, 1), (1, 1))).reshape(N, Cin, flat)
    xp = jnp.pad(xp, ((0, 0), (0, 0), (0, flat_in - flat))).astype(jnp.float32)

    # Valid-pixel mask over the flat padded spatial axis.
    mvalid = np.zeros((H + 2, Wp), np.float32)
    mvalid[:H, :W] = 1.0
    mask = jnp.asarray(mvalid.reshape(1, flat))

    # PixelShuffle lane-interleave selection matrices: E[j, w, r*w + j] = 1 (tiny, O(W*Wr)).
    E = np.zeros((r, W, Wr), np.float32)
    for j in range(r):
        E[j, np.arange(W), r * np.arange(W) + j] = 1.0
    E = jnp.asarray(E)

    kernel = functools.partial(fused_kernel, n_batch=N, cin=Cin, cps=Cps,
                               r=r, h=H, w=W, eps=float(eps))

    return pl.pallas_call(
        kernel,
        out_shape=jax.ShapeDtypeStruct((N, Cps, Hr, Wr), out_dtype),
        grid_spec=pltpu.PrefetchScalarGridSpec(
            num_scalar_prefetch=0,
            # pass axis (0: conv + stats, 1: normalize + shuffle) x batch axis.
            grid=(2, N),
            in_specs=[
                # pass 1 never reads x: map it to block 0 there so it is not re-fetched.
                pl.BlockSpec((1, Cin, flat_in), lambda p, n: (n * (1 - p), 0, 0)),
                pl.BlockSpec((Cout, 9 * Cin), lambda p, n: (0, 0)),
                pl.BlockSpec((Cout, 1), lambda p, n: (0, 0)),
                pl.BlockSpec((Cout, 1), lambda p, n: (0, 0)),
                pl.BlockSpec((1, flat), lambda p, n: (0, 0)),
                pl.BlockSpec((r, W, Wr), lambda p, n: (0, 0, 0)),
            ],
            out_specs=pl.BlockSpec((1, Cps, Hr, Wr), lambda p, n: (n, 0, 0, 0)),
            scratch_shapes=[
                pltpu.VMEM((9 * Cin, flat), jnp.float32),   # im2col operand (per image)
                pltpu.VMEM((N, Cout, flat), jnp.float32),   # conv results, VMEM-resident
                pltpu.VMEM((Cout, 1), jnp.float32),         # per-channel sum
                pltpu.VMEM((Cout, 1), jnp.float32),         # folded BN scale
                pltpu.VMEM((Cout, 1), jnp.float32),         # folded BN shift
                pltpu.VMEM((Cout, flat), jnp.float32),      # BN + QuickGELU activation
            ],
        ),
        compiler_params=pltpu.CompilerParams(
            # Batch stays "arbitrary": BN statistics accumulate in a shared VMEM scratch.
            dimension_semantics=("arbitrary", "arbitrary"),
            # v7x-safe limit (64 MiB physical per TC); raise toward ~100 MiB on v5e/v6e
            # when tiles grow.
            vmem_limit_bytes=48 * 1024 * 1024,
        ),
    )(xp, w_mat, gamma_k, beta_k, mask, E)


# -----------------------------------------------------------------------------
# Pure-JAX reference (includes the conv bias -> also validates the bias-cancellation claim).
# -----------------------------------------------------------------------------
def reference(x_nchw, w_oihw, bias, gamma, beta, scale_factor=2, eps=1e-5):
    x = jnp.transpose(x_nchw, (0, 2, 3, 1))
    w = jnp.transpose(w_oihw, (2, 3, 1, 0))
    conv = jax.lax.conv_general_dilated(
        x, w, window_strides=(1, 1), padding="SAME",
        dimension_numbers=("NHWC", "HWIO", "NHWC")) + bias.reshape(1, 1, 1, -1)
    mean = jnp.mean(conv, axis=(0, 1, 2))
    var = jnp.mean((conv - mean) ** 2, axis=(0, 1, 2))
    z = (conv - mean) * jax.lax.rsqrt(var + eps) * gamma + beta
    z = z * jax.nn.sigmoid(1.702 * z)
    r = scale_factor
    N, H, W, C = z.shape
    Cps = C // (r * r)
    y = z.reshape(N, H, W, Cps, r, r)
    y = jnp.transpose(y, (0, 1, 4, 2, 5, 3)).reshape(N, H * r, W * r, Cps)
    return jnp.transpose(y, (0, 3, 1, 2))


if __name__ == "__main__":
    N, Cin, H, W = 2, 4, 16, 16
    scale_factor = 2
    Cout = Cin * scale_factor ** 2

    key = jax.random.PRNGKey(0)
    kx, kw, kb, kg, kbe = jax.random.split(key, 5)

    x = jax.random.normal(kx, (N, Cin, H, W), dtype=jnp.float32)
    # Synthetic parameters with nn.Conv2d / nn.BatchNorm2d shapes.
    w = jax.random.normal(kw, (Cout, Cin, 3, 3), dtype=jnp.float32) * 0.1
    b = jax.random.normal(kb, (Cout,), dtype=jnp.float32) * 0.1
    gamma = 1.0 + 0.1 * jax.random.normal(kg, (Cout,), dtype=jnp.float32)
    beta = 0.1 * jax.random.normal(kbe, (Cout,), dtype=jnp.float32)

    fn = jax.jit(functools.partial(upsample_block_pixel_shuffle,
                                   scale_factor=scale_factor))
    out = jax.block_until_ready(fn(x, w, b, gamma, beta))

    ref = reference(x, w, b, gamma, beta, scale_factor=scale_factor)
    assert out.shape == (N, Cin, H * scale_factor, W * scale_factor), out.shape
    # bf16 conv operands -> slightly looser tolerance than pure-f32.
    np.testing.assert_allclose(np.asarray(out), np.asarray(ref),
                               rtol=3e-2, atol=3e-2)
    print("KERNEL_OK")
</pallas_src>

<mosaic_0001>
module attributes {stable_mosaic.version = 11 : i64} {
  func.func @fused_kernel(%arg0: i32, %arg1: i32, %arg2: memref<1x4x362xf32, #tpu.memory_space<vmem>>, %arg3: memref<16x36xbf16, #tpu.memory_space<vmem>>, %arg4: memref<16x1xf32, #tpu.memory_space<vmem>>, %arg5: memref<16x1xf32, #tpu.memory_space<vmem>>, %arg6: memref<1x324xf32, #tpu.memory_space<vmem>>, %arg7: memref<2x16x32xf32, #tpu.memory_space<vmem>>, %arg8: memref<1x4x32x32xf32, #tpu.memory_space<vmem>>, %arg9: memref<36x324xf32, #tpu.memory_space<vmem>>, %arg10: memref<2x16x324xf32, #tpu.memory_space<vmem>>, %arg11: memref<16x1xf32, #tpu.memory_space<vmem>>, %arg12: memref<16x1xf32, #tpu.memory_space<vmem>>, %arg13: memref<16x1xf32, #tpu.memory_space<vmem>>, %arg14: memref<16x324xf32, #tpu.memory_space<vmem>>) attributes {dimension_semantics = [#tpu.dimension_semantics<arbitrary>, #tpu.dimension_semantics<arbitrary>], iteration_bounds = array<i64: 2, 2>, scalar_prefetch = 0 : i64, scratch_operands = 6 : i64, tpu.core_type = #tpu.core_type<tc>, window_params = [{transform_indices = @transform_0, window_bounds = array<i64: 1, 4, 362>}, {pipeline_mode = #tpu.pipeline_mode<synchronous>, transform_indices = @transform_1, window_bounds = array<i64: 16, 36>}, {pipeline_mode = #tpu.pipeline_mode<synchronous>, transform_indices = @transform_2, window_bounds = array<i64: 16, 1>}, {pipeline_mode = #tpu.pipeline_mode<synchronous>, transform_indices = @transform_3, window_bounds = array<i64: 16, 1>}, {pipeline_mode = #tpu.pipeline_mode<synchronous>, transform_indices = @transform_4, window_bounds = array<i64: 1, 324>}, {pipeline_mode = #tpu.pipeline_mode<synchronous>, transform_indices = @transform_5, window_bounds = array<i64: 2, 16, 32>}, {transform_indices = @transform_6, window_bounds = array<i64: 1, 4, 32, 32>}]} {
    %c0_i32 = arith.constant 0 : i32
    %0 = arith.cmpi eq, %arg0, %c0_i32 : i32
    %1 = arith.extui %0 : i1 to i32
    %c0_i32_0 = arith.constant 0 : i32
    %2 = arith.cmpi ne, %1, %c0_i32_0 : i32
    scf.if %2 {
      %c0 = arith.constant 0 : index
      %c0_2 = arith.constant 0 : index
      %c0_3 = arith.constant 0 : index
      %6 = vector.load %arg2[%c0, %c0_2, %c0_3] : memref<1x4x362xf32, #tpu.memory_space<vmem>>, vector<1x4x324xf32>
      %7 = vector.shape_cast %6 : vector<1x4x324xf32> to vector<4x324xf32>
      %c0_4 = arith.constant 0 : index
      %c0_5 = arith.constant 0 : index
      %8 = vector.load %arg9[%c0_4, %c0_5] : memref<36x324xf32, #tpu.memory_space<vmem>>, vector<4x324xf32>
      tpu.vector_store %arg9[%c0_4, %c0_5], %7 {strides = array<i32>} : memref<36x324xf32, #tpu.memory_space<vmem>>, vector<4x324xf32>,
      %c0_6 = arith.constant 0 : index
      %c0_7 = arith.constant 0 : index
      %c1 = arith.constant 1 : index
      %9 = vector.load %arg2[%c0_6, %c0_7, %c1] : memref<1x4x362xf32, #tpu.memory_space<vmem>>, vector<1x4x324xf32>
      %10 = vector.shape_cast %9 : vector<1x4x324xf32> to vector<4x324xf32>
      %c4 = arith.constant 4 : index
      %c0_8 = arith.constant 0 : index
      %11 = vector.load %arg9[%c4, %c0_8] : memref<36x324xf32, #tpu.memory_space<vmem>>, vector<4x324xf32>
      tpu.vector_store %arg9[%c4, %c0_8], %10 {strides = array<i32>} : memref<36x324xf32, #tpu.memory_space<vmem>>, vector<4x324xf32>,
      %c0_9 = arith.constant 0 : index
      %c0_10 = arith.constant 0 : index
      %c2 = arith.constant 2 : index
      %12 = vector.load %arg2[%c0_9, %c0_10, %c2] : memref<1x4x362xf32, #tpu.memory_space<vmem>>, vector<1x4x324xf32>
      %13 = vector.shape_cast %12 : vector<1x4x324xf32> to vector<4x324xf32>
      %c8 = arith.constant 8 : index
      %c0_11 = arith.constant 0 : index
      %14 = vector.load %arg9[%c8, %c0_11] : memref<36x324xf32, #tpu.memory_space<vmem>>, vector<4x324xf32>
      tpu.vector_store %arg9[%c8, %c0_11], %13 {strides = array<i32>} : memref<36x324xf32, #tpu.memory_space<vmem>>, vector<4x324xf32>,
      %c0_12 = arith.constant 0 : index
      %c0_13 = arith.constant 0 : index
      %c18 = arith.constant 18 : index
      %15 = vector.load %arg2[%c0_12, %c0_13, %c18] : memref<1x4x362xf32, #tpu.memory_space<vmem>>, vector<1x4x324xf32>
      %16 = vector.shape_cast %15 : vector<1x4x324xf32> to vector<4x324xf32>
      %c12 = arith.constant 12 : index
      %c0_14 = arith.constant 0 : index
      %17 = vector.load %arg9[%c12, %c0_14] : memref<36x324xf32, #tpu.memory_space<vmem>>, vector<4x324xf32>
      tpu.vector_store %arg9[%c12, %c0_14], %16 {strides = array<i32>} : memref<36x324xf32, #tpu.memory_space<vmem>>, vector<4x324xf32>,
      %c0_15 = arith.constant 0 : index
      %c0_16 = arith.constant 0 : index
      %c19 = arith.constant 19 : index
      %18 = vector.load %arg2[%c0_15, %c0_16, %c19] : memref<1x4x362xf32, #tpu.memory_space<vmem>>, vector<1x4x324xf32>
      %19 = vector.shape_cast %18 : vector<1x4x324xf32> to vector<4x324xf32>
      %c16 = arith.constant 16 : index
      %c0_17 = arith.constant 0 : index
      %20 = vector.load %arg9[%c16, %c0_17] : memref<36x324xf32, #tpu.memory_space<vmem>>, vector<4x324xf32>
      tpu.vector_store %arg9[%c16, %c0_17], %19 {strides = array<i32>} : memref<36x324xf32, #tpu.memory_space<vmem>>, vector<4x324xf32>,
      %c0_18 = arith.constant 0 : index
      %c0_19 = arith.constant 0 : index
      %c20 = arith.constant 20 : index
      %21 = vector.load %arg2[%c0_18, %c0_19, %c20] : memref<1x4x362xf32, #tpu.memory_space<vmem>>, vector<1x4x324xf32>
      %22 = vector.shape_cast %21 : vector<1x4x324xf32> to vector<4x324xf32>
      %c20_20 = arith.constant 20 : index
      %c0_21 = arith.constant 0 : index
      %23 = vector.load %arg9[%c20_20, %c0_21] : memref<36x324xf32, #tpu.memory_space<vmem>>, vector<4x324xf32>
      tpu.vector_store %arg9[%c20_20, %c0_21], %22 {strides = array<i32>} : memref<36x324xf32, #tpu.memory_space<vmem>>, vector<4x324xf32>,
      %c0_22 = arith.constant 0 : index
      %c0_23 = arith.constant 0 : index
      %c36 = arith.constant 36 : index
      %24 = vector.load %arg2[%c0_22, %c0_23, %c36] : memref<1x4x362xf32, #tpu.memory_space<vmem>>, vector<1x4x324xf32>
      %25 = vector.shape_cast %24 : vector<1x4x324xf32> to vector<4x324xf32>
      %c24 = arith.constant 24 : index
      %c0_24 = arith.constant 0 : index
      %26 = vector.load %arg9[%c24, %c0_24] : memref<36x324xf32, #tpu.memory_space<vmem>>, vector<4x324xf32>
      tpu.vector_store %arg9[%c24, %c0_24], %25 {strides = array<i32>} : memref<36x324xf32, #tpu.memory_space<vmem>>, vector<4x324xf32>,
      %c0_25 = arith.constant 0 : index
      %c0_26 = arith.constant 0 : index
      %c37 = arith.constant 37 : index
      %27 = vector.load %arg2[%c0_25, %c0_26, %c37] : memref<1x4x362xf32, #tpu.memory_space<vmem>>, vector<1x4x324xf32>
      %28 = vector.shape_cast %27 : vector<1x4x324xf32> to vector<4x324xf32>
      %c28 = arith.constant 28 : index
      %c0_27 = arith.constant 0 : index
      %29 = vector.load %arg9[%c28, %c0_27] : memref<36x324xf32, #tpu.memory_space<vmem>>, vector<4x324xf32>
      tpu.vector_store %arg9[%c28, %c0_27], %28 {strides = array<i32>} : memref<36x324xf32, #tpu.memory_space<vmem>>, vector<4x324xf32>,
      %c0_28 = arith.constant 0 : index
      %c0_29 = arith.constant 0 : index
      %c38 = arith.constant 38 : index
      %30 = vector.load %arg2[%c0_28, %c0_29, %c38] : memref<1x4x362xf32, #tpu.memory_space<vmem>>, vector<1x4x324xf32>
      %31 = vector.shape_cast %30 : vector<1x4x324xf32> to vector<4x324xf32>
      %c32 = arith.constant 32 : index
      %c0_30 = arith.constant 0 : index
      %32 = vector.load %arg9[%c32, %c0_30] : memref<36x324xf32, #tpu.memory_space<vmem>>, vector<4x324xf32>
      tpu.vector_store %arg9[%c32, %c0_30], %31 {strides = array<i32>} : memref<36x324xf32, #tpu.memory_space<vmem>>, vector<4x324xf32>,
      %c0_31 = arith.constant 0 : index
      %c0_32 = arith.constant 0 : index
      %33 = vector.load %arg3[%c0_31, %c0_32] : memref<16x36xbf16, #tpu.memory_space<vmem>>, vector<16x36xbf16>
      %c0_33 = arith.constant 0 : index
      %c0_34 = arith.constant 0 : index
      %34 = vector.load %arg9[%c0_33, %c0_34] : memref<36x324xf32, #tpu.memory_space<vmem>>, vector<36x324xf32>
      %35 = arith.truncf %34 : vector<36x324xf32> to vector<36x324xbf16>
      %cst = arith.constant dense<0.000000e+00> : vector<16x324xf32>
      %36 = tpu.matmul %33, %35, %cst {dimension_numbers = #tpu.dot_dimension_numbers<[1], [0], [0], [1], [0, 0, 1, 1], [], []>} : vector<16x36xbf16>, vector<36x324xbf16>, vector<16x324xf32> -> vector<16x324xf32>
      %37 = arith.index_cast %arg1 : i32 to index
      %c0_35 = arith.constant 0 : index
      %c0_36 = arith.constant 0 : index
      %38 = vector.load %arg10[%37, %c0_35, %c0_36] : memref<2x16x324xf32, #tpu.memory_space<vmem>>, vector<1x16x324xf32>
      %39 = vector.shape_cast %38 : vector<1x16x324xf32> to vector<16x324xf32>
      %40 = vector.shape_cast %36 : vector<16x324xf32> to vector<1x16x324xf32>
      tpu.vector_store %arg10[%37, %c0_35, %c0_36], %40 {strides = array<i32>} : memref<2x16x324xf32, #tpu.memory_space<vmem>>, vector<1x16x324xf32>,
      %c0_i32_37 = arith.constant 0 : i32
      %41 = arith.cmpi eq, %arg1, %c0_i32_37 : i32
      %42 = arith.extui %41 : i1 to i32
      %c0_i32_38 = arith.constant 0 : i32
      %43 = arith.cmpi ne, %42, %c0_i32_38 : i32
      scf.if %43 {
        %cst_46 = arith.constant 0.000000e+00 : f32
        %52 = vector.broadcast %cst_46 : f32 to vector<16x1xf32>
        %c0_47 = arith.constant 0 : index
        %c0_48 = arith.constant 0 : index
        %53 = vector.load %arg11[%c0_47, %c0_48] : memref<16x1xf32, #tpu.memory_space<vmem>>, vector<16x1xf32>
        tpu.vector_store %arg11[%c0_47, %c0_48], %52 {strides = array<i32>} : memref<16x1xf32, #tpu.memory_space<vmem>>, vector<16x1xf32>,
      } else {
      }
      %c0_39 = arith.constant 0 : index
      %c0_40 = arith.constant 0 : index
      %44 = vector.load %arg11[%c0_39, %c0_40] : memref<16x1xf32, #tpu.memory_space<vmem>>, vector<16x1xf32>
      %c0_41 = arith.constant 0 : index
      %c0_42 = arith.constant 0 : index
      %45 = vector.load %arg6[%c0_41, %c0_42] : memref<1x324xf32, #tpu.memory_space<vmem>>, vector<1x324xf32>
      %46 = vector.broadcast %45 : vector<1x324xf32> to vector<16x324xf32>
      %47 = arith.mulf %36, %46 : vector<16x324xf32>
      %cst_43 = arith.constant dense<0.000000e+00> : vector<16xf32>
      %48 = vector.multi_reduction <add>, %47, %cst_43 [1] : vector<16x324xf32> to vector<16xf32>
      %49 = vector.shape_cast %48 : vector<16xf32> to vector<16x1xf32>
      %50 = arith.addf %44, %49 : vector<16x1xf32>
      %c0_44 = arith.constant 0 : index
      %c0_45 = arith.constant 0 : index
      %51 = vector.load %arg11[%c0_44, %c0_45] : memref<16x1xf32, #tpu.memory_space<vmem>>, vector<16x1xf32>
      tpu.vector_store %arg11[%c0_44, %c0_45], %50 {strides = array<i32>} : memref<16x1xf32, #tpu.memory_space<vmem>>, vector<16x1xf32>,
    } else {
    }
    %c1_i32 = arith.constant 1 : i32
    %3 = arith.cmpi eq, %arg0, %c1_i32 : i32
    %4 = arith.extui %3 : i1 to i32
    %c0_i32_1 = arith.constant 0 : i32
    %5 = arith.cmpi ne, %4, %c0_i32_1 : i32
    scf.if %5 {
      %c0_i32_2 = arith.constant 0 : i32
      %6 = arith.cmpi eq, %arg1, %c0_i32_2 : i32
      %7 = arith.extui %6 : i1 to i32
      %c0_i32_3 = arith.constant 0 : i32
      %8 = arith.cmpi ne, %7, %c0_i32_3 : i32
      scf.if %8 {
        %c0_511 = arith.constant 0 : index
        %c0_512 = arith.constant 0 : index
        %475 = vector.load %arg11[%c0_511, %c0_512] : memref<16x1xf32, #tpu.memory_space<vmem>>, vector<16x1xf32>
        %cst_513 = arith.constant 0.001953125 : f32
        %476 = vector.broadcast %cst_513 : f32 to vector<16x1xf32>
        %477 = arith.mulf %475, %476 : vector<16x1xf32>
        %cst_514 = arith.constant 0.000000e+00 : f32
        %478 = vector.broadcast %cst_514 : f32 to vector<16x1xf32>
        %c0_515 = arith.constant 0 : index
        %c0_516 = arith.constant 0 : index
        %c0_517 = arith.constant 0 : index
        %479 = vector.load %arg10[%c0_515, %c0_516, %c0_517] : memref<2x16x324xf32, #tpu.memory_space<vmem>>, vector<1x16x324xf32>
        %480 = vector.shape_cast %479 : vector<1x16x324xf32> to vector<16x324xf32>
        %481 = vector.broadcast %477 : vector<16x1xf32> to vector<16x324xf32>
        %482 = arith.subf %480, %481 : vector<16x324xf32>
        %c0_518 = arith.constant 0 : index
        %c0_519 = arith.constant 0 : index
        %483 = vector.load %arg6[%c0_518, %c0_519] : memref<1x324xf32, #tpu.memory_space<vmem>>, vector<1x324xf32>
        %484 = vector.broadcast %483 : vector<1x324xf32> to vector<16x324xf32>
        %485 = arith.mulf %482, %484 : vector<16x324xf32>
        %486 = arith.mulf %485, %485 : vector<16x324xf32>
        %cst_520 = arith.constant dense<0.000000e+00> : vector<16xf32>
        %487 = vector.multi_reduction <add>, %486, %cst_520 [1] : vector<16x324xf32> to vector<16xf32>
        %488 = vector.shape_cast %487 : vector<16xf32> to vector<16x1xf32>
        %489 = arith.addf %478, %488 : vector<16x1xf32>
        %c1_521 = arith.constant 1 : index
        %c0_522 = arith.constant 0 : index
        %c0_523 = arith.constant 0 : index
        %490 = vector.load %arg10[%c1_521, %c0_522, %c0_523] : memref<2x16x324xf32, #tpu.memory_space<vmem>>, vector<1x16x324xf32>
        %491 = vector.shape_cast %490 : vector<1x16x324xf32> to vector<16x324xf32>
        %492 = vector.broadcast %477 : vector<16x1xf32> to vector<16x324xf32>
        %493 = arith.subf %491, %492 : vector<16x324xf32>
        %c0_524 = arith.constant 0 : index
        %c0_525 = arith.constant 0 : index
        %494 = vector.load %arg6[%c0_524, %c0_525] : memref<1x324xf32, #tpu.memory_space<vmem>>, vector<1x324xf32>
        %495 = vector.broadcast %494 : vector<1x324xf32> to vector<16x324xf32>
        %496 = arith.mulf %493, %495 : vector<16x324xf32>
        %497 = arith.mulf %496, %496 : vector<16x324xf32>
        %cst_526 = arith.constant dense<0.000000e+00> : vector<16xf32>
        %498 = vector.multi_reduction <add>, %497, %cst_526 [1] : vector<16x324xf32> to vector<16xf32>
        %499 = vector.shape_cast %498 : vector<16xf32> to vector<16x1xf32>
        %500 = arith.addf %489, %499 : vector<16x1xf32>
        %cst_527 = arith.constant 0.001953125 : f32
        %501 = vector.broadcast %cst_527 : f32 to vector<16x1xf32>
        %502 = arith.mulf %500, %501 : vector<16x1xf32>
        %c0_528 = arith.constant 0 : index
        %c0_529 = arith.constant 0 : index
        %503 = vector.load %arg4[%c0_528, %c0_529] : memref<16x1xf32, #tpu.memory_space<vmem>>, vector<16x1xf32>
        %cst_530 = arith.constant 9.99999974E-6 : f32
        %504 = vector.broadcast %cst_530 : f32 to vector<16x1xf32>
        %505 = arith.addf %502, %504 : vector<16x1xf32>
        %506 = math.rsqrt %505 : vector<16x1xf32>
        %507 = arith.mulf %503, %506 : vector<16x1xf32>
        %c0_531 = arith.constant 0 : index
        %c0_532 = arith.constant 0 : index
        %508 = vector.load %arg12[%c0_531, %c0_532] : memref<16x1xf32, #tpu.memory_space<vmem>>, vector<16x1xf32>
        tpu.vector_store %arg12[%c0_531, %c0_532], %507 {strides = array<i32>} : memref<16x1xf32, #tpu.memory_space<vmem>>, vector<16x1xf32>,
        %c0_533 = arith.constant 0 : index
        %c0_534 = arith.constant 0 : index
        %509 = vector.load %arg5[%c0_533, %c0_534] : memref<16x1xf32, #tpu.memory_space<vmem>>, vector<16x1xf32>
        %510 = arith.mulf %477, %507 : vector<16x1xf32>
        %511 = arith.subf %509, %510 : vector<16x1xf32>
        %c0_535 = arith.constant 0 : index
        %c0_536 = arith.constant 0 : index
        %512 = vector.load %arg13[%c0_535, %c0_536] : memref<16x1xf32, #tpu.memory_space<vmem>>, vector<16x1xf32>
        tpu.vector_store %arg13[%c0_535, %c0_536], %511 {strides = array<i32>} : memref<16x1xf32, #tpu.memory_space<vmem>>, vector<16x1xf32>,
      } else {
      }
      %9 = arith.index_cast %arg1 : i32 to index
      %c0 = arith.constant 0 : index
      %c0_4 = arith.constant 0 : index
      %10 = vector.load %arg10[%9, %c0, %c0_4] : memref<2x16x324xf32, #tpu.memory_space<vmem>>, vector<1x16x324xf32>
      %11 = vector.shape_cast %10 : vector<1x16x324xf32> to vector<16x324xf32>
      %c0_5 = arith.constant 0 : index
      %c0_6 = arith.constant 0 : index
      %12 = vector.load %arg12[%c0_5, %c0_6] : memref<16x1xf32, #tpu.memory_space<vmem>>, vector<16x1xf32>
      %13 = vector.broadcast %12 : vector<16x1xf32> to vector<16x324xf32>
      %14 = arith.mulf %11, %13 : vector<16x324xf32>
      %c0_7 = arith.constant 0 : index
      %c0_8 = arith.constant 0 : index
      %15 = vector.load %arg13[%c0_7, %c0_8] : memref<16x1xf32, #tpu.memory_space<vmem>>, vector<16x1xf32>
      %16 = vector.broadcast %15 : vector<16x1xf32> to vector<16x324xf32>
      %17 = arith.addf %14, %16 : vector<16x324xf32>
      %cst = arith.constant 1.702000e+00 : f32
      %18 = vector.broadcast %cst : f32 to vector<16x324xf32>
      %19 = arith.mulf %18, %17 : vector<16x324xf32>
      %20 = arith.negf %19 : vector<16x324xf32>
      %21 = math.exp %20 : vector<16x324xf32>
      %cst_9 = arith.constant 1.000000e+00 : f32
      %22 = vector.broadcast %cst_9 : f32 to vector<16x324xf32>
      %23 = arith.addf %22, %21 : vector<16x324xf32>
      %24 = arith.divf %22, %23 : vector<16x324xf32>
      %25 = arith.mulf %17, %24 : vector<16x324xf32>
      %c0_10 = arith.constant 0 : index
      %c0_11 = arith.constant 0 : index
      %26 = vector.load %arg14[%c0_10, %c0_11] : memref<16x324xf32, #tpu.memory_space<vmem>>, vector<16x324xf32>
      tpu.vector_store %arg14[%c0_10, %c0_11], %25 {strides = array<i32>} : memref<16x324xf32, #tpu.memory_space<vmem>>, vector<16x324xf32>,
      %cst_12 = arith.constant 0.000000e+00 : f32
      %27 = vector.broadcast %cst_12 : f32 to vector<4x32xf32>
      %c0_13 = arith.constant 0 : index
      %c0_14 = arith.constant 0 : index
      %28 = vector.load %arg14[%c0_13, %c0_14] : memref<16x324xf32, #tpu.memory_space<vmem>>, vector<4x16xf32>
      %c0_15 = arith.constant 0 : index
      %c0_16 = arith.constant 0 : index
      %c0_17 = arith.constant 0 : index
      %29 = vector.load %arg7[%c0_15, %c0_16, %c0_17] : memref<2x16x32xf32, #tpu.memory_space<vmem>>, vector<1x16x32xf32>
      %30 = vector.shape_cast %29 : vector<1x16x32xf32> to vector<16x32xf32>
      %cst_18 = arith.constant dense<0.000000e+00> : vector<4x32xf32>
      %31 = tpu.matmul %28, %30, %cst_18 {dimension_numbers = #tpu.dot_dimension_numbers<[1], [0], [0], [1], [0, 0, 1, 1], [], []>} : vector<4x16xf32>, vector<16x32xf32>, vector<4x32xf32> -> vector<4x32xf32>
      %32 = arith.addf %27, %31 : vector<4x32xf32>
      %c4 = arith.constant 4 : index
      %c0_19 = arith.constant 0 : index
      %33 = vector.load %arg14[%c4, %c0_19] : memref<16x324xf32, #tpu.memory_space<vmem>>, vector<4x16xf32>
      %c1 = arith.constant 1 : index
      %c0_20 = arith.constant 0 : index
      %c0_21 = arith.constant 0 : index
      %34 = vector.load %arg7[%c1, %c0_20, %c0_21] : memref<2x16x32xf32, #tpu.memory_space<vmem>>, vector<1x16x32xf32>
      %35 = vector.shape_cast %34 : vector<1x16x32xf32> to vector<16x32xf32>
      %cst_22 = arith.constant dense<0.000000e+00> : vector<4x32xf32>
      %36 = tpu.matmul %33, %35, %cst_22 {dimension_numbers = #tpu.dot_dimension_numbers<[1], [0], [0], [1], [0, 0, 1, 1], [], []>} : vector<4x16xf32>, vector<16x32xf32>, vector<4x32xf32> -> vector<4x32xf32>
      %37 = arith.addf %32, %36 : vector<4x32xf32>
      %c0_23 = arith.constant 0 : index
      %c0_24 = arith.constant 0 : index
      %c0_25 = arith.constant 0 : index
      %c0_26 = arith.constant 0 : index
      %38 = vector.load %arg8[%c0_23, %c0_24, %c0_25, %c0_26] : memref<1x4x32x32xf32, #tpu.memory_space<vmem>>, vector<1x4x1x32xf32>
      %39 = vector.shape_cast %38 : vector<1x4x1x32xf32> to vector<4x32xf32>
      %40 = vector.shape_cast %37 : vector<4x32xf32> to vector<1x4x1x32xf32>
      tpu.vector_store %arg8[%c0_23, %c0_24, %c0_25, %c0_26], %40 {strides = array<i32>} : memref<1x4x32x32xf32, #tpu.memory_space<vmem>>, vector<1x4x1x32xf32>,
      %cst_27 = arith.constant 0.000000e+00 : f32
      %41 = vector.broadcast %cst_27 : f32 to vector<4x32xf32>
      %c8 = arith.constant 8 : index
      %c0_28 = arith.constant 0 : index
      %42 = vector.load %arg14[%c8, %c0_28] : memref<16x324xf32, #tpu.memory_space<vmem>>, vector<4x16xf32>
      %c0_29 = arith.constant 0 : index
      %c0_30 = arith.constant 0 : index
      %c0_31 = arith.constant 0 : index
      %43 = vector.load %arg7[%c0_29, %c0_30, %c0_31] : memref<2x16x32xf32, #tpu.memory_space<vmem>>, vector<1x16x32xf32>
      %44 = vector.shape_cast %43 : vector<1x16x32xf32> to vector<16x32xf32>
      %cst_32 = arith.constant dense<0.000000e+00> : vector<4x32xf32>
      %45 = tpu.matmul %42, %44, %cst_32 {dimension_numbers = #tpu.dot_dimension_numbers<[1], [0], [0], [1], [0, 0, 1, 1], [], []>} : vector<4x16xf32>, vector<16x32xf32>, vector<4x32xf32> -> vector<4x32xf32>
      %46 = arith.addf %41, %45 : vector<4x32xf32>
      %c12 = arith.constant 12 : index
      %c0_33 = arith.constant 0 : index
      %47 = vector.load %arg14[%c12, %c0_33] : memref<16x324xf32, #tpu.memory_space<vmem>>, vector<4x16xf32>
      %c1_34 = arith.constant 1 : index
      %c0_35 = arith.constant 0 : index
      %c0_36 = arith.constant 0 : index
      %48 = vector.load %arg7[%c1_34, %c0_35, %c0_36] : memref<2x16x32xf32, #tpu.memory_space<vmem>>, vector<1x16x32xf32>
      %49 = vector.shape_cast %48 : vector<1x16x32xf32> to vector<16x32xf32>
      %cst_37 = arith.constant dense<0.000000e+00> : vector<4x32xf32>
      %50 = tpu.matmul %47, %49, %cst_37 {dimension_numbers = #tpu.dot_dimension_numbers<[1], [0], [0], [1], [0, 0, 1, 1], [], []>} : vector<4x16xf32>, vector<16x32xf32>, vector<4x32xf32> -> vector<4x32xf32>
      %51 = arith.addf %46, %50 : vector<4x32xf32>
      %c0_38 = arith.constant 0 : index
      %c0_39 = arith.constant 0 : index
      %c1_40 = arith.constant 1 : index
      %c0_41 = arith.constant 0 : index
      %52 = vector.load %arg8[%c0_38, %c0_39, %c1_40, %c0_41] : memref<1x4x32x32xf32, #tpu.memory_space<vmem>>, vector<1x4x1x32xf32>
      %53 = vector.shape_cast %52 : vector<1x4x1x32xf32> to vector<4x32xf32>
      %54 = vector.shape_cast %51 : vector<4x32xf32> to vector<1x4x1x32xf32>
      tpu.vector_store %arg8[%c0_38, %c0_39, %c1_40, %c0_41], %54 {strides = array<i32>} : memref<1x4x32x32xf32, #tpu.memory_space<vmem>>, vector<1x4x1x32xf32>,
      %cst_42 = arith.constant 0.000000e+00 : f32
      %55 = vector.broadcast %cst_42 : f32 to vector<4x32xf32>
      %c0_43 = arith.constant 0 : index
      %c18 = arith.constant 18 : index
      %56 = vector.load %arg14[%c0_43, %c18] : memref<16x324xf32, #tpu.memory_space<vmem>>, vector<4x16xf32>
      %c0_44 = arith.constant 0 : index
      %c0_45 = arith.constant 0 : index
      %c0_46 = arith.constant 0 : index
      %57 = vector.load %arg7[%c0_44, %c0_45, %c0_46] : memref<2x16x32xf32, #tpu.memory_space<vmem>>, vector<1x16x32xf32>
      %58 = vector.shape_cast %57 : vector<1x16x32xf32> to vector<16x32xf32>
      %cst_47 = arith.constant dense<0.000000e+00> : vector<4x32xf32>
      %59 = tpu.matmul %56, %58, %cst_47 {dimension_numbers = #tpu.dot_dimension_numbers<[1], [0], [0], [1], [0, 0, 1, 1], [], []>} : vector<4x16xf32>, vector<16x32xf32>, vector<4x32xf32> -> vector<4x32xf32>
      %60 = arith.addf %55, %59 : vector<4x32xf32>
      %c4_48 = arith.constant 4 : index
      %c18_49 = arith.constant 18 : index
      %61 = vector.load %arg14[%c4_48, %c18_49] : memref<16x324xf32, #tpu.memory_space<vmem>>, vector<4x16xf32>
      %c1_50 = arith.constant 1 : index
      %c0_51 = arith.constant 0 : index
      %c0_52 = arith.constant 0 : index
      %62 = vector.load %arg7[%c1_50, %c0_51, %c0_52] : memref<2x16x32xf32, #tpu.memory_space<vmem>>, vector<1x16x32xf32>
      %63 = vector.shape_cast %62 : vector<1x16x32xf32> to vector<16x32xf32>
      %cst_53 = arith.constant dense<0.000000e+00> : vector<4x32xf32>
      %64 = tpu.matmul %61, %63, %cst_53 {dimension_numbers = #tpu.dot_dimension_numbers<[1], [0], [0], [1], [0, 0, 1, 1], [], []>} : vector<4x16xf32>, vector<16x32xf32>, vector<4x32xf32> -> vector<4x32xf32>
      %65 = arith.addf %60, %64 : vector<4x32xf32>
      %c0_54 = arith.constant 0 : index
      %c0_55 = arith.constant 0 : index
      %c2 = arith.constant 2 : index
      %c0_56 = arith.constant 0 : index
      %66 = vector.load %arg8[%c0_54, %c0_55, %c2, %c0_56] : memref<1x4x32x32xf32, #tpu.memory_space<vmem>>, vector<1x4x1x32xf32>
      %67 = vector.shape_cast %66 : vector<1x4x1x32xf32> to vector<4x32xf32>
      %68 = vector.shape_cast %65 : vector<4x32xf32> to vector<1x4x1x32xf32>
      tpu.vector_store %arg8[%c0_54, %c0_55, %c2, %c0_56], %68 {strides = array<i32>} : memref<1x4x32x32xf32, #tpu.memory_space<vmem>>, vector<1x4x1x32xf32>,
      %cst_57 = arith.constant 0.000000e+00 : f32
      %69 = vector.broadcast %cst_57 : f32 to vector<4x32xf32>
      %c8_58 = arith.constant 8 : index
      %c18_59 = arith.constant 18 : index
      %70 = vector.load %arg14[%c8_58, %c18_59] : memref<16x324xf32, #tpu.memory_space<vmem>>, vector<4x16xf32>
      %c0_60 = arith.constant 0 : index
      %c0_61 = arith.constant 0 : index
      %c0_62 = arith.constant 0 : index
      %71 = vector.load %arg7[%c0_60, %c0_61, %c0_62] : memref<2x16x32xf32, #tpu.memory_space<vmem>>, vector<1x16x32xf32>
      %72 = vector.shape_cast %71 : vector<1x16x32xf32> to vector<16x32xf32>
      %cst_63 = arith.constant dense<0.000000e+00> : vector<4x32xf32>
      %73 = tpu.matmul %70, %72, %cst_63 {dimension_numbers = #tpu.dot_dimension_numbers<[1], [0], [0], [1], [0, 0, 1, 1], [], []>} : vector<4x16xf32>, vector<16x32xf32>, vector<4x32xf32> -> vector<4x32xf32>
      %74 = arith.addf %69, %73 : vector<4x32xf32>
      %c12_64 = arith.constant 12 : index
      %c18_65 = arith.constant 18 : index
      %75 = vector.load %arg14[%c12_64, %c18_65] : memref<16x324xf32, #tpu.memory_space<vmem>>, vector<4x16xf32>
      %c1_66 = arith.constant 1 : index
      %c0_67 = arith.constant 0 : index
      %c0_68 = arith.constant 0 : index
      %76 = vector.load %arg7[%c1_66, %c0_67, %c0_68] : memref<2x16x32xf32, #tpu.memory_space<vmem>>, vector<1x16x32xf32>
      %77 = vector.shape_cast %76 : vector<1x16x32xf32> to vector<16x32xf32>
      %cst_69 = arith.constant dense<0.000000e+00> : vector<4x32xf32>
      %78 = tpu.matmul %75, %77, %cst_69 {dimension_numbers = #tpu.dot_dimension_numbers<[1], [0], [0], [1], [0, 0, 1, 1], [], []>} : vector<4x16xf32>, vector<16x32xf32>, vector<4x32xf32> -> vector<4x32xf32>
      %79 = arith.addf %74, %78 : vector<4x32xf32>
      %c0_70 = arith.constant 0 : index
      %c0_71 = arith.constant 0 : index
      %c3 = arith.constant 3 : index
      %c0_72 = arith.constant 0 : index
      %80 = vector.load %arg8[%c0_70, %c0_71, %c3, %c0_72] : memref<1x4x32x32xf32, #tpu.memory_space<vmem>>, vector<1x4x1x32xf32>
      %81 = vector.shape_cast %80 : vector<1x4x1x32xf32> to vector<4x32xf32>
      %82 = vector.shape_cast %79 : vector<4x32xf32> to vector<1x4x1x32xf32>
      tpu.vector_store %arg8[%c0_70, %c0_71, %c3, %c0_72], %82 {strides = array<i32>} : memref<1x4x32x32xf32, #tpu.memory_space<vmem>>, vector<1x4x1x32xf32>,
      %cst_73 = arith.constant 0.000000e+00 : f32
      %83 = vector.broadcast %cst_73 : f32 to vector<4x32xf32>
      %c0_74 = arith.constant 0 : index
      %c36 = arith.constant 36 : index
      %84 = vector.load %arg14[%c0_74, %c36] : memref<16x324xf32, #tpu.memory_space<vmem>>, vector<4x16xf32>
      %c0_75 = arith.constant 0 : index
      %c0_76 = arith.constant 0 : index
      %c0_77 = arith.constant 0 : index
      %85 = vector.load %arg7[%c0_75, %c0_76, %c0_77] : memref<2x16x32xf32, #tpu.memory_space<vmem>>, vector<1x16x32xf32>
      %86 = vector.shape_cast %85 : vector<1x16x32xf32> to vector<16x32xf32>
      %cst_78 = arith.constant dense<0.000000e+00> : vector<4x32xf32>
      %87 = tpu.matmul %84, %86, %cst_78 {dimension_numbers = #tpu.dot_dimension_numbers<[1], [0], [0], [1], [0, 0, 1, 1], [], []>} : vector<4x16xf32>, vector<16x32xf32>, vector<4x32xf32> -> vector<4x32xf32>
      %88 = arith.addf %83, %87 : vector<4x32xf32>
      %c4_79 = arith.constant 4 : index
      %c36_80 = arith.constant 36 : index
      %89 = vector.load %arg14[%c4_79, %c36_80] : memref<16x324xf32, #tpu.memory_space<vmem>>, vector<4x16xf32>
      %c1_81 = arith.constant 1 : index
      %c0_82 = arith.constant 0 : index
      %c0_83 = arith.constant 0 : index
      %90 = vector.load %arg7[%c1_81, %c0_82, %c0_83] : memref<2x16x32xf32, #tpu.memory_space<vmem>>, vector<1x16x32xf32>
      %91 = vector.shape_cast %90 : vector<1x16x32xf32> to vector<16x32xf32>
      %cst_84 = arith.constant dense<0.000000e+00> : vector<4x32xf32>
      %92 = tpu.matmul %89, %91, %cst_84 {dimension_numbers = #tpu.dot_dimension_numbers<[1], [0], [0], [1], [0, 0, 1, 1], [], []>} : vector<4x16xf32>, vector<16x32xf32>, vector<4x32xf32> -> vector<4x32xf32>
      %93 = arith.addf %88, %92 : vector<4x32xf32>
      %c0_85 = arith.constant 0 : index
      %c0_86 = arith.constant 0 : index
      %c4_87 = arith.constant 4 : index
      %c0_88 = arith.constant 0 : index
      %94 = vector.load %arg8[%c0_85, %c0_86, %c4_87, %c0_88] : memref<1x4x32x32xf32, #tpu.memory_space<vmem>>, vector<1x4x1x32xf32>
      %95 = vector.shape_cast %94 : vector<1x4x1x32xf32> to vector<4x32xf32>
      %96 = vector.shape_cast %93 : vector<4x32xf32> to vector<1x4x1x32xf32>
      tpu.vector_store %arg8[%c0_85, %c0_86, %c4_87, %c0_88], %96 {strides = array<i32>} : memref<1x4x32x32xf32, #tpu.memory_space<vmem>>, vector<1x4x1x32xf32>,
      %cst_89 = arith.constant 0.000000e+00 : f32
      %97 = vector.broadcast %cst_89 : f32 to vector<4x32xf32>
      %c8_90 = arith.constant 8 : index
      %c36_91 = arith.constant 36 : index
      %98 = vector.load %arg14[%c8_90, %c36_91] : memref<16x324xf32, #tpu.memory_space<vmem>>, vector<4x16xf32>
      %c0_92 = arith.constant 0 : index
      %c0_93 = arith.constant 0 : index
      %c0_94 = arith.constant 0 : index
      %99 = vector.load %arg7[%c0_92, %c0_93, %c0_94] : memref<2x16x32xf32, #tpu.memory_space<vmem>>, vector<1x16x32xf32>
      %100 = vector.shape_cast %99 : vector<1x16x32xf32> to vector<16x32xf32>
      %cst_95 = arith.constant dense<0.000000e+00> : vector<4x32xf32>
      %101 = tpu.matmul %98, %100, %cst_95 {dimension_numbers = #tpu.dot_dimension_numbers<[1], [0], [0], [1], [0, 0, 1, 1], [], []>} : vector<4x16xf32>, vector<16x32xf32>, vector<4x32xf32> -> vector<4x32xf32>
      %102 = arith.addf %97, %101 : vector<4x32xf32>
      %c12_96 = arith.constant 12 : index
      %c36_97 = arith.constant 36 : index
      %103 = vector.load %arg14[%c12_96, %c36_97] : memref<16x324xf32, #tpu.memory_space<vmem>>, vector<4x16xf32>
      %c1_98 = arith.constant 1 : index
      %c0_99 = arith.constant 0 : index
      %c0_100 = arith.constant 0 : index
      %104 = vector.load %arg7[%c1_98, %c0_99, %c0_100] : memref<2x16x32xf32, #tpu.memory_space<vmem>>, vector<1x16x32xf32>
      %105 = vector.shape_cast %104 : vector<1x16x32xf32> to vector<16x32xf32>
      %cst_101 = arith.constant dense<0.000000e+00> : vector<4x32xf32>
      %106 = tpu.matmul %103, %105, %cst_101 {dimension_numbers = #tpu.dot_dimension_numbers<[1], [0], [0], [1], [0, 0, 1, 1], [], []>} : vector<4x16xf32>, vector<16x32xf32>, vector<4x32xf32> -> vector<4x32xf32>
      %107 = arith.addf %102, %106 : vector<4x32xf32>
      %c0_102 = arith.constant 0 : index
      %c0_103 = arith.constant 0 : index
      %c5 = arith.constant 5 : index
      %c0_104 = arith.constant 0 : index
      %108 = vector.load %arg8[%c0_102, %c0_103, %c5, %c0_104] : memref<1x4x32x32xf32, #tpu.memory_space<vmem>>, vector<1x4x1x32xf32>
      %109 = vector.shape_cast %108 : vector<1x4x1x32xf32> to vector<4x32xf32>
      %110 = vector.shape_cast %107 : vector<4x32xf32> to vector<1x4x1x32xf32>
      tpu.vector_store %arg8[%c0_102, %c0_103, %c5, %c0_104], %110 {strides = array<i32>} : memref<1x4x32x32xf32, #tpu.memory_space<vmem>>, vector<1x4x1x32xf32>,
      %cst_105 = arith.constant 0.000000e+00 : f32
      %111 = vector.broadcast %cst_105 : f32 to vector<4x32xf32>
      %c0_106 = arith.constant 0 : index
      %c54 = arith.constant 54 : index
      %112 = vector.load %arg14[%c0_106, %c54] : memref<16x324xf32, #tpu.memory_space<vmem>>, vector<4x16xf32>
      %c0_107 = arith.constant 0 : index
      %c0_108 = arith.constant 0 : index
      %c0_109 = arith.constant 0 : index
      %113 = vector.load %arg7[%c0_107, %c0_108, %c0_109] : memref<2x16x32xf32, #tpu.memory_space<vmem>>, vector<1x16x32xf32>
      %114 = vector.shape_cast %113 : vector<1x16x32xf32> to vector<16x32xf32>
      %cst_110 = arith.constant dense<0.000000e+00> : vector<4x32xf32>
      %115 = tpu.matmul %112, %114, %cst_110 {dimension_numbers = #tpu.dot_dimension_numbers<[1], [0], [0], [1], [0, 0, 1, 1], [], []>} : vector<4x16xf32>, vector<16x32xf32>, vector<4x32xf32> -> vector<4x32xf32>
      %116 = arith.addf %111, %115 : vector<4x32xf32>
      %c4_111 = arith.constant 4 : index
      %c54_112 = arith.constant 54 : index
      %117 = vector.load %arg14[%c4_111, %c54_112] : memref<16x324xf32, #tpu.memory_space<vmem>>, vector<4x16xf32>
      %c1_113 = arith.constant 1 : index
      %c0_114 = arith.constant 0 : index
      %c0_115 = arith.constant 0 : index
      %118 = vector.load %arg7[%c1_113, %c0_114, %c0_115] : memref<2x16x32xf32, #tpu.memory_space<vmem>>, vector<1x16x32xf32>
      %119 = vector.shape_cast %118 : vector<1x16x32xf32> to vector<16x32xf32>
      %cst_116 = arith.constant dense<0.000000e+00> : vector<4x32xf32>
      %120 = tpu.matmul %117, %119, %cst_116 {dimension_numbers = #tpu.dot_dimension_numbers<[1], [0], [0], [1], [0, 0, 1, 1], [], []>} : vector<4x16xf32>, vector<16x32xf32>, vector<4x32xf32> -> vector<4x32xf32>
      %121 = arith.addf %116, %120 : vector<4x32xf32>
      %c0_117 = arith.constant 0 : index
      %c0_118 = arith.constant 0 : index
      %c6 = arith.constant 6 : index
      %c0_119 = arith.constant 0 : index
      %122 = vector.load %arg8[%c0_117, %c0_118, %c6, %c0_119] : memref<1x4x32x32xf32, #tpu.memory_space<vmem>>, vector<1x4x1x32xf32>
      %123 = vector.shape_cast %122 : vector<1x4x1x32xf32> to vector<4x32xf32>
      %124 = vector.shape_cast %121 : vector<4x32xf32> to vector<1x4x1x32xf32>
      tpu.vector_store %arg8[%c0_117, %c0_118, %c6, %c0_119], %124 {strides = array<i32>} : memref<1x4x32x32xf32, #tpu.memory_space<vmem>>, vector<1x4x1x32xf32>,
      %cst_120 = arith.constant 0.000000e+00 : f32
      %125 = vector.broadcast %cst_120 : f32 to vector<4x32xf32>
      %c8_121 = arith.constant 8 : index
      %c54_122 = arith.constant 54 : index
      %126 = vector.load %arg14[%c8_121, %c54_122] : memref<16x324xf32, #tpu.memory_space<vmem>>, vector<4x16xf32>
      %c0_123 = arith.constant 0 : index
      %c0_124 = arith.constant 0 : index
      %c0_125 = arith.constant 0 : index
      %127 = vector.load %arg7[%c0_123, %c0_124, %c0_125] : memref<2x16x32xf32, #tpu.memory_space<vmem>>, vector<1x16x32xf32>
      %128 = vector.shape_cast %127 : vector<1x16x32xf32> to vector<16x32xf32>
      %cst_126 = arith.constant dense<0.000000e+00> : vector<4x32xf32>
      %129 = tpu.matmul %126, %128, %cst_126 {dimension_numbers = #tpu.dot_dimension_numbers<[1], [0], [0], [1], [0, 0, 1, 1], [], []>} : vector<4x16xf32>, vector<16x32xf32>, vector<4x32xf32> -> vector<4x32xf32>
      %130 = arith.addf %125, %129 : vector<4x32xf32>
      %c12_127 = arith.constant 12 : index
      %c54_128 = arith.constant 54 : index
      %131 = vector.load %arg14[%c12_127, %c54_128] : memref<16x324xf32, #tpu.memory_space<vmem>>, vector<4x16xf32>
      %c1_129 = arith.constant 1 : index
      %c0_130 = arith.constant 0 : index
      %c0_131 = arith.constant 0 : index
      %132 = vector.load %arg7[%c1_129, %c0_130, %c0_131] : memref<2x16x32xf32, #tpu.memory_space<vmem>>, vector<1x16x32xf32>
      %133 = vector.shape_cast %132 : vector<1x16x32xf32> to vector<16x32xf32>
      %cst_132 = arith.constant dense<0.000000e+00> : vector<4x32xf32>
      %134 = tpu.matmul %131, %133, %cst_132 {dimension_numbers = #tpu.dot_dimension_numbers<[1], [0], [0], [1], [0, 0, 1, 1], [], []>} : vector<4x16xf32>, vector<16x32xf32>, vector<4x32xf32> -> vector<4x32xf32>
      %135 = arith.addf %130, %134 : vector<4x32xf32>
      %c0_133 = arith.constant 0 : index
      %c0_134 = arith.constant 0 : index
      %c7 = arith.constant 7 : index
      %c0_135 = arith.constant 0 : index
      %136 = vector.load %arg8[%c0_133, %c0_134, %c7, %c0_135] : memref<1x4x32x32xf32, #tpu.memory_space<vmem>>, vector<1x4x1x32xf32>
      %137 = vector.shape_cast %136 : vector<1x4x1x32xf32> to vector<4x32xf32>
      %138 = vector.shape_cast %135 : vector<4x32xf32> to vector<1x4x1x32xf32>
      tpu.vector_store %arg8[%c0_133, %c0_134, %c7, %c0_135], %138 {strides = array<i32>} : memref<1x4x32x32xf32, #tpu.memory_space<vmem>>, vector<1x4x1x32xf32>,
      %cst_136 = arith.constant 0.000000e+00 : f32
      %139 = vector.broadcast %cst_136 : f32 to vector<4x32xf32>
      %c0_137 = arith.constant 0 : index
      %c72 = arith.constant 72 : index
      %140 = vector.load %arg14[%c0_137, %c72] : memref<16x324xf32, #tpu.memory_space<vmem>>, vector<4x16xf32>
      %c0_138 = arith.constant 0 : index
      %c0_139 = arith.constant 0 : index
      %c0_140 = arith.constant 0 : index
      %141 = vector.load %arg7[%c0_138, %c0_139, %c0_140] : memref<2x16x32xf32, #tpu.memory_space<vmem>>, vector<1x16x32xf32>
      %142 = vector.shape_cast %141 : vector<1x16x32xf32> to vector<16x32xf32>
      %cst_141 = arith.constant dense<0.000000e+00> : vector<4x32xf32>
      %143 = tpu.matmul %140, %142, %cst_141 {dimension_numbers = #tpu.dot_dimension_numbers<[1], [0], [0], [1], [0, 0, 1, 1], [], []>} : vector<4x16xf32>, vector<16x32xf32>, vector<4x32xf32> -> vector<4x32xf32>
      %144 = arith.addf %139, %143 : vector<4x32xf32>
      %c4_142 = arith.constant 4 : index
      %c72_143 = arith.constant 72 : index
      %145 = vector.load %arg14[%c4_142, %c72_143] : memref<16x324xf32, #tpu.memory_space<vmem>>, vector<4x16xf32>
      %c1_144 = arith.constant 1 : index
      %c0_145 = arith.constant 0 : index
      %c0_146 = arith.constant 0 : index
      %146 = vector.load %arg7[%c1_144, %c0_145, %c0_146] : memref<2x16x32xf32, #tpu.memory_space<vmem>>, vector<1x16x32xf32>
      %147 = vector.shape_cast %146 : vector<1x16x32xf32> to vector<16x32xf32>
      %cst_147 = arith.constant dense<0.000000e+00> : vector<4x32xf32>
      %148 = tpu.matmul %145, %147, %cst_147 {dimension_numbers = #tpu.dot_dimension_numbers<[1], [0], [0], [1], [0, 0, 1, 1], [], []>} : vector<4x16xf32>, vector<16x32xf32>, vector<4x32xf32> -> vector<4x32xf32>
      %149 = arith.addf %144, %148 : vector<4x32xf32>
      %c0_148 = arith.constant 0 : index
      %c0_149 = arith.constant 0 : index
      %c8_150 = arith.constant 8 : index
      %c0_151 = arith.constant 0 : index
      %150 = vector.load %arg8[%c0_148, %c0_149, %c8_150, %c0_151] : memref<1x4x32x32xf32, #tpu.memory_space<vmem>>, vector<1x4x1x32xf32>
      %151 = vector.shape_cast %150 : vector<1x4x1x32xf32> to vector<4x32xf32>
      %152 = vector.shape_cast %149 : vector<4x32xf32> to vector<1x4x1x32xf32>
      tpu.vector_store %arg8[%c0_148, %c0_149, %c8_150, %c0_151], %152 {strides = array<i32>} : memref<1x4x32x32xf32, #tpu.memory_space<vmem>>, vector<1x4x1x32xf32>,
      %cst_152 = arith.constant 0.000000e+00 : f32
      %153 = vector.broadcast %cst_152 : f32 to vector<4x32xf32>
      %c8_153 = arith.constant 8 : index
      %c72_154 = arith.constant 72 : index
      %154 = vector.load %arg14[%c8_153, %c72_154] : memref<16x324xf32, #tpu.memory_space<vmem>>, vector<4x16xf32>
      %c0_155 = arith.constant 0 : index
      %c0_156 = arith.constant 0 : index
      %c0_157 = arith.constant 0 : index
      %155 = vector.load %arg7[%c0_155, %c0_156, %c0_157] : memref<2x16x32xf32, #tpu.memory_space<vmem>>, vector<1x16x32xf32>
      %156 = vector.shape_cast %155 : vector<1x16x32xf32> to vector<16x32xf32>
      %cst_158 = arith.constant dense<0.000000e+00> : vector<4x32xf32>
      %157 = tpu.matmul %154, %156, %cst_158 {dimension_numbers = #tpu.dot_dimension_numbers<[1], [0], [0], [1], [0, 0, 1, 1], [], []>} : vector<4x16xf32>, vector<16x32xf32>, vector<4x32xf32> -> vector<4x32xf32>
      %158 = arith.addf %153, %157 : vector<4x32xf32>
      %c12_159 = arith.constant 12 : index
      %c72_160 = arith.constant 72 : index
      %159 = vector.load %arg14[%c12_159, %c72_160] : memref<16x324xf32, #tpu.memory_space<vmem>>, vector<4x16xf32>
      %c1_161 = arith.constant 1 : index
      %c0_162 = arith.constant 0 : index
      %c0_163 = arith.constant 0 : index
      %160 = vector.load %arg7[%c1_161, %c0_162, %c0_163] : memref<2x16x32xf32, #tpu.memory_space<vmem>>, vector<1x16x32xf32>
      %161 = vector.shape_cast %160 : vector<1x16x32xf32> to vector<16x32xf32>
      %cst_164 = arith.constant dense<0.000000e+00> : vector<4x32xf32>
      %162 = tpu.matmul %159, %161, %cst_164 {dimension_numbers = #tpu.dot_dimension_numbers<[1], [0], [0], [1], [0, 0, 1, 1], [], []>} : vector<4x16xf32>, vector<16x32xf32>, vector<4x32xf32> -> vector<4x32xf32>
      %163 = arith.addf %158, %162 : vector<4x32xf32>
      %c0_165 = arith.constant 0 : index
      %c0_166 = arith.constant 0 : index
      %c9 = arith.constant 9 : index
      %c0_167 = arith.constant 0 : index
      %164 = vector.load %arg8[%c0_165, %c0_166, %c9, %c0_167] : memref<1x4x32x32xf32, #tpu.memory_space<vmem>>, vector<1x4x1x32xf32>
      %165 = vector.shape_cast %164 : vector<1x4x1x32xf32> to vector<4x32xf32>
      %166 = vector.shape_cast %163 : vector<4x32xf32> to vector<1x4x1x32xf32>
      tpu.vector_store %arg8[%c0_165, %c0_166, %c9, %c0_167], %166 {strides = array<i32>} : memref<1x4x32x32xf32, #tpu.memory_space<vmem>>, vector<1x4x1x32xf32>,
      %cst_168 = arith.constant 0.000000e+00 : f32
      %167 = vector.broadcast %cst_168 : f32 to vector<4x32xf32>
      %c0_169 = arith.constant 0 : index
      %c90 = arith.constant 90 : index
      %168 = vector.load %arg14[%c0_169, %c90] : memref<16x324xf32, #tpu.memory_space<vmem>>, vector<4x16xf32>
      %c0_170 = arith.constant 0 : index
      %c0_171 = arith.constant 0 : index
      %c0_172 = arith.constant 0 : index
      %169 = vector.load %arg7[%c0_170, %c0_171, %c0_172] : memref<2x16x32xf32, #tpu.memory_space<vmem>>, vector<1x16x32xf32>
      %170 = vector.shape_cast %169 : vector<1x16x32xf32> to vector<16x32xf32>
      %cst_173 = arith.constant dense<0.000000e+00> : vector<4x32xf32>
      %171 = tpu.matmul %168, %170, %cst_173 {dimension_numbers = #tpu.dot_dimension_numbers<[1], [0], [0], [1], [0, 0, 1, 1], [], []>} : vector<4x16xf32>, vector<16x32xf32>, vector<4x32xf32> -> vector<4x32xf32>
      %172 = arith.addf %167, %171 : vector<4x32xf32>
      %c4_174 = arith.constant 4 : index
      %c90_175 = arith.constant 90 : index
      %173 = vector.load %arg14[%c4_174, %c90_175] : memref<16x324xf32, #tpu.memory_space<vmem>>, vector<4x16xf32>
      %c1_176 = arith.constant 1 : index
      %c0_177 = arith.constant 0 : index
      %c0_178 = arith.constant 0 : index
      %174 = vector.load %arg7[%c1_176, %c0_177, %c0_178] : memref<2x16x32xf32, #tpu.memory_space<vmem>>, vector<1x16x32xf32>
      %175 = vector.shape_cast %174 : vector<1x16x32xf32> to vector<16x32xf32>
      %cst_179 = arith.constant dense<0.000000e+00> : vector<4x32xf32>
      %176 = tpu.matmul %173, %175, %cst_179 {dimension_numbers = #tpu.dot_dimension_numbers<[1], [0], [0], [1], [0, 0, 1, 1], [], []>} : vector<4x16xf32>, vector<16x32xf32>, vector<4x32xf32> -> vector<4x32xf32>
      %177 = arith.addf %172, %176 : vector<4x32xf32>
      %c0_180 = arith.constant 0 : index
      %c0_181 = arith.constant 0 : index
      %c10 = arith.constant 10 : index
      %c0_182 = arith.constant 0 : index
      %178 = vector.load %arg8[%c0_180, %c0_181, %c10, %c0_182] : memref<1x4x32x32xf32, #tpu.memory_space<vmem>>, vector<1x4x1x32xf32>
      %179 = vector.shape_cast %178 : vector<1x4x1x32xf32> to vector<4x32xf32>
      %180 = vector.shape_cast %177 : vector<4x32xf32> to vector<1x4x1x32xf32>
      tpu.vector_store %arg8[%c0_180, %c0_181, %c10, %c0_182], %180 {strides = array<i32>} : memref<1x4x32x32xf32, #tpu.memory_space<vmem>>, vector<1x4x1x32xf32>,
      %cst_183 = arith.constant 0.000000e+00 : f32
      %181 = vector.broadcast %cst_183 : f32 to vector<4x32xf32>
      %c8_184 = arith.constant 8 : index
      %c90_185 = arith.constant 90 : index
      %182 = vector.load %arg14[%c8_184, %c90_185] : memref<16x324xf32, #tpu.memory_space<vmem>>, vector<4x16xf32>
      %c0_186 = arith.constant 0 : index
      %c0_187 = arith.constant 0 : index
      %c0_188 = arith.constant 0 : index
      %183 = vector.load %arg7[%c0_186, %c0_187, %c0_188] : memref<2x16x32xf32, #tpu.memory_space<vmem>>, vector<1x16x32xf32>
      %184 = vector.shape_cast %183 : vector<1x16x32xf32> to vector<16x32xf32>
      %cst_189 = arith.constant dense<0.000000e+00> : vector<4x32xf32>
      %185 = tpu.matmul %182, %184, %cst_189 {dimension_numbers = #tpu.dot_dimension_numbers<[1], [0], [0], [1], [0, 0, 1, 1], [], []>} : vector<4x16xf32>, vector<16x32xf32>, vector<4x32xf32> -> vector<4x32xf32>
      %186 = arith.addf %181, %185 : vector<4x32xf32>
      %c12_190 = arith.constant 12 : index
      %c90_191 = arith.constant 90 : index
      %187 = vector.load %arg14[%c12_190, %c90_191] : memref<16x324xf32, #tpu.memory_space<vmem>>, vector<4x16xf32>
      %c1_192 = arith.constant 1 : index
      %c0_193 = arith.constant 0 : index
      %c0_194 = arith.constant 0 : index
      %188 = vector.load %arg7[%c1_192, %c0_193, %c0_194] : memref<2x16x32xf32, #tpu.memory_space<vmem>>, vector<1x16x32xf32>
      %189 = vector.shape_cast %188 : vector<1x16x32xf32> to vector<16x32xf32>
      %cst_195 = arith.constant dense<0.000000e+00> : vector<4x32xf32>
      %190 = tpu.matmul %187, %189, %cst_195 {dimension_numbers = #tpu.dot_dimension_numbers<[1], [0], [0], [1], [0, 0, 1, 1], [], []>} : vector<4x16xf32>, vector<16x32xf32>, vector<4x32xf32> -> vector<4x32xf32>
      %191 = arith.addf %186, %190 : vector<4x32xf32>
      %c0_196 = arith.constant 0 : index
      %c0_197 = arith.constant 0 : index
      %c11 = arith.constant 11 : index
      %c0_198 = arith.constant 0 : index
      %192 = vector.load %arg8[%c0_196, %c0_197, %c11, %c0_198] : memref<1x4x32x32xf32, #tpu.memory_space<vmem>>, vector<1x4x1x32xf32>
      %193 = vector.shape_cast %192 : vector<1x4x1x32xf32> to vector<4x32xf32>
      %194 = vector.shape_cast %191 : vector<4x32xf32> to vector<1x4x1x32xf32>
      tpu.vector_store %arg8[%c0_196, %c0_197, %c11, %c0_198], %194 {strides = array<i32>} : memref<1x4x32x32xf32, #tpu.memory_space<vmem>>, vector<1x4x1x32xf32>,
      %cst_199 = arith.constant 0.000000e+00 : f32
      %195 = vector.broadcast %cst_199 : f32 to vector<4x32xf32>
      %c0_200 = arith.constant 0 : index
      %c108 = arith.constant 108 : index
      %196 = vector.load %arg14[%c0_200, %c108] : memref<16x324xf32, #tpu.memory_space<vmem>>, vector<4x16xf32>
      %c0_201 = arith.constant 0 : index
      %c0_202 = arith.constant 0 : index
      %c0_203 = arith.constant 0 : index
      %197 = vector.load %arg7[%c0_201, %c0_202, %c0_203] : memref<2x16x32xf32, #tpu.memory_space<vmem>>, vector<1x16x32xf32>
      %198 = vector.shape_cast %197 : vector<1x16x32xf32> to vector<16x32xf32>
      %cst_204 = arith.constant dense<0.000000e+00> : vector<4x32xf32>
      %199 = tpu.matmul %196, %198, %cst_204 {dimension_numbers = #tpu.dot_dimension_numbers<[1], [0], [0], [1], [0, 0, 1, 1], [], []>} : vector<4x16xf32>, vector<16x32xf32>, vector<4x32xf32> -> vector<4x32xf32>
      %200 = arith.addf %195, %199 : vector<4x32xf32>
      %c4_205 = arith.constant 4 : index
      %c108_206 = arith.constant 108 : index
      %201 = vector.load %arg14[%c4_205, %c108_206] : memref<16x324xf32, #tpu.memory_space<vmem>>, vector<4x16xf32>
      %c1_207 = arith.constant 1 : index
      %c0_208 = arith.constant 0 : index
      %c0_209 = arith.constant 0 : index
      %202 = vector.load %arg7[%c1_207, %c0_208, %c0_209] : memref<2x16x32xf32, #tpu.memory_space<vmem>>, vector<1x16x32xf32>
      %203 = vector.shape_cast %202 : vector<1x16x32xf32> to vector<16x32xf32>
      %cst_210 = arith.constant dense<0.000000e+00> : vector<4x32xf32>
      %204 = tpu.matmul %201, %203, %cst_210 {dimension_numbers = #tpu.dot_dimension_numbers<[1], [0], [0], [1], [0, 0, 1, 1], [], []>} : vector<4x16xf32>, vector<16x32xf32>, vector<4x32xf32> -> vector<4x32xf32>
      %205 = arith.addf %200, %204 : vector<4x32xf32>
      %c0_211 = arith.constant 0 : index
      %c0_212 = arith.constant 0 : index
      %c12_213 = arith.constant 12 : index
      %c0_214 = arith.constant 0 : index
      %206 = vector.load %arg8[%c0_211, %c0_212, %c12_213, %c0_214] : memref<1x4x32x32xf32, #tpu.memory_space<vmem>>, vector<1x4x1x32xf32>
      %207 = vector.shape_cast %206 : vector<1x4x1x32xf32> to vector<4x32xf32>
      %208 = vector.shape_cast %205 : vector<4x32xf32> to vector<1x4x1x32xf32>
      tpu.vector_store %arg8[%c0_211, %c0_212, %c12_213, %c0_214], %208 {strides = array<i32>} : memref<1x4x32x32xf32, #tpu.memory_space<vmem>>, vector<1x4x1x32xf32>,
      %cst_215 = arith.constant 0.000000e+00 : f32
      %209 = vector.broadcast %cst_215 : f32 to vector<4x32xf32>
      %c8_216 = arith.constant 8 : index
      %c108_217 = arith.constant 108 : index
      %210 = vector.load %arg14[%c8_216, %c108_217] : memref<16x324xf32, #tpu.memory_space<vmem>>, vector<4x16xf32>
      %c0_218 = arith.constant 0 : index
      %c0_219 = arith.constant 0 : index
      %c0_220 = arith.constant 0 : index
      %211 = vector.load %arg7[%c0_218, %c0_219, %c0_220] : memref<2x16x32xf32, #tpu.memory_space<vmem>>, vector<1x16x32xf32>
      %212 = vector.shape_cast %211 : vector<1x16x32xf32> to vector<16x32xf32>
      %cst_221 = arith.constant dense<0.000000e+00> : vector<4x32xf32>
      %213 = tpu.matmul %210, %212, %cst_221 {dimension_numbers = #tpu.dot_dimension_numbers<[1], [0], [0], [1], [0, 0, 1, 1], [], []>} : vector<4x16xf32>, vector<16x32xf32>, vector<4x32xf32> -> vector<4x32xf32>
      %214 = arith.addf %209, %213 : vector<4x32xf32>
      %c12_222 = arith.constant 12 : index
      %c108_223 = arith.constant 108 : index
      %215 = vector.load %arg14[%c12_222, %c108_223] : memref<16x324xf32, #tpu.memory_space<vmem>>, vector<4x16xf32>
      %c1_224 = arith.constant 1 : index
      %c0_225 = arith.constant 0 : index
      %c0_226 = arith.constant 0 : index
      %216 = vector.load %arg7[%c1_224, %c0_225, %c0_226] : memref<2x16x32xf32, #tpu.memory_space<vmem>>, vector<1x16x32xf32>
      %217 = vector.shape_cast %216 : vector<1x16x32xf32> to vector<16x32xf32>
      %cst_227 = arith.constant dense<0.000000e+00> : vector<4x32xf32>
      %218 = tpu.matmul %215, %217, %cst_227 {dimension_numbers = #tpu.dot_dimension_numbers<[1], [0], [0], [1], [0, 0, 1, 1], [], []>} : vector<4x16xf32>, vector<16x32xf32>, vector<4x32xf32> -> vector<4x32xf32>
      %219 = arith.addf %214, %218 : vector<4x32xf32>
      %c0_228 = arith.constant 0 : index
      %c0_229 = arith.constant 0 : index
      %c13 = arith.constant 13 : index
      %c0_230 = arith.constant 0 : index
      %220 = vector.load %arg8[%c0_228, %c0_229, %c13, %c0_230] : memref<1x4x32x32xf32, #tpu.memory_space<vmem>>, vector<1x4x1x32xf32>
      %221 = vector.shape_cast %220 : vector<1x4x1x32xf32> to vector<4x32xf32>
      %222 = vector.shape_cast %219 : vector<4x32xf32> to vector<1x4x1x32xf32>
      tpu.vector_store %arg8[%c0_228, %c0_229, %c13, %c0_230], %222 {strides = array<i32>} : memref<1x4x32x32xf32, #tpu.memory_space<vmem>>, vector<1x4x1x32xf32>,
      %cst_231 = arith.constant 0.000000e+00 : f32
      %223 = vector.broadcast %cst_231 : f32 to vector<4x32xf32>
      %c0_232 = arith.constant 0 : index
      %c126 = arith.constant 126 : index
      %224 = vector.load %arg14[%c0_232, %c126] : memref<16x324xf32, #tpu.memory_space<vmem>>, vector<4x16xf32>
      %c0_233 = arith.constant 0 : index
      %c0_234 = arith.constant 0 : index
      %c0_235 = arith.constant 0 : index
      %225 = vector.load %arg7[%c0_233, %c0_234, %c0_235] : memref<2x16x32xf32, #tpu.memory_space<vmem>>, vector<1x16x32xf32>
      %226 = vector.shape_cast %225 : vector<1x16x32xf32> to vector<16x32xf32>
      %cst_236 = arith.constant dense<0.000000e+00> : vector<4x32xf32>
      %227 = tpu.matmul %224, %226, %cst_236 {dimension_numbers = #tpu.dot_dimension_numbers<[1], [0], [0], [1], [0, 0, 1, 1], [], []>} : vector<4x16xf32>, vector<16x32xf32>, vector<4x32xf32> -> vector<4x32xf32>
      %228 = arith.addf %223, %227 : vector<4x32xf32>
      %c4_237 = arith.constant 4 : index
      %c126_238 = arith.constant 126 : index
      %229 = vector.load %arg14[%c4_237, %c126_238] : memref<16x324xf32, #tpu.memory_space<vmem>>, vector<4x16xf32>
      %c1_239 = arith.constant 1 : index
      %c0_240 = arith.constant 0 : index
      %c0_241 = arith.constant 0 : index
      %230 = vector.load %arg7[%c1_239, %c0_240, %c0_241] : memref<2x16x32xf32, #tpu.memory_space<vmem>>, vector<1x16x32xf32>
      %231 = vector.shape_cast %230 : vector<1x16x32xf32> to vector<16x32xf32>
      %cst_242 = arith.constant dense<0.000000e+00> : vector<4x32xf32>
      %232 = tpu.matmul %229, %231, %cst_242 {dimension_numbers = #tpu.dot_dimension_numbers<[1], [0], [0], [1], [0, 0, 1, 1], [], []>} : vector<4x16xf32>, vector<16x32xf32>, vector<4x32xf32> -> vector<4x32xf32>
      %233 = arith.addf %228, %232 : vector<4x32xf32>
      %c0_243 = arith.constant 0 : index
      %c0_244 = arith.constant 0 : index
      %c14 = arith.constant 14 : index
      %c0_245 = arith.constant 0 : index
      %234 = vector.load %arg8[%c0_243, %c0_244, %c14, %c0_245] : memref<1x4x32x32xf32, #tpu.memory_space<vmem>>, vector<1x4x1x32xf32>
      %235 = vector.shape_cast %234 : vector<1x4x1x32xf32> to vector<4x32xf32>
      %236 = vector.shape_cast %233 : vector<4x32xf32> to vector<1x4x1x32xf32>
      tpu.vector_store %arg8[%c0_243, %c0_244, %c14, %c0_245], %236 {strides = array<i32>} : memref<1x4x32x32xf32, #tpu.memory_space<vmem>>, vector<1x4x1x32xf32>,
      %cst_246 = arith.constant 0.000000e+00 : f32
      %237 = vector.broadcast %cst_246 : f32 to vector<4x32xf32>
      %c8_247 = arith.constant 8 : index
      %c126_248 = arith.constant 126 : index
      %238 = vector.load %arg14[%c8_247, %c126_248] : memref<16x324xf32, #tpu.memory_space<vmem>>, vector<4x16xf32>
      %c0_249 = arith.constant 0 : index
      %c0_250 = arith.constant 0 : index
      %c0_251 = arith.constant 0 : index
      %239 = vector.load %arg7[%c0_249, %c0_250, %c0_251] : memref<2x16x32xf32, #tpu.memory_space<vmem>>, vector<1x16x32xf32>
      %240 = vector.shape_cast %239 : vector<1x16x32xf32> to vector<16x32xf32>
      %cst_252 = arith.constant dense<0.000000e+00> : vector<4x32xf32>
      %241 = tpu.matmul %238, %240, %cst_252 {dimension_numbers = #tpu.dot_dimension_numbers<[1], [0], [0], [1], [0, 0, 1, 1], [], []>} : vector<4x16xf32>, vector<16x32xf32>, vector<4x32xf32> -> vector<4x32xf32>
      %242 = arith.addf %237, %241 : vector<4x32xf32>
      %c12_253 = arith.constant 12 : index
      %c126_254 = arith.constant 126 : index
      %243 = vector.load %arg14[%c12_253, %c126_254] : memref<16x324xf32, #tpu.memory_space<vmem>>, vector<4x16xf32>
      %c1_255 = arith.constant 1 : index
      %c0_256 = arith.constant 0 : index
      %c0_257 = arith.constant 0 : index
      %244 = vector.load %arg7[%c1_255, %c0_256, %c0_257] : memref<2x16x32xf32, #tpu.memory_space<vmem>>, vector<1x16x32xf32>
      %245 = vector.shape_cast %244 : vector<1x16x32xf32> to vector<16x32xf32>
      %cst_258 = arith.constant dense<0.000000e+00> : vector<4x32xf32>
      %246 = tpu.matmul %243, %245, %cst_258 {dimension_numbers = #tpu.dot_dimension_numbers<[1], [0], [0], [1], [0, 0, 1, 1], [], []>} : vector<4x16xf32>, vector<16x32xf32>, vector<4x32xf32> -> vector<4x32xf32>
      %247 = arith.addf %242, %246 : vector<4x32xf32>
      %c0_259 = arith.constant 0 : index
      %c0_260 = arith.constant 0 : index
      %c15 = arith.constant 15 : index
      %c0_261 = arith.constant 0 : index
      %248 = vector.load %arg8[%c0_259, %c0_260, %c15, %c0_261] : memref<1x4x32x32xf32, #tpu.memory_space<vmem>>, vector<1x4x1x32xf32>
      %249 = vector.shape_cast %248 : vector<1x4x1x32xf32> to vector<4x32xf32>
      %250 = vector.shape_cast %247 : vector<4x32xf32> to vector<1x4x1x32xf32>
      tpu.vector_store %arg8[%c0_259, %c0_260, %c15, %c0_261], %250 {strides = array<i32>} : memref<1x4x32x32xf32, #tpu.memory_space<vmem>>, vector<1x4x1x32xf32>,
      %cst_262 = arith.constant 0.000000e+00 : f32
      %251 = vector.broadcast %cst_262 : f32 to vector<4x32xf32>
      %c0_263 = arith.constant 0 : index
      %c144 = arith.constant 144 : index
      %252 = vector.load %arg14[%c0_263, %c144] : memref<16x324xf32, #tpu.memory_space<vmem>>, vector<4x16xf32>
      %c0_264 = arith.constant 0 : index
      %c0_265 = arith.constant 0 : index
      %c0_266 = arith.constant 0 : index
      %253 = vector.load %arg7[%c0_264, %c0_265, %c0_266] : memref<2x16x32xf32, #tpu.memory_space<vmem>>, vector<1x16x32xf32>
      %254 = vector.shape_cast %253 : vector<1x16x32xf32> to vector<16x32xf32>
      %cst_267 = arith.constant dense<0.000000e+00> : vector<4x32xf32>
      %255 = tpu.matmul %252, %254, %cst_267 {dimension_numbers = #tpu.dot_dimension_numbers<[1], [0], [0], [1], [0, 0, 1, 1], [], []>} : vector<4x16xf32>, vector<16x32xf32>, vector<4x32xf32> -> vector<4x32xf32>
      %256 = arith.addf %251, %255 : vector<4x32xf32>
      %c4_268 = arith.constant 4 : index
      %c144_269 = arith.constant 144 : index
      %257 = vector.load %arg14[%c4_268, %c144_269] : memref<16x324xf32, #tpu.memory_space<vmem>>, vector<4x16xf32>
      %c1_270 = arith.constant 1 : index
      %c0_271 = arith.constant 0 : index
      %c0_272 = arith.constant 0 : index
      %258 = vector.load %arg7[%c1_270, %c0_271, %c0_272] : memref<2x16x32xf32, #tpu.memory_space<vmem>>, vector<1x16x32xf32>
      %259 = vector.shape_cast %258 : vector<1x16x32xf32> to vector<16x32xf32>
      %cst_273 = arith.constant dense<0.000000e+00> : vector<4x32xf32>
      %260 = tpu.matmul %257, %259, %cst_273 {dimension_numbers = #tpu.dot_dimension_numbers<[1], [0], [0], [1], [0, 0, 1, 1], [], []>} : vector<4x16xf32>, vector<16x32xf32>, vector<4x32xf32> -> vector<4x32xf32>
      %261 = arith.addf %256, %260 : vector<4x32xf32>
      %c0_274 = arith.constant 0 : index
      %c0_275 = arith.constant 0 : index
      %c16 = arith.constant 16 : index
      %c0_276 = arith.constant 0 : index
      %262 = vector.load %arg8[%c0_274, %c0_275, %c16, %c0_276] : memref<1x4x32x32xf32, #tpu.memory_space<vmem>>, vector<1x4x1x32xf32>
      %263 = vector.shape_cast %262 : vector<1x4x1x32xf32> to vector<4x32xf32>
      %264 = vector.shape_cast %261 : vector<4x32xf32> to vector<1x4x1x32xf32>
      tpu.vector_store %arg8[%c0_274, %c0_275, %c16, %c0_276], %264 {strides = array<i32>} : memref<1x4x32x32xf32, #tpu.memory_space<vmem>>, vector<1x4x1x32xf32>,
      %cst_277 = arith.constant 0.000000e+00 : f32
      %265 = vector.broadcast %cst_277 : f32 to vector<4x32xf32>
      %c8_278 = arith.constant 8 : index
      %c144_279 = arith.constant 144 : index
      %266 = vector.load %arg14[%c8_278, %c144_279] : memref<16x324xf32, #tpu.memory_space<vmem>>, vector<4x16xf32>
      %c0_280 = arith.constant 0 : index
      %c0_281 = arith.constant 0 : index
      %c0_282 = arith.constant 0 : index
      %267 = vector.load %arg7[%c0_280, %c0_281, %c0_282] : memref<2x16x32xf32, #tpu.memory_space<vmem>>, vector<1x16x32xf32>
      %268 = vector.shape_cast %267 : vector<1x16x32xf32> to vector<16x32xf32>
      %cst_283 = arith.constant dense<0.000000e+00> : vector<4x32xf32>
      %269 = tpu.matmul %266, %268, %cst_283 {dimension_numbers = #tpu.dot_dimension_numbers<[1], [0], [0], [1], [0, 0, 1, 1], [], []>} : vector<4x16xf32>, vector<16x32xf32>, vector<4x32xf32> -> vector<4x32xf32>
      %270 = arith.addf %265, %269 : vector<4x32xf32>
      %c12_284 = arith.constant 12 : index
      %c144_285 = arith.constant 144 : index
      %271 = vector.load %arg14[%c12_284, %c144_285] : memref<16x324xf32, #tpu.memory_space<vmem>>, vector<4x16xf32>
      %c1_286 = arith.constant 1 : index
      %c0_287 = arith.constant 0 : index
      %c0_288 = arith.constant 0 : index
      %272 = vector.load %arg7[%c1_286, %c0_287, %c0_288] : memref<2x16x32xf32, #tpu.memory_space<vmem>>, vector<1x16x32xf32>
      %273 = vector.shape_cast %272 : vector<1x16x32xf32> to vector<16x32xf32>
      %cst_289 = arith.constant dense<0.000000e+00> : vector<4x32xf32>
      %274 = tpu.matmul %271, %273, %cst_289 {dimension_numbers = #tpu.dot_dimension_numbers<[1], [0], [0], [1], [0, 0, 1, 1], [], []>} : vector<4x16xf32>, vector<16x32xf32>, vector<4x32xf32> -> vector<4x32xf32>
      %275 = arith.addf %270, %274 : vector<4x32xf32>
      %c0_290 = arith.constant 0 : index
      %c0_291 = arith.constant 0 : index
      %c17 = arith.constant 17 : index
      %c0_292 = arith.constant 0 : index
      %276 = vector.load %arg8[%c0_290, %c0_291, %c17, %c0_292] : memref<1x4x32x32xf32, #tpu.memory_space<vmem>>, vector<1x4x1x32xf32>
      %277 = vector.shape_cast %276 : vector<1x4x1x32xf32> to vector<4x32xf32>
      %278 = vector.shape_cast %275 : vector<4x32xf32> to vector<1x4x1x32xf32>
      tpu.vector_store %arg8[%c0_290, %c0_291, %c17, %c0_292], %278 {strides = array<i32>} : memref<1x4x32x32xf32, #tpu.memory_space<vmem>>, vector<1x4x1x32xf32>,
      %cst_293 = arith.constant 0.000000e+00 : f32
      %279 = vector.broadcast %cst_293 : f32 to vector<4x32xf32>
      %c0_294 = arith.constant 0 : index
      %c162 = arith.constant 162 : index
      %280 = vector.load %arg14[%c0_294, %c162] : memref<16x324xf32, #tpu.memory_space<vmem>>, vector<4x16xf32>
      %c0_295 = arith.constant 0 : index
      %c0_296 = arith.constant 0 : index
      %c0_297 = arith.constant 0 : index
      %281 = vector.load %arg7[%c0_295, %c0_296, %c0_297] : memref<2x16x32xf32, #tpu.memory_space<vmem>>, vector<1x16x32xf32>
      %282 = vector.shape_cast %281 : vector<1x16x32xf32> to vector<16x32xf32>
      %cst_298 = arith.constant dense<0.000000e+00> : vector<4x32xf32>
      %283 = tpu.matmul %280, %282, %cst_298 {dimension_numbers = #tpu.dot_dimension_numbers<[1], [0], [0], [1], [0, 0, 1, 1], [], []>} : vector<4x16xf32>, vector<16x32xf32>, vector<4x32xf32> -> vector<4x32xf32>
      %284 = arith.addf %279, %283 : vector<4x32xf32>
      %c4_299 = arith.constant 4 : index
      %c162_300 = arith.constant 162 : index
      %285 = vector.load %arg14[%c4_299, %c162_300] : memref<16x324xf32, #tpu.memory_space<vmem>>, vector<4x16xf32>
      %c1_301 = arith.constant 1 : index
      %c0_302 = arith.constant 0 : index
      %c0_303 = arith.constant 0 : index
      %286 = vector.load %arg7[%c1_301, %c0_302, %c0_303] : memref<2x16x32xf32, #tpu.memory_space<vmem>>, vector<1x16x32xf32>
      %287 = vector.shape_cast %286 : vector<1x16x32xf32> to vector<16x32xf32>
      %cst_304 = arith.constant dense<0.000000e+00> : vector<4x32xf32>
      %288 = tpu.matmul %285, %287, %cst_304 {dimension_numbers = #tpu.dot_dimension_numbers<[1], [0], [0], [1], [0, 0, 1, 1], [], []>} : vector<4x16xf32>, vector<16x32xf32>, vector<4x32xf32> -> vector<4x32xf32>
      %289 = arith.addf %284, %288 : vector<4x32xf32>
      %c0_305 = arith.constant 0 : index
      %c0_306 = arith.constant 0 : index
      %c18_307 = arith.constant 18 : index
      %c0_308 = arith.constant 0 : index
      %290 = vector.load %arg8[%c0_305, %c0_306, %c18_307, %c0_308] : memref<1x4x32x32xf32, #tpu.memory_space<vmem>>, vector<1x4x1x32xf32>
      %291 = vector.shape_cast %290 : vector<1x4x1x32xf32> to vector<4x32xf32>
      %292 = vector.shape_cast %289 : vector<4x32xf32> to vector<1x4x1x32xf32>
      tpu.vector_store %arg8[%c0_305, %c0_306, %c18_307, %c0_308], %292 {strides = array<i32>} : memref<1x4x32x32xf32, #tpu.memory_space<vmem>>, vector<1x4x1x32xf32>,
      %cst_309 = arith.constant 0.000000e+00 : f32
      %293 = vector.broadcast %cst_309 : f32 to vector<4x32xf32>
      %c8_310 = arith.constant 8 : index
      %c162_311 = arith.constant 162 : index
      %294 = vector.load %arg14[%c8_310, %c162_311] : memref<16x324xf32, #tpu.memory_space<vmem>>, vector<4x16xf32>
      %c0_312 = arith.constant 0 : index
      %c0_313 = arith.constant 0 : index
      %c0_314 = arith.constant 0 : index
      %295 = vector.load %arg7[%c0_312, %c0_313, %c0_314] : memref<2x16x32xf32, #tpu.memory_space<vmem>>, vector<1x16x32xf32>
      %296 = vector.shape_cast %295 : vector<1x16x32xf32> to vector<16x32xf32>
      %cst_315 = arith.constant dense<0.000000e+00> : vector<4x32xf32>
      %297 = tpu.matmul %294, %296, %cst_315 {dimension_numbers = #tpu.dot_dimension_numbers<[1], [0], [0], [1], [0, 0, 1, 1], [], []>} : vector<4x16xf32>, vector<16x32xf32>, vector<4x32xf32> -> vector<4x32xf32>
      %298 = arith.addf %293, %297 : vector<4x32xf32>
      %c12_316 = arith.constant 12 : index
      %c162_317 = arith.constant 162 : index
      %299 = vector.load %arg14[%c12_316, %c162_317] : memref<16x324xf32, #tpu.memory_space<vmem>>, vector<4x16xf32>
      %c1_318 = arith.constant 1 : index
      %c0_319 = arith.constant 0 : index
      %c0_320 = arith.constant 0 : index
      %300 = vector.load %arg7[%c1_318, %c0_319, %c0_320] : memref<2x16x32xf32, #tpu.memory_space<vmem>>, vector<1x16x32xf32>
      %301 = vector.shape_cast %300 : vector<1x16x32xf32> to vector<16x32xf32>
      %cst_321 = arith.constant dense<0.000000e+00> : vector<4x32xf32>
      %302 = tpu.matmul %299, %301, %cst_321 {dimension_numbers = #tpu.dot_dimension_numbers<[1], [0], [0], [1], [0, 0, 1, 1], [], []>} : vector<4x16xf32>, vector<16x32xf32>, vector<4x32xf32> -> vector<4x32xf32>
      %303 = arith.addf %298, %302 : vector<4x32xf32>
      %c0_322 = arith.constant 0 : index
      %c0_323 = arith.constant 0 : index
      %c19 = arith.constant 19 : index
      %c0_324 = arith.constant 0 : index
      %304 = vector.load %arg8[%c0_322, %c0_323, %c19, %c0_324] : memref<1x4x32x32xf32, #tpu.memory_space<vmem>>, vector<1x4x1x32xf32>
      %305 = vector.shape_cast %304 : vector<1x4x1x32xf32> to vector<4x32xf32>
      %306 = vector.shape_cast %303 : vector<4x32xf32> to vector<1x4x1x32xf32>
      tpu.vector_store %arg8[%c0_322, %c0_323, %c19, %c0_324], %306 {strides = array<i32>} : memref<1x4x32x32xf32, #tpu.memory_space<vmem>>, vector<1x4x1x32xf32>,
      %cst_325 = arith.constant 0.000000e+00 : f32
      %307 = vector.broadcast %cst_325 : f32 to vector<4x32xf32>
      %c0_326 = arith.constant 0 : index
      %c180 = arith.constant 180 : index
      %308 = vector.load %arg14[%c0_326, %c180] : memref<16x324xf32, #tpu.memory_space<vmem>>, vector<4x16xf32>
      %c0_327 = arith.constant 0 : index
      %c0_328 = arith.constant 0 : index
      %c0_329 = arith.constant 0 : index
      %309 = vector.load %arg7[%c0_327, %c0_328, %c0_329] : memref<2x16x32xf32, #tpu.memory_space<vmem>>, vector<1x16x32xf32>
      %310 = vector.shape_cast %309 : vector<1x16x32xf32> to vector<16x32xf32>
      %cst_330 = arith.constant dense<0.000000e+00> : vector<4x32xf32>
      %311 = tpu.matmul %308, %310, %cst_330 {dimension_numbers = #tpu.dot_dimension_numbers<[1], [0], [0], [1], [0, 0, 1, 1], [], []>} : vector<4x16xf32>, vector<16x32xf32>, vector<4x32xf32> -> vector<4x32xf32>
      %312 = arith.addf %307, %311 : vector<4x32xf32>
      %c4_331 = arith.constant 4 : index
      %c180_332 = arith.constant 180 : index
      %313 = vector.load %arg14[%c4_331, %c180_332] : memref<16x324xf32, #tpu.memory_space<vmem>>, vector<4x16xf32>
      %c1_333 = arith.constant 1 : index
      %c0_334 = arith.constant 0 : index
      %c0_335 = arith.constant 0 : index
      %314 = vector.load %arg7[%c1_333, %c0_334, %c0_335] : memref<2x16x32xf32, #tpu.memory_space<vmem>>, vector<1x16x32xf32>
      %315 = vector.shape_cast %314 : vector<1x16x32xf32> to vector<16x32xf32>
      %cst_336 = arith.constant dense<0.000000e+00> : vector<4x32xf32>
      %316 = tpu.matmul %313, %315, %cst_336 {dimension_numbers = #tpu.dot_dimension_numbers<[1], [0], [0], [1], [0, 0, 1, 1], [], []>} : vector<4x16xf32>, vector<16x32xf32>, vector<4x32xf32> -> vector<4x32xf32>
      %317 = arith.addf %312, %316 : vector<4x32xf32>
      %c0_337 = arith.constant 0 : index
      %c0_338 = arith.constant 0 : index
      %c20 = arith.constant 20 : index
      %c0_339 = arith.constant 0 : index
      %318 = vector.load %arg8[%c0_337, %c0_338, %c20, %c0_339] : memref<1x4x32x32xf32, #tpu.memory_space<vmem>>, vector<1x4x1x32xf32>
      %319 = vector.shape_cast %318 : vector<1x4x1x32xf32> to vector<4x32xf32>
      %320 = vector.shape_cast %317 : vector<4x32xf32> to vector<1x4x1x32xf32>
      tpu.vector_store %arg8[%c0_337, %c0_338, %c20, %c0_339], %320 {strides = array<i32>} : memref<1x4x32x32xf32, #tpu.memory_space<vmem>>, vector<1x4x1x32xf32>,
      %cst_340 = arith.constant 0.000000e+00 : f32
      %321 = vector.broadcast %cst_340 : f32 to vector<4x32xf32>
      %c8_341 = arith.constant 8 : index
      %c180_342 = arith.constant 180 : index
      %322 = vector.load %arg14[%c8_341, %c180_342] : memref<16x324xf32, #tpu.memory_space<vmem>>, vector<4x16xf32>
      %c0_343 = arith.constant 0 : index
      %c0_344 = arith.constant 0 : index
      %c0_345 = arith.constant 0 : index
      %323 = vector.load %arg7[%c0_343, %c0_344, %c0_345] : memref<2x16x32xf32, #tpu.memory_space<vmem>>, vector<1x16x32xf32>
      %324 = vector.shape_cast %323 : vector<1x16x32xf32> to vector<16x32xf32>
      %cst_346 = arith.constant dense<0.000000e+00> : vector<4x32xf32>
      %325 = tpu.matmul %322, %324, %cst_346 {dimension_numbers = #tpu.dot_dimension_numbers<[1], [0], [0], [1], [0, 0, 1, 1], [], []>} : vector<4x16xf32>, vector<16x32xf32>, vector<4x32xf32> -> vector<4x32xf32>
      %326 = arith.addf %321, %325 : vector<4x32xf32>
      %c12_347 = arith.constant 12 : index
      %c180_348 = arith.constant 180 : index
      %327 = vector.load %arg14[%c12_347, %c180_348] : memref<16x324xf32, #tpu.memory_space<vmem>>, vector<4x16xf32>
      %c1_349 = arith.constant 1 : index
      %c0_350 = arith.constant 0 : index
      %c0_351 = arith.constant 0 : index
      %328 = vector.load %arg7[%c1_349, %c0_350, %c0_351] : memref<2x16x32xf32, #tpu.memory_space<vmem>>, vector<1x16x32xf32>
      %329 = vector.shape_cast %328 : vector<1x16x32xf32> to vector<16x32xf32>
      %cst_352 = arith.constant dense<0.000000e+00> : vector<4x32xf32>
      %330 = tpu.matmul %327, %329, %cst_352 {dimension_numbers = #tpu.dot_dimension_numbers<[1], [0], [0], [1], [0, 0, 1, 1], [], []>} : vector<4x16xf32>, vector<16x32xf32>, vector<4x32xf32> -> vector<4x32xf32>
      %331 = arith.addf %326, %330 : vector<4x32xf32>
      %c0_353 = arith.constant 0 : index
      %c0_354 = arith.constant 0 : index
      %c21 = arith.constant 21 : index
      %c0_355 = arith.constant 0 : index
      %332 = vector.load %arg8[%c0_353, %c0_354, %c21, %c0_355] : memref<1x4x32x32xf32, #tpu.memory_space<vmem>>, vector<1x4x1x32xf32>
      %333 = vector.shape_cast %332 : vector<1x4x1x32xf32> to vector<4x32xf32>
      %334 = vector.shape_cast %331 : vector<4x32xf32> to vector<1x4x1x32xf32>
      tpu.vector_store %arg8[%c0_353, %c0_354, %c21, %c0_355], %334 {strides = array<i32>} : memref<1x4x32x32xf32, #tpu.memory_space<vmem>>, vector<1x4x1x32xf32>,
      %cst_356 = arith.constant 0.000000e+00 : f32
      %335 = vector.broadcast %cst_356 : f32 to vector<4x32xf32>
      %c0_357 = arith.constant 0 : index
      %c198 = arith.constant 198 : index
      %336 = vector.load %arg14[%c0_357, %c198] : memref<16x324xf32, #tpu.memory_space<vmem>>, vector<4x16xf32>
      %c0_358 = arith.constant 0 : index
      %c0_359 = arith.constant 0 : index
      %c0_360 = arith.constant 0 : index
      %337 = vector.load %arg7[%c0_358, %c0_359, %c0_360] : memref<2x16x32xf32, #tpu.memory_space<vmem>>, vector<1x16x32xf32>
      %338 = vector.shape_cast %337 : vector<1x16x32xf32> to vector<16x32xf32>
      %cst_361 = arith.constant dense<0.000000e+00> : vector<4x32xf32>
      %339 = tpu.matmul %336, %338, %cst_361 {dimension_numbers = #tpu.dot_dimension_numbers<[1], [0], [0], [1], [0, 0, 1, 1], [], []>} : vector<4x16xf32>, vector<16x32xf32>, vector<4x32xf32> -> vector<4x32xf32>
      %340 = arith.addf %335, %339 : vector<4x32xf32>
      %c4_362 = arith.constant 4 : index
      %c198_363 = arith.constant 198 : index
      %341 = vector.load %arg14[%c4_362, %c198_363] : memref<16x324xf32, #tpu.memory_space<vmem>>, vector<4x16xf32>
      %c1_364 = arith.constant 1 : index
      %c0_365 = arith.constant 0 : index
      %c0_366 = arith.constant 0 : index
      %342 = vector.load %arg7[%c1_364, %c0_365, %c0_366] : memref<2x16x32xf32, #tpu.memory_space<vmem>>, vector<1x16x32xf32>
      %343 = vector.shape_cast %342 : vector<1x16x32xf32> to vector<16x32xf32>
      %cst_367 = arith.constant dense<0.000000e+00> : vector<4x32xf32>
      %344 = tpu.matmul %341, %343, %cst_367 {dimension_numbers = #tpu.dot_dimension_numbers<[1], [0], [0], [1], [0, 0, 1, 1], [], []>} : vector<4x16xf32>, vector<16x32xf32>, vector<4x32xf32> -> vector<4x32xf32>
      %345 = arith.addf %340, %344 : vector<4x32xf32>
      %c0_368 = arith.constant 0 : index
      %c0_369 = arith.constant 0 : index
      %c22 = arith.constant 22 : index
      %c0_370 = arith.constant 0 : index
      %346 = vector.load %arg8[%c0_368, %c0_369, %c22, %c0_370] : memref<1x4x32x32xf32, #tpu.memory_space<vmem>>, vector<1x4x1x32xf32>
      %347 = vector.shape_cast %346 : vector<1x4x1x32xf32> to vector<4x32xf32>
      %348 = vector.shape_cast %345 : vector<4x32xf32> to vector<1x4x1x32xf32>
      tpu.vector_store %arg8[%c0_368, %c0_369, %c22, %c0_370], %348 {strides = array<i32>} : memref<1x4x32x32xf32, #tpu.memory_space<vmem>>, vector<1x4x1x32xf32>,
      %cst_371 = arith.constant 0.000000e+00 : f32
      %349 = vector.broadcast %cst_371 : f32 to vector<4x32xf32>
      %c8_372 = arith.constant 8 : index
      %c198_373 = arith.constant 198 : index
      %350 = vector.load %arg14[%c8_372, %c198_373] : memref<16x324xf32, #tpu.memory_space<vmem>>, vector<4x16xf32>
      %c0_374 = arith.constant 0 : index
      %c0_375 = arith.constant 0 : index
      %c0_376 = arith.constant 0 : index
      %351 = vector.load %arg7[%c0_374, %c0_375, %c0_376] : memref<2x16x32xf32, #tpu.memory_space<vmem>>, vector<1x16x32xf32>
      %352 = vector.shape_cast %351 : vector<1x16x32xf32> to vector<16x32xf32>
      %cst_377 = arith.constant dense<0.000000e+00> : vector<4x32xf32>
      %353 = tpu.matmul %350, %352, %cst_377 {dimension_numbers = #tpu.dot_dimension_numbers<[1], [0], [0], [1], [0, 0, 1, 1], [], []>} : vector<4x16xf32>, vector<16x32xf32>, vector<4x32xf32> -> vector<4x32xf32>
      %354 = arith.addf %349, %353 : vector<4x32xf32>
      %c12_378 = arith.constant 12 : index
      %c198_379 = arith.constant 198 : index
      %355 = vector.load %arg14[%c12_378, %c198_379] : memref<16x324xf32, #tpu.memory_space<vmem>>, vector<4x16xf32>
      %c1_380 = arith.constant 1 : index
      %c0_381 = arith.constant 0 : index
      %c0_382 = arith.constant 0 : index
      %356 = vector.load %arg7[%c1_380, %c0_381, %c0_382] : memref<2x16x32xf32, #tpu.memory_space<vmem>>, vector<1x16x32xf32>
      %357 = vector.shape_cast %356 : vector<1x16x32xf32> to vector<16x32xf32>
      %cst_383 = arith.constant dense<0.000000e+00> : vector<4x32xf32>
      %358 = tpu.matmul %355, %357, %cst_383 {dimension_numbers = #tpu.dot_dimension_numbers<[1], [0], [0], [1], [0, 0, 1, 1], [], []>} : vector<4x16xf32>, vector<16x32xf32>, vector<4x32xf32> -> vector<4x32xf32>
      %359 = arith.addf %354, %358 : vector<4x32xf32>
      %c0_384 = arith.constant 0 : index
      %c0_385 = arith.constant 0 : index
      %c23 = arith.constant 23 : index
      %c0_386 = arith.constant 0 : index
      %360 = vector.load %arg8[%c0_384, %c0_385, %c23, %c0_386] : memref<1x4x32x32xf32, #tpu.memory_space<vmem>>, vector<1x4x1x32xf32>
      %361 = vector.shape_cast %360 : vector<1x4x1x32xf32> to vector<4x32xf32>
      %362 = vector.shape_cast %359 : vector<4x32xf32> to vector<1x4x1x32xf32>
      tpu.vector_store %arg8[%c0_384, %c0_385, %c23, %c0_386], %362 {strides = array<i32>} : memref<1x4x32x32xf32, #tpu.memory_space<vmem>>, vector<1x4x1x32xf32>,
      %cst_387 = arith.constant 0.000000e+00 : f32
      %363 = vector.broadcast %cst_387 : f32 to vector<4x32xf32>
      %c0_388 = arith.constant 0 : index
      %c216 = arith.constant 216 : index
      %364 = vector.load %arg14[%c0_388, %c216] : memref<16x324xf32, #tpu.memory_space<vmem>>, vector<4x16xf32>
      %c0_389 = arith.constant 0 : index
      %c0_390 = arith.constant 0 : index
      %c0_391 = arith.constant 0 : index
      %365 = vector.load %arg7[%c0_389, %c0_390, %c0_391] : memref<2x16x32xf32, #tpu.memory_space<vmem>>, vector<1x16x32xf32>
      %366 = vector.shape_cast %365 : vector<1x16x32xf32> to vector<16x32xf32>
      %cst_392 = arith.constant dense<0.000000e+00> : vector<4x32xf32>
      %367 = tpu.matmul %364, %366, %cst_392 {dimension_numbers = #tpu.dot_dimension_numbers<[1], [0], [0], [1], [0, 0, 1, 1], [], []>} : vector<4x16xf32>, vector<16x32xf32>, vector<4x32xf32> -> vector<4x32xf32>
      %368 = arith.addf %363, %367 : vector<4x32xf32>
      %c4_393 = arith.constant 4 : index
      %c216_394 = arith.constant 216 : index
      %369 = vector.load %arg14[%c4_393, %c216_394] : memref<16x324xf32, #tpu.memory_space<vmem>>, vector<4x16xf32>
      %c1_395 = arith.constant 1 : index
      %c0_396 = arith.constant 0 : index
      %c0_397 = arith.constant 0 : index
      %370 = vector.load %arg7[%c1_395, %c0_396, %c0_397] : memref<2x16x32xf32, #tpu.memory_space<vmem>>, vector<1x16x32xf32>
      %371 = vector.shape_cast %370 : vector<1x16x32xf32> to vector<16x32xf32>
      %cst_398 = arith.constant dense<0.000000e+00> : vector<4x32xf32>
      %372 = tpu.matmul %369, %371, %cst_398 {dimension_numbers = #tpu.dot_dimension_numbers<[1], [0], [0], [1], [0, 0, 1, 1], [], []>} : vector<4x16xf32>, vector<16x32xf32>, vector<4x32xf32> -> vector<4x32xf32>
      %373 = arith.addf %368, %372 : vector<4x32xf32>
      %c0_399 = arith.constant 0 : index
      %c0_400 = arith.constant 0 : index
      %c24 = arith.constant 24 : index
      %c0_401 = arith.constant 0 : index
      %374 = vector.load %arg8[%c0_399, %c0_400, %c24, %c0_401] : memref<1x4x32x32xf32, #tpu.memory_space<vmem>>, vector<1x4x1x32xf32>
      %375 = vector.shape_cast %374 : vector<1x4x1x32xf32> to vector<4x32xf32>
      %376 = vector.shape_cast %373 : vector<4x32xf32> to vector<1x4x1x32xf32>
      tpu.vector_store %arg8[%c0_399, %c0_400, %c24, %c0_401], %376 {strides = array<i32>} : memref<1x4x32x32xf32, #tpu.memory_space<vmem>>, vector<1x4x1x32xf32>,
      %cst_402 = arith.constant 0.000000e+00 : f32
      %377 = vector.broadcast %cst_402 : f32 to vector<4x32xf32>
      %c8_403 = arith.constant 8 : index
      %c216_404 = arith.constant 216 : index
      %378 = vector.load %arg14[%c8_403, %c216_404] : memref<16x324xf32, #tpu.memory_space<vmem>>, vector<4x16xf32>
      %c0_405 = arith.constant 0 : index
      %c0_406 = arith.constant 0 : index
      %c0_407 = arith.constant 0 : index
      %379 = vector.load %arg7[%c0_405, %c0_406, %c0_407] : memref<2x16x32xf32, #tpu.memory_space<vmem>>, vector<1x16x32xf32>
      %380 = vector.shape_cast %379 : vector<1x16x32xf32> to vector<16x32xf32>
      %cst_408 = arith.constant dense<0.000000e+00> : vector<4x32xf32>
      %381 = tpu.matmul %378, %380, %cst_408 {dimension_numbers = #tpu.dot_dimension_numbers<[1], [0], [0], [1], [0, 0, 1, 1], [], []>} : vector<4x16xf32>, vector<16x32xf32>, vector<4x32xf32> -> vector<4x32xf32>
      %382 = arith.addf %377, %381 : vector<4x32xf32>
      %c12_409 = arith.constant 12 : index
      %c216_410 = arith.constant 216 : index
      %383 = vector.load %arg14[%c12_409, %c216_410] : memref<16x324xf32, #tpu.memory_space<vmem>>, vector<4x16xf32>
      %c1_411 = arith.constant 1 : index
      %c0_412 = arith.constant 0 : index
      %c0_413 = arith.constant 0 : index
      %384 = vector.load %arg7[%c1_411, %c0_412, %c0_413] : memref<2x16x32xf32, #tpu.memory_space<vmem>>, vector<1x16x32xf32>
      %385 = vector.shape_cast %384 : vector<1x16x32xf32> to vector<16x32xf32>
      %cst_414 = arith.constant dense<0.000000e+00> : vector<4x32xf32>
      %386 = tpu.matmul %383, %385, %cst_414 {dimension_numbers = #tpu.dot_dimension_numbers<[1], [0], [0], [1], [0, 0, 1, 1], [], []>} : vector<4x16xf32>, vector<16x32xf32>, vector<4x32xf32> -> vector<4x32xf32>
      %387 = arith.addf %382, %386 : vector<4x32xf32>
      %c0_415 = arith.constant 0 : index
      %c0_416 = arith.constant 0 : index
      %c25 = arith.constant 25 : index
      %c0_417 = arith.constant 0 : index
      %388 = vector.load %arg8[%c0_415, %c0_416, %c25, %c0_417] : memref<1x4x32x32xf32, #tpu.memory_space<vmem>>, vector<1x4x1x32xf32>
      %389 = vector.shape_cast %388 : vector<1x4x1x32xf32> to vector<4x32xf32>
      %390 = vector.shape_cast %387 : vector<4x32xf32> to vector<1x4x1x32xf32>
      tpu.vector_store %arg8[%c0_415, %c0_416, %c25, %c0_417], %390 {strides = array<i32>} : memref<1x4x32x32xf32, #tpu.memory_space<vmem>>, vector<1x4x1x32xf32>,
      %cst_418 = arith.constant 0.000000e+00 : f32
      %391 = vector.broadcast %cst_418 : f32 to vector<4x32xf32>
      %c0_419 = arith.constant 0 : index
      %c234 = arith.constant 234 : index
      %392 = vector.load %arg14[%c0_419, %c234] : memref<16x324xf32, #tpu.memory_space<vmem>>, vector<4x16xf32>
      %c0_420 = arith.constant 0 : index
      %c0_421 = arith.constant 0 : index
      %c0_422 = arith.constant 0 : index
      %393 = vector.load %arg7[%c0_420, %c0_421, %c0_422] : memref<2x16x32xf32, #tpu.memory_space<vmem>>, vector<1x16x32xf32>
      %394 = vector.shape_cast %393 : vector<1x16x32xf32> to vector<16x32xf32>
      %cst_423 = arith.constant dense<0.000000e+00> : vector<4x32xf32>
      %395 = tpu.matmul %392, %394, %cst_423 {dimension_numbers = #tpu.dot_dimension_numbers<[1], [0], [0], [1], [0, 0, 1, 1], [], []>} : vector<4x16xf32>, vector<16x32xf32>, vector<4x32xf32> -> vector<4x32xf32>
      %396 = arith.addf %391, %395 : vector<4x32xf32>
      %c4_424 = arith.constant 4 : index
      %c234_425 = arith.constant 234 : index
      %397 = vector.load %arg14[%c4_424, %c234_425] : memref<16x324xf32, #tpu.memory_space<vmem>>, vector<4x16xf32>
      %c1_426 = arith.constant 1 : index
      %c0_427 = arith.constant 0 : index
      %c0_428 = arith.constant 0 : index
      %398 = vector.load %arg7[%c1_426, %c0_427, %c0_428] : memref<2x16x32xf32, #tpu.memory_space<vmem>>, vector<1x16x32xf32>
      %399 = vector.shape_cast %398 : vector<1x16x32xf32> to vector<16x32xf32>
      %cst_429 = arith.constant dense<0.000000e+00> : vector<4x32xf32>
      %400 = tpu.matmul %397, %399, %cst_429 {dimension_numbers = #tpu.dot_dimension_numbers<[1], [0], [0], [1], [0, 0, 1, 1], [], []>} : vector<4x16xf32>, vector<16x32xf32>, vector<4x32xf32> -> vector<4x32xf32>
      %401 = arith.addf %396, %400 : vector<4x32xf32>
      %c0_430 = arith.constant 0 : index
      %c0_431 = arith.constant 0 : index
      %c26 = arith.constant 26 : index
      %c0_432 = arith.constant 0 : index
      %402 = vector.load %arg8[%c0_430, %c0_431, %c26, %c0_432] : memref<1x4x32x32xf32, #tpu.memory_space<vmem>>, vector<1x4x1x32xf32>
      %403 = vector.shape_cast %402 : vector<1x4x1x32xf32> to vector<4x32xf32>
      %404 = vector.shape_cast %401 : vector<4x32xf32> to vector<1x4x1x32xf32>
      tpu.vector_store %arg8[%c0_430, %c0_431, %c26, %c0_432], %404 {strides = array<i32>} : memref<1x4x32x32xf32, #tpu.memory_space<vmem>>, vector<1x4x1x32xf32>,
      %cst_433 = arith.constant 0.000000e+00 : f32
      %405 = vector.broadcast %cst_433 : f32 to vector<4x32xf32>
      %c8_434 = arith.constant 8 : index
      %c234_435 = arith.constant 234 : index
      %406 = vector.load %arg14[%c8_434, %c234_435] : memref<16x324xf32, #tpu.memory_space<vmem>>, vector<4x16xf32>
      %c0_436 = arith.constant 0 : index
      %c0_437 = arith.constant 0 : index
      %c0_438 = arith.constant 0 : index
      %407 = vector.load %arg7[%c0_436, %c0_437, %c0_438] : memref<2x16x32xf32, #tpu.memory_space<vmem>>, vector<1x16x32xf32>
      %408 = vector.shape_cast %407 : vector<1x16x32xf32> to vector<16x32xf32>
      %cst_439 = arith.constant dense<0.000000e+00> : vector<4x32xf32>
      %409 = tpu.matmul %406, %408, %cst_439 {dimension_numbers = #tpu.dot_dimension_numbers<[1], [0], [0], [1], [0, 0, 1, 1], [], []>} : vector<4x16xf32>, vector<16x32xf32>, vector<4x32xf32> -> vector<4x32xf32>
      %410 = arith.addf %405, %409 : vector<4x32xf32>
      %c12_440 = arith.constant 12 : index
      %c234_441 = arith.constant 234 : index
      %411 = vector.load %arg14[%c12_440, %c234_441] : memref<16x324xf32, #tpu.memory_space<vmem>>, vector<4x16xf32>
      %c1_442 = arith.constant 1 : index
      %c0_443 = arith.constant 0 : index
      %c0_444 = arith.constant 0 : index
      %412 = vector.load %arg7[%c1_442, %c0_443, %c0_444] : memref<2x16x32xf32, #tpu.memory_space<vmem>>, vector<1x16x32xf32>
      %413 = vector.shape_cast %412 : vector<1x16x32xf32> to vector<16x32xf32>
      %cst_445 = arith.constant dense<0.000000e+00> : vector<4x32xf32>
      %414 = tpu.matmul %411, %413, %cst_445 {dimension_numbers = #tpu.dot_dimension_numbers<[1], [0], [0], [1], [0, 0, 1, 1], [], []>} : vector<4x16xf32>, vector<16x32xf32>, vector<4x32xf32> -> vector<4x32xf32>
      %415 = arith.addf %410, %414 : vector<4x32xf32>
      %c0_446 = arith.constant 0 : index
      %c0_447 = arith.constant 0 : index
      %c27 = arith.constant 27 : index
      %c0_448 = arith.constant 0 : index
      %416 = vector.load %arg8[%c0_446, %c0_447, %c27, %c0_448] : memref<1x4x32x32xf32, #tpu.memory_space<vmem>>, vector<1x4x1x32xf32>
      %417 = vector.shape_cast %416 : vector<1x4x1x32xf32> to vector<4x32xf32>
      %418 = vector.shape_cast %415 : vector<4x32xf32> to vector<1x4x1x32xf32>
      tpu.vector_store %arg8[%c0_446, %c0_447, %c27, %c0_448], %418 {strides = array<i32>} : memref<1x4x32x32xf32, #tpu.memory_space<vmem>>, vector<1x4x1x32xf32>,
      %cst_449 = arith.constant 0.000000e+00 : f32
      %419 = vector.broadcast %cst_449 : f32 to vector<4x32xf32>
      %c0_450 = arith.constant 0 : index
      %c252 = arith.constant 252 : index
      %420 = vector.load %arg14[%c0_450, %c252] : memref<16x324xf32, #tpu.memory_space<vmem>>, vector<4x16xf32>
      %c0_451 = arith.constant 0 : index
      %c0_452 = arith.constant 0 : index
      %c0_453 = arith.constant 0 : index
      %421 = vector.load %arg7[%c0_451, %c0_452, %c0_453] : memref<2x16x32xf32, #tpu.memory_space<vmem>>, vector<1x16x32xf32>
      %422 = vector.shape_cast %421 : vector<1x16x32xf32> to vector<16x32xf32>
      %cst_454 = arith.constant dense<0.000000e+00> : vector<4x32xf32>
      %423 = tpu.matmul %420, %422, %cst_454 {dimension_numbers = #tpu.dot_dimension_numbers<[1], [0], [0], [1], [0, 0, 1, 1], [], []>} : vector<4x16xf32>, vector<16x32xf32>, vector<4x32xf32> -> vector<4x32xf32>
      %424 = arith.addf %419, %423 : vector<4x32xf32>
      %c4_455 = arith.constant 4 : index
      %c252_456 = arith.constant 252 : index
      %425 = vector.load %arg14[%c4_455, %c252_456] : memref<16x324xf32, #tpu.memory_space<vmem>>, vector<4x16xf32>
      %c1_457 = arith.constant 1 : index
      %c0_458 = arith.constant 0 : index
      %c0_459 = arith.constant 0 : index
      %426 = vector.load %arg7[%c1_457, %c0_458, %c0_459] : memref<2x16x32xf32, #tpu.memory_space<vmem>>, vector<1x16x32xf32>
      %427 = vector.shape_cast %426 : vector<1x16x32xf32> to vector<16x32xf32>
      %cst_460 = arith.constant dense<0.000000e+00> : vector<4x32xf32>
      %428 = tpu.matmul %425, %427, %cst_460 {dimension_numbers = #tpu.dot_dimension_numbers<[1], [0], [0], [1], [0, 0, 1, 1], [], []>} : vector<4x16xf32>, vector<16x32xf32>, vector<4x32xf32> -> vector<4x32xf32>
      %429 = arith.addf %424, %428 : vector<4x32xf32>
      %c0_461 = arith.constant 0 : index
      %c0_462 = arith.constant 0 : index
      %c28 = arith.constant 28 : index
      %c0_463 = arith.constant 0 : index
      %430 = vector.load %arg8[%c0_461, %c0_462, %c28, %c0_463] : memref<1x4x32x32xf32, #tpu.memory_space<vmem>>, vector<1x4x1x32xf32>
      %431 = vector.shape_cast %430 : vector<1x4x1x32xf32> to vector<4x32xf32>
      %432 = vector.shape_cast %429 : vector<4x32xf32> to vector<1x4x1x32xf32>
      tpu.vector_store %arg8[%c0_461, %c0_462, %c28, %c0_463], %432 {strides = array<i32>} : memref<1x4x32x32xf32, #tpu.memory_space<vmem>>, vector<1x4x1x32xf32>,
      %cst_464 = arith.constant 0.000000e+00 : f32
      %433 = vector.broadcast %cst_464 : f32 to vector<4x32xf32>
      %c8_465 = arith.constant 8 : index
      %c252_466 = arith.constant 252 : index
      %434 = vector.load %arg14[%c8_465, %c252_466] : memref<16x324xf32, #tpu.memory_space<vmem>>, vector<4x16xf32>
      %c0_467 = arith.constant 0 : index
      %c0_468 = arith.constant 0 : index
      %c0_469 = arith.constant 0 : index
      %435 = vector.load %arg7[%c0_467, %c0_468, %c0_469] : memref<2x16x32xf32, #tpu.memory_space<vmem>>, vector<1x16x32xf32>
      %436 = vector.shape_cast %435 : vector<1x16x32xf32> to vector<16x32xf32>
      %cst_470 = arith.constant dense<0.000000e+00> : vector<4x32xf32>
      %437 = tpu.matmul %434, %436, %cst_470 {dimension_numbers = #tpu.dot_dimension_numbers<[1], [0], [0], [1], [0, 0, 1, 1], [], []>} : vector<4x16xf32>, vector<16x32xf32>, vector<4x32xf32> -> vector<4x32xf32>
      %438 = arith.addf %433, %437 : vector<4x32xf32>
      %c12_471 = arith.constant 12 : index
      %c252_472 = arith.constant 252 : index
      %439 = vector.load %arg14[%c12_471, %c252_472] : memref<16x324xf32, #tpu.memory_space<vmem>>, vector<4x16xf32>
      %c1_473 = arith.constant 1 : index
      %c0_474 = arith.constant 0 : index
      %c0_475 = arith.constant 0 : index
      %440 = vector.load %arg7[%c1_473, %c0_474, %c0_475] : memref<2x16x32xf32, #tpu.memory_space<vmem>>, vector<1x16x32xf32>
      %441 = vector.shape_cast %440 : vector<1x16x32xf32> to vector<16x32xf32>
      %cst_476 = arith.constant dense<0.000000e+00> : vector<4x32xf32>
      %442 = tpu.matmul %439, %441, %cst_476 {dimension_numbers = #tpu.dot_dimension_numbers<[1], [0], [0], [1], [0, 0, 1, 1], [], []>} : vector<4x16xf32>, vector<16x32xf32>, vector<4x32xf32> -> vector<4x32xf32>
      %443 = arith.addf %438, %442 : vector<4x32xf32>
      %c0_477 = arith.constant 0 : index
      %c0_478 = arith.constant 0 : index
      %c29 = arith.constant 29 : index
      %c0_479 = arith.constant 0 : index
      %444 = vector.load %arg8[%c0_477, %c0_478, %c29, %c0_479] : memref<1x4x32x32xf32, #tpu.memory_space<vmem>>, vector<1x4x1x32xf32>
      %445 = vector.shape_cast %444 : vector<1x4x1x32xf32> to vector<4x32xf32>
      %446 = vector.shape_cast %443 : vector<4x32xf32> to vector<1x4x1x32xf32>
      tpu.vector_store %arg8[%c0_477, %c0_478, %c29, %c0_479], %446 {strides = array<i32>} : memref<1x4x32x32xf32, #tpu.memory_space<vmem>>, vector<1x4x1x32xf32>,
      %cst_480 = arith.constant 0.000000e+00 : f32
      %447 = vector.broadcast %cst_480 : f32 to vector<4x32xf32>
      %c0_481 = arith.constant 0 : index
      %c270 = arith.constant 270 : index
      %448 = vector.load %arg14[%c0_481, %c270] : memref<16x324xf32, #tpu.memory_space<vmem>>, vector<4x16xf32>
      %c0_482 = arith.constant 0 : index
      %c0_483 = arith.constant 0 : index
      %c0_484 = arith.constant 0 : index
      %449 = vector.load %arg7[%c0_482, %c0_483, %c0_484] : memref<2x16x32xf32, #tpu.memory_space<vmem>>, vector<1x16x32xf32>
      %450 = vector.shape_cast %449 : vector<1x16x32xf32> to vector<16x32xf32>
      %cst_485 = arith.constant dense<0.000000e+00> : vector<4x32xf32>
      %451 = tpu.matmul %448, %450, %cst_485 {dimension_numbers = #tpu.dot_dimension_numbers<[1], [0], [0], [1], [0, 0, 1, 1], [], []>} : vector<4x16xf32>, vector<16x32xf32>, vector<4x32xf32> -> vector<4x32xf32>
      %452 = arith.addf %447, %451 : vector<4x32xf32>
      %c4_486 = arith.constant 4 : index
      %c270_487 = arith.constant 270 : index
      %453 = vector.load %arg14[%c4_486, %c270_487] : memref<16x324xf32, #tpu.memory_space<vmem>>, vector<4x16xf32>
      %c1_488 = arith.constant 1 : index
      %c0_489 = arith.constant 0 : index
      %c0_490 = arith.constant 0 : index
      %454 = vector.load %arg7[%c1_488, %c0_489, %c0_490] : memref<2x16x32xf32, #tpu.memory_space<vmem>>, vector<1x16x32xf32>
      %455 = vector.shape_cast %454 : vector<1x16x32xf32> to vector<16x32xf32>
      %cst_491 = arith.constant dense<0.000000e+00> : vector<4x32xf32>
      %456 = tpu.matmul %453, %455, %cst_491 {dimension_numbers = #tpu.dot_dimension_numbers<[1], [0], [0], [1], [0, 0, 1, 1], [], []>} : vector<4x16xf32>, vector<16x32xf32>, vector<4x32xf32> -> vector<4x32xf32>
      %457 = arith.addf %452, %456 : vector<4x32xf32>
      %c0_492 = arith.constant 0 : index
      %c0_493 = arith.constant 0 : index
      %c30 = arith.constant 30 : index
      %c0_494 = arith.constant 0 : index
      %458 = vector.load %arg8[%c0_492, %c0_493, %c30, %c0_494] : memref<1x4x32x32xf32, #tpu.memory_space<vmem>>, vector<1x4x1x32xf32>
      %459 = vector.shape_cast %458 : vector<1x4x1x32xf32> to vector<4x32xf32>
      %460 = vector.shape_cast %457 : vector<4x32xf32> to vector<1x4x1x32xf32>
      tpu.vector_store %arg8[%c0_492, %c0_493, %c30, %c0_494], %460 {strides = array<i32>} : memref<1x4x32x32xf32, #tpu.memory_space<vmem>>, vector<1x4x1x32xf32>,
      %cst_495 = arith.constant 0.000000e+00 : f32
      %461 = vector.broadcast %cst_495 : f32 to vector<4x32xf32>
      %c8_496 = arith.constant 8 : index
      %c270_497 = arith.constant 270 : index
      %462 = vector.load %arg14[%c8_496, %c270_497] : memref<16x324xf32, #tpu.memory_space<vmem>>, vector<4x16xf32>
      %c0_498 = arith.constant 0 : index
      %c0_499 = arith.constant 0 : index
      %c0_500 = arith.constant 0 : index
      %463 = vector.load %arg7[%c0_498, %c0_499, %c0_500] : memref<2x16x32xf32, #tpu.memory_space<vmem>>, vector<1x16x32xf32>
      %464 = vector.shape_cast %463 : vector<1x16x32xf32> to vector<16x32xf32>
      %cst_501 = arith.constant dense<0.000000e+00> : vector<4x32xf32>
      %465 = tpu.matmul %462, %464, %cst_501 {dimension_numbers = #tpu.dot_dimension_numbers<[1], [0], [0], [1], [0, 0, 1, 1], [], []>} : vector<4x16xf32>, vector<16x32xf32>, vector<4x32xf32> -> vector<4x32xf32>
      %466 = arith.addf %461, %465 : vector<4x32xf32>
      %c12_502 = arith.constant 12 : index
      %c270_503 = arith.constant 270 : index
      %467 = vector.load %arg14[%c12_502, %c270_503] : memref<16x324xf32, #tpu.memory_space<vmem>>, vector<4x16xf32>
      %c1_504 = arith.constant 1 : index
      %c0_505 = arith.constant 0 : index
      %c0_506 = arith.constant 0 : index
      %468 = vector.load %arg7[%c1_504, %c0_505, %c0_506] : memref<2x16x32xf32, #tpu.memory_space<vmem>>, vector<1x16x32xf32>
      %469 = vector.shape_cast %468 : vector<1x16x32xf32> to vector<16x32xf32>
      %cst_507 = arith.constant dense<0.000000e+00> : vector<4x32xf32>
      %470 = tpu.matmul %467, %469, %cst_507 {dimension_numbers = #tpu.dot_dimension_numbers<[1], [0], [0], [1], [0, 0, 1, 1], [], []>} : vector<4x16xf32>, vector<16x32xf32>, vector<4x32xf32> -> vector<4x32xf32>
      %471 = arith.addf %466, %470 : vector<4x32xf32>
      %c0_508 = arith.constant 0 : index
      %c0_509 = arith.constant 0 : index
      %c31 = arith.constant 31 : index
      %c0_510 = arith.constant 0 : index
      %472 = vector.load %arg8[%c0_508, %c0_509, %c31, %c0_510] : memref<1x4x32x32xf32, #tpu.memory_space<vmem>>, vector<1x4x1x32xf32>
      %473 = vector.shape_cast %472 : vector<1x4x1x32xf32> to vector<4x32xf32>
      %474 = vector.shape_cast %471 : vector<4x32xf32> to vector<1x4x1x32xf32>
      tpu.vector_store %arg8[%c0_508, %c0_509, %c31, %c0_510], %474 {strides = array<i32>} : memref<1x4x32x32xf32, #tpu.memory_space<vmem>>, vector<1x4x1x32xf32>,
    } else {
    }
    return
  }
  func.func @transform_0(%arg0: i32, %arg1: i32) -> (i32, i32, i32) {
    %c1_i32 = arith.constant 1 : i32
    %0 = arith.subi %c1_i32, %arg0 : i32
    %1 = arith.muli %arg1, %0 : i32
    %c0_i32 = arith.constant 0 : i32
    %c0_i32_0 = arith.constant 0 : i32
    %c0_i32_1 = arith.constant 0 : i32
    return %1, %c0_i32, %c0_i32_0 : i32, i32, i32
  }
  func.func @transform_1(%arg0: i32, %arg1: i32) -> (i32, i32) {
    %c0_i32 = arith.constant 0 : i32
    %c0_i32_0 = arith.constant 0 : i32
    %c0_i32_1 = arith.constant 0 : i32
    return %c0_i32, %c0_i32_0 : i32, i32
  }
  func.func @transform_2(%arg0: i32, %arg1: i32) -> (i32, i32) {
    %c0_i32 = arith.constant 0 : i32
    %c0_i32_0 = arith.constant 0 : i32
    %c0_i32_1 = arith.constant 0 : i32
    return %c0_i32, %c0_i32_0 : i32, i32
  }
  func.func @transform_3(%arg0: i32, %arg1: i32) -> (i32, i32) {
    %c0_i32 = arith.constant 0 : i32
    %c0_i32_0 = arith.constant 0 : i32
    %c0_i32_1 = arith.constant 0 : i32
    return %c0_i32, %c0_i32_0 : i32, i32
  }
  func.func @transform_4(%arg0: i32, %arg1: i32) -> (i32, i32) {
    %c0_i32 = arith.constant 0 : i32
    %c0_i32_0 = arith.constant 0 : i32
    %c0_i32_1 = arith.constant 0 : i32
    return %c0_i32, %c0_i32_0 : i32, i32
  }
  func.func @transform_5(%arg0: i32, %arg1: i32) -> (i32, i32, i32) {
    %c0_i32 = arith.constant 0 : i32
    %c0_i32_0 = arith.constant 0 : i32
    %c0_i32_1 = arith.constant 0 : i32
    %c0_i32_2 = arith.constant 0 : i32
    return %c0_i32, %c0_i32_0, %c0_i32_1 : i32, i32, i32
  }
  func.func @transform_6(%arg0: i32, %arg1: i32) -> (i32, i32, i32, i32) {
    %c0_i32 = arith.constant 0 : i32
    %c0_i32_0 = arith.constant 0 : i32
    %c0_i32_1 = arith.constant 0 : i32
    %c0_i32_2 = arith.constant 0 : i32
    return %arg1, %c0_i32, %c0_i32_0, %c0_i32_1 : i32, i32, i32, i32
  }
}

</mosaic_0001>

<llo_original>
// kernel: upsample_block_pixel_shuffle.1
$region0: #{upsample_block_pixel_shuffle.1}
  #allocation0 [shape = 'u32[]', space=smem, size = 0x4, offset = 0x4, fixed_abs, tag = 'smem constant byte address 0x4 - core index']
  #allocation1 [shape = 'u32[144,128]{1,0:T(1,128)}', space=vmem, size = 0x12000, scoped, tag = 'internal scratch']
  #allocation2 [shape = 'f32[36,324]{1,0:T(8,128)}', space=vmem, size = 0xf000, scoped, tag = 'scratch operand']
  #allocation3 [shape = 'f32[2,16,324]{2,1,0:T(8,128)}', space=vmem, size = 0xc000, scoped, tag = 'scratch operand']
  #allocation4 [shape = 'f32[16,1]{1,0:T(8,128)}', space=vmem, size = 0x2000, scoped, tag = 'scratch operand']
  #allocation5 [shape = 'f32[16,1]{1,0:T(8,128)}', space=vmem, size = 0x2000, scoped, tag = 'scratch operand']
  #allocation6 [shape = 'f32[16,1]{1,0:T(8,128)}', space=vmem, size = 0x2000, scoped, tag = 'scratch operand']
  #allocation7 [shape = 'f32[16,324]{1,0:T(8,128)}', space=vmem, size = 0x6000, scoped, tag = 'scratch operand']
  %s0 = inlined_call_operand.vmem [shape: f32[2,4,362], index: 0, kind: input, shape index: {}]
  %s1 = inlined_call_operand.vmem [shape: bf16[16,36], index: 1, kind: input, shape index: {}]
  %s2 = inlined_call_operand.vmem [shape: f32[16,1], index: 2, kind: input, shape index: {}]
  %s3 = inlined_call_operand.vmem [shape: f32[16,1], index: 3, kind: input, shape index: {}]
  %s4 = inlined_call_operand.vmem [shape: f32[1,324], index: 4, kind: input, shape index: {}]
  %s5 = inlined_call_operand.vmem [shape: f32[2,16,32], index: 5, kind: input, shape index: {}]
  %s6 = inlined_call_operand.hbm [shape: f32[2,4,32,32], index: 6, kind: output, shape index: {}]
  %s7 = sld [smem:[#allocation0]]
  $region73: #{upsample_block_pixel_shuffle.1} parent=0
    _
  %s9 = ssub.s32 1, %s7
  %s10 = scalar_select 0, %s9, %s7
  $region1: #{upsample_block_pixel_shuffle.1} parent=0
    #allocation8 [shape = 'u8[131072]{0}', space=vmem, size = 0x20000, scoped, tag = 'output window, operand 0']
    #allocation9 [shape = 's32[2]{0}', space=sflag, size = 0x8, scoped, tag = 'scoped memory for upsample_block_pixel_shuffle.1']
    %11 = vsyncpa [#allocation9], 0
    %s12 = scalar_lea.sflag [#allocation9], 1
    %13 = vsyncpa %s12, 0
    loop: start=0, step=1, limit=6
    $region2: #{upsample_block_pixel_shuffle.1} parent=1 // loop_pre_header
      _
    $region3: #{upsample_block_pixel_shuffle.1} parent=1 // loop_header
      %s15 = sphi 0, %s19
      %p16 = scmp.ge.s32.totalorder %s15, 6
      %s22 = sphi 0, %s34
      %s23 = sphi 0, %s30
      %s24 = sphi 0, %s22
      %s25 = sphi 0, %s23
      %s26 = sphi 0, %s24
      %s27 = sphi 0, %s25
      %s41 = sphi 0, %s43
      %s44 = sphi 0, %s41
      %s45 = sphi 0, %s44
      %s61 = sphi 0, %s45
      %s65 = sphi 0, %s65
      %s67 = sphi 0, %s65
      %s68 = sphi 0, %s67
      %s82 = sphi 0, %s68
      %s86 = sphi 0, %s86
      %s88 = sphi 0, %s86
      %s89 = sphi 0, %s88
      %s103 = sphi 0, %s89
      %s107 = sphi 0, %s107
      %s109 = sphi 0, %s107
      %s110 = sphi 0, %s109
      %s124 = sphi 0, %s110
      %s128 = sphi 0, %s128
      %s130 = sphi 0, %s128
      %s131 = sphi 0, %s130
      %s145 = sphi 0, %s131
      %s149 = sphi 0, %s149
      %s151 = sphi 0, %s149
      %s152 = sphi 0, %s151
      %s166 = sphi 0, %s152
      %s172 = sphi 0, %s174
      %s175 = sphi 0, %s172
      %s176 = sphi 0, %s175
      %s192 = sphi 0, %s176
    $region4: #{upsample_block_pixel_shuffle.1} parent=1 // loop_header_branch
      %18 = sbr.rel (%p16) target = $region8
    $region5: #{upsample_block_pixel_shuffle.1} parent=1 // loop_body
      %s20 = ssub.s32 %s15, 1
      %s21 = ssub.s32 %s15, 2
      %s28 = sadd.s32 1, %s23
      %p29 = scmp.ge.s32.totalorder %s28, 2
      %s30 = scalar_select %p29, 0, %s28
      %s31 = sadd.s32 1, %s22
      %s32 = scalar_select %p29, %s31, %s22
      %p33 = scmp.ge.s32.totalorder %s32, 2
      %s34 = scalar_select %p33, 0, %s32
      %s35 = ssub.s32 1, %s22
      %s36 = smul.u32 %s23, %s35
      %s37 = ssub.s32 1, %s34
      %s38 = smul.u32 %s30, %s37
      %s39 = ssub.s32 %s36, %s38
      %p40 = scmp.eq.s32.totalorder %s39, 0
      %s42 = sadd.s32 %s41, 1
      %s43 = scalar_select %p40, %s41, %s42
      %p46 = pneg %p40
      %p47 = scmp.eq.s32.totalorder %s15, 3
      %p48 = por %p46, %p47
      %p49 = scmp.ne.s32.totalorder %s41, %s44
      %p50 = scmp.eq.s32.totalorder %s15, 0
      %p51 = por %p49, %p50
      %p52 = scmp.ne.s32.totalorder %s41, %s44
      %p53 = scmp.eq.s32.totalorder %s20, 3
      %p54 = por %p52, %p53
      %p55 = scmp.ne.s32.totalorder %s44, %s45
      %p56 = scmp.eq.s32.totalorder %s20, 0
      %p57 = por %p55, %p56
      %p58 = scmp.ne.s32.totalorder %s44, %s45
      %p59 = scmp.eq.s32.totalorder %s21, 3
      %p60 = por %p58, %p59
      %p62 = scmp.ne.s32.totalorder %s45, %s61
      %p63 = scmp.eq.s32.totalorder %s21, 0
      %p64 = por %p62, %p63
      %s66 = sadd.s32 %s65, 1
      %p69 = scmp.eq.s32.totalorder %s15, 3
      %p70 = scmp.ne.s32.totalorder %s65, %s67
      %p71 = scmp.eq.s32.totalorder %s15, 0
      %p72 = por %p70, %p71
      %p73 = scmp.ne.s32.totalorder %s65, %s67
      %p74 = scmp.eq.s32.totalorder %s20, 3
      %p75 = por %p73, %p74
      %p76 = scmp.ne.s32.totalorder %s67, %s68
      %p77 = scmp.eq.s32.totalorder %s20, 0
      %p78 = por %p76, %p77
      %p79 = scmp.ne.s32.totalorder %s67, %s68
      %p80 = scmp.eq.s32.totalorder %s21, 3
      %p81 = por %p79, %p80
      %p83 = scmp.ne.s32.totalorder %s68, %s82
      %p84 = scmp.eq.s32.totalorder %s21, 0
      %p85 = por %p83, %p84
      %s87 = sadd.s32 %s86, 1
      %p90 = scmp.eq.s32.totalorder %s15, 3
      %p91 = scmp.ne.s32.totalorder %s86, %s88
      %p92 = scmp.eq.s32.totalorder %s15, 0
      %p93 = por %p91, %p92
      %p94 = scmp.ne.s32.totalorder %s86, %s88
      %p95 = scmp.eq.s32.totalorder %s20, 3
      %p96 = por %p94, %p95
      %p97 = scmp.ne.s32.totalorder %s88, %s89
      %p98 = scmp.eq.s32.totalorder %s20, 0
      %p99 = por %p97, %p98
      %p100 = scmp.ne.s32.totalorder %s88, %s89
      %p101 = scmp.eq.s32.totalorder %s21, 3
      %p102 = por %p100, %p101
      %p104 = scmp.ne.s32.totalorder %s89, %s103
      %p105 = scmp.eq.s32.totalorder %s21, 0
      %p106 = por %p104, %p105
      %s108 = sadd.s32 %s107, 1
      %p111 = scmp.eq.s32.totalorder %s15, 3
      %p112 = scmp.ne.s32.totalorder %s107, %s109
      %p113 = scmp.eq.s32.totalorder %s15, 0
      %p114 = por %p112, %p113
      %p115 = scmp.ne.s32.totalorder %s107, %s109
      %p116 = scmp.eq.s32.totalorder %s20, 3
      %p117 = por %p115, %p116
      %p118 = scmp.ne.s32.totalorder %s109, %s110
      %p119 = scmp.eq.s32.totalorder %s20, 0
      %p120 = por %p118, %p119
      %p121 = scmp.ne.s32.totalorder %s109, %s110
      %p122 = scmp.eq.s32.totalorder %s21, 3
      %p123 = por %p121, %p122
      %p125 = scmp.ne.s32.totalorder %s110, %s124
      %p126 = scmp.eq.s32.totalorder %s21, 0
      %p127 = por %p125, %p126
      %s129 = sadd.s32 %s128, 1
      %p132 = scmp.eq.s32.totalorder %s15, 3
      %p133 = scmp.ne.s32.totalorder %s128, %s130
      %p134 = scmp.eq.s32.totalorder %s15, 0
      %p135 = por %p133, %p134
      %p136 = scmp.ne.s32.totalorder %s128, %s130
      %p137 = scmp.eq.s32.totalorder %s20, 3
      %p138 = por %p136, %p137
      %p139 = scmp.ne.s32.totalorder %s130, %s131
      %p140 = scmp.eq.s32.totalorder %s20, 0
      %p141 = por %p139, %p140
      %p142 = scmp.ne.s32.totalorder %s130, %s131
      %p143 = scmp.eq.s32.totalorder %s21, 3
      %p144 = por %p142, %p143
      %p146 = scmp.ne.s32.totalorder %s131, %s145
      %p147 = scmp.eq.s32.totalorder %s21, 0
      %p148 = por %p146, %p147
      %s150 = sadd.s32 %s149, 1
      %p153 = scmp.eq.s32.totalorder %s15, 3
      %p154 = scmp.ne.s32.totalorder %s149, %s151
      %p155 = scmp.eq.s32.totalorder %s15, 0
      %p156 = por %p154, %p155
      %p157 = scmp.ne.s32.totalorder %s149, %s151
      %p158 = scmp.eq.s32.totalorder %s20, 3
      %p159 = por %p157, %p158
      %p160 = scmp.ne.s32.totalorder %s151, %s152
      %p161 = scmp.eq.s32.totalorder %s20, 0
      %p162 = por %p160, %p161
      %p163 = scmp.ne.s32.totalorder %s151, %s152
      %p164 = scmp.eq.s32.totalorder %s21, 3
      %p165 = por %p163, %p164
      %p167 = scmp.ne.s32.totalorder %s152, %s166
      %p168 = scmp.eq.s32.totalorder %s21, 0
      %p169 = por %p167, %p168
      %s170 = ssub.s32 %s23, %s30
      %p171 = scmp.eq.s32.totalorder %s170, 0
      %s173 = sadd.s32 %s172, 1
      %s174 = scalar_select %p171, %s172, %s173
      %p177 = pneg %p171
      %p178 = scmp.eq.s32.totalorder %s15, 3
      %p179 = por %p177, %p178
      %p180 = scmp.ne.s32.totalorder %s172, %s175
      %p181 = scmp.eq.s32.totalorder %s15, 0
      %p182 = por %p180, %p181
      %p183 = scmp.ne.s32.totalorder %s172, %s175
      %p184 = scmp.eq.s32.totalorder %s20, 3
      %p185 = por %p183, %p184
      %p186 = scmp.ne.s32.totalorder %s175, %s176
      %p187 = scmp.eq.s32.totalorder %s20, 0
      %p188 = por %p186, %p187
      %p189 = scmp.ne.s32.totalorder %s175, %s176
      %p190 = scmp.eq.s32.totalorder %s21, 3
      %p191 = por %p189, %p190
      %p193 = scmp.ne.s32.totalorder %s176, %s192
      %p194 = scmp.eq.s32.totalorder %s21, 0
      %p195 = por %p193, %p194
      %p196 = scmp.le.s32.totalorder 1, %s15
      %p197 = scmp.lt.s32.totalorder %s15, 5
      %p198 = pnand %p196, %p197
      %p199 = pneg %p198
      // Predicated region
      $region9: #{upsample_block_pixel_shuffle.1} parent=5 // pred_check
        _
      $region10: #{upsample_block_pixel_shuffle.1} parent=5 // pred_check_branch
        %201 = sbr.rel (%p198) target = $region12
      $region11: #{upsample_block_pixel_shuffle.1} parent=5 // pred_region
        %s202 = ssub.s32 %s15, 1
        // Predicated region
        $region13: #{upsample_block_pixel_shuffle.1} parent=11 // pred_check
          %p203 = pneg %p78
        $region14: #{upsample_block_pixel_shuffle.1} parent=11 // pred_check_branch
          %205 = sbr.rel (%p203) target = $region16
        $region15: #{upsample_block_pixel_shuffle.1} parent=11 // pred_region
          _
        $region16: #{upsample_block_pixel_shuffle.1} parent=11 // pred_fallthru
          _
        // Predicated region
        $region17: #{upsample_block_pixel_shuffle.1} parent=11 // pred_check
          %p206 = pneg %p99
        $region18: #{upsample_block_pixel_shuffle.1} parent=11 // pred_check_branch
          %208 = sbr.rel (%p206) target = $region20
        $region19: #{upsample_block_pixel_shuffle.1} parent=11 // pred_region
          _
        $region20: #{upsample_block_pixel_shuffle.1} parent=11 // pred_fallthru
          _
        // Predicated region
        $region21: #{upsample_block_pixel_shuffle.1} parent=11 // pred_check
          %p209 = pneg %p120
        $region22: #{upsample_block_pixel_shuffle.1} parent=11 // pred_check_branch
          %211 = sbr.rel (%p209) target = $region24
        $region23: #{upsample_block_pixel_shuffle.1} parent=11 // pred_region
          _
        $region24: #{upsample_block_pixel_shuffle.1} parent=11 // pred_fallthru
          _
        // Predicated region
        $region25: #{upsample_block_pixel_shuffle.1} parent=11 // pred_check
          %p212 = pneg %p141
        $region26: #{upsample_block_pixel_shuffle.1} parent=11 // pred_check_branch
          %214 = sbr.rel (%p212) target = $region28
        $region27: #{upsample_block_pixel_shuffle.1} parent=11 // pred_region
          _
        $region28: #{upsample_block_pixel_shuffle.1} parent=11 // pred_fallthru
          _
        // Predicated region
        $region29: #{upsample_block_pixel_shuffle.1} parent=11 // pred_check
          %p215 = pneg %p162
        $region30: #{upsample_block_pixel_shuffle.1} parent=11 // pred_check_branch
          %217 = sbr.rel (%p215) target = $region32
        $region31: #{upsample_block_pixel_shuffle.1} parent=11 // pred_region
          _
        $region32: #{upsample_block_pixel_shuffle.1} parent=11 // pred_fallthru
          _
      $region12: #{upsample_block_pixel_shuffle.1} parent=5 // pred_fallthru
        _
      %p218 = scmp.lt.s32.totalorder %s15, 4
      // Predicated region
      $region33: #{upsample_block_pixel_shuffle.1} parent=5 // pred_check
        %p219 = pneg %p218
      $region34: #{upsample_block_pixel_shuffle.1} parent=5 // pred_check_branch
        %221 = sbr.rel (%p219) target = $region36
      $region35: #{upsample_block_pixel_shuffle.1} parent=5 // pred_region
        // Predicated region
        $region37: #{upsample_block_pixel_shuffle.1} parent=35 // pred_check
          %p222 = pneg %p51
        $region38: #{upsample_block_pixel_shuffle.1} parent=35 // pred_check_branch
          %224 = sbr.rel (%p222) target = $region40
        $region39: #{upsample_block_pixel_shuffle.1} parent=35 // pred_region
          %s225 = ssub.s32 1, %s22
          %s226 = smul.u32 %s23, %s225
          %p227 = scmp.lt.s32.totalorder %s226, 1
          %s228 = scalar_select %p227, %s226, 1
          %s229 = smul.addr %s228, 3
          %s230 = smul.addr %s229, 4
          %s231 = scalar_lea.vmem %s0, %s230
          %s232 = ssub.s32 1, %s22
          %s233 = smul.u32 %s23, %s232
        $region40: #{upsample_block_pixel_shuffle.1} parent=35 // pred_fallthru
          _
      $region36: #{upsample_block_pixel_shuffle.1} parent=5 // pred_fallthru
        _
      %p234 = scmp.le.s32.totalorder 1, %s15
      %p235 = scmp.lt.s32.totalorder %s15, 5
      %p236 = pnand %p234, %p235
      %p237 = pneg %p236
      // Predicated region
      $region41: #{upsample_block_pixel_shuffle.1} parent=5 // pred_check
        _
      $region42: #{upsample_block_pixel_shuffle.1} parent=5 // pred_check_branch
        %239 = sbr.rel (%p236) target = $region44
      $region43: #{upsample_block_pixel_shuffle.1} parent=5 // pred_region
        %s240 = ssub.s32 %s15, 1
        %s241 = ssub.s32 1, %s24
        %s242 = smul.u32 %s25, %s241
        %p243 = scmp.lt.s32.totalorder %s242, 1
        %s244 = scalar_select %p243, %s242, 1
        %s245 = smul.addr %s244, 3
        %s246 = smul.addr %s245, 4
        %s247 = scalar_lea.vmem %s0, %s246
        %p248 = pneg %p57
        %p249 = pneg %p54
        %p250 = pneg %p78
        %p251 = pneg %p75
        %p252 = pneg %p99
        %p253 = pneg %p96
        %p254 = pneg %p120
        %p255 = pneg %p117
        %p256 = pneg %p141
        %p257 = pneg %p138
        %p258 = pneg %p162
        %p259 = pneg %p159
        %p260 = pneg %p188
        %p261 = pneg %p185
        %s262 = sand.u32 %s175, 1
        %s263 = scalar_lea.sflag [#allocation9], %s262
        %s264 = sand.u32 %s175, 1
        %s265 = smul.addr %s264, 128
        %s266 = scalar_lea.vmem [#allocation8], %s265
        %s267 = ssub.s32 1, %s24
        %s268 = smul.u32 %s25, %s267
        %p269 = scmp.lt.s32.totalorder %s268, 1
        %s270 = scalar_select %p269, %s268, 1
        %s271 = smul.addr %s270, 3
        %s272 = smul.addr %s271, 4
        %s273 = scalar_lea.vmem %s0, %s272
        %s274 = ssub.s32 1, %s24
        %s275 = smul.u32 %s25, %s274
        %p277 = scmp.eq.s32.totalorder %s24, 0
        // Predicated region
        $region45: #{upsample_block_pixel_shuffle.1} parent=43 // pred_check
          %p278 = pneg %p277
        $region46: #{upsample_block_pixel_shuffle.1} parent=43 // pred_check_branch
          %280 = sbr.rel (%p278) target = $region48
        $region47: #{upsample_block_pixel_shuffle.1} parent=43 // pred_region
          %v281 = vld [vmem:[%s273] sm:$0xff]
          %v282 = vld [vmem:[%s273 + $0x8] sm:$0xf]
          %v284 = vcombine.high %v281, %v281
          %286 = vst [vmem:[#allocation2] sm:$0xf] %v281
          %287 = vst [vmem:[#allocation2 + $0x8] sm:$0xf] %v284
          %vm288 = vcmask 551936
          %289 = vst.msk [vmem:[#allocation2 + $0x10] sm:$0xf] %vm288, %v282
          %v290 = vld [vmem:[%s273] sm:$0xff]
          %v291 = vld [vmem:[%s273 + $0x8] sm:$0xf]
          %v294 = vcombine.low %v290, %v290
          %v295 = vcombine.low %v291, %v291
          %296 = vrot.lane.b32.xlu0 %v294, 127
          %v297 = vpop.permute.xlu0 %296
          %298 = vrot.lane.b32.xlu0 %v290, 127
          %v299 = vpop.permute.xlu0 %298
          %300 = vrot.lane.b32.xlu0 %v295, 127
          %v301 = vpop.permute.xlu0 %300
          %vm302 = vcmask 1039360
          %v303 = vsel %vm302, %v297, %v299
          %v304 = vsel %vm302, %v299, %v301
          %308 = vst [vmem:[#allocation2] sm:$0xf0] %v303
          %309 = vst [vmem:[#allocation2 + $0x8] sm:$0xf0] %v304
          %vm310 = vcmask 556036
          %311 = vst.msk [vmem:[#allocation2 + $0x10] sm:$0xf0] %vm310, %v301
          %v312 = vld [vmem:[%s273] sm:$0xff]
          %v313 = vld [vmem:[%s273 + $0x8] sm:$0xf]
          %v316 = vcombine.high %v312, %v312
          %317 = vrot.lane.b32.xlu0 %v312, 126
          %v318 = vpop.permute.xlu0 %317
          %319 = vrot.lane.b32.xlu0 %v316, 126
          %v320 = vpop.permute.xlu0 %319
          %321 = vrot.lane.b32.xlu0 %v313, 126
          %v322 = vpop.permute.xlu0 %321
          %vm323 = vcmask 1031168
          %v324 = vsel %vm323, %v318, %v320
          %v325 = vsel %vm323, %v320, %v322
          %329 = vst [vmem:[#allocation2 + $0x18] sm:$0xf] %v324
          %330 = vst [vmem:[#allocation2 + $0x20] sm:$0xf] %v325
          %331 = vst.msk [vmem:[#allocation2 + $0x28] sm:$0xf] %vm288, %v322
          %v332 = vld [vmem:[%s273] sm:$0xff]
          %v333 = vld [vmem:[%s273 + $0x8] sm:$0xf]
          %v336 = vcombine.low %v332, %v332
          %v337 = vcombine.low %v333, %v333
          %338 = vrot.lane.b32.xlu0 %v336, 110
          %v339 = vpop.permute.xlu0 %338
          %340 = vrot.lane.b32.xlu0 %v332, 110
          %v341 = vpop.permute.xlu0 %340
          %342 = vrot.lane.b32.xlu0 %v337, 110
          %v343 = vpop.permute.xlu0 %342
          %vm344 = vcmask 900096
          %v345 = vsel %vm344, %v339, %v341
          %v346 = vsel %vm344, %v341, %v343
          %350 = vst [vmem:[#allocation2 + $0x18] sm:$0xf0] %v345
          %351 = vst [vmem:[#allocation2 + $0x20] sm:$0xf0] %v346
          %352 = vst.msk [vmem:[#allocation2 + $0x28] sm:$0xf0] %vm310, %v343
          %v353 = vld [vmem:[%s273] sm:$0xff]
          %v354 = vld [vmem:[%s273 + $0x8] sm:$0xf]
          %v357 = vcombine.high %v353, %v353
          %358 = vrot.lane.b32.xlu0 %v353, 109
          %v359 = vpop.permute.xlu0 %358
          %360 = vrot.lane.b32.xlu0 %v357, 109
          %v361 = vpop.permute.xlu0 %360
          %362 = vrot.lane.b32.xlu0 %v354, 109
          %v363 = vpop.permute.xlu0 %362
          %vm364 = vcmask 891904
          %v365 = vsel %vm364, %v359, %v361
          %v366 = vsel %vm364, %v361, %v363
          %370 = vst [vmem:[#allocation2 + $0x30] sm:$0xf] %v365
          %371 = vst [vmem:[#allocation2 + $0x38] sm:$0xf] %v366
          %372 = vst.msk [vmem:[#allocation2 + $0x40] sm:$0xf] %vm288, %v363
          %v373 = vld [vmem:[%s273] sm:$0xff]
          %v374 = vld [vmem:[%s273 + $0x8] sm:$0xf]
          %v377 = vcombine.low %v373, %v373
          %v378 = vcombine.low %v374, %v374
          %379 = vrot.lane.b32.xlu0 %v377, 108
          %v380 = vpop.permute.xlu0 %379
          %381 = vrot.lane.b32.xlu0 %v373, 108
          %v382 = vpop.permute.xlu0 %381
          %383 = vrot.lane.b32.xlu0 %v378, 108
          %v384 = vpop.permute.xlu0 %383
          %vm385 = vcmask 883712
          %v386 = vsel %vm385, %v380, %v382
          %v387 = vsel %vm385, %v382, %v384
          %391 = vst [vmem:[#allocation2 + $0x30] sm:$0xf0] %v386
          %392 = vst [vmem:[#allocation2 + $0x38] sm:$0xf0] %v387
          %393 = vst.msk [vmem:[#allocation2 + $0x40] sm:$0xf0] %vm310, %v384
          %v394 = vld [vmem:[%s273] sm:$0xff]
          %v395 = vld [vmem:[%s273 + $0x8] sm:$0xf]
          %v398 = vcombine.high %v394, %v394
          %399 = vrot.lane.b32.xlu0 %v394, 92
          %v400 = vpop.permute.xlu0 %399
          %401 = vrot.lane.b32.xlu0 %v398, 92
          %v402 = vpop.permute.xlu0 %401
          %403 = vrot.lane.b32.xlu0 %v395, 92
          %v404 = vpop.permute.xlu0 %403
          %vm405 = vcmask 752640
          %v406 = vsel %vm405, %v400, %v402
          %v407 = vsel %vm405, %v402, %v404
          %411 = vst [vmem:[#allocation2 + $0x48] sm:$0xf] %v406
          %412 = vst [vmem:[#allocation2 + $0x50] sm:$0xf] %v407
          %413 = vst.msk [vmem:[#allocation2 + $0x58] sm:$0xf] %vm288, %v404
          %v414 = vld [vmem:[%s273] sm:$0xff]
          %v415 = vld [vmem:[%s273 + $0x8] sm:$0xf]
          %v418 = vcombine.low %v414, %v414
          %v419 = vcombine.low %v415, %v415
          %420 = vrot.lane.b32.xlu0 %v418, 91
          %v421 = vpop.permute.xlu0 %420
          %422 = vrot.lane.b32.xlu0 %v414, 91
          %v423 = vpop.permute.xlu0 %422
          %424 = vrot.lane.b32.xlu0 %v419, 91
          %v425 = vpop.permute.xlu0 %424
          %vm426 = vcmask 744448
          %v427 = vsel %vm426, %v421, %v423
          %v428 = vsel %vm426, %v423, %v425
          %432 = vst [vmem:[#allocation2 + $0x48] sm:$0xf0] %v427
          %433 = vst [vmem:[#allocation2 + $0x50] sm:$0xf0] %v428
          %434 = vst.msk [vmem:[#allocation2 + $0x58] sm:$0xf0] %vm310, %v425
          %v435 = vld [vmem:[%s273] sm:$0xff]
          %v436 = vld [vmem:[%s273 + $0x8] sm:$0xf]
          %v439 = vcombine.high %v435, %v435
          %440 = vrot.lane.b32.xlu0 %v435, 90
          %v441 = vpop.permute.xlu0 %440
          %442 = vrot.lane.b32.xlu0 %v439, 90
          %v443 = vpop.permute.xlu0 %442
          %444 = vrot.lane.b32.xlu0 %v436, 90
          %v445 = vpop.permute.xlu0 %444
          %vm446 = vcmask 736256
          %v447 = vsel %vm446, %v441, %v443
          %v448 = vsel %vm446, %v443, %v445
          %452 = vst [vmem:[#allocation2 + $0x60] sm:$0xf] %v447
          %453 = vst [vmem:[#allocation2 + $0x68] sm:$0xf] %v448
          %454 = vst.msk [vmem:[#allocation2 + $0x70] sm:$0xf] %vm288, %v445
          %v455 = vld [vmem:[%s1] sm:$0xf]
          %v456 = vld [vmem:[%s1 + $0x4] sm:$0xf]
          %v457 = vld [vmem:[#allocation2] sm:$0xff]
          %v458 = vld [vmem:[#allocation2 + $0x8] sm:$0xff]
          %v459 = vld [vmem:[#allocation2 + $0x10] sm:$0xff]
          %v460 = vld [vmem:[#allocation2 + $0x18] sm:$0xff]
          %v461 = vld [vmem:[#allocation2 + $0x20] sm:$0xff]
          %v462 = vld [vmem:[#allocation2 + $0x28] sm:$0xff]
          %v463 = vld [vmem:[#allocation2 + $0x30] sm:$0xff]
          %v464 = vld [vmem:[#allocation2 + $0x38] sm:$0xff]
          %v465 = vld [vmem:[#allocation2 + $0x40] sm:$0xff]
          %v466 = vld [vmem:[#allocation2 + $0x48] sm:$0xff]
          %v467 = vld [vmem:[#allocation2 + $0x50] sm:$0xff]
          %v468 = vld [vmem:[#allocation2 + $0x58] sm:$0xff]
          %v469 = vld [vmem:[#allocation2 + $0x60] sm:$0xf]
          %v470 = vld [vmem:[#allocation2 + $0x68] sm:$0xf]
          %v471 = vld [vmem:[#allocation2 + $0x70] sm:$0xf]
          %v472 = vpack.c.bf16 %v460, %v457
          %v473 = vpack.c.bf16 %v461, %v458
          %v474 = vpack.c.bf16 %v462, %v459
          %v475 = vpack.c.bf16 %v466, %v463
          %v476 = vpack.c.bf16 %v467, %v464
          %v477 = vpack.c.bf16 %v468, %v465
          %v478 = vpack.c.bf16 %v469, %v469
          %v479 = vpack.c.bf16 %v470, %v470
          %v480 = vpack.c.bf16 %v471, %v471
          %v483 = vunpack.c.l.b16 %v455
          %v484 = vunpack.c.l.b16 %v456
          %v485 = vpack.c.b16 %v484, %v483
          %vm486 = vcmask 293888
          %v488 = vsel %vm486, %v485, 0
          %vm490 = vcmask 1041408
          %v492 = vsel %vm490, %v478, 0
          %v495 = vsel %vm490, %v479, 0
          %v498 = vsel %vm490, %v480, 0
          %500 = vmatprep.subr.bf16.mxu0 0
          %501 = vmatpush1.bf16.msra.mxu0 0
          %502 = vmatprep.subr.bf16.mxu0 0
          %503 = vmatpush1.bf16.msra.mxu0 0
          %504 = vmatprep.subr.bf16.mxu0 0
          %505 = vmatpush1.bf16.msra.mxu0 0
          %506 = vmatprep.subr.bf16.mxu0 0
          %507 = vmatpush1.bf16.msra.mxu0 0
          %508 = vmatprep.subr.bf16.mxu0 0
          %509 = vmatpush1.bf16.msra.mxu0 0
          %510 = vmatprep.subr.bf16.mxu0 %v495
          %511 = vmatpush1.bf16.msra.mxu0 %v492
          %512 = vmatprep.subr.bf16.mxu0 %v476
          %513 = vmatpush1.bf16.msra.mxu0 %v475
          %514 = vmatprep.subr.bf16.mxu0 %v473
          %515 = vmatpush1.bf16.msra.mxu0 %v472
          %516 = vmatprep.subr.bf16.mxu0 0
          %517 = vmatpush2.bf16.msra.mxu0 0
          %518 = vmatprep.subr.bf16.mxu0 0
          %519 = vmatpush2.bf16.msra.mxu0 0
          %520 = vmatprep.subr.bf16.mxu0 0
          %521 = vmatpush2.bf16.msra.mxu0 0
          %522 = vmatprep.subr.bf16.mxu0 0
          %523 = vmatpush2.bf16.msra.mxu0 0
          %524 = vmatprep.subr.bf16.mxu0 0
          %525 = vmatpush2.bf16.msra.mxu0 0
          %526 = vmatprep.subr.bf16.mxu0 0
          %527 = vmatpush2.bf16.msra.mxu0 0
          %528 = vmatprep.subr.bf16.mxu0 0
          %529 = vmatpush2.bf16.msra.mxu0 0
          %530 = vmatprep.subr.bf16.mxu0 0
          %531 = vmatpush2.bf16.msra.mxu0 0
          %532 = vmatprep.mubr.bf16.mxu0 0
          %533 = vmatmul.mubr.bf16.gmra.mxu0 %v488
          %v534 = vpop.f32.mrf.mxu0
          %v535 = vadd.f32 0.0, %v534
          %v536 = vpop.f32.mrf.mxu0
          %v537 = vadd.f32 0.0, %v536
          %v538 = vpop.f32.mrf.mxu0
          %v539 = vadd.f32 0.0, %v538
          %v540 = vpop.f32.mrf.mxu0
          %v541 = vadd.f32 0.0, %v540
          %542 = vdwg.mxu0
          %543 = vmatprep.subr.bf16.mxu0 0
          %544 = vmatpush1.bf16.msra.mxu0 0
          %545 = vmatprep.subr.bf16.mxu0 0
          %546 = vmatpush1.bf16.msra.mxu0 0
          %547 = vmatprep.subr.bf16.mxu0 0
          %548 = vmatpush1.bf16.msra.mxu0 0
          %549 = vmatprep.subr.bf16.mxu0 0
          %550 = vmatpush1.bf16.msra.mxu0 0
          %551 = vmatprep.subr.bf16.mxu0 0
          %552 = vmatpush1.bf16.msra.mxu0 0
          %553 = vmatprep.subr.bf16.mxu0 0
          %554 = vmatpush1.bf16.msra.mxu0 %v498
          %555 = vmatprep.subr.bf16.mxu0 0
          %556 = vmatpush1.bf16.msra.mxu0 %v477
          %557 = vmatprep.subr.bf16.mxu0 0
          %558 = vmatpush1.bf16.msra.mxu0 %v474
          %559 = vmatprep.subr.bf16.mxu0 0
          %560 = vmatpush2.bf16.msra.mxu0 0
          %561 = vmatprep.subr.bf16.mxu0 0
          %562 = vmatpush2.bf16.msra.mxu0 0
          %563 = vmatprep.subr.bf16.mxu0 0
          %564 = vmatpush2.bf16.msra.mxu0 0
          %565 = vmatprep.subr.bf16.mxu0 0
          %566 = vmatpush2.bf16.msra.mxu0 0
          %567 = vmatprep.subr.bf16.mxu0 0
          %568 = vmatpush2.bf16.msra.mxu0 0
          %569 = vmatprep.subr.bf16.mxu0 0
          %570 = vmatpush2.bf16.msra.mxu0 0
          %571 = vmatprep.subr.bf16.mxu0 0
          %572 = vmatpush2.bf16.msra.mxu0 0
          %573 = vmatprep.subr.bf16.mxu0 0
          %574 = vmatpush2.bf16.msra.mxu0 0
          %575 = vmatprep.mubr.bf16.mxu0 0
          %576 = vmatmul.mubr.bf16.gmra.mxu0 %v488
          %v577 = vpop.f32.mrf.mxu0
          %v578 = vadd.f32 0.0, %v577
          %v579 = vpop.f32.mrf.mxu0
          %v580 = vpop.f32.mrf.mxu0
          %v581 = vadd.f32 0.0, %v580
          %v582 = vpop.f32.mrf.mxu0
          %583 = vdwg.mxu0
          %s584 = smul.u32 %s25, 6
          %s585 = smul.addr %s584, 8
          %s586 = scalar_lea.vmem [#allocation3], %s585
          %587 = vst [vmem:[%s586] sm:$0xff] %v535
          %588 = vst [vmem:[%s586 + $0x8] sm:$0xff] %v537
          %vm589 = vcmask 556032
          %590 = vst.msk [vmem:[%s586 + $0x10] sm:$0xff] %vm589, %v578
          %591 = vst [vmem:[%s586 + $0x18] sm:$0xff] %v539
          %592 = vst [vmem:[%s586 + $0x20] sm:$0xff] %v541
          %593 = vst.msk [vmem:[%s586 + $0x28] sm:$0xff] %vm589, %v581
          %p594 = scmp.eq.s32.totalorder %s25, 0
          // Predicated region
          $region49: #{upsample_block_pixel_shuffle.1} parent=47 // pred_check
            %p595 = pneg %p594
          $region50: #{upsample_block_pixel_shuffle.1} parent=47 // pred_check_branch
            %597 = sbr.rel (%p595) target = $region52
          $region51: #{upsample_block_pixel_shuffle.1} parent=47 // pred_region
            %vm598 = vcmask 7168
            %599 = vst.msk [vmem:[#allocation4] sm:$0xff] %vm598, 0.0
            %600 = vst.msk [vmem:[#allocation4 + $0x8] sm:$0xff] %vm598, 0.0
          $region52: #{upsample_block_pixel_shuffle.1} parent=47 // pred_fallthru
            _
          %v601 = vld [vmem:[#allocation4] sm:$0xff]
          %v602 = vld [vmem:[#allocation4 + $0x8] sm:$0xff]
          %v603 = vld [vmem:[%s4] sm:$0x7]
          %v605 = vlaneseq
          %v606 = vshrl.u32 %v605, 7
          %v607 = vsub.s32 0, %v606
          %v608 = vrot.slane %v603, %v607
          %v609 = vlaneseq
          %v610 = vshrl.u32 %v609, 7
          %v611 = vsub.s32 1, %v610
          %v612 = vrot.slane %v603, %v611
          %v613 = vlaneseq
          %v614 = vshrl.u32 %v613, 7
          %v615 = vsub.s32 2, %v614
          %v616 = vrot.slane %v603, %v615
          %v620 = vmul.f32 %v535, %v608
          %v621 = vmul.f32 %v537, %v612
          %v622 = vmul.f32 %v578, %v616
          %v623 = vmul.f32 %v539, %v608
          %v624 = vmul.f32 %v541, %v612
          %v625 = vmul.f32 %v581, %v616
          %v626 = vadd.f32 %v620, %v621
          %v627 = vsel %vm589, %v622, 0.0
          %v628 = vadd.f32 %v626, %v627
          %629 = vadd.xlane.f32.xlu0 %v628
          %v630 = vpop.xlane.xlu0 %629
          %v631 = vadd.f32 %v623, %v624
          %v632 = vsel %vm589, %v625, 0.0
          %v633 = vadd.f32 %v631, %v632
          %634 = vadd.xlane.f32.xlu0 %v633
          %v635 = vpop.xlane.xlu0 %634
          %v636 = vadd.f32 %v601, %v630
          %v637 = vadd.f32 %v602, %v635
          %vm638 = vcmask 7168
          %639 = vst.msk [vmem:[#allocation4] sm:$0xff] %vm638, %v636
          %640 = vst.msk [vmem:[#allocation4 + $0x8] sm:$0xff] %vm638, %v637
        $region48: #{upsample_block_pixel_shuffle.1} parent=43 // pred_fallthru
          _
        %p641 = scmp.eq.s32.totalorder %s24, 1
        // Predicated region
        $region53: #{upsample_block_pixel_shuffle.1} parent=43 // pred_check
          %p642 = pneg %p641
        $region54: #{upsample_block_pixel_shuffle.1} parent=43 // pred_check_branch
          %644 = sbr.rel (%p642) target = $region56
        $region55: #{upsample_block_pixel_shuffle.1} parent=43 // pred_region
          %p645 = scmp.eq.s32.totalorder %s25, 0
          // Predicated region
          $region57: #{upsample_block_pixel_shuffle.1} parent=55 // pred_check
            %p646 = pneg %p645
          $region58: #{upsample_block_pixel_shuffle.1} parent=55 // pred_check_branch
            %648 = sbr.rel (%p646) target = $region60
          $region59: #{upsample_block_pixel_shuffle.1} parent=55 // pred_region
            %v649 = vld [vmem:[#allocation4] sm:$0xff]
            %v650 = vld [vmem:[#allocation4 + $0x8] sm:$0xff]
            %v651 = vmul.f32 %v649, 0.001953125
            %v652 = vmul.f32 %v650, 0.001953125
            %v653 = vld [vmem:[#allocation3] sm:$0xff]
            %v654 = vld [vmem:[#allocation3 + $0x8] sm:$0xff]
            %v655 = vld [vmem:[#allocation3 + $0x10] sm:$0xff]
            %v656 = vld [vmem:[#allocation3 + $0x18] sm:$0xff]
            %v657 = vld [vmem:[#allocation3 + $0x20] sm:$0xff]
            %v658 = vld [vmem:[#allocation3 + $0x28] sm:$0xff]
            %660 = vset.pattern.permute.xlu0 0
            %661 = vperm.xlu0 %660, %v651
            %v662 = vpop.permute.xlu0 %661
            %665 = vset.pattern.permute.xlu0 0
            %666 = vperm.xlu0 %665, %v652
            %v667 = vpop.permute.xlu0 %666
            %v669 = vsub.f32 %v653, %v662
            %v670 = vsub.f32 %v654, %v662
            %v671 = vsub.f32 %v655, %v662
            %v672 = vsub.f32 %v656, %v667
            %v673 = vsub.f32 %v657, %v667
            %v674 = vsub.f32 %v658, %v667
            %v675 = vld [vmem:[%s4] sm:$0x7]
            %v677 = vlaneseq
            %v678 = vshrl.u32 %v677, 7
            %v679 = vsub.s32 0, %v678
            %v680 = vrot.slane %v675, %v679
            %v681 = vlaneseq
            %v682 = vshrl.u32 %v681, 7
            %v683 = vsub.s32 1, %v682
            %v684 = vrot.slane %v675, %v683
            %v685 = vlaneseq
            %v686 = vshrl.u32 %v685, 7
            %v687 = vsub.s32 2, %v686
            %v688 = vrot.slane %v675, %v687
            %v692 = vmul.f32 %v669, %v680
            %v693 = vmul.f32 %v670, %v684
            %v694 = vmul.f32 %v671, %v688
            %v695 = vmul.f32 %v672, %v680
            %v696 = vmul.f32 %v673, %v684
            %v697 = vmul.f32 %v674, %v688
            %v698 = vmul.f32 %v692, %v692
            %v699 = vmul.f32 %v693, %v693
            %v700 = vmul.f32 %v694, %v694
            %v701 = vmul.f32 %v695, %v695
            %v702 = vmul.f32 %v696, %v696
            %v703 = vmul.f32 %v697, %v697
            %v704 = vadd.f32 %v698, %v699
            %vm705 = vcmask 556032
            %v706 = vsel %vm705, %v700, 0.0
            %v707 = vadd.f32 %v704, %v706
            %708 = vadd.xlane.f32.xlu0 %v707
            %v709 = vpop.xlane.xlu0 %708
            %v710 = vadd.f32 %v701, %v702
            %v711 = vsel %vm705, %v703, 0.0
            %v712 = vadd.f32 %v710, %v711
            %713 = vadd.xlane.f32.xlu0 %v712
            %v714 = vpop.xlane.xlu0 %713
            %v715 = vadd.f32 %v709, 0.0
            %v716 = vadd.f32 %v714, 0.0
            %s717 = scalar_lea.vmem [#allocation3], 48
            %v718 = vld [vmem:[%s717] sm:$0xff]
            %v719 = vld [vmem:[%s717 + $0x8] sm:$0xff]
            %v720 = vld [vmem:[%s717 + $0x10] sm:$0xff]
            %v721 = vld [vmem:[%s717 + $0x18] sm:$0xff]
            %v722 = vld [vmem:[%s717 + $0x20] sm:$0xff]
            %v723 = vld [vmem:[%s717 + $0x28] sm:$0xff]
            %v724 = vsub.f32 %v718, %v662
            %v725 = vsub.f32 %v719, %v662
            %v726 = vsub.f32 %v720, %v662
            %v727 = vsub.f32 %v721, %v667
            %v728 = vsub.f32 %v722, %v667
            %v729 = vsub.f32 %v723, %v667
            %v730 = vmul.f32 %v724, %v680
            %v731 = vmul.f32 %v725, %v684
            %v732 = vmul.f32 %v726, %v688
            %v733 = vmul.f32 %v727, %v680
            %v734 = vmul.f32 %v728, %v684
            %v735 = vmul.f32 %v729, %v688
            %v736 = vmul.f32 %v730, %v730
            %v737 = vmul.f32 %v731, %v731
            %v738 = vmul.f32 %v732, %v732
            %v739 = vmul.f32 %v733, %v733
            %v740 = vmul.f32 %v734, %v734
            %v741 = vmul.f32 %v735, %v735
            %v742 = vadd.f32 %v736, %v737
            %v743 = vsel %vm705, %v738, 0.0
            %v744 = vadd.f32 %v742, %v743
            %745 = vadd.xlane.f32.xlu0 %v744
            %v746 = vpop.xlane.xlu0 %745
            %v747 = vadd.f32 %v739, %v740
            %v748 = vsel %vm705, %v741, 0.0
            %v749 = vadd.f32 %v747, %v748
            %750 = vadd.xlane.f32.xlu0 %v749
            %v751 = vpop.xlane.xlu0 %750
            %v752 = vadd.f32 %v715, %v746
            %v753 = vadd.f32 %v716, %v751
            %v754 = vmul.f32 %v752, 0.001953125
            %v755 = vmul.f32 %v753, 0.001953125
            %v756 = vld [vmem:[%s2] sm:$0xff]
            %v757 = vld [vmem:[%s2 + $0x8] sm:$0xff]
            %v758 = vadd.f32 %v754, 1e-05
            %v759 = vadd.f32 %v755, 1e-05
            %v760 = vrsqrt.pop %v758
            %v761 = vrsqrt.pop %v759
            %v762 = vmul.f32 %v756, %v760
            %v763 = vmul.f32 %v757, %v761
            %vm764 = vcmask 7168
            %765 = vst.msk [vmem:[#allocation5] sm:$0xff] %vm764, %v762
            %766 = vst.msk [vmem:[#allocation5 + $0x8] sm:$0xff] %vm764, %v763
            %v767 = vld [vmem:[%s3] sm:$0xff]
            %v768 = vld [vmem:[%s3 + $0x8] sm:$0xff]
            %v769 = vmul.f32 %v651, %v762
            %v770 = vmul.f32 %v652, %v763
            %v771 = vsub.f32 %v767, %v769
            %v772 = vsub.f32 %v768, %v770
            %773 = vst.msk [vmem:[#allocation6] sm:$0xff] %vm764, %v771
            %774 = vst.msk [vmem:[#allocation6 + $0x8] sm:$0xff] %vm764, %v772
          $region60: #{upsample_block_pixel_shuffle.1} parent=55 // pred_fallthru
            _
          %s775 = smul.u32 %s25, 6
          %s776 = smul.addr %s775, 8
          %s777 = scalar_lea.vmem [#allocation3], %s776
          %v778 = vld [vmem:[%s777] sm:$0xff]
          %v779 = vld [vmem:[%s777 + $0x8] sm:$0xff]
          %v780 = vld [vmem:[%s777 + $0x10] sm:$0xff]
          %v781 = vld [vmem:[%s777 + $0x18] sm:$0xff]
          %v782 = vld [vmem:[%s777 + $0x20] sm:$0xff]
          %v783 = vld [vmem:[%s777 + $0x28] sm:$0xff]
          %v784 = vld [vmem:[#allocation5] sm:$0xff]
          %v785 = vld [vmem:[#allocation5 + $0x8] sm:$0xff]
          %787 = vset.pattern.permute.xlu0 0
          %788 = vperm.xlu0 %787, %v784
          %v789 = vpop.permute.xlu0 %788
          %792 = vset.pattern.permute.xlu0 0
          %793 = vperm.xlu0 %792, %v785
          %v794 = vpop.permute.xlu0 %793
          %v796 = vmul.f32 %v778, %v789
          %v797 = vmul.f32 %v779, %v789
          %v798 = vmul.f32 %v780, %v789
          %v799 = vmul.f32 %v781, %v794
          %v800 = vmul.f32 %v782, %v794
          %v801 = vmul.f32 %v783, %v794
          %v802 = vld [vmem:[#allocation6] sm:$0xff]
          %v803 = vld [vmem:[#allocation6 + $0x8] sm:$0xff]
          %805 = vset.pattern.permute.xlu0 0
          %806 = vperm.xlu0 %805, %v802
          %v807 = vpop.permute.xlu0 %806
          %810 = vset.pattern.permute.xlu0 0
          %811 = vperm.xlu0 %810, %v803
          %v812 = vpop.permute.xlu0 %811
          %v814 = vadd.f32 %v796, %v807
          %v815 = vadd.f32 %v797, %v807
          %v816 = vadd.f32 %v798, %v807
          %v817 = vadd.f32 %v799, %v812
          %v818 = vadd.f32 %v800, %v812
          %v819 = vadd.f32 %v801, %v812
          %v820 = vmul.f32 %v814, 1.702
          %v821 = vmul.f32 %v815, 1.702
          %v822 = vmul.f32 %v816, 1.702
          %v823 = vmul.f32 %v817, 1.702
          %v824 = vmul.f32 %v818, 1.702
          %v825 = vmul.f32 %v819, 1.702
          %v826 = vxor.u32 %v820, 2147483648
          %v827 = vxor.u32 %v821, 2147483648
          %v828 = vxor.u32 %v822, 2147483648
          %v829 = vxor.u32 %v823, 2147483648
          %v830 = vxor.u32 %v824, 2147483648
          %v831 = vxor.u32 %v825, 2147483648
          %v832 = vmul.f32 %v826, 1.442695
          %v833 = vpow.pop %v832
          %v834 = vmul.f32 %v827, 1.442695
          %v835 = vpow.pop %v834
          %v836 = vmul.f32 %v828, 1.442695
          %v837 = vpow.pop %v836
          %v838 = vmul.f32 %v829, 1.442695
          %v839 = vpow.pop %v838
          %v840 = vmul.f32 %v830, 1.442695
          %v841 = vpow.pop %v840
          %v842 = vmul.f32 %v831, 1.442695
          %v843 = vpow.pop %v842
          %v844 = vadd.f32 %v833, 1.0
          %v845 = vadd.f32 %v835, 1.0
          %v846 = vadd.f32 %v837, 1.0
          %v847 = vadd.f32 %v839, 1.0
          %v848 = vadd.f32 %v841, 1.0
          %v849 = vadd.f32 %v843, 1.0
          %v850 = vrcp.pop %v844
          %v851 = vmul.f32 1.0, %v850
          %v852 = vrcp.pop %v845
          %v853 = vmul.f32 1.0, %v852
          %v854 = vrcp.pop %v846
          %v855 = vmul.f32 1.0, %v854
          %v856 = vrcp.pop %v847
          %v857 = vmul.f32 1.0, %v856
          %v858 = vrcp.pop %v848
          %v859 = vmul.f32 1.0, %v858
          %v860 = vrcp.pop %v849
          %v861 = vmul.f32 1.0, %v860
          %v862 = vmul.f32 %v814, %v851
          %v863 = vmul.f32 %v815, %v853
          %v864 = vmul.f32 %v816, %v855
          %v865 = vmul.f32 %v817, %v857
          %v866 = vmul.f32 %v818, %v859
          %v867 = vmul.f32 %v819, %v861
          %868 = vst [vmem:[#allocation7] sm:$0xff] %v862
          %869 = vst [vmem:[#allocation7 + $0x8] sm:$0xff] %v863
          %vm870 = vcmask 556032
          %871 = vst.msk [vmem:[#allocation7 + $0x10] sm:$0xff] %vm870, %v864
          %872 = vst [vmem:[#allocation7 + $0x18] sm:$0xff] %v865
          %873 = vst [vmem:[#allocation7 + $0x20] sm:$0xff] %v866
          %874 = vst.msk [vmem:[#allocation7 + $0x28] sm:$0xff] %vm870, %v867
          %v875 = vld [vmem:[#allocation7] sm:$0xf]
          %v876 = vld [vmem:[%s5] sm:$0xff]
          %v877 = vld [vmem:[%s5 + $0x8] sm:$0xff]
          %v878 = vld [vmem:[#allocation7] sm:$0xf0]
          %s879 = scalar_lea.vmem %s5, 16
          %v880 = vld [vmem:[%s879] sm:$0xff]
          %v881 = vld [vmem:[%s879 + $0x8] sm:$0xff]
          %v883 = vrot.slane %v878, 4
          %vm884 = vcmask 130048
          %v885 = vsel %vm884, %v883, 0
          %887 = vmatprep.subr.mxu0 0.0
          %888 = vmatpush1.msra.mxu0 0.0
          %889 = vmatprep.subr.mxu0 0.0
          %890 = vmatpush1.msra.mxu0 0.0
          %891 = vmatprep.subr.mxu0 0.0
          %892 = vmatpush1.msra.mxu0 0.0
          %893 = vmatprep.subr.mxu0 0.0
          %894 = vmatpush1.msra.mxu0 0.0
          %895 = vmatprep.subr.mxu0 0.0
          %896 = vmatpush1.msra.mxu0 0.0
          %897 = vmatprep.subr.mxu0 0.0
          %898 = vmatpush1.msra.mxu0 0.0
          %899 = vmatprep.subr.mxu0 0.0
          %900 = vmatpush1.msra.mxu0 0.0
          %901 = vmatprep.subr.mxu0 0.0
          %902 = vmatpush1.msra.mxu0 0.0
          %903 = vmatprep.subr.mxu0 0.0
          %904 = vmatpush1.msra.mxu0 0.0
          %905 = vmatprep.subr.mxu0 0.0
          %906 = vmatpush1.msra.mxu0 0.0
          %907 = vmatprep.subr.mxu0 0.0
          %908 = vmatpush1.msra.mxu0 0.0
          %909 = vmatprep.subr.mxu0 0.0
          %910 = vmatpush1.msra.mxu0 0.0
          %911 = vmatprep.subr.mxu0 0.0
          %912 = vmatpush1.msra.mxu0 0.0
          %913 = vmatprep.subr.mxu0 0.0
          %914 = vmatpush1.msra.mxu0 0.0
          %915 = vmatprep.subr.mxu0 0.0
          %916 = vmatpush1.msra.mxu0 %v881
          %917 = vmatprep.subr.mxu0 0.0
          %918 = vmatpush1.msra.mxu0 %v880
          %919 = vmatprep.subr.mxu0 0.0
          %920 = vmatpush2.msra.mxu0 0.0
          %921 = vmatprep.subr.mxu0 0.0
          %922 = vmatpush2.msra.mxu0 0.0
          %923 = vmatprep.subr.mxu0 0.0
          %924 = vmatpush2.msra.mxu0 0.0
          %925 = vmatprep.subr.mxu0 0.0
          %926 = vmatpush2.msra.mxu0 0.0
          %927 = vmatprep.subr.mxu0 0.0
          %928 = vmatpush2.msra.mxu0 0.0
          %929 = vmatprep.subr.mxu0 0.0
          %930 = vmatpush2.msra.mxu0 0.0
          %931 = vmatprep.subr.mxu0 0.0
          %932 = vmatpush2.msra.mxu0 0.0
          %933 = vmatprep.subr.mxu0 0.0
          %934 = vmatpush2.msra.mxu0 0.0
          %935 = vmatprep.subr.mxu0 0.0
          %936 = vmatpush2.msra.mxu0 0.0
          %937 = vmatprep.subr.mxu0 0.0
          %938 = vmatpush2.msra.mxu0 0.0
          %939 = vmatprep.subr.mxu0 0.0
          %940 = vmatpush2.msra.mxu0 0.0
          %941 = vmatprep.subr.mxu0 0.0
          %942 = vmatpush2.msra.mxu0 0.0
          %943 = vmatprep.subr.mxu0 0.0
          %944 = vmatpush2.msra.mxu0 0.0
          %945 = vmatprep.subr.mxu0 0.0
          %946 = vmatpush2.msra.mxu0 0.0
          %947 = vmatprep.subr.mxu0 0.0
          %948 = vmatpush2.msra.mxu0 0.0
          %949 = vmatprep.subr.mxu0 0.0
          %950 = vmatpush2.msra.mxu0 0.0
          %951 = vmatprep.mubr.f32.mxu0 0.0
          %952 = vmatmul.mubr.f32.gmra.mxu0 %v885
          %v953 = vpop.f32.mrf.mxu0
          %v954 = vadd.f32 0.0, %v953
          %v955 = vpop.f32.mrf.mxu0
          %956 = vdwg.mxu0
          %v958 = vsel %vm884, %v875, 0
          %960 = vmatprep.subr.mxu0 0.0
          %961 = vmatpush1.msra.mxu0 0.0
          %962 = vmatprep.subr.mxu0 0.0
          %963 = vmatpush1.msra.mxu0 0.0
          %964 = vmatprep.subr.mxu0 0.0
          %965 = vmatpush1.msra.mxu0 0.0
          %966 = vmatprep.subr.mxu0 0.0
          %967 = vmatpush1.msra.mxu0 0.0
          %968 = vmatprep.subr.mxu0 0.0
          %969 = vmatpush1.msra.mxu0 0.0
          %970 = vmatprep.subr.mxu0 0.0
          %971 = vmatpush1.msra.mxu0 0.0
          %972 = vmatprep.subr.mxu0 0.0
          %973 = vmatpush1.msra.mxu0 0.0
          %974 = vmatprep.subr.mxu0 0.0
          %975 = vmatpush1.msra.mxu0 0.0
          %976 = vmatprep.subr.mxu0 0.0
          %977 = vmatpush1.msra.mxu0 0.0
          %978 = vmatprep.subr.mxu0 0.0
          %979 = vmatpush1.msra.mxu0 0.0
          %980 = vmatprep.subr.mxu0 0.0
          %981 = vmatpush1.msra.mxu0 0.0
          %982 = vmatprep.subr.mxu0 0.0
          %983 = vmatpush1.msra.mxu0 0.0
          %984 = vmatprep.subr.mxu0 0.0
          %985 = vmatpush1.msra.mxu0 0.0
          %986 = vmatprep.subr.mxu0 0.0
          %987 = vmatpush1.msra.mxu0 0.0
          %988 = vmatprep.subr.mxu0 0.0
          %989 = vmatpush1.msra.mxu0 %v877
          %990 = vmatprep.subr.mxu0 0.0
          %991 = vmatpush1.msra.mxu0 %v876
          %992 = vmatprep.subr.mxu0 0.0
          %993 = vmatpush2.msra.mxu0 0.0
          %994 = vmatprep.subr.mxu0 0.0
          %995 = vmatpush2.msra.mxu0 0.0
          %996 = vmatprep.subr.mxu0 0.0
          %997 = vmatpush2.msra.mxu0 0.0
          %998 = vmatprep.subr.mxu0 0.0
          %999 = vmatpush2.msra.mxu0 0.0
          %1000 = vmatprep.subr.mxu0 0.0
          %1001 = vmatpush2.msra.mxu0 0.0
          %1002 = vmatprep.subr.mxu0 0.0
          %1003 = vmatpush2.msra.mxu0 0.0
          %1004 = vmatprep.subr.mxu0 0.0
          %1005 = vmatpush2.msra.mxu0 0.0
          %1006 = vmatprep.subr.mxu0 0.0
          %1007 = vmatpush2.msra.mxu0 0.0
          %1008 = vmatprep.subr.mxu0 0.0
          %1009 = vmatpush2.msra.mxu0 0.0
          %1010 = vmatprep.subr.mxu0 0.0
          %1011 = vmatpush2.msra.mxu0 0.0
          %1012 = vmatprep.subr.mxu0 0.0
          %1013 = vmatpush2.msra.mxu0 0.0
          %1014 = vmatprep.subr.mxu0 0.0
          %1015 = vmatpush2.msra.mxu0 0.0
          %1016 = vmatprep.subr.mxu0 0.0
          %1017 = vmatpush2.msra.mxu0 0.0
          %1018 = vmatprep.subr.mxu0 0.0
          %1019 = vmatpush2.msra.mxu0 0.0
          %1020 = vmatprep.subr.mxu0 0.0
          %1021 = vmatpush2.msra.mxu0 0.0
          %1022 = vmatprep.subr.mxu0 0.0
          %1023 = vmatpush2.msra.mxu0 0.0
          %1024 = vmatprep.mubr.f32.mxu0 0.0
          %1025 = vmatmul.mubr.f32.gmra.mxu0 %v958
          %v1026 = vpop.f32.mrf.mxu0
          %v1027 = vadd.f32 %v954, %v1026
          %v1028 = vpop.f32.mrf.mxu0
          %1029 = vdwg.mxu0
          %v1032 = vunpack.c.l.s4 1966171168
          %v1033 = vunpack.c.0.s8 %v1032
          %v1034 = vlaneseq
          %v1035 = vshrl.u32 %v1034, 7
          %v1036 = vsub.s32 %v1033, %v1035
          %v1037 = vrot.slane %v1027, %v1036
          %v1038 = vcombine.high %v1037, %v1037
          %v1040 = vunpack.c.l.s4 1966171168
          %v1041 = vunpack.c.0.s8 %v1040
          %v1042 = vlaneseq
          %v1043 = vshrl.u32 %v1042, 7
          %v1044 = vsub.s32 %v1041, %v1043
          %v1045 = vrot.slane %v1037, %v1044
          %v1047 = vunpack.c.l.s4 1966171168
          %v1048 = vunpack.c.0.s8 %v1047
          %v1049 = vlaneseq
          %v1050 = vshrl.u32 %v1049, 7
          %v1051 = vsub.s32 %v1048, %v1050
          %v1052 = vrot.slane %v1038, %v1051
          %v1053 = vcombine.high %v1045, %v1045
          %v1054 = vcombine.high %v1052, %v1052
          %vm1059 = vcmask 253952
          %1060 = vst.msk [vmem:[%s266] sm:$0x1] %vm1059, %v1045
          %1061 = vst.msk [vmem:[%s266 + $0x20] sm:$0x1] %vm1059, %v1052
          %1062 = vst.msk [vmem:[%s266 + $0x40] sm:$0x1] %vm1059, %v1053
          %1063 = vst.msk [vmem:[%s266 + $0x60] sm:$0x1] %vm1059, %v1054
          %v1064 = vld [vmem:[#allocation7 + $0x18] sm:$0xf]
          %v1065 = vld [vmem:[%s5] sm:$0xff]
          %v1066 = vld [vmem:[%s5 + $0x8] sm:$0xff]
          %v1067 = vld [vmem:[#allocation7 + $0x18] sm:$0xf0]
          %v1068 = vld [vmem:[%s879] sm:$0xff]
          %v1069 = vld [vmem:[%s879 + $0x8] sm:$0xff]
          %v1071 = vrot.slane %v1067, 4
          %v1072 = vsel %vm884, %v1071, 0
          %1074 = vmatprep.subr.mxu0 0.0
          %1075 = vmatpush1.msra.mxu0 0.0
          %1076 = vmatprep.subr.mxu0 0.0
          %1077 = vmatpush1.msra.mxu0 0.0
          %1078 = vmatprep.subr.mxu0 0.0
          %1079 = vmatpush1.msra.mxu0 0.0
          %1080 = vmatprep.subr.mxu0 0.0
          %1081 = vmatpush1.msra.mxu0 0.0
          %1082 = vmatprep.subr.mxu0 0.0
          %1083 = vmatpush1.msra.mxu0 0.0
          %1084 = vmatprep.subr.mxu0 0.0
          %1085 = vmatpush1.msra.mxu0 0.0
          %1086 = vmatprep.subr.mxu0 0.0
          %1087 = vmatpush1.msra.mxu0 0.0
          %1088 = vmatprep.subr.mxu0 0.0
          %1089 = vmatpush1.msra.mxu0 0.0
          %1090 = vmatprep.subr.mxu0 0.0
          %1091 = vmatpush1.msra.mxu0 0.0
          %1092 = vmatprep.subr.mxu0 0.0
          %1093 = vmatpush1.msra.mxu0 0.0
          %1094 = vmatprep.subr.mxu0 0.0
          %1095 = vmatpush1.msra.mxu0 0.0
          %1096 = vmatprep.subr.mxu0 0.0
          %1097 = vmatpush1.msra.mxu0 0.0
          %1098 = vmatprep.subr.mxu0 0.0
          %1099 = vmatpush1.msra.mxu0 0.0
          %1100 = vmatprep.subr.mxu0 0.0
          %1101 = vmatpush1.msra.mxu0 0.0
          %1102 = vmatprep.subr.mxu0 0.0
          %1103 = vmatpush1.msra.mxu0 %v1069
          %1104 = vmatprep.subr.mxu0 0.0
          %1105 = vmatpush1.msra.mxu0 %v1068
          %1106 = vmatprep.subr.mxu0 0.0
          %1107 = vmatpush2.msra.mxu0 0.0
          %1108 = vmatprep.subr.mxu0 0.0
          %1109 = vmatpush2.msra.mxu0 0.0
          %1110 = vmatprep.subr.mxu0 0.0
          %1111 = vmatpush2.msra.mxu0 0.0
          %1112 = vmatprep.subr.mxu0 0.0
          %1113 = vmatpush2.msra.mxu0 0.0
          %1114 = vmatprep.subr.mxu0 0.0
          %1115 = vmatpush2.msra.mxu0 0.0
          %1116 = vmatprep.subr.mxu0 0.0
          %1117 = vmatpush2.msra.mxu0 0.0
          %1118 = vmatprep.subr.mxu0 0.0
          %1119 = vmatpush2.msra.mxu0 0.0
          %1120 = vmatprep.subr.mxu0 0.0
          %1121 = vmatpush2.msra.mxu0 0.0
          %1122 = vmatprep.subr.mxu0 0.0
          %1123 = vmatpush2.msra.mxu0 0.0
          %1124 = vmatprep.subr.mxu0 0.0
          %1125 = vmatpush2.msra.mxu0 0.0
          %1126 = vmatprep.subr.mxu0 0.0
          %1127 = vmatpush2.msra.mxu0 0.0
          %1128 = vmatprep.subr.mxu0 0.0
          %1129 = vmatpush2.msra.mxu0 0.0
          %1130 = vmatprep.subr.mxu0 0.0
          %1131 = vmatpush2.msra.mxu0 0.0
          %1132 = vmatprep.subr.mxu0 0.0
          %1133 = vmatpush2.msra.mxu0 0.0
          %1134 = vmatprep.subr.mxu0 0.0
          %1135 = vmatpush2.msra.mxu0 0.0
          %1136 = vmatprep.subr.mxu0 0.0
          %1137 = vmatpush2.msra.mxu0 0.0
          %1138 = vmatprep.mubr.f32.mxu0 0.0
          %1139 = vmatmul.mubr.f32.gmra.mxu0 %v1072
          %v1140 = vpop.f32.mrf.mxu0
          %v1141 = vadd.f32 0.0, %v1140
          %v1142 = vpop.f32.mrf.mxu0
          %1143 = vdwg.mxu0
          %v1145 = vsel %vm884, %v1064, 0
          %1147 = vmatprep.subr.mxu0 0.0
          %1148 = vmatpush1.msra.mxu0 0.0
          %1149 = vmatprep.subr.mxu0 0.0
          %1150 = vmatpush1.msra.mxu0 0.0
          %1151 = vmatprep.subr.mxu0 0.0
          %1152 = vmatpush1.msra.mxu0 0.0
          %1153 = vmatprep.subr.mxu0 0.0
          %1154 = vmatpush1.msra.mxu0 0.0
          %1155 = vmatprep.subr.mxu0 0.0
          %1156 = vmatpush1.msra.mxu0 0.0
          %1157 = vmatprep.subr.mxu0 0.0
          %1158 = vmatpush1.msra.mxu0 0.0
          %1159 = vmatprep.subr.mxu0 0.0
          %1160 = vmatpush1.msra.mxu0 0.0
          %1161 = vmatprep.subr.mxu0 0.0
          %1162 = vmatpush1.msra.mxu0 0.0
          %1163 = vmatprep.subr.mxu0 0.0
          %1164 = vmatpush1.msra.mxu0 0.0
          %1165 = vmatprep.subr.mxu0 0.0
          %1166 = vmatpush1.msra.mxu0 0.0
          %1167 = vmatprep.subr.mxu0 0.0
          %1168 = vmatpush1.msra.mxu0 0.0
          %1169 = vmatprep.subr.mxu0 0.0
          %1170 = vmatpush1.msra.mxu0 0.0
          %1171 = vmatprep.subr.mxu0 0.0
          %1172 = vmatpush1.msra.mxu0 0.0
          %1173 = vmatprep.subr.mxu0 0.0
          %1174 = vmatpush1.msra.mxu0 0.0
          %1175 = vmatprep.subr.mxu0 0.0
          %1176 = vmatpush1.msra.mxu0 %v1066
          %1177 = vmatprep.subr.mxu0 0.0
          %1178 = vmatpush1.msra.mxu0 %v1065
          %1179 = vmatprep.subr.mxu0 0.0
          %1180 = vmatpush2.msra.mxu0 0.0
          %1181 = vmatprep.subr.mxu0 0.0
          %1182 = vmatpush2.msra.mxu0 0.0
          %1183 = vmatprep.subr.mxu0 0.0
          %1184 = vmatpush2.msra.mxu0 0.0
          %1185 = vmatprep.subr.mxu0 0.0
          %1186 = vmatpush2.msra.mxu0 0.0
          %1187 = vmatprep.subr.mxu0 0.0
          %1188 = vmatpush2.msra.mxu0 0.0
          %1189 = vmatprep.subr.mxu0 0.0
          %1190 = vmatpush2.msra.mxu0 0.0
          %1191 = vmatprep.subr.mxu0 0.0
          %1192 = vmatpush2.msra.mxu0 0.0
          %1193 = vmatprep.subr.mxu0 0.0
          %1194 = vmatpush2.msra.mxu0 0.0
          %1195 = vmatprep.subr.mxu0 0.0
          %1196 = vmatpush2.msra.mxu0 0.0
          %1197 = vmatprep.subr.mxu0 0.0
          %1198 = vmatpush2.msra.mxu0 0.0
          %1199 = vmatprep.subr.mxu0 0.0
          %1200 = vmatpush2.msra.mxu0 0.0
          %1201 = vmatprep.subr.mxu0 0.0
          %1202 = vmatpush2.msra.mxu0 0.0
          %1203 = vmatprep.subr.mxu0 0.0
          %1204 = vmatpush2.msra.mxu0 0.0
          %1205 = vmatprep.subr.mxu0 0.0
          %1206 = vmatpush2.msra.mxu0 0.0
          %1207 = vmatprep.subr.mxu0 0.0
          %1208 = vmatpush2.msra.mxu0 0.0
          %1209 = vmatprep.subr.mxu0 0.0
          %1210 = vmatpush2.msra.mxu0 0.0
          %1211 = vmatprep.mubr.f32.mxu0 0.0
          %1212 = vmatmul.mubr.f32.gmra.mxu0 %v1145
          %v1213 = vpop.f32.mrf.mxu0
          %v1214 = vadd.f32 %v1141, %v1213
          %v1215 = vpop.f32.mrf.mxu0
          %1216 = vdwg.mxu0
          %v1219 = vunpack.c.l.s4 1966171168
          %v1220 = vunpack.c.0.s8 %v1219
          %v1221 = vlaneseq
          %v1222 = vshrl.u32 %v1221, 7
          %v1223 = vsub.s32 %v1220, %v1222
          %v1224 = vrot.slane %v1214, %v1223
          %v1225 = vcombine.high %v1224, %v1224
          %v1227 = vunpack.c.l.s4 1966171168
          %v1228 = vunpack.c.0.s8 %v1227
          %v1229 = vlaneseq
          %v1230 = vshrl.u32 %v1229, 7
          %v1231 = vsub.s32 %v1228, %v1230
          %v1232 = vrot.slane %v1224, %v1231
          %v1234 = vunpack.c.l.s4 1966171168
          %v1235 = vunpack.c.0.s8 %v1234
          %v1236 = vlaneseq
          %v1237 = vshrl.u32 %v1236, 7
          %v1238 = vsub.s32 %v1235, %v1237
          %v1239 = vrot.slane %v1225, %v1238
          %v1240 = vcombine.high %v1232, %v1232
          %v1241 = vcombine.high %v1239, %v1239
          %1246 = vst.msk [vmem:[%s266 + $0x1] sm:$0x1] %vm1059, %v1232
          %1247 = vst.msk [vmem:[%s266 + $0x21] sm:$0x1] %vm1059, %v1239
          %1248 = vst.msk [vmem:[%s266 + $0x41] sm:$0x1] %vm1059, %v1240
          %1249 = vst.msk [vmem:[%s266 + $0x61] sm:$0x1] %vm1059, %v1241
          %v1250 = vld [vmem:[#allocation7] sm:$0xf]
          %v1251 = vld [vmem:[%s5] sm:$0xff]
          %v1252 = vld [vmem:[%s5 + $0x8] sm:$0xff]
          %v1253 = vld [vmem:[#allocation7] sm:$0xf0]
          %v1254 = vld [vmem:[%s879] sm:$0xff]
          %v1255 = vld [vmem:[%s879 + $0x8] sm:$0xff]
          %v1257 = vrot.slane %v1253, 4
          %1258 = vrot.lane.b32.xlu0 %v1257, 110
          %v1259 = vpop.permute.xlu0 %1258
          %v1260 = vsel %vm884, %v1259, 0
          %1262 = vmatprep.subr.mxu0 0.0
          %1263 = vmatpush1.msra.mxu0 0.0
          %1264 = vmatprep.subr.mxu0 0.0
          %1265 = vmatpush1.msra.mxu0 0.0
          %1266 = vmatprep.subr.mxu0 0.0
          %1267 = vmatpush1.msra.mxu0 0.0
          %1268 = vmatprep.subr.mxu0 0.0
          %1269 = vmatpush1.msra.mxu0 0.0
          %1270 = vmatprep.subr.mxu0 0.0
          %1271 = vmatpush1.msra.mxu0 0.0
          %1272 = vmatprep.subr.mxu0 0.0
          %1273 = vmatpush1.msra.mxu0 0.0
          %1274 = vmatprep.subr.mxu0 0.0
          %1275 = vmatpush1.msra.mxu0 0.0
          %1276 = vmatprep.subr.mxu0 0.0
          %1277 = vmatpush1.msra.mxu0 0.0
          %1278 = vmatprep.subr.mxu0 0.0
          %1279 = vmatpush1.msra.mxu0 0.0
          %1280 = vmatprep.subr.mxu0 0.0
          %1281 = vmatpush1.msra.mxu0 0.0
          %1282 = vmatprep.subr.mxu0 0.0
          %1283 = vmatpush1.msra.mxu0 0.0
          %1284 = vmatprep.subr.mxu0 0.0
          %1285 = vmatpush1.msra.mxu0 0.0
          %1286 = vmatprep.subr.mxu0 0.0
          %1287 = vmatpush1.msra.mxu0 0.0
          %1288 = vmatprep.subr.mxu0 0.0
          %1289 = vmatpush1.msra.mxu0 0.0
          %1290 = vmatprep.subr.mxu0 0.0
          %1291 = vmatpush1.msra.mxu0 %v1255
          %1292 = vmatprep.subr.mxu0 0.0
          %1293 = vmatpush1.msra.mxu0 %v1254
          %1294 = vmatprep.subr.mxu0 0.0
          %1295 = vmatpush2.msra.mxu0 0.0
          %1296 = vmatprep.subr.mxu0 0.0
          %1297 = vmatpush2.msra.mxu0 0.0
          %1298 = vmatprep.subr.mxu0 0.0
          %1299 = vmatpush2.msra.mxu0 0.0
          %1300 = vmatprep.subr.mxu0 0.0
          %1301 = vmatpush2.msra.mxu0 0.0
          %1302 = vmatprep.subr.mxu0 0.0
          %1303 = vmatpush2.msra.mxu0 0.0
          %1304 = vmatprep.subr.mxu0 0.0
          %1305 = vmatpush2.msra.mxu0 0.0
          %1306 = vmatprep.subr.mxu0 0.0
          %1307 = vmatpush2.msra.mxu0 0.0
          %1308 = vmatprep.subr.mxu0 0.0
          %1309 = vmatpush2.msra.mxu0 0.0
          %1310 = vmatprep.subr.mxu0 0.0
          %1311 = vmatpush2.msra.mxu0 0.0
          %1312 = vmatprep.subr.mxu0 0.0
          %1313 = vmatpush2.msra.mxu0 0.0
          %1314 = vmatprep.subr.mxu0 0.0
          %1315 = vmatpush2.msra.mxu0 0.0
          %1316 = vmatprep.subr.mxu0 0.0
          %1317 = vmatpush2.msra.mxu0 0.0
          %1318 = vmatprep.subr.mxu0 0.0
          %1319 = vmatpush2.msra.mxu0 0.0
          %1320 = vmatprep.subr.mxu0 0.0
          %1321 = vmatpush2.msra.mxu0 0.0
          %1322 = vmatprep.subr.mxu0 0.0
          %1323 = vmatpush2.msra.mxu0 0.0
          %1324 = vmatprep.subr.mxu0 0.0
          %1325 = vmatpush2.msra.mxu0 0.0
          %1326 = vmatprep.mubr.f32.mxu0 0.0
          %1327 = vmatmul.mubr.f32.gmra.mxu0 %v1260
          %v1328 = vpop.f32.mrf.mxu0
          %v1329 = vadd.f32 0.0, %v1328
          %v1330 = vpop.f32.mrf.mxu0
          %1331 = vdwg.mxu0
          %1333 = vrot.lane.b32.xlu0 %v1250, 110
          %v1334 = vpop.permute.xlu0 %1333
          %v1335 = vsel %vm884, %v1334, 0
          %1337 = vmatprep.subr.mxu0 0.0
          %1338 = vmatpush1.msra.mxu0 0.0
          %1339 = vmatprep.subr.mxu0 0.0
          %1340 = vmatpush1.msra.mxu0 0.0
          %1341 = vmatprep.subr.mxu0 0.0
          %1342 = vmatpush1.msra.mxu0 0.0
          %1343 = vmatprep.subr.mxu0 0.0
          %1344 = vmatpush1.msra.mxu0 0.0
          %1345 = vmatprep.subr.mxu0 0.0
          %1346 = vmatpush1.msra.mxu0 0.0
          %1347 = vmatprep.subr.mxu0 0.0
          %1348 = vmatpush1.msra.mxu0 0.0
          %1349 = vmatprep.subr.mxu0 0.0
          %1350 = vmatpush1.msra.mxu0 0.0
          %1351 = vmatprep.subr.mxu0 0.0
          %1352 = vmatpush1.msra.mxu0 0.0
          %1353 = vmatprep.subr.mxu0 0.0
          %1354 = vmatpush1.msra.mxu0 0.0
          %1355 = vmatprep.subr.mxu0 0.0
          %1356 = vmatpush1.msra.mxu0 0.0
          %1357 = vmatprep.subr.mxu0 0.0
          %1358 = vmatpush1.msra.mxu0 0.0
          %1359 = vmatprep.subr.mxu0 0.0
          %1360 = vmatpush1.msra.mxu0 0.0
          %1361 = vmatprep.subr.mxu0 0.0
          %1362 = vmatpush1.msra.mxu0 0.0
          %1363 = vmatprep.subr.mxu0 0.0
          %1364 = vmatpush1.msra.mxu0 0.0
          %1365 = vmatprep.subr.mxu0 0.0
          %1366 = vmatpush1.msra.mxu0 %v1252
          %1367 = vmatprep.subr.mxu0 0.0
          %1368 = vmatpush1.msra.mxu0 %v1251
          %1369 = vmatprep.subr.mxu0 0.0
          %1370 = vmatpush2.msra.mxu0 0.0
          %1371 = vmatprep.subr.mxu0 0.0
          %1372 = vmatpush2.msra.mxu0 0.0
          %1373 = vmatprep.subr.mxu0 0.0
          %1374 = vmatpush2.msra.mxu0 0.0
          %1375 = vmatprep.subr.mxu0 0.0
          %1376 = vmatpush2.msra.mxu0 0.0
          %1377 = vmatprep.subr.mxu0 0.0
          %1378 = vmatpush2.msra.mxu0 0.0
          %1379 = vmatprep.subr.mxu0 0.0
          %1380 = vmatpush2.msra.mxu0 0.0
          %1381 = vmatprep.subr.mxu0 0.0
          %1382 = vmatpush2.msra.mxu0 0.0
          %1383 = vmatprep.subr.mxu0 0.0
          %1384 = vmatpush2.msra.mxu0 0.0
          %1385 = vmatprep.subr.mxu0 0.0
          %1386 = vmatpush2.msra.mxu0 0.0
          %1387 = vmatprep.subr.mxu0 0.0
          %1388 = vmatpush2.msra.mxu0 0.0
          %1389 = vmatprep.subr.mxu0 0.0
          %1390 = vmatpush2.msra.mxu0 0.0
          %1391 = vmatprep.subr.mxu0 0.0
          %1392 = vmatpush2.msra.mxu0 0.0
          %1393 = vmatprep.subr.mxu0 0.0
          %1394 = vmatpush2.msra.mxu0 0.0
          %1395 = vmatprep.subr.mxu0 0.0
          %1396 = vmatpush2.msra.mxu0 0.0
          %1397 = vmatprep.subr.mxu0 0.0
          %1398 = vmatpush2.msra.mxu0 0.0
          %1399 = vmatprep.subr.mxu0 0.0
          %1400 = vmatpush2.msra.mxu0 0.0
          %1401 = vmatprep.mubr.f32.mxu0 0.0
          %1402 = vmatmul.mubr.f32.gmra.mxu0 %v1335
          %v1403 = vpop.f32.mrf.mxu0
          %v1404 = vadd.f32 %v1329, %v1403
          %v1405 = vpop.f32.mrf.mxu0
          %1406 = vdwg.mxu0
          %v1409 = vunpack.c.l.s4 1966171168
          %v1410 = vunpack.c.0.s8 %v1409
          %v1411 = vlaneseq
          %v1412 = vshrl.u32 %v1411, 7
          %v1413 = vsub.s32 %v1410, %v1412
          %v1414 = vrot.slane %v1404, %v1413
          %v1415 = vcombine.high %v1414, %v1414
          %v1417 = vunpack.c.l.s4 1966171168
          %v1418 = vunpack.c.0.s8 %v1417
          %v1419 = vlaneseq
          %v1420 = vshrl.u32 %v1419, 7
          %v1421 = vsub.s32 %v1418, %v1420
          %v1422 = vrot.slane %v1414, %v1421
          %v1424 = vunpack.c.l.s4 1966171168
          %v1425 = vunpack.c.0.s8 %v1424
          %v1426 = vlaneseq
          %v1427 = vshrl.u32 %v1426, 7
          %v1428 = vsub.s32 %v1425, %v1427
          %v1429 = vrot.slane %v1415, %v1428
          %v1430 = vcombine.high %v1422, %v1422
          %v1431 = vcombine.high %v1429, %v1429
          %1436 = vst.msk [vmem:[%s266 + $0x2] sm:$0x1] %vm1059, %v1422
          %1437 = vst.msk [vmem:[%s266 + $0x22] sm:$0x1] %vm1059, %v1429
          %1438 = vst.msk [vmem:[%s266 + $0x42] sm:$0x1] %vm1059, %v1430
          %1439 = vst.msk [vmem:[%s266 + $0x62] sm:$0x1] %vm1059, %v1431
          %v1440 = vld [vmem:[#allocation7 + $0x18] sm:$0xf]
          %v1441 = vld [vmem:[%s5] sm:$0xff]
          %v1442 = vld [vmem:[%s5 + $0x8] sm:$0xff]
          %v1443 = vld [vmem:[#allocation7 + $0x18] sm:$0xf0]
          %v1444 = vld [vmem:[%s879] sm:$0xff]
          %v1445 = vld [vmem:[%s879 + $0x8] sm:$0xff]
          %v1447 = vrot.slane %v1443, 4
          %1448 = vrot.lane.b32.xlu0 %v1447, 110
          %v1449 = vpop.permute.xlu0 %1448
          %v1450 = vsel %vm884, %v1449, 0
          %1452 = vmatprep.subr.mxu0 0.0
          %1453 = vmatpush1.msra.mxu0 0.0
          %1454 = vmatprep.subr.mxu0 0.0
          %1455 = vmatpush1.msra.mxu0 0.0
          %1456 = vmatprep.subr.mxu0 0.0
          %1457 = vmatpush1.msra.mxu0 0.0
          %1458 = vmatprep.subr.mxu0 0.0
          %1459 = vmatpush1.msra.mxu0 0.0
          %1460 = vmatprep.subr.mxu0 0.0
          %1461 = vmatpush1.msra.mxu0 0.0
          %1462 = vmatprep.subr.mxu0 0.0
          %1463 = vmatpush1.msra.mxu0 0.0
          %1464 = vmatprep.subr.mxu0 0.0
          %1465 = vmatpush1.msra.mxu0 0.0
          %1466 = vmatprep.subr.mxu0 0.0
          %1467 = vmatpush1.msra.mxu0 0.0
          %1468 = vmatprep.subr.mxu0 0.0
          %1469 = vmatpush1.msra.mxu0 0.0
          %1470 = vmatprep.subr.mxu0 0.0
          %1471 = vmatpush1.msra.mxu0 0.0
          %1472 = vmatprep.subr.mxu0 0.0
          %1473 = vmatpush1.msra.mxu0 0.0
          %1474 = vmatprep.subr.mxu0 0.0
          %1475 = vmatpush1.msra.mxu0 0.0
          %1476 = vmatprep.subr.mxu0 0.0
          %1477 = vmatpush1.msra.mxu0 0.0
          %1478 = vmatprep.subr.mxu0 0.0
          %1479 = vmatpush1.msra.mxu0 0.0
          %1480 = vmatprep.subr.mxu0 0.0
          %1481 = vmatpush1.msra.mxu0 %v1445
          %1482 = vmatprep.subr.mxu0 0.0
          %1483 = vmatpush1.msra.mxu0 %v1444
          %1484 = vmatprep.subr.mxu0 0.0
          %1485 = vmatpush2.msra.mxu0 0.0
          %1486 = vmatprep.subr.mxu0 0.0
          %1487 = vmatpush2.msra.mxu0 0.0
          %1488 = vmatprep.subr.mxu0 0.0
          %1489 = vmatpush2.msra.mxu0 0.0
          %1490 = vmatprep.subr.mxu0 0.0
          %1491 = vmatpush2.msra.mxu0 0.0
          %1492 = vmatprep.subr.mxu0 0.0
          %1493 = vmatpush2.msra.mxu0 0.0
          %1494 = vmatprep.subr.mxu0 0.0
          %1495 = vmatpush2.msra.mxu0 0.0
          %1496 = vmatprep.subr.mxu0 0.0
          %1497 = vmatpush2.msra.mxu0 0.0
          %1498 = vmatprep.subr.mxu0 0.0
          %1499 = vmatpush2.msra.mxu0 0.0
          %1500 = vmatprep.subr.mxu0 0.0
          %1501 = vmatpush2.msra.mxu0 0.0
          %1502 = vmatprep.subr.mxu0 0.0
          %1503 = vmatpush2.msra.mxu0 0.0
          %1504 = vmatprep.subr.mxu0 0.0
          %1505 = vmatpush2.msra.mxu0 0.0
          %1506 = vmatprep.subr.mxu0 0.0
          %1507 = vmatpush2.msra.mxu0 0.0
          %1508 = vmatprep.subr.mxu0 0.0
          %1509 = vmatpush2.msra.mxu0 0.0
          %1510 = vmatprep.subr.mxu0 0.0
          %1511 = vmatpush2.msra.mxu0 0.0
          %1512 = vmatprep.subr.mxu0 0.0
          %1513 = vmatpush2.msra.mxu0 0.0
          %1514 = vmatprep.subr.mxu0 0.0
          %1515 = vmatpush2.msra.mxu0 0.0
          %1516 = vmatprep.mubr.f32.mxu0 0.0
          %1517 = vmatmul.mubr.f32.gmra.mxu0 %v1450
          %v1518 = vpop.f32.mrf.mxu0
          %v1519 = vadd.f32 0.0, %v1518
          %v1520 = vpop.f32.mrf.mxu0
          %1521 = vdwg.mxu0
          %1523 = vrot.lane.b32.xlu0 %v1440, 110
          %v1524 = vpop.permute.xlu0 %1523
          %v1525 = vsel %vm884, %v1524, 0
          %1527 = vmatprep.subr.mxu0 0.0
          %1528 = vmatpush1.msra.mxu0 0.0
          %1529 = vmatprep.subr.mxu0 0.0
          %1530 = vmatpush1.msra.mxu0 0.0
          %1531 = vmatprep.subr.mxu0 0.0
          %1532 = vmatpush1.msra.mxu0 0.0
          %1533 = vmatprep.subr.mxu0 0.0
          %1534 = vmatpush1.msra.mxu0 0.0
          %1535 = vmatprep.subr.mxu0 0.0
          %1536 = vmatpush1.msra.mxu0 0.0
          %1537 = vmatprep.subr.mxu0 0.0
          %1538 = vmatpush1.msra.mxu0 0.0
          %1539 = vmatprep.subr.mxu0 0.0
          %1540 = vmatpush1.msra.mxu0 0.0
          %1541 = vmatprep.subr.mxu0 0.0
          %1542 = vmatpush1.msra.mxu0 0.0
          %1543 = vmatprep.subr.mxu0 0.0
          %1544 = vmatpush1.msra.mxu0 0.0
          %1545 = vmatprep.subr.mxu0 0.0
          %1546 = vmatpush1.msra.mxu0 0.0
          %1547 = vmatprep.subr.mxu0 0.0
          %1548 = vmatpush1.msra.mxu0 0.0
          %1549 = vmatprep.subr.mxu0 0.0
          %1550 = vmatpush1.msra.mxu0 0.0
          %1551 = vmatprep.subr.mxu0 0.0
          %1552 = vmatpush1.msra.mxu0 0.0
          %1553 = vmatprep.subr.mxu0 0.0
          %1554 = vmatpush1.msra.mxu0 0.0
          %1555 = vmatprep.subr.mxu0 0.0
          %1556 = vmatpush1.msra.mxu0 %v1442
          %1557 = vmatprep.subr.mxu0 0.0
          %1558 = vmatpush1.msra.mxu0 %v1441
          %1559 = vmatprep.subr.mxu0 0.0
          %1560 = vmatpush2.msra.mxu0 0.0
          %1561 = vmatprep.subr.mxu0 0.0
          %1562 = vmatpush2.msra.mxu0 0.0
          %1563 = vmatprep.subr.mxu0 0.0
          %1564 = vmatpush2.msra.mxu0 0.0
          %1565 = vmatprep.subr.mxu0 0.0
          %1566 = vmatpush2.msra.mxu0 0.0
          %1567 = vmatprep.subr.mxu0 0.0
          %1568 = vmatpush2.msra.mxu0 0.0
          %1569 = vmatprep.subr.mxu0 0.0
          %1570 = vmatpush2.msra.mxu0 0.0
          %1571 = vmatprep.subr.mxu0 0.0
          %1572 = vmatpush2.msra.mxu0 0.0
          %1573 = vmatprep.subr.mxu0 0.0
          %1574 = vmatpush2.msra.mxu0 0.0
          %1575 = vmatprep.subr.mxu0 0.0
          %1576 = vmatpush2.msra.mxu0 0.0
          %1577 = vmatprep.subr.mxu0 0.0
          %1578 = vmatpush2.msra.mxu0 0.0
          %1579 = vmatprep.subr.mxu0 0.0
          %1580 = vmatpush2.msra.mxu0 0.0
          %1581 = vmatprep.subr.mxu0 0.0
          %1582 = vmatpush2.msra.mxu0 0.0
          %1583 = vmatprep.subr.mxu0 0.0
          %1584 = vmatpush2.msra.mxu0 0.0
          %1585 = vmatprep.subr.mxu0 0.0
          %1586 = vmatpush2.msra.mxu0 0.0
          %1587 = vmatprep.subr.mxu0 0.0
          %1588 = vmatpush2.msra.mxu0 0.0
          %1589 = vmatprep.subr.mxu0 0.0
          %1590 = vmatpush2.msra.mxu0 0.0
          %1591 = vmatprep.mubr.f32.mxu0 0.0
          %1592 = vmatmul.mubr.f32.gmra.mxu0 %v1525
          %v1593 = vpop.f32.mrf.mxu0
          %v1594 = vadd.f32 %v1519, %v1593
          %v1595 = vpop.f32.mrf.mxu0
          %1596 = vdwg.mxu0
          %v1599 = vunpack.c.l.s4 1966171168
          %v1600 = vunpack.c.0.s8 %v1599
          %v1601 = vlaneseq
          %v1602 = vshrl.u32 %v1601, 7
          %v1603 = vsub.s32 %v1600, %v1602
          %v1604 = vrot.slane %v1594, %v1603
          %v1605 = vcombine.high %v1604, %v1604
          %v1607 = vunpack.c.l.s4 1966171168
          %v1608 = vunpack.c.0.s8 %v1607
          %v1609 = vlaneseq
          %v1610 = vshrl.u32 %v1609, 7
          %v1611 = vsub.s32 %v1608, %v1610
          %v1612 = vrot.slane %v1604, %v1611
          %v1614 = vunpack.c.l.s4 1966171168
          %v1615 = vunpack.c.0.s8 %v1614
          %v1616 = vlaneseq
          %v1617 = vshrl.u32 %v1616, 7
          %v1618 = vsub.s32 %v1615, %v1617
          %v1619 = vrot.slane %v1605, %v1618
          %v1620 = vcombine.high %v1612, %v1612
          %v1621 = vcombine.high %v1619, %v1619
          %1626 = vst.msk [vmem:[%s266 + $0x3] sm:$0x1] %vm1059, %v1612
          %1627 = vst.msk [vmem:[%s266 + $0x23] sm:$0x1] %vm1059, %v1619
          %1628 = vst.msk [vmem:[%s266 + $0x43] sm:$0x1] %vm1059, %v1620
          %1629 = vst.msk [vmem:[%s266 + $0x63] sm:$0x1] %vm1059, %v1621
          %v1630 = vld [vmem:[#allocation7] sm:$0xf]
          %v1631 = vld [vmem:[%s5] sm:$0xff]
          %v1632 = vld [vmem:[%s5 + $0x8] sm:$0xff]
          %v1633 = vld [vmem:[#allocation7] sm:$0xf0]
          %v1634 = vld [vmem:[%s879] sm:$0xff]
          %v1635 = vld [vmem:[%s879 + $0x8] sm:$0xff]
          %v1637 = vrot.slane %v1633, 4
          %1638 = vrot.lane.b32.xlu0 %v1637, 92
          %v1639 = vpop.permute.xlu0 %1638
          %v1640 = vsel %vm884, %v1639, 0
          %1642 = vmatprep.subr.mxu0 0.0
          %1643 = vmatpush1.msra.mxu0 0.0
          %1644 = vmatprep.subr.mxu0 0.0
          %1645 = vmatpush1.msra.mxu0 0.0
          %1646 = vmatprep.subr.mxu0 0.0
          %1647 = vmatpush1.msra.mxu0 0.0
          %1648 = vmatprep.subr.mxu0 0.0
          %1649 = vmatpush1.msra.mxu0 0.0
          %1650 = vmatprep.subr.mxu0 0.0
          %1651 = vmatpush1.msra.mxu0 0.0
          %1652 = vmatprep.subr.mxu0 0.0
          %1653 = vmatpush1.msra.mxu0 0.0
          %1654 = vmatprep.subr.mxu0 0.0
          %1655 = vmatpush1.msra.mxu0 0.0
          %1656 = vmatprep.subr.mxu0 0.0
          %1657 = vmatpush1.msra.mxu0 0.0
          %1658 = vmatprep.subr.mxu0 0.0
          %1659 = vmatpush1.msra.mxu0 0.0
          %1660 = vmatprep.subr.mxu0 0.0
          %1661 = vmatpush1.msra.mxu0 0.0
          %1662 = vmatprep.subr.mxu0 0.0
          %1663 = vmatpush1.msra.mxu0 0.0
          %1664 = vmatprep.subr.mxu0 0.0
          %1665 = vmatpush1.msra.mxu0 0.0
          %1666 = vmatprep.subr.mxu0 0.0
          %1667 = vmatpush1.msra.mxu0 0.0
          %1668 = vmatprep.subr.mxu0 0.0
          %1669 = vmatpush1.msra.mxu0 0.0
          %1670 = vmatprep.subr.mxu0 0.0
          %1671 = vmatpush1.msra.mxu0 %v1635
          %1672 = vmatprep.subr.mxu0 0.0
          %1673 = vmatpush1.msra.mxu0 %v1634
          %1674 = vmatprep.subr.mxu0 0.0
          %1675 = vmatpush2.msra.mxu0 0.0
          %1676 = vmatprep.subr.mxu0 0.0
          %1677 = vmatpush2.msra.mxu0 0.0
          %1678 = vmatprep.subr.mxu0 0.0
          %1679 = vmatpush2.msra.mxu0 0.0
          %1680 = vmatprep.subr.mxu0 0.0
          %1681 = vmatpush2.msra.mxu0 0.0
          %1682 = vmatprep.subr.mxu0 0.0
          %1683 = vmatpush2.msra.mxu0 0.0
          %1684 = vmatprep.subr.mxu0 0.0
          %1685 = vmatpush2.msra.mxu0 0.0
          %1686 = vmatprep.subr.mxu0 0.0
          %1687 = vmatpush2.msra.mxu0 0.0
          %1688 = vmatprep.subr.mxu0 0.0
          %1689 = vmatpush2.msra.mxu0 0.0
          %1690 = vmatprep.subr.mxu0 0.0
          %1691 = vmatpush2.msra.mxu0 0.0
          %1692 = vmatprep.subr.mxu0 0.0
          %1693 = vmatpush2.msra.mxu0 0.0
          %1694 = vmatprep.subr.mxu0 0.0
          %1695 = vmatpush2.msra.mxu0 0.0
          %1696 = vmatprep.subr.mxu0 0.0
          %1697 = vmatpush2.msra.mxu0 0.0
          %1698 = vmatprep.subr.mxu0 0.0
          %1699 = vmatpush2.msra.mxu0 0.0
          %1700 = vmatprep.subr.mxu0 0.0
          %1701 = vmatpush2.msra.mxu0 0.0
          %1702 = vmatprep.subr.mxu0 0.0
          %1703 = vmatpush2.msra.mxu0 0.0
          %1704 = vmatprep.subr.mxu0 0.0
          %1705 = vmatpush2.msra.mxu0 0.0
          %1706 = vmatprep.mubr.f32.mxu0 0.0
          %1707 = vmatmul.mubr.f32.gmra.mxu0 %v1640
          %v1708 = vpop.f32.mrf.mxu0
          %v1709 = vadd.f32 0.0, %v1708
          %v1710 = vpop.f32.mrf.mxu0
          %1711 = vdwg.mxu0
          %1713 = vrot.lane.b32.xlu0 %v1630, 92
          %v1714 = vpop.permute.xlu0 %1713
          %v1715 = vsel %vm884, %v1714, 0
          %1717 = vmatprep.subr.mxu0 0.0
          %1718 = vmatpush1.msra.mxu0 0.0
          %1719 = vmatprep.subr.mxu0 0.0
          %1720 = vmatpush1.msra.mxu0 0.0
          %1721 = vmatprep.subr.mxu0 0.0
          %1722 = vmatpush1.msra.mxu0 0.0
          %1723 = vmatprep.subr.mxu0 0.0
          %1724 = vmatpush1.msra.mxu0 0.0
          %1725 = vmatprep.subr.mxu0 0.0
          %1726 = vmatpush1.msra.mxu0 0.0
          %1727 = vmatprep.subr.mxu0 0.0
          %1728 = vmatpush1.msra.mxu0 0.0
          %1729 = vmatprep.subr.mxu0 0.0
          %1730 = vmatpush1.msra.mxu0 0.0
          %1731 = vmatprep.subr.mxu0 0.0
          %1732 = vmatpush1.msra.mxu0 0.0
          %1733 = vmatprep.subr.mxu0 0.0
          %1734 = vmatpush1.msra.mxu0 0.0
          %1735 = vmatprep.subr.mxu0 0.0
          %1736 = vmatpush1.msra.mxu0 0.0
          %1737 = vmatprep.subr.mxu0 0.0
          %1738 = vmatpush1.msra.mxu0 0.0
          %1739 = vmatprep.subr.mxu0 0.0
          %1740 = vmatpush1.msra.mxu0 0.0
          %1741 = vmatprep.subr.mxu0 0.0
          %1742 = vmatpush1.msra.mxu0 0.0
          %1743 = vmatprep.subr.mxu0 0.0
          %1744 = vmatpush1.msra.mxu0 0.0
          %1745 = vmatprep.subr.mxu0 0.0
          %1746 = vmatpush1.msra.mxu0 %v1632
          %1747 = vmatprep.subr.mxu0 0.0
          %1748 = vmatpush1.msra.mxu0 %v1631
          %1749 = vmatprep.subr.mxu0 0.0
          %1750 = vmatpush2.msra.mxu0 0.0
          %1751 = vmatprep.subr.mxu0 0.0
          %1752 = vmatpush2.msra.mxu0 0.0
          %1753 = vmatprep.subr.mxu0 0.0
          %1754 = vmatpush2.msra.mxu0 0.0
          %1755 = vmatprep.subr.mxu0 0.0
          %1756 = vmatpush2.msra.mxu0 0.0
          %1757 = vmatprep.subr.mxu0 0.0
          %1758 = vmatpush2.msra.mxu0 0.0
          %1759 = vmatprep.subr.mxu0 0.0
          %1760 = vmatpush2.msra.mxu0 0.0
          %1761 = vmatprep.subr.mxu0 0.0
          %1762 = vmatpush2.msra.mxu0 0.0
          %1763 = vmatprep.subr.mxu0 0.0
          %1764 = vmatpush2.msra.mxu0 0.0
          %1765 = vmatprep.subr.mxu0 0.0
          %1766 = vmatpush2.msra.mxu0 0.0
          %1767 = vmatprep.subr.mxu0 0.0
          %1768 = vmatpush2.msra.mxu0 0.0
          %1769 = vmatprep.subr.mxu0 0.0
          %1770 = vmatpush2.msra.mxu0 0.0
          %1771 = vmatprep.subr.mxu0 0.0
          %1772 = vmatpush2.msra.mxu0 0.0
          %1773 = vmatprep.subr.mxu0 0.0
          %1774 = vmatpush2.msra.mxu0 0.0
          %1775 = vmatprep.subr.mxu0 0.0
          %1776 = vmatpush2.msra.mxu0 0.0
          %1777 = vmatprep.subr.mxu0 0.0
          %1778 = vmatpush2.msra.mxu0 0.0
          %1779 = vmatprep.subr.mxu0 0.0
          %1780 = vmatpush2.msra.mxu0 0.0
          %1781 = vmatprep.mubr.f32.mxu0 0.0
          %1782 = vmatmul.mubr.f32.gmra.mxu0 %v1715
          %v1783 = vpop.f32.mrf.mxu0
          %v1784 = vadd.f32 %v1709, %v1783
          %v1785 = vpop.f32.mrf.mxu0
          %1786 = vdwg.mxu0
          %v1789 = vunpack.c.l.s4 1966171168
          %v1790 = vunpack.c.0.s8 %v1789
          %v1791 = vlaneseq
          %v1792 = vshrl.u32 %v1791, 7
          %v1793 = vsub.s32 %v1790, %v1792
          %v1794 = vrot.slane %v1784, %v1793
          %v1795 = vcombine.high %v1794, %v1794
          %v1797 = vunpack.c.l.s4 1966171168
          %v1798 = vunpack.c.0.s8 %v1797
          %v1799 = vlaneseq
          %v1800 = vshrl.u32 %v1799, 7
          %v1801 = vsub.s32 %v1798, %v1800
          %v1802 = vrot.slane %v1794, %v1801
          %v1804 = vunpack.c.l.s4 1966171168
          %v1805 = vunpack.c.0.s8 %v1804
          %v1806 = vlaneseq
          %v1807 = vshrl.u32 %v1806, 7
          %v1808 = vsub.s32 %v1805, %v1807
          %v1809 = vrot.slane %v1795, %v1808
          %v1810 = vcombine.high %v1802, %v1802
          %v1811 = vcombine.high %v1809, %v1809
          %1816 = vst.msk [vmem:[%s266 + $0x4] sm:$0x1] %vm1059, %v1802
          %1817 = vst.msk [vmem:[%s266 + $0x24] sm:$0x1] %vm1059, %v1809
          %1818 = vst.msk [vmem:[%s266 + $0x44] sm:$0x1] %vm1059, %v1810
          %1819 = vst.msk [vmem:[%s266 + $0x64] sm:$0x1] %vm1059, %v1811
          %v1820 = vld [vmem:[#allocation7 + $0x18] sm:$0xf]
          %v1821 = vld [vmem:[%s5] sm:$0xff]
          %v1822 = vld [vmem:[%s5 + $0x8] sm:$0xff]
          %v1823 = vld [vmem:[#allocation7 + $0x18] sm:$0xf0]
          %v1824 = vld [vmem:[%s879] sm:$0xff]
          %v1825 = vld [vmem:[%s879 + $0x8] sm:$0xff]
          %v1827 = vrot.slane %v1823, 4
          %1828 = vrot.lane.b32.xlu0 %v1827, 92
          %v1829 = vpop.permute.xlu0 %1828
          %v1830 = vsel %vm884, %v1829, 0
          %1832 = vmatprep.subr.mxu0 0.0
          %1833 = vmatpush1.msra.mxu0 0.0
          %1834 = vmatprep.subr.mxu0 0.0
          %1835 = vmatpush1.msra.mxu0 0.0
          %1836 = vmatprep.subr.mxu0 0.0
          %1837 = vmatpush1.msra.mxu0 0.0
          %1838 = vmatprep.subr.mxu0 0.0
          %1839 = vmatpush1.msra.mxu0 0.0
          %1840 = vmatprep.subr.mxu0 0.0
          %1841 = vmatpush1.msra.mxu0 0.0
          %1842 = vmatprep.subr.mxu0 0.0
          %1843 = vmatpush1.msra.mxu0 0.0
          %1844 = vmatprep.subr.mxu0 0.0
          %1845 = vmatpush1.msra.mxu0 0.0
          %1846 = vmatprep.subr.mxu0 0.0
          %1847 = vmatpush1.msra.mxu0 0.0
          %1848 = vmatprep.subr.mxu0 0.0
          %1849 = vmatpush1.msra.mxu0 0.0
          %1850 = vmatprep.subr.mxu0 0.0
          %1851 = vmatpush1.msra.mxu0 0.0
          %1852 = vmatprep.subr.mxu0 0.0
          %1853 = vmatpush1.msra.mxu0 0.0
          %1854 = vmatprep.subr.mxu0 0.0
          %1855 = vmatpush1.msra.mxu0 0.0
          %1856 = vmatprep.subr.mxu0 0.0
          %1857 = vmatpush1.msra.mxu0 0.0
          %1858 = vmatprep.subr.mxu0 0.0
          %1859 = vmatpush1.msra.mxu0 0.0
          %1860 = vmatprep.subr.mxu0 0.0
          %1861 = vmatpush1.msra.mxu0 %v1825
          %1862 = vmatprep.subr.mxu0 0.0
          %1863 = vmatpush1.msra.mxu0 %v1824
          %1864 = vmatprep.subr.mxu0 0.0
          %1865 = vmatpush2.msra.mxu0 0.0
          %1866 = vmatprep.subr.mxu0 0.0
          %1867 = vmatpush2.msra.mxu0 0.0
          %1868 = vmatprep.subr.mxu0 0.0
          %1869 = vmatpush2.msra.mxu0 0.0
          %1870 = vmatprep.subr.mxu0 0.0
          %1871 = vmatpush2.msra.mxu0 0.0
          %1872 = vmatprep.subr.mxu0 0.0
          %1873 = vmatpush2.msra.mxu0 0.0
          %1874 = vmatprep.subr.mxu0 0.0
          %1875 = vmatpush2.msra.mxu0 0.0
          %1876 = vmatprep.subr.mxu0 0.0
          %1877 = vmatpush2.msra.mxu0 0.0
          %1878 = vmatprep.subr.mxu0 0.0
          %1879 = vmatpush2.msra.mxu0 0.0
          %1880 = vmatprep.subr.mxu0 0.0
          %1881 = vmatpush2.msra.mxu0 0.0
          %1882 = vmatprep.subr.mxu0 0.0
          %1883 = vmatpush2.msra.mxu0 0.0
          %1884 = vmatprep.subr.mxu0 0.0
          %1885 = vmatpush2.msra.mxu0 0.0
          %1886 = vmatprep.subr.mxu0 0.0
          %1887 = vmatpush2.msra.mxu0 0.0
          %1888 = vmatprep.subr.mxu0 0.0
          %1889 = vmatpush2.msra.mxu0 0.0
          %1890 = vmatprep.subr.mxu0 0.0
          %1891 = vmatpush2.msra.mxu0 0.0
          %1892 = vmatprep.subr.mxu0 0.0
          %1893 = vmatpush2.msra.mxu0 0.0
          %1894 = vmatprep.subr.mxu0 0.0
          %1895 = vmatpush2.msra.mxu0 0.0
          %1896 = vmatprep.mubr.f32.mxu0 0.0
          %1897 = vmatmul.mubr.f32.gmra.mxu0 %v1830
          %v1898 = vpop.f32.mrf.mxu0
          %v1899 = vadd.f32 0.0, %v1898
          %v1900 = vpop.f32.mrf.mxu0
          %1901 = vdwg.mxu0
          %1903 = vrot.lane.b32.xlu0 %v1820, 92
          %v1904 = vpop.permute.xlu0 %1903
          %v1905 = vsel %vm884, %v1904, 0
          %1907 = vmatprep.subr.mxu0 0.0
          %1908 = vmatpush1.msra.mxu0 0.0
          %1909 = vmatprep.subr.mxu0 0.0
          %1910 = vmatpush1.msra.mxu0 0.0
          %1911 = vmatprep.subr.mxu0 0.0
          %1912 = vmatpush1.msra.mxu0 0.0
          %1913 = vmatprep.subr.mxu0 0.0
          %1914 = vmatpush1.msra.mxu0 0.0
          %1915 = vmatprep.subr.mxu0 0.0
          %1916 = vmatpush1.msra.mxu0 0.0
          %1917 = vmatprep.subr.mxu0 0.0
          %1918 = vmatpush1.msra.mxu0 0.0
          %1919 = vmatprep.subr.mxu0 0.0
          %1920 = vmatpush1.msra.mxu0 0.0
          %1921 = vmatprep.subr.mxu0 0.0
          %1922 = vmatpush1.msra.mxu0 0.0
          %1923 = vmatprep.subr.mxu0 0.0
          %1924 = vmatpush1.msra.mxu0 0.0
          %1925 = vmatprep.subr.mxu0 0.0
          %1926 = vmatpush1.msra.mxu0 0.0
          %1927 = vmatprep.subr.mxu0 0.0
          %1928 = vmatpush1.msra.mxu0 0.0
          %1929 = vmatprep.subr.mxu0 0.0
          %1930 = vmatpush1.msra.mxu0 0.0
          %1931 = vmatprep.subr.mxu0 0.0
          %1932 = vmatpush1.msra.mxu0 0.0
          %1933 = vmatprep.subr.mxu0 0.0
          %1934 = vmatpush1.msra.mxu0 0.0
          %1935 = vmatprep.subr.mxu0 0.0
          %1936 = vmatpush1.msra.mxu0 %v1822
          %1937 = vmatprep.subr.mxu0 0.0
          %1938 = vmatpush1.msra.mxu0 %v1821
          %1939 = vmatprep.subr.mxu0 0.0
          %1940 = vmatpush2.msra.mxu0 0.0
          %1941 = vmatprep.subr.mxu0 0.0
          %1942 = vmatpush2.msra.mxu0 0.0
          %1943 = vmatprep.subr.mxu0 0.0
          %1944 = vmatpush2.msra.mxu0 0.0
          %1945 = vmatprep.subr.mxu0 0.0
          %1946 = vmatpush2.msra.mxu0 0.0
          %1947 = vmatprep.subr.mxu0 0.0
          %1948 = vmatpush2.msra.mxu0 0.0
          %1949 = vmatprep.subr.mxu0 0.0
          %1950 = vmatpush2.msra.mxu0 0.0
          %1951 = vmatprep.subr.mxu0 0.0
          %1952 = vmatpush2.msra.mxu0 0.0
          %1953 = vmatprep.subr.mxu0 0.0
          %1954 = vmatpush2.msra.mxu0 0.0
          %1955 = vmatprep.subr.mxu0 0.0
          %1956 = vmatpush2.msra.mxu0 0.0
          %1957 = vmatprep.subr.mxu0 0.0
          %1958 = vmatpush2.msra.mxu0 0.0
          %1959 = vmatprep.subr.mxu0 0.0
          %1960 = vmatpush2.msra.mxu0 0.0
          %1961 = vmatprep.subr.mxu0 0.0
          %1962 = vmatpush2.msra.mxu0 0.0
          %1963 = vmatprep.subr.mxu0 0.0
          %1964 = vmatpush2.msra.mxu0 0.0
          %1965 = vmatprep.subr.mxu0 0.0
          %1966 = vmatpush2.msra.mxu0 0.0
          %1967 = vmatprep.subr.mxu0 0.0
          %1968 = vmatpush2.msra.mxu0 0.0
          %1969 = vmatprep.subr.mxu0 0.0
          %1970 = vmatpush2.msra.mxu0 0.0
          %1971 = vmatprep.mubr.f32.mxu0 0.0
          %1972 = vmatmul.mubr.f32.gmra.mxu0 %v1905
          %v1973 = vpop.f32.mrf.mxu0
          %v1974 = vadd.f32 %v1899, %v1973
          %v1975 = vpop.f32.mrf.mxu0
          %1976 = vdwg.mxu0
          %v1979 = vunpack.c.l.s4 1966171168
          %v1980 = vunpack.c.0.s8 %v1979
          %v1981 = vlaneseq
          %v1982 = vshrl.u32 %v1981, 7
          %v1983 = vsub.s32 %v1980, %v1982
          %v1984 = vrot.slane %v1974, %v1983
          %v1985 = vcombine.high %v1984, %v1984
          %v1987 = vunpack.c.l.s4 1966171168
          %v1988 = vunpack.c.0.s8 %v1987
          %v1989 = vlaneseq
          %v1990 = vshrl.u32 %v1989, 7
          %v1991 = vsub.s32 %v1988, %v1990
          %v1992 = vrot.slane %v1984, %v1991
          %v1994 = vunpack.c.l.s4 1966171168
          %v1995 = vunpack.c.0.s8 %v1994
          %v1996 = vlaneseq
          %v1997 = vshrl.u32 %v1996, 7
          %v1998 = vsub.s32 %v1995, %v1997
          %v1999 = vrot.slane %v1985, %v1998
          %v2000 = vcombine.high %v1992, %v1992
          %v2001 = vcombine.high %v1999, %v1999
          %2006 = vst.msk [vmem:[%s266 + $0x5] sm:$0x1] %vm1059, %v1992
          %2007 = vst.msk [vmem:[%s266 + $0x25] sm:$0x1] %vm1059, %v1999
          %2008 = vst.msk [vmem:[%s266 + $0x45] sm:$0x1] %vm1059, %v2000
          %2009 = vst.msk [vmem:[%s266 + $0x65] sm:$0x1] %vm1059, %v2001
          %v2010 = vld [vmem:[#allocation7] sm:$0xf]
          %v2011 = vld [vmem:[%s5] sm:$0xff]
          %v2012 = vld [vmem:[%s5 + $0x8] sm:$0xff]
          %v2013 = vld [vmem:[#allocation7] sm:$0xf0]
          %v2014 = vld [vmem:[%s879] sm:$0xff]
          %v2015 = vld [vmem:[%s879 + $0x8] sm:$0xff]
          %v2017 = vrot.slane %v2013, 4
          %2018 = vrot.lane.b32.xlu0 %v2017, 74
          %v2019 = vpop.permute.xlu0 %2018
          %v2020 = vsel %vm884, %v2019, 0
          %2022 = vmatprep.subr.mxu0 0.0
          %2023 = vmatpush1.msra.mxu0 0.0
          %2024 = vmatprep.subr.mxu0 0.0
          %2025 = vmatpush1.msra.mxu0 0.0
          %2026 = vmatprep.subr.mxu0 0.0
          %2027 = vmatpush1.msra.mxu0 0.0
          %2028 = vmatprep.subr.mxu0 0.0
          %2029 = vmatpush1.msra.mxu0 0.0
          %2030 = vmatprep.subr.mxu0 0.0
          %2031 = vmatpush1.msra.mxu0 0.0
          %2032 = vmatprep.subr.mxu0 0.0
          %2033 = vmatpush1.msra.mxu0 0.0
          %2034 = vmatprep.subr.mxu0 0.0
          %2035 = vmatpush1.msra.mxu0 0.0
          %2036 = vmatprep.subr.mxu0 0.0
          %2037 = vmatpush1.msra.mxu0 0.0
          %2038 = vmatprep.subr.mxu0 0.0
          %2039 = vmatpush1.msra.mxu0 0.0
          %2040 = vmatprep.subr.mxu0 0.0
          %2041 = vmatpush1.msra.mxu0 0.0
          %2042 = vmatprep.subr.mxu0 0.0
          %2043 = vmatpush1.msra.mxu0 0.0
          %2044 = vmatprep.subr.mxu0 0.0
          %2045 = vmatpush1.msra.mxu0 0.0
          %2046 = vmatprep.subr.mxu0 0.0
          %2047 = vmatpush1.msra.mxu0 0.0
          %2048 = vmatprep.subr.mxu0 0.0
          %2049 = vmatpush1.msra.mxu0 0.0
          %2050 = vmatprep.subr.mxu0 0.0
          %2051 = vmatpush1.msra.mxu0 %v2015
          %2052 = vmatprep.subr.mxu0 0.0
          %2053 = vmatpush1.msra.mxu0 %v2014
          %2054 = vmatprep.subr.mxu0 0.0
          %2055 = vmatpush2.msra.mxu0 0.0
          %2056 = vmatprep.subr.mxu0 0.0
          %2057 = vmatpush2.msra.mxu0 0.0
          %2058 = vmatprep.subr.mxu0 0.0
          %2059 = vmatpush2.msra.mxu0 0.0
          %2060 = vmatprep.subr.mxu0 0.0
          %2061 = vmatpush2.msra.mxu0 0.0
          %2062 = vmatprep.subr.mxu0 0.0
          %2063 = vmatpush2.msra.mxu0 0.0
          %2064 = vmatprep.subr.mxu0 0.0
          %2065 = vmatpush2.msra.mxu0 0.0
          %2066 = vmatprep.subr.mxu0 0.0
          %2067 = vmatpush2.msra.mxu0 0.0
          %2068 = vmatprep.subr.mxu0 0.0
          %2069 = vmatpush2.msra.mxu0 0.0
          %2070 = vmatprep.subr.mxu0 0.0
          %2071 = vmatpush2.msra.mxu0 0.0
          %2072 = vmatprep.subr.mxu0 0.0
          %2073 = vmatpush2.msra.mxu0 0.0
          %2074 = vmatprep.subr.mxu0 0.0
          %2075 = vmatpush2.msra.mxu0 0.0
          %2076 = vmatprep.subr.mxu0 0.0
          %2077 = vmatpush2.msra.mxu0 0.0
          %2078 = vmatprep.subr.mxu0 0.0
          %2079 = vmatpush2.msra.mxu0 0.0
          %2080 = vmatprep.subr.mxu0 0.0
          %2081 = vmatpush2.msra.mxu0 0.0
          %2082 = vmatprep.subr.mxu0 0.0
          %2083 = vmatpush2.msra.mxu0 0.0
          %2084 = vmatprep.subr.mxu0 0.0
          %2085 = vmatpush2.msra.mxu0 0.0
          %2086 = vmatprep.mubr.f32.mxu0 0.0
          %2087 = vmatmul.mubr.f32.gmra.mxu0 %v2020
          %v2088 = vpop.f32.mrf.mxu0
          %v2089 = vadd.f32 0.0, %v2088
          %v2090 = vpop.f32.mrf.mxu0
          %2091 = vdwg.mxu0
          %2093 = vrot.lane.b32.xlu0 %v2010, 74
          %v2094 = vpop.permute.xlu0 %2093
          %v2095 = vsel %vm884, %v2094, 0
          %2097 = vmatprep.subr.mxu0 0.0
          %2098 = vmatpush1.msra.mxu0 0.0
          %2099 = vmatprep.subr.mxu0 0.0
          %2100 = vmatpush1.msra.mxu0 0.0
          %2101 = vmatprep.subr.mxu0 0.0
          %2102 = vmatpush1.msra.mxu0 0.0
          %2103 = vmatprep.subr.mxu0 0.0
          %2104 = vmatpush1.msra.mxu0 0.0
          %2105 = vmatprep.subr.mxu0 0.0
          %2106 = vmatpush1.msra.mxu0 0.0
          %2107 = vmatprep.subr.mxu0 0.0
          %2108 = vmatpush1.msra.mxu0 0.0
          %2109 = vmatprep.subr.mxu0 0.0
          %2110 = vmatpush1.msra.mxu0 0.0
          %2111 = vmatprep.subr.mxu0 0.0
          %2112 = vmatpush1.msra.mxu0 0.0
          %2113 = vmatprep.subr.mxu0 0.0
          %2114 = vmatpush1.msra.mxu0 0.0
          %2115 = vmatprep.subr.mxu0 0.0
          %2116 = vmatpush1.msra.mxu0 0.0
          %2117 = vmatprep.subr.mxu0 0.0
          %2118 = vmatpush1.msra.mxu0 0.0
          %2119 = vmatprep.subr.mxu0 0.0
          %2120 = vmatpush1.msra.mxu0 0.0
          %2121 = vmatprep.subr.mxu0 0.0
          %2122 = vmatpush1.msra.mxu0 0.0
          %2123 = vmatprep.subr.mxu0 0.0
          %2124 = vmatpush1.msra.mxu0 0.0
          %2125 = vmatprep.subr.mxu0 0.0
          %2126 = vmatpush1.msra.mxu0 %v2012
          %2127 = vmatprep.subr.mxu0 0.0
          %2128 = vmatpush1.msra.mxu0 %v2011
          %2129 = vmatprep.subr.mxu0 0.0
          %2130 = vmatpush2.msra.mxu0 0.0
          %2131 = vmatprep.subr.mxu0 0.0
          %2132 = vmatpush2.msra.mxu0 0.0
          %2133 = vmatprep.subr.mxu0 0.0
          %2134 = vmatpush2.msra.mxu0 0.0
          %2135 = vmatprep.subr.mxu0 0.0
          %2136 = vmatpush2.msra.mxu0 0.0
          %2137 = vmatprep.subr.mxu0 0.0
          %2138 = vmatpush2.msra.mxu0 0.0
          %2139 = vmatprep.subr.mxu0 0.0
          %2140 = vmatpush2.msra.mxu0 0.0
          %2141 = vmatprep.subr.mxu0 0.0
          %2142 = vmatpush2.msra.mxu0 0.0
          %2143 = vmatprep.subr.mxu0 0.0
          %2144 = vmatpush2.msra.mxu0 0.0
          %2145 = vmatprep.subr.mxu0 0.0
          %2146 = vmatpush2.msra.mxu0 0.0
          %2147 = vmatprep.subr.mxu0 0.0
          %2148 = vmatpush2.msra.mxu0 0.0
          %2149 = vmatprep.subr.mxu0 0.0
          %2150 = vmatpush2.msra.mxu0 0.0
          %2151 = vmatprep.subr.mxu0 0.0
          %2152 = vmatpush2.msra.mxu0 0.0
          %2153 = vmatprep.subr.mxu0 0.0
          %2154 = vmatpush2.msra.mxu0 0.0
          %2155 = vmatprep.subr.mxu0 0.0
          %2156 = vmatpush2.msra.mxu0 0.0
          %2157 = vmatprep.subr.mxu0 0.0
          %2158 = vmatpush2.msra.mxu0 0.0
          %2159 = vmatprep.subr.mxu0 0.0
          %2160 = vmatpush2.msra.mxu0 0.0
          %2161 = vmatprep.mubr.f32.mxu0 0.0
          %2162 = vmatmul.mubr.f32.gmra.mxu0 %v2095
          %v2163 = vpop.f32.mrf.mxu0
          %v2164 = vadd.f32 %v2089, %v2163
          %v2165 = vpop.f32.mrf.mxu0
          %2166 = vdwg.mxu0
          %v2169 = vunpack.c.l.s4 1966171168
          %v2170 = vunpack.c.0.s8 %v2169
          %v2171 = vlaneseq
          %v2172 = vshrl.u32 %v2171, 7
          %v2173 = vsub.s32 %v2170, %v2172
          %v2174 = vrot.slane %v2164, %v2173
          %v2175 = vcombine.high %v2174, %v2174
          %v2177 = vunpack.c.l.s4 1966171168
          %v2178 = vunpack.c.0.s8 %v2177
          %v2179 = vlaneseq
          %v2180 = vshrl.u32 %v2179, 7
          %v2181 = vsub.s32 %v2178, %v2180
          %v2182 = vrot.slane %v2174, %v2181
          %v2184 = vunpack.c.l.s4 1966171168
          %v2185 = vunpack.c.0.s8 %v2184
          %v2186 = vlaneseq
          %v2187 = vshrl.u32 %v2186, 7
          %v2188 = vsub.s32 %v2185, %v2187
          %v2189 = vrot.slane %v2175, %v2188
          %v2190 = vcombine.high %v2182, %v2182
          %v2191 = vcombine.high %v2189, %v2189
          %2196 = vst.msk [vmem:[%s266 + $0x6] sm:$0x1] %vm1059, %v2182
          %2197 = vst.msk [vmem:[%s266 + $0x26] sm:$0x1] %vm1059, %v2189
          %2198 = vst.msk [vmem:[%s266 + $0x46] sm:$0x1] %vm1059, %v2190
          %2199 = vst.msk [vmem:[%s266 + $0x66] sm:$0x1] %vm1059, %v2191
          %v2200 = vld [vmem:[#allocation7 + $0x18] sm:$0xf]
          %v2201 = vld [vmem:[%s5] sm:$0xff]
          %v2202 = vld [vmem:[%s5 + $0x8] sm:$0xff]
          %v2203 = vld [vmem:[#allocation7 + $0x18] sm:$0xf0]
          %v2204 = vld [vmem:[%s879] sm:$0xff]
          %v2205 = vld [vmem:[%s879 + $0x8] sm:$0xff]
          %v2207 = vrot.slane %v2203, 4
          %2208 = vrot.lane.b32.xlu0 %v2207, 74
          %v2209 = vpop.permute.xlu0 %2208
          %v2210 = vsel %vm884, %v2209, 0
          %2212 = vmatprep.subr.mxu0 0.0
          %2213 = vmatpush1.msra.mxu0 0.0
          %2214 = vmatprep.subr.mxu0 0.0
          %2215 = vmatpush1.msra.mxu0 0.0
          %2216 = vmatprep.subr.mxu0 0.0
          %2217 = vmatpush1.msra.mxu0 0.0
          %2218 = vmatprep.subr.mxu0 0.0
          %2219 = vmatpush1.msra.mxu0 0.0
          %2220 = vmatprep.subr.mxu0 0.0
          %2221 = vmatpush1.msra.mxu0 0.0
          %2222 = vmatprep.subr.mxu0 0.0
          %2223 = vmatpush1.msra.mxu0 0.0
          %2224 = vmatprep.subr.mxu0 0.0
          %2225 = vmatpush1.msra.mxu0 0.0
          %2226 = vmatprep.subr.mxu0 0.0
          %2227 = vmatpush1.msra.mxu0 0.0
          %2228 = vmatprep.subr.mxu0 0.0
          %2229 = vmatpush1.msra.mxu0 0.0
          %2230 = vmatprep.subr.mxu0 0.0
          %2231 = vmatpush1.msra.mxu0 0.0
          %2232 = vmatprep.subr.mxu0 0.0
          %2233 = vmatpush1.msra.mxu0 0.0
          %2234 = vmatprep.subr.mxu0 0.0
          %2235 = vmatpush1.msra.mxu0 0.0
          %2236 = vmatprep.subr.mxu0 0.0
          %2237 = vmatpush1.msra.mxu0 0.0
          %2238 = vmatprep.subr.mxu0 0.0
          %2239 = vmatpush1.msra.mxu0 0.0
          %2240 = vmatprep.subr.mxu0 0.0
          %2241 = vmatpush1.msra.mxu0 %v2205
          %2242 = vmatprep.subr.mxu0 0.0
          %2243 = vmatpush1.msra.mxu0 %v2204
          %2244 = vmatprep.subr.mxu0 0.0
          %2245 = vmatpush2.msra.mxu0 0.0
          %2246 = vmatprep.subr.mxu0 0.0
          %2247 = vmatpush2.msra.mxu0 0.0
          %2248 = vmatprep.subr.mxu0 0.0
          %2249 = vmatpush2.msra.mxu0 0.0
          %2250 = vmatprep.subr.mxu0 0.0
          %2251 = vmatpush2.msra.mxu0 0.0
          %2252 = vmatprep.subr.mxu0 0.0
          %2253 = vmatpush2.msra.mxu0 0.0
          %2254 = vmatprep.subr.mxu0 0.0
          %2255 = vmatpush2.msra.mxu0 0.0
          %2256 = vmatprep.subr.mxu0 0.0
          %2257 = vmatpush2.msra.mxu0 0.0
          %2258 = vmatprep.subr.mxu0 0.0
          %2259 = vmatpush2.msra.mxu0 0.0
          %2260 = vmatprep.subr.mxu0 0.0
          %2261 = vmatpush2.msra.mxu0 0.0
          %2262 = vmatprep.subr.mxu0 0.0
          %2263 = vmatpush2.msra.mxu0 0.0
          %2264 = vmatprep.subr.mxu0 0.0
          %2265 = vmatpush2.msra.mxu0 0.0
          %2266 = vmatprep.subr.mxu0 0.0
          %2267 = vmatpush2.msra.mxu0 0.0
          %2268 = vmatprep.subr.mxu0 0.0
          %2269 = vmatpush2.msra.mxu0 0.0
          %2270 = vmatprep.subr.mxu0 0.0
          %2271 = vmatpush2.msra.mxu0 0.0
          %2272 = vmatprep.subr.mxu0 0.0
          %2273 = vmatpush2.msra.mxu0 0.0
          %2274 = vmatprep.subr.mxu0 0.0
          %2275 = vmatpush2.msra.mxu0 0.0
          %2276 = vmatprep.mubr.f32.mxu0 0.0
          %2277 = vmatmul.mubr.f32.gmra.mxu0 %v2210
          %v2278 = vpop.f32.mrf.mxu0
          %v2279 = vadd.f32 0.0, %v2278
          %v2280 = vpop.f32.mrf.mxu0
          %2281 = vdwg.mxu0
          %2283 = vrot.lane.b32.xlu0 %v2200, 74
          %v2284 = vpop.permute.xlu0 %2283
          %v2285 = vsel %vm884, %v2284, 0
          %2287 = vmatprep.subr.mxu0 0.0
          %2288 = vmatpush1.msra.mxu0 0.0
          %2289 = vmatprep.subr.mxu0 0.0
          %2290 = vmatpush1.msra.mxu0 0.0
          %2291 = vmatprep.subr.mxu0 0.0
          %2292 = vmatpush1.msra.mxu0 0.0
          %2293 = vmatprep.subr.mxu0 0.0
          %2294 = vmatpush1.msra.mxu0 0.0
          %2295 = vmatprep.subr.mxu0 0.0
          %2296 = vmatpush1.msra.mxu0 0.0
          %2297 = vmatprep.subr.mxu0 0.0
          %2298 = vmatpush1.msra.mxu0 0.0
          %2299 = vmatprep.subr.mxu0 0.0
          %2300 = vmatpush1.msra.mxu0 0.0
          %2301 = vmatprep.subr.mxu0 0.0
          %2302 = vmatpush1.msra.mxu0 0.0
          %2303 = vmatprep.subr.mxu0 0.0
          %2304 = vmatpush1.msra.mxu0 0.0
          %2305 = vmatprep.subr.mxu0 0.0
          %2306 = vmatpush1.msra.mxu0 0.0
          %2307 = vmatprep.subr.mxu0 0.0
          %2308 = vmatpush1.msra.mxu0 0.0
          %2309 = vmatprep.subr.mxu0 0.0
          %2310 = vmatpush1.msra.mxu0 0.0
          %2311 = vmatprep.subr.mxu0 0.0
          %2312 = vmatpush1.msra.mxu0 0.0
          %2313 = vmatprep.subr.mxu0 0.0
          %2314 = vmatpush1.msra.mxu0 0.0
          %2315 = vmatprep.subr.mxu0 0.0
          %2316 = vmatpush1.msra.mxu0 %v2202
          %2317 = vmatprep.subr.mxu0 0.0
          %2318 = vmatpush1.msra.mxu0 %v2201
          %2319 = vmatprep.subr.mxu0 0.0
          %2320 = vmatpush2.msra.mxu0 0.0
          %2321 = vmatprep.subr.mxu0 0.0
          %2322 = vmatpush2.msra.mxu0 0.0
          %2323 = vmatprep.subr.mxu0 0.0
          %2324 = vmatpush2.msra.mxu0 0.0
          %2325 = vmatprep.subr.mxu0 0.0
          %2326 = vmatpush2.msra.mxu0 0.0
          %2327 = vmatprep.subr.mxu0 0.0
          %2328 = vmatpush2.msra.mxu0 0.0
          %2329 = vmatprep.subr.mxu0 0.0
          %2330 = vmatpush2.msra.mxu0 0.0
          %2331 = vmatprep.subr.mxu0 0.0
          %2332 = vmatpush2.msra.mxu0 0.0
          %2333 = vmatprep.subr.mxu0 0.0
          %2334 = vmatpush2.msra.mxu0 0.0
          %2335 = vmatprep.subr.mxu0 0.0
          %2336 = vmatpush2.msra.mxu0 0.0
          %2337 = vmatprep.subr.mxu0 0.0
          %2338 = vmatpush2.msra.mxu0 0.0
          %2339 = vmatprep.subr.mxu0 0.0
          %2340 = vmatpush2.msra.mxu0 0.0
          %2341 = vmatprep.subr.mxu0 0.0
          %2342 = vmatpush2.msra.mxu0 0.0
          %2343 = vmatprep.subr.mxu0 0.0
          %2344 = vmatpush2.msra.mxu0 0.0
          %2345 = vmatprep.subr.mxu0 0.0
          %2346 = vmatpush2.msra.mxu0 0.0
          %2347 = vmatprep.subr.mxu0 0.0
          %2348 = vmatpush2.msra.mxu0 0.0
          %2349 = vmatprep.subr.mxu0 0.0
          %2350 = vmatpush2.msra.mxu0 0.0
          %2351 = vmatprep.mubr.f32.mxu0 0.0
          %2352 = vmatmul.mubr.f32.gmra.mxu0 %v2285
          %v2353 = vpop.f32.mrf.mxu0
          %v2354 = vadd.f32 %v2279, %v2353
          %v2355 = vpop.f32.mrf.mxu0
          %2356 = vdwg.mxu0
          %v2359 = vunpack.c.l.s4 1966171168
          %v2360 = vunpack.c.0.s8 %v2359
          %v2361 = vlaneseq
          %v2362 = vshrl.u32 %v2361, 7
          %v2363 = vsub.s32 %v2360, %v2362
          %v2364 = vrot.slane %v2354, %v2363
          %v2365 = vcombine.high %v2364, %v2364
          %v2367 = vunpack.c.l.s4 1966171168
          %v2368 = vunpack.c.0.s8 %v2367
          %v2369 = vlaneseq
          %v2370 = vshrl.u32 %v2369, 7
          %v2371 = vsub.s32 %v2368, %v2370
          %v2372 = vrot.slane %v2364, %v2371
          %v2374 = vunpack.c.l.s4 1966171168
          %v2375 = vunpack.c.0.s8 %v2374
          %v2376 = vlaneseq
          %v2377 = vshrl.u32 %v2376, 7
          %v2378 = vsub.s32 %v2375, %v2377
          %v2379 = vrot.slane %v2365, %v2378
          %v2380 = vcombine.high %v2372, %v2372
          %v2381 = vcombine.high %v2379, %v2379
          %2386 = vst.msk [vmem:[%s266 + $0x7] sm:$0x1] %vm1059, %v2372
          %2387 = vst.msk [vmem:[%s266 + $0x27] sm:$0x1] %vm1059, %v2379
          %2388 = vst.msk [vmem:[%s266 + $0x47] sm:$0x1] %vm1059, %v2380
          %2389 = vst.msk [vmem:[%s266 + $0x67] sm:$0x1] %vm1059, %v2381
          %v2390 = vld [vmem:[#allocation7] sm:$0xf]
          %v2391 = vld [vmem:[%s5] sm:$0xff]
          %v2392 = vld [vmem:[%s5 + $0x8] sm:$0xff]
          %v2393 = vld [vmem:[#allocation7] sm:$0xf0]
          %v2394 = vld [vmem:[%s879] sm:$0xff]
          %v2395 = vld [vmem:[%s879 + $0x8] sm:$0xff]
          %v2397 = vrot.slane %v2393, 4
          %2398 = vrot.lane.b32.xlu0 %v2397, 56
          %v2399 = vpop.permute.xlu0 %2398
          %v2400 = vsel %vm884, %v2399, 0
          %2402 = vmatprep.subr.mxu0 0.0
          %2403 = vmatpush1.msra.mxu0 0.0
          %2404 = vmatprep.subr.mxu0 0.0
          %2405 = vmatpush1.msra.mxu0 0.0
          %2406 = vmatprep.subr.mxu0 0.0
          %2407 = vmatpush1.msra.mxu0 0.0
          %2408 = vmatprep.subr.mxu0 0.0
          %2409 = vmatpush1.msra.mxu0 0.0
          %2410 = vmatprep.subr.mxu0 0.0
          %2411 = vmatpush1.msra.mxu0 0.0
          %2412 = vmatprep.subr.mxu0 0.0
          %2413 = vmatpush1.msra.mxu0 0.0
          %2414 = vmatprep.subr.mxu0 0.0
          %2415 = vmatpush1.msra.mxu0 0.0
          %2416 = vmatprep.subr.mxu0 0.0
          %2417 = vmatpush1.msra.mxu0 0.0
          %2418 = vmatprep.subr.mxu0 0.0
          %2419 = vmatpush1.msra.mxu0 0.0
          %2420 = vmatprep.subr.mxu0 0.0
          %2421 = vmatpush1.msra.mxu0 0.0
          %2422 = vmatprep.subr.mxu0 0.0
          %2423 = vmatpush1.msra.mxu0 0.0
          %2424 = vmatprep.subr.mxu0 0.0
          %2425 = vmatpush1.msra.mxu0 0.0
          %2426 = vmatprep.subr.mxu0 0.0
          %2427 = vmatpush1.msra.mxu0 0.0
          %2428 = vmatprep.subr.mxu0 0.0
          %2429 = vmatpush1.msra.mxu0 0.0
          %2430 = vmatprep.subr.mxu0 0.0
          %2431 = vmatpush1.msra.mxu0 %v2395
          %2432 = vmatprep.subr.mxu0 0.0
          %2433 = vmatpush1.msra.mxu0 %v2394
          %2434 = vmatprep.subr.mxu0 0.0
          %2435 = vmatpush2.msra.mxu0 0.0
          %2436 = vmatprep.subr.mxu0 0.0
          %2437 = vmatpush2.msra.mxu0 0.0
          %2438 = vmatprep.subr.mxu0 0.0
          %2439 = vmatpush2.msra.mxu0 0.0
          %2440 = vmatprep.subr.mxu0 0.0
          %2441 = vmatpush2.msra.mxu0 0.0
          %2442 = vmatprep.subr.mxu0 0.0
          %2443 = vmatpush2.msra.mxu0 0.0
          %2444 = vmatprep.subr.mxu0 0.0
          %2445 = vmatpush2.msra.mxu0 0.0
          %2446 = vmatprep.subr.mxu0 0.0
          %2447 = vmatpush2.msra.mxu0 0.0
          %2448 = vmatprep.subr.mxu0 0.0
          %2449 = vmatpush2.msra.mxu0 0.0
          %2450 = vmatprep.subr.mxu0 0.0
          %2451 = vmatpush2.msra.mxu0 0.0
          %2452 = vmatprep.subr.mxu0 0.0
          %2453 = vmatpush2.msra.mxu0 0.0
          %2454 = vmatprep.subr.mxu0 0.0
          %2455 = vmatpush2.msra.mxu0 0.0
          %2456 = vmatprep.subr.mxu0 0.0
          %2457 = vmatpush2.msra.mxu0 0.0
          %2458 = vmatprep.subr.mxu0 0.0
          %2459 = vmatpush2.msra.mxu0 0.0
          %2460 = vmatprep.subr.mxu0 0.0
          %2461 = vmatpush2.msra.mxu0 0.0
          %2462 = vmatprep.subr.mxu0 0.0
          %2463 = vmatpush2.msra.mxu0 0.0
          %2464 = vmatprep.subr.mxu0 0.0
          %2465 = vmatpush2.msra.mxu0 0.0
          %2466 = vmatprep.mubr.f32.mxu0 0.0
          %2467 = vmatmul.mubr.f32.gmra.mxu0 %v2400
          %v2468 = vpop.f32.mrf.mxu0
          %v2469 = vadd.f32 0.0, %v2468
          %v2470 = vpop.f32.mrf.mxu0
          %2471 = vdwg.mxu0
          %2473 = vrot.lane.b32.xlu0 %v2390, 56
          %v2474 = vpop.permute.xlu0 %2473
          %v2475 = vsel %vm884, %v2474, 0
          %2477 = vmatprep.subr.mxu0 0.0
          %2478 = vmatpush1.msra.mxu0 0.0
          %2479 = vmatprep.subr.mxu0 0.0
          %2480 = vmatpush1.msra.mxu0 0.0
          %2481 = vmatprep.subr.mxu0 0.0
          %2482 = vmatpush1.msra.mxu0 0.0
          %2483 = vmatprep.subr.mxu0 0.0
          %2484 = vmatpush1.msra.mxu0 0.0
          %2485 = vmatprep.subr.mxu0 0.0
          %2486 = vmatpush1.msra.mxu0 0.0
          %2487 = vmatprep.subr.mxu0 0.0
          %2488 = vmatpush1.msra.mxu0 0.0
          %2489 = vmatprep.subr.mxu0 0.0
          %2490 = vmatpush1.msra.mxu0 0.0
          %2491 = vmatprep.subr.mxu0 0.0
          %2492 = vmatpush1.msra.mxu0 0.0
          %2493 = vmatprep.subr.mxu0 0.0
          %2494 = vmatpush1.msra.mxu0 0.0
          %2495 = vmatprep.subr.mxu0 0.0
          %2496 = vmatpush1.msra.mxu0 0.0
          %2497 = vmatprep.subr.mxu0 0.0
          %2498 = vmatpush1.msra.mxu0 0.0
          %2499 = vmatprep.subr.mxu0 0.0
          %2500 = vmatpush1.msra.mxu0 0.0
          %2501 = vmatprep.subr.mxu0 0.0
          %2502 = vmatpush1.msra.mxu0 0.0
          %2503 = vmatprep.subr.mxu0 0.0
          %2504 = vmatpush1.msra.mxu0 0.0
          %2505 = vmatprep.subr.mxu0 0.0
          %2506 = vmatpush1.msra.mxu0 %v2392
          %2507 = vmatprep.subr.mxu0 0.0
          %2508 = vmatpush1.msra.mxu0 %v2391
          %2509 = vmatprep.subr.mxu0 0.0
          %2510 = vmatpush2.msra.mxu0 0.0
          %2511 = vmatprep.subr.mxu0 0.0
          %2512 = vmatpush2.msra.mxu0 0.0
          %2513 = vmatprep.subr.mxu0 0.0
          %2514 = vmatpush2.msra.mxu0 0.0
          %2515 = vmatprep.subr.mxu0 0.0
          %2516 = vmatpush2.msra.mxu0 0.0
          %2517 = vmatprep.subr.mxu0 0.0
          %2518 = vmatpush2.msra.mxu0 0.0
          %2519 = vmatprep.subr.mxu0 0.0
          %2520 = vmatpush2.msra.mxu0 0.0
          %2521 = vmatprep.subr.mxu0 0.0
          %2522 = vmatpush2.msra.mxu0 0.0
          %2523 = vmatprep.subr.mxu0 0.0
          %2524 = vmatpush2.msra.mxu0 0.0
          %2525 = vmatprep.subr.mxu0 0.0
          %2526 = vmatpush2.msra.mxu0 0.0
          %2527 = vmatprep.subr.mxu0 0.0
          %2528 = vmatpush2.msra.mxu0 0.0
          %2529 = vmatprep.subr.mxu0 0.0
          %2530 = vmatpush2.msra.mxu0 0.0
          %2531 = vmatprep.subr.mxu0 0.0
          %2532 = vmatpush2.msra.mxu0 0.0
          %2533 = vmatprep.subr.mxu0 0.0
          %2534 = vmatpush2.msra.mxu0 0.0
          %2535 = vmatprep.subr.mxu0 0.0
          %2536 = vmatpush2.msra.mxu0 0.0
          %2537 = vmatprep.subr.mxu0 0.0
          %2538 = vmatpush2.msra.mxu0 0.0
          %2539 = vmatprep.subr.mxu0 0.0
          %2540 = vmatpush2.msra.mxu0 0.0
          %2541 = vmatprep.mubr.f32.mxu0 0.0
          %2542 = vmatmul.mubr.f32.gmra.mxu0 %v2475
          %v2543 = vpop.f32.mrf.mxu0
          %v2544 = vadd.f32 %v2469, %v2543
          %v2545 = vpop.f32.mrf.mxu0
          %2546 = vdwg.mxu0
          %v2549 = vunpack.c.l.s4 1966171168
          %v2550 = vunpack.c.0.s8 %v2549
          %v2551 = vlaneseq
          %v2552 = vshrl.u32 %v2551, 7
          %v2553 = vsub.s32 %v2550, %v2552
          %v2554 = vrot.slane %v2544, %v2553
          %v2555 = vcombine.high %v2554, %v2554
          %v2557 = vunpack.c.l.s4 1966171168
          %v2558 = vunpack.c.0.s8 %v2557
          %v2559 = vlaneseq
          %v2560 = vshrl.u32 %v2559, 7
          %v2561 = vsub.s32 %v2558, %v2560
          %v2562 = vrot.slane %v2554, %v2561
          %v2564 = vunpack.c.l.s4 1966171168
          %v2565 = vunpack.c.0.s8 %v2564
          %v2566 = vlaneseq
          %v2567 = vshrl.u32 %v2566, 7
          %v2568 = vsub.s32 %v2565, %v2567
          %v2569 = vrot.slane %v2555, %v2568
          %v2570 = vcombine.high %v2562, %v2562
          %v2571 = vcombine.high %v2569, %v2569
          %2576 = vst.msk [vmem:[%s266 + $0x8] sm:$0x1] %vm1059, %v2562
          %2577 = vst.msk [vmem:[%s266 + $0x28] sm:$0x1] %vm1059, %v2569
          %2578 = vst.msk [vmem:[%s266 + $0x48] sm:$0x1] %vm1059, %v2570
          %2579 = vst.msk [vmem:[%s266 + $0x68] sm:$0x1] %vm1059, %v2571
          %v2580 = vld [vmem:[#allocation7 + $0x18] sm:$0xf]
          %v2581 = vld [vmem:[%s5] sm:$0xff]
          %v2582 = vld [vmem:[%s5 + $0x8] sm:$0xff]
          %v2583 = vld [vmem:[#allocation7 + $0x18] sm:$0xf0]
          %v2584 = vld [vmem:[%s879] sm:$0xff]
          %v2585 = vld [vmem:[%s879 + $0x8] sm:$0xff]
          %v2587 = vrot.slane %v2583, 4
          %2588 = vrot.lane.b32.xlu0 %v2587, 56
          %v2589 = vpop.permute.xlu0 %2588
          %v2590 = vsel %vm884, %v2589, 0
          %2592 = vmatprep.subr.mxu0 0.0
          %2593 = vmatpush1.msra.mxu0 0.0
          %2594 = vmatprep.subr.mxu0 0.0
          %2595 = vmatpush1.msra.mxu0 0.0
          %2596 = vmatprep.subr.mxu0 0.0
          %2597 = vmatpush1.msra.mxu0 0.0
          %2598 = vmatprep.subr.mxu0 0.0
          %2599 = vmatpush1.msra.mxu0 0.0
          %2600 = vmatprep.subr.mxu0 0.0
          %2601 = vmatpush1.msra.mxu0 0.0
          %2602 = vmatprep.subr.mxu0 0.0
          %2603 = vmatpush1.msra.mxu0 0.0
          %2604 = vmatprep.subr.mxu0 0.0
          %2605 = vmatpush1.msra.mxu0 0.0
          %2606 = vmatprep.subr.mxu0 0.0
          %2607 = vmatpush1.msra.mxu0 0.0
          %2608 = vmatprep.subr.mxu0 0.0
          %2609 = vmatpush1.msra.mxu0 0.0
          %2610 = vmatprep.subr.mxu0 0.0
          %2611 = vmatpush1.msra.mxu0 0.0
          %2612 = vmatprep.subr.mxu0 0.0
          %2613 = vmatpush1.msra.mxu0 0.0
          %2614 = vmatprep.subr.mxu0 0.0
          %2615 = vmatpush1.msra.mxu0 0.0
          %2616 = vmatprep.subr.mxu0 0.0
          %2617 = vmatpush1.msra.mxu0 0.0
          %2618 = vmatprep.subr.mxu0 0.0
          %2619 = vmatpush1.msra.mxu0 0.0
          %2620 = vmatprep.subr.mxu0 0.0
          %2621 = vmatpush1.msra.mxu0 %v2585
          %2622 = vmatprep.subr.mxu0 0.0
          %2623 = vmatpush1.msra.mxu0 %v2584
          %2624 = vmatprep.subr.mxu0 0.0
          %2625 = vmatpush2.msra.mxu0 0.0
          %2626 = vmatprep.subr.mxu0 0.0
          %2627 = vmatpush2.msra.mxu0 0.0
          %2628 = vmatprep.subr.mxu0 0.0
          %2629 = vmatpush2.msra.mxu0 0.0
          %2630 = vmatprep.subr.mxu0 0.0
          %2631 = vmatpush2.msra.mxu0 0.0
          %2632 = vmatprep.subr.mxu0 0.0
          %2633 = vmatpush2.msra.mxu0 0.0
          %2634 = vmatprep.subr.mxu0 0.0
          %2635 = vmatpush2.msra.mxu0 0.0
          %2636 = vmatprep.subr.mxu0 0.0
          %2637 = vmatpush2.msra.mxu0 0.0
          %2638 = vmatprep.subr.mxu0 0.0
          %2639 = vmatpush2.msra.mxu0 0.0
          %2640 = vmatprep.subr.mxu0 0.0
          %2641 = vmatpush2.msra.mxu0 0.0
          %2642 = vmatprep.subr.mxu0 0.0
          %2643 = vmatpush2.msra.mxu0 0.0
          %2644 = vmatprep.subr.mxu0 0.0
          %2645 = vmatpush2.msra.mxu0 0.0
          %2646 = vmatprep.subr.mxu0 0.0
          %2647 = vmatpush2.msra.mxu0 0.0
          %2648 = vmatprep.subr.mxu0 0.0
          %2649 = vmatpush2.msra.mxu0 0.0
          %2650 = vmatprep.subr.mxu0 0.0
          %2651 = vmatpush2.msra.mxu0 0.0
          %2652 = vmatprep.subr.mxu0 0.0
          %2653 = vmatpush2.msra.mxu0 0.0
          %2654 = vmatprep.subr.mxu0 0.0
          %2655 = vmatpush2.msra.mxu0 0.0
          %2656 = vmatprep.mubr.f32.mxu0 0.0
          %2657 = vmatmul.mubr.f32.gmra.mxu0 %v2590
          %v2658 = vpop.f32.mrf.mxu0
          %v2659 = vadd.f32 0.0, %v2658
          %v2660 = vpop.f32.mrf.mxu0
          %2661 = vdwg.mxu0
          %2663 = vrot.lane.b32.xlu0 %v2580, 56
          %v2664 = vpop.permute.xlu0 %2663
          %v2665 = vsel %vm884, %v2664, 0
          %2667 = vmatprep.subr.mxu0 0.0
          %2668 = vmatpush1.msra.mxu0 0.0
          %2669 = vmatprep.subr.mxu0 0.0
          %2670 = vmatpush1.msra.mxu0 0.0
          %2671 = vmatprep.subr.mxu0 0.0
          %2672 = vmatpush1.msra.mxu0 0.0
          %2673 = vmatprep.subr.mxu0 0.0
          %2674 = vmatpush1.msra.mxu0 0.0
          %2675 = vmatprep.subr.mxu0 0.0
          %2676 = vmatpush1.msra.mxu0 0.0
          %2677 = vmatprep.subr.mxu0 0.0
          %2678 = vmatpush1.msra.mxu0 0.0
          %2679 = vmatprep.subr.mxu0 0.0
          %2680 = vmatpush1.msra.mxu0 0.0
          %2681 = vmatprep.subr.mxu0 0.0
          %2682 = vmatpush1.msra.mxu0 0.0
          %2683 = vmatprep.subr.mxu0 0.0
          %2684 = vmatpush1.msra.mxu0 0.0
          %2685 = vmatprep.subr.mxu0 0.0
          %2686 = vmatpush1.msra.mxu0 0.0
          %2687 = vmatprep.subr.mxu0 0.0
          %2688 = vmatpush1.msra.mxu0 0.0
          %2689 = vmatprep.subr.mxu0 0.0
          %2690 = vmatpush1.msra.mxu0 0.0
          %2691 = vmatprep.subr.mxu0 0.0
          %2692 = vmatpush1.msra.mxu0 0.0
          %2693 = vmatprep.subr.mxu0 0.0
          %2694 = vmatpush1.msra.mxu0 0.0
          %2695 = vmatprep.subr.mxu0 0.0
          %2696 = vmatpush1.msra.mxu0 %v2582
          %2697 = vmatprep.subr.mxu0 0.0
          %2698 = vmatpush1.msra.mxu0 %v2581
          %2699 = vmatprep.subr.mxu0 0.0
          %2700 = vmatpush2.msra.mxu0 0.0
          %2701 = vmatprep.subr.mxu0 0.0
          %2702 = vmatpush2.msra.mxu0 0.0
          %2703 = vmatprep.subr.mxu0 0.0
          %2704 = vmatpush2.msra.mxu0 0.0
          %2705 = vmatprep.subr.mxu0 0.0
          %2706 = vmatpush2.msra.mxu0 0.0
          %2707 = vmatprep.subr.mxu0 0.0
          %2708 = vmatpush2.msra.mxu0 0.0
          %2709 = vmatprep.subr.mxu0 0.0
          %2710 = vmatpush2.msra.mxu0 0.0
          %2711 = vmatprep.subr.mxu0 0.0
          %2712 = vmatpush2.msra.mxu0 0.0
          %2713 = vmatprep.subr.mxu0 0.0
          %2714 = vmatpush2.msra.mxu0 0.0
          %2715 = vmatprep.subr.mxu0 0.0
          %2716 = vmatpush2.msra.mxu0 0.0
          %2717 = vmatprep.subr.mxu0 0.0
          %2718 = vmatpush2.msra.mxu0 0.0
          %2719 = vmatprep.subr.mxu0 0.0
          %2720 = vmatpush2.msra.mxu0 0.0
          %2721 = vmatprep.subr.mxu0 0.0
          %2722 = vmatpush2.msra.mxu0 0.0
          %2723 = vmatprep.subr.mxu0 0.0
          %2724 = vmatpush2.msra.mxu0 0.0
          %2725 = vmatprep.subr.mxu0 0.0
          %2726 = vmatpush2.msra.mxu0 0.0
          %2727 = vmatprep.subr.mxu0 0.0
          %2728 = vmatpush2.msra.mxu0 0.0
          %2729 = vmatprep.subr.mxu0 0.0
          %2730 = vmatpush2.msra.mxu0 0.0
          %2731 = vmatprep.mubr.f32.mxu0 0.0
          %2732 = vmatmul.mubr.f32.gmra.mxu0 %v2665
          %v2733 = vpop.f32.mrf.mxu0
          %v2734 = vadd.f32 %v2659, %v2733
          %v2735 = vpop.f32.mrf.mxu0
          %2736 = vdwg.mxu0
          %v2739 = vunpack.c.l.s4 1966171168
          %v2740 = vunpack.c.0.s8 %v2739
          %v2741 = vlaneseq
          %v2742 = vshrl.u32 %v2741, 7
          %v2743 = vsub.s32 %v2740, %v2742
          %v2744 = vrot.slane %v2734, %v2743
          %v2745 = vcombine.high %v2744, %v2744
          %v2747 = vunpack.c.l.s4 1966171168
          %v2748 = vunpack.c.0.s8 %v2747
          %v2749 = vlaneseq
          %v2750 = vshrl.u32 %v2749, 7
          %v2751 = vsub.s32 %v2748, %v2750
          %v2752 = vrot.slane %v2744, %v2751
          %v2754 = vunpack.c.l.s4 1966171168
          %v2755 = vunpack.c.0.s8 %v2754
          %v2756 = vlaneseq
          %v2757 = vshrl.u32 %v2756, 7
          %v2758 = vsub.s32 %v2755, %v2757
          %v2759 = vrot.slane %v2745, %v2758
          %v2760 = vcombine.high %v2752, %v2752
          %v2761 = vcombine.high %v2759, %v2759
          %2766 = vst.msk [vmem:[%s266 + $0x9] sm:$0x1] %vm1059, %v2752
          %2767 = vst.msk [vmem:[%s266 + $0x29] sm:$0x1] %vm1059, %v2759
          %2768 = vst.msk [vmem:[%s266 + $0x49] sm:$0x1] %vm1059, %v2760
          %2769 = vst.msk [vmem:[%s266 + $0x69] sm:$0x1] %vm1059, %v2761
          %v2770 = vld [vmem:[#allocation7] sm:$0xf]
          %v2771 = vld [vmem:[%s5] sm:$0xff]
          %v2772 = vld [vmem:[%s5 + $0x8] sm:$0xff]
          %v2773 = vld [vmem:[#allocation7] sm:$0xf0]
          %v2774 = vld [vmem:[%s879] sm:$0xff]
          %v2775 = vld [vmem:[%s879 + $0x8] sm:$0xff]
          %v2777 = vrot.slane %v2773, 4
          %2778 = vrot.lane.b32.xlu0 %v2777, 38
          %v2779 = vpop.permute.xlu0 %2778
          %v2780 = vsel %vm884, %v2779, 0
          %2782 = vmatprep.subr.mxu0 0.0
          %2783 = vmatpush1.msra.mxu0 0.0
          %2784 = vmatprep.subr.mxu0 0.0
          %2785 = vmatpush1.msra.mxu0 0.0
          %2786 = vmatprep.subr.mxu0 0.0
          %2787 = vmatpush1.msra.mxu0 0.0
          %2788 = vmatprep.subr.mxu0 0.0
          %2789 = vmatpush1.msra.mxu0 0.0
          %2790 = vmatprep.subr.mxu0 0.0
          %2791 = vmatpush1.msra.mxu0 0.0
          %2792 = vmatprep.subr.mxu0 0.0
          %2793 = vmatpush1.msra.mxu0 0.0
          %2794 = vmatprep.subr.mxu0 0.0
          %2795 = vmatpush1.msra.mxu0 0.0
          %2796 = vmatprep.subr.mxu0 0.0
          %2797 = vmatpush1.msra.mxu0 0.0
          %2798 = vmatprep.subr.mxu0 0.0
          %2799 = vmatpush1.msra.mxu0 0.0
          %2800 = vmatprep.subr.mxu0 0.0
          %2801 = vmatpush1.msra.mxu0 0.0
          %2802 = vmatprep.subr.mxu0 0.0
          %2803 = vmatpush1.msra.mxu0 0.0
          %2804 = vmatprep.subr.mxu0 0.0
          %2805 = vmatpush1.msra.mxu0 0.0
          %2806 = vmatprep.subr.mxu0 0.0
          %2807 = vmatpush1.msra.mxu0 0.0
          %2808 = vmatprep.subr.mxu0 0.0
          %2809 = vmatpush1.msra.mxu0 0.0
          %2810 = vmatprep.subr.mxu0 0.0
          %2811 = vmatpush1.msra.mxu0 %v2775
          %2812 = vmatprep.subr.mxu0 0.0
          %2813 = vmatpush1.msra.mxu0 %v2774
          %2814 = vmatprep.subr.mxu0 0.0
          %2815 = vmatpush2.msra.mxu0 0.0
          %2816 = vmatprep.subr.mxu0 0.0
          %2817 = vmatpush2.msra.mxu0 0.0
          %2818 = vmatprep.subr.mxu0 0.0
          %2819 = vmatpush2.msra.mxu0 0.0
          %2820 = vmatprep.subr.mxu0 0.0
          %2821 = vmatpush2.msra.mxu0 0.0
          %2822 = vmatprep.subr.mxu0 0.0
          %2823 = vmatpush2.msra.mxu0 0.0
          %2824 = vmatprep.subr.mxu0 0.0
          %2825 = vmatpush2.msra.mxu0 0.0
          %2826 = vmatprep.subr.mxu0 0.0
          %2827 = vmatpush2.msra.mxu0 0.0
          %2828 = vmatprep.subr.mxu0 0.0
          %2829 = vmatpush2.msra.mxu0 0.0
          %2830 = vmatprep.subr.mxu0 0.0
          %2831 = vmatpush2.msra.mxu0 0.0
          %2832 = vmatprep.subr.mxu0 0.0
          %2833 = vmatpush2.msra.mxu0 0.0
          %2834 = vmatprep.subr.mxu0 0.0
          %2835 = vmatpush2.msra.mxu0 0.0
          %2836 = vmatprep.subr.mxu0 0.0
          %2837 = vmatpush2.msra.mxu0 0.0
          %2838 = vmatprep.subr.mxu0 0.0
          %2839 = vmatpush2.msra.mxu0 0.0
          %2840 = vmatprep.subr.mxu0 0.0
          %2841 = vmatpush2.msra.mxu0 0.0
          %2842 = vmatprep.subr.mxu0 0.0
          %2843 = vmatpush2.msra.mxu0 0.0
          %2844 = vmatprep.subr.mxu0 0.0
          %2845 = vmatpush2.msra.mxu0 0.0
          %2846 = vmatprep.mubr.f32.mxu0 0.0
          %2847 = vmatmul.mubr.f32.gmra.mxu0 %v2780
          %v2848 = vpop.f32.mrf.mxu0
          %v2849 = vadd.f32 0.0, %v2848
          %v2850 = vpop.f32.mrf.mxu0
          %2851 = vdwg.mxu0
          %2853 = vrot.lane.b32.xlu0 %v2770, 38
          %v2854 = vpop.permute.xlu0 %2853
          %v2855 = vsel %vm884, %v2854, 0
          %2857 = vmatprep.subr.mxu0 0.0
          %2858 = vmatpush1.msra.mxu0 0.0
          %2859 = vmatprep.subr.mxu0 0.0
          %2860 = vmatpush1.msra.mxu0 0.0
          %2861 = vmatprep.subr.mxu0 0.0
          %2862 = vmatpush1.msra.mxu0 0.0
          %2863 = vmatprep.subr.mxu0 0.0
          %2864 = vmatpush1.msra.mxu0 0.0
          %2865 = vmatprep.subr.mxu0 0.0
          %2866 = vmatpush1.msra.mxu0 0.0
          %2867 = vmatprep.subr.mxu0 0.0
          %2868 = vmatpush1.msra.mxu0 0.0
          %2869 = vmatprep.subr.mxu0 0.0
          %2870 = vmatpush1.msra.mxu0 0.0
          %2871 = vmatprep.subr.mxu0 0.0
          %2872 = vmatpush1.msra.mxu0 0.0
          %2873 = vmatprep.subr.mxu0 0.0
          %2874 = vmatpush1.msra.mxu0 0.0
          %2875 = vmatprep.subr.mxu0 0.0
          %2876 = vmatpush1.msra.mxu0 0.0
          %2877 = vmatprep.subr.mxu0 0.0
          %2878 = vmatpush1.msra.mxu0 0.0
          %2879 = vmatprep.subr.mxu0 0.0
          %2880 = vmatpush1.msra.mxu0 0.0
          %2881 = vmatprep.subr.mxu0 0.0
          %2882 = vmatpush1.msra.mxu0 0.0
          %2883 = vmatprep.subr.mxu0 0.0
          %2884 = vmatpush1.msra.mxu0 0.0
          %2885 = vmatprep.subr.mxu0 0.0
          %2886 = vmatpush1.msra.mxu0 %v2772
          %2887 = vmatprep.subr.mxu0 0.0
          %2888 = vmatpush1.msra.mxu0 %v2771
          %2889 = vmatprep.subr.mxu0 0.0
          %2890 = vmatpush2.msra.mxu0 0.0
          %2891 = vmatprep.subr.mxu0 0.0
          %2892 = vmatpush2.msra.mxu0 0.0
          %2893 = vmatprep.subr.mxu0 0.0
          %2894 = vmatpush2.msra.mxu0 0.0
          %2895 = vmatprep.subr.mxu0 0.0
          %2896 = vmatpush2.msra.mxu0 0.0
          %2897 = vmatprep.subr.mxu0 0.0
          %2898 = vmatpush2.msra.mxu0 0.0
          %2899 = vmatprep.subr.mxu0 0.0
          %2900 = vmatpush2.msra.mxu0 0.0
          %2901 = vmatprep.subr.mxu0 0.0
          %2902 = vmatpush2.msra.mxu0 0.0
          %2903 = vmatprep.subr.mxu0 0.0
          %2904 = vmatpush2.msra.mxu0 0.0
          %2905 = vmatprep.subr.mxu0 0.0
          %2906 = vmatpush2.msra.mxu0 0.0
          %2907 = vmatprep.subr.mxu0 0.0
          %2908 = vmatpush2.msra.mxu0 0.0
          %2909 = vmatprep.subr.mxu0 0.0
          %2910 = vmatpush2.msra.mxu0 0.0
          %2911 = vmatprep.subr.mxu0 0.0
          %2912 = vmatpush2.msra.mxu0 0.0
          %2913 = vmatprep.subr.mxu0 0.0
          %2914 = vmatpush2.msra.mxu0 0.0
          %2915 = vmatprep.subr.mxu0 0.0
          %2916 = vmatpush2.msra.mxu0 0.0
          %2917 = vmatprep.subr.mxu0 0.0
          %2918 = vmatpush2.msra.mxu0 0.0
          %2919 = vmatprep.subr.mxu0 0.0
          %2920 = vmatpush2.msra.mxu0 0.0
          %2921 = vmatprep.mubr.f32.mxu0 0.0
          %2922 = vmatmul.mubr.f32.gmra.mxu0 %v2855
          %v2923 = vpop.f32.mrf.mxu0
          %v2924 = vadd.f32 %v2849, %v2923
          %v2925 = vpop.f32.mrf.mxu0
          %2926 = vdwg.mxu0
          %v2929 = vunpack.c.l.s4 1966171168
          %v2930 = vunpack.c.0.s8 %v2929
          %v2931 = vlaneseq
          %v2932 = vshrl.u32 %v2931, 7
          %v2933 = vsub.s32 %v2930, %v2932
          %v2934 = vrot.slane %v2924, %v2933
          %v2935 = vcombine.high %v2934, %v2934
          %v2937 = vunpack.c.l.s4 1966171168
          %v2938 = vunpack.c.0.s8 %v2937
          %v2939 = vlaneseq
          %v2940 = vshrl.u32 %v2939, 7
          %v2941 = vsub.s32 %v2938, %v2940
          %v2942 = vrot.slane %v2934, %v2941
          %v2944 = vunpack.c.l.s4 1966171168
          %v2945 = vunpack.c.0.s8 %v2944
          %v2946 = vlaneseq
          %v2947 = vshrl.u32 %v2946, 7
          %v2948 = vsub.s32 %v2945, %v2947
          %v2949 = vrot.slane %v2935, %v2948
          %v2950 = vcombine.high %v2942, %v2942
          %v2951 = vcombine.high %v2949, %v2949
          %2956 = vst.msk [vmem:[%s266 + $0xa] sm:$0x1] %vm1059, %v2942
          %2957 = vst.msk [vmem:[%s266 + $0x2a] sm:$0x1] %vm1059, %v2949
          %2958 = vst.msk [vmem:[%s266 + $0x4a] sm:$0x1] %vm1059, %v2950
          %2959 = vst.msk [vmem:[%s266 + $0x6a] sm:$0x1] %vm1059, %v2951
          %v2960 = vld [vmem:[#allocation7 + $0x18] sm:$0xf]
          %v2961 = vld [vmem:[%s5] sm:$0xff]
          %v2962 = vld [vmem:[%s5 + $0x8] sm:$0xff]
          %v2963 = vld [vmem:[#allocation7 + $0x18] sm:$0xf0]
          %v2964 = vld [vmem:[%s879] sm:$0xff]
          %v2965 = vld [vmem:[%s879 + $0x8] sm:$0xff]
          %v2967 = vrot.slane %v2963, 4
          %2968 = vrot.lane.b32.xlu0 %v2967, 38
          %v2969 = vpop.permute.xlu0 %2968
          %v2970 = vsel %vm884, %v2969, 0
          %2972 = vmatprep.subr.mxu0 0.0
          %2973 = vmatpush1.msra.mxu0 0.0
          %2974 = vmatprep.subr.mxu0 0.0
          %2975 = vmatpush1.msra.mxu0 0.0
          %2976 = vmatprep.subr.mxu0 0.0
          %2977 = vmatpush1.msra.mxu0 0.0
          %2978 = vmatprep.subr.mxu0 0.0
          %2979 = vmatpush1.msra.mxu0 0.0
          %2980 = vmatprep.subr.mxu0 0.0
          %2981 = vmatpush1.msra.mxu0 0.0
          %2982 = vmatprep.subr.mxu0 0.0
          %2983 = vmatpush1.msra.mxu0 0.0
          %2984 = vmatprep.subr.mxu0 0.0
          %2985 = vmatpush1.msra.mxu0 0.0
          %2986 = vmatprep.subr.mxu0 0.0
          %2987 = vmatpush1.msra.mxu0 0.0
          %2988 = vmatprep.subr.mxu0 0.0
          %2989 = vmatpush1.msra.mxu0 0.0
          %2990 = vmatprep.subr.mxu0 0.0
          %2991 = vmatpush1.msra.mxu0 0.0
          %2992 = vmatprep.subr.mxu0 0.0
          %2993 = vmatpush1.msra.mxu0 0.0
          %2994 = vmatprep.subr.mxu0 0.0
          %2995 = vmatpush1.msra.mxu0 0.0
          %2996 = vmatprep.subr.mxu0 0.0
          %2997 = vmatpush1.msra.mxu0 0.0
          %2998 = vmatprep.subr.mxu0 0.0
          %2999 = vmatpush1.msra.mxu0 0.0
          %3000 = vmatprep.subr.mxu0 0.0
          %3001 = vmatpush1.msra.mxu0 %v2965
          %3002 = vmatprep.subr.mxu0 0.0
          %3003 = vmatpush1.msra.mxu0 %v2964
          %3004 = vmatprep.subr.mxu0 0.0
          %3005 = vmatpush2.msra.mxu0 0.0
          %3006 = vmatprep.subr.mxu0 0.0
          %3007 = vmatpush2.msra.mxu0 0.0
          %3008 = vmatprep.subr.mxu0 0.0
          %3009 = vmatpush2.msra.mxu0 0.0
          %3010 = vmatprep.subr.mxu0 0.0
          %3011 = vmatpush2.msra.mxu0 0.0
          %3012 = vmatprep.subr.mxu0 0.0
          %3013 = vmatpush2.msra.mxu0 0.0
          %3014 = vmatprep.subr.mxu0 0.0
          %3015 = vmatpush2.msra.mxu0 0.0
          %3016 = vmatprep.subr.mxu0 0.0
          %3017 = vmatpush2.msra.mxu0 0.0
          %3018 = vmatprep.subr.mxu0 0.0
          %3019 = vmatpush2.msra.mxu0 0.0
          %3020 = vmatprep.subr.mxu0 0.0
          %3021 = vmatpush2.msra.mxu0 0.0
          %3022 = vmatprep.subr.mxu0 0.0
          %3023 = vmatpush2.msra.mxu0 0.0
          %3024 = vmatprep.subr.mxu0 0.0
          %3025 = vmatpush2.msra.mxu0 0.0
          %3026 = vmatprep.subr.mxu0 0.0
          %3027 = vmatpush2.msra.mxu0 0.0
          %3028 = vmatprep.subr.mxu0 0.0
          %3029 = vmatpush2.msra.mxu0 0.0
          %3030 = vmatprep.subr.mxu0 0.0
          %3031 = vmatpush2.msra.mxu0 0.0
          %3032 = vmatprep.subr.mxu0 0.0
          %3033 = vmatpush2.msra.mxu0 0.0
          %3034 = vmatprep.subr.mxu0 0.0
          %3035 = vmatpush2.msra.mxu0 0.0
          %3036 = vmatprep.mubr.f32.mxu0 0.0
          %3037 = vmatmul.mubr.f32.gmra.mxu0 %v2970
          %v3038 = vpop.f32.mrf.mxu0
          %v3039 = vadd.f32 0.0, %v3038
          %v3040 = vpop.f32.mrf.mxu0
          %3041 = vdwg.mxu0
          %3043 = vrot.lane.b32.xlu0 %v2960, 38
          %v3044 = vpop.permute.xlu0 %3043
          %v3045 = vsel %vm884, %v3044, 0
          %3047 = vmatprep.subr.mxu0 0.0
          %3048 = vmatpush1.msra.mxu0 0.0
          %3049 = vmatprep.subr.mxu0 0.0
          %3050 = vmatpush1.msra.mxu0 0.0
          %3051 = vmatprep.subr.mxu0 0.0
          %3052 = vmatpush1.msra.mxu0 0.0
          %3053 = vmatprep.subr.mxu0 0.0
          %3054 = vmatpush1.msra.mxu0 0.0
          %3055 = vmatprep.subr.mxu0 0.0
          %3056 = vmatpush1.msra.mxu0 0.0
          %3057 = vmatprep.subr.mxu0 0.0
          %3058 = vmatpush1.msra.mxu0 0.0
          %3059 = vmatprep.subr.mxu0 0.0
          %3060 = vmatpush1.msra.mxu0 0.0
          %3061 = vmatprep.subr.mxu0 0.0
          %3062 = vmatpush1.msra.mxu0 0.0
          %3063 = vmatprep.subr.mxu0 0.0
          %3064 = vmatpush1.msra.mxu0 0.0
          %3065 = vmatprep.subr.mxu0 0.0
          %3066 = vmatpush1.msra.mxu0 0.0
          %3067 = vmatprep.subr.mxu0 0.0
          %3068 = vmatpush1.msra.mxu0 0.0
          %3069 = vmatprep.subr.mxu0 0.0
          %3070 = vmatpush1.msra.mxu0 0.0
          %3071 = vmatprep.subr.mxu0 0.0
          %3072 = vmatpush1.msra.mxu0 0.0
          %3073 = vmatprep.subr.mxu0 0.0
          %3074 = vmatpush1.msra.mxu0 0.0
          %3075 = vmatprep.subr.mxu0 0.0
          %3076 = vmatpush1.msra.mxu0 %v2962
          %3077 = vmatprep.subr.mxu0 0.0
          %3078 = vmatpush1.msra.mxu0 %v2961
          %3079 = vmatprep.subr.mxu0 0.0
          %3080 = vmatpush2.msra.mxu0 0.0
          %3081 = vmatprep.subr.mxu0 0.0
          %3082 = vmatpush2.msra.mxu0 0.0
          %3083 = vmatprep.subr.mxu0 0.0
          %3084 = vmatpush2.msra.mxu0 0.0
          %3085 = vmatprep.subr.mxu0 0.0
          %3086 = vmatpush2.msra.mxu0 0.0
          %3087 = vmatprep.subr.mxu0 0.0
          %3088 = vmatpush2.msra.mxu0 0.0
          %3089 = vmatprep.subr.mxu0 0.0
          %3090 = vmatpush2.msra.mxu0 0.0
          %3091 = vmatprep.subr.mxu0 0.0
          %3092 = vmatpush2.msra.mxu0 0.0
          %3093 = vmatprep.subr.mxu0 0.0
          %3094 = vmatpush2.msra.mxu0 0.0
          %3095 = vmatprep.subr.mxu0 0.0
          %3096 = vmatpush2.msra.mxu0 0.0
          %3097 = vmatprep.subr.mxu0 0.0
          %3098 = vmatpush2.msra.mxu0 0.0
          %3099 = vmatprep.subr.mxu0 0.0
          %3100 = vmatpush2.msra.mxu0 0.0
          %3101 = vmatprep.subr.mxu0 0.0
          %3102 = vmatpush2.msra.mxu0 0.0
          %3103 = vmatprep.subr.mxu0 0.0
          %3104 = vmatpush2.msra.mxu0 0.0
          %3105 = vmatprep.subr.mxu0 0.0
          %3106 = vmatpush2.msra.mxu0 0.0
          %3107 = vmatprep.subr.mxu0 0.0
          %3108 = vmatpush2.msra.mxu0 0.0
          %3109 = vmatprep.subr.mxu0 0.0
          %3110 = vmatpush2.msra.mxu0 0.0
          %3111 = vmatprep.mubr.f32.mxu0 0.0
          %3112 = vmatmul.mubr.f32.gmra.mxu0 %v3045
          %v3113 = vpop.f32.mrf.mxu0
          %v3114 = vadd.f32 %v3039, %v3113
          %v3115 = vpop.f32.mrf.mxu0
          %3116 = vdwg.mxu0
          %v3119 = vunpack.c.l.s4 1966171168
          %v3120 = vunpack.c.0.s8 %v3119
          %v3121 = vlaneseq
          %v3122 = vshrl.u32 %v3121, 7
          %v3123 = vsub.s32 %v3120, %v3122
          %v3124 = vrot.slane %v3114, %v3123
          %v3125 = vcombine.high %v3124, %v3124
          %v3127 = vunpack.c.l.s4 1966171168
          %v3128 = vunpack.c.0.s8 %v3127
          %v3129 = vlaneseq
          %v3130 = vshrl.u32 %v3129, 7
          %v3131 = vsub.s32 %v3128, %v3130
          %v3132 = vrot.slane %v3124, %v3131
          %v3134 = vunpack.c.l.s4 1966171168
          %v3135 = vunpack.c.0.s8 %v3134
          %v3136 = vlaneseq
          %v3137 = vshrl.u32 %v3136, 7
          %v3138 = vsub.s32 %v3135, %v3137
          %v3139 = vrot.slane %v3125, %v3138
          %v3140 = vcombine.high %v3132, %v3132
          %v3141 = vcombine.high %v3139, %v3139
          %3146 = vst.msk [vmem:[%s266 + $0xb] sm:$0x1] %vm1059, %v3132
          %3147 = vst.msk [vmem:[%s266 + $0x2b] sm:$0x1] %vm1059, %v3139
          %3148 = vst.msk [vmem:[%s266 + $0x4b] sm:$0x1] %vm1059, %v3140
          %3149 = vst.msk [vmem:[%s266 + $0x6b] sm:$0x1] %vm1059, %v3141
          %v3150 = vld [vmem:[#allocation7] sm:$0xf]
          %v3151 = vld [vmem:[%s5] sm:$0xff]
          %v3152 = vld [vmem:[%s5 + $0x8] sm:$0xff]
          %v3153 = vld [vmem:[#allocation7] sm:$0xf0]
          %v3154 = vld [vmem:[%s879] sm:$0xff]
          %v3155 = vld [vmem:[%s879 + $0x8] sm:$0xff]
          %v3157 = vrot.slane %v3153, 4
          %3158 = vrot.lane.b32.xlu0 %v3157, 20
          %v3159 = vpop.permute.xlu0 %3158
          %v3160 = vsel %vm884, %v3159, 0
          %3162 = vmatprep.subr.mxu0 0.0
          %3163 = vmatpush1.msra.mxu0 0.0
          %3164 = vmatprep.subr.mxu0 0.0
          %3165 = vmatpush1.msra.mxu0 0.0
          %3166 = vmatprep.subr.mxu0 0.0
          %3167 = vmatpush1.msra.mxu0 0.0
          %3168 = vmatprep.subr.mxu0 0.0
          %3169 = vmatpush1.msra.mxu0 0.0
          %3170 = vmatprep.subr.mxu0 0.0
          %3171 = vmatpush1.msra.mxu0 0.0
          %3172 = vmatprep.subr.mxu0 0.0
          %3173 = vmatpush1.msra.mxu0 0.0
          %3174 = vmatprep.subr.mxu0 0.0
          %3175 = vmatpush1.msra.mxu0 0.0
          %3176 = vmatprep.subr.mxu0 0.0
          %3177 = vmatpush1.msra.mxu0 0.0
          %3178 = vmatprep.subr.mxu0 0.0
          %3179 = vmatpush1.msra.mxu0 0.0
          %3180 = vmatprep.subr.mxu0 0.0
          %3181 = vmatpush1.msra.mxu0 0.0
          %3182 = vmatprep.subr.mxu0 0.0
          %3183 = vmatpush1.msra.mxu0 0.0
          %3184 = vmatprep.subr.mxu0 0.0
          %3185 = vmatpush1.msra.mxu0 0.0
          %3186 = vmatprep.subr.mxu0 0.0
          %3187 = vmatpush1.msra.mxu0 0.0
          %3188 = vmatprep.subr.mxu0 0.0
          %3189 = vmatpush1.msra.mxu0 0.0
          %3190 = vmatprep.subr.mxu0 0.0
          %3191 = vmatpush1.msra.mxu0 %v3155
          %3192 = vmatprep.subr.mxu0 0.0
          %3193 = vmatpush1.msra.mxu0 %v3154
          %3194 = vmatprep.subr.mxu0 0.0
          %3195 = vmatpush2.msra.mxu0 0.0
          %3196 = vmatprep.subr.mxu0 0.0
          %3197 = vmatpush2.msra.mxu0 0.0
          %3198 = vmatprep.subr.mxu0 0.0
          %3199 = vmatpush2.msra.mxu0 0.0
          %3200 = vmatprep.subr.mxu0 0.0
          %3201 = vmatpush2.msra.mxu0 0.0
          %3202 = vmatprep.subr.mxu0 0.0
          %3203 = vmatpush2.msra.mxu0 0.0
          %3204 = vmatprep.subr.mxu0 0.0
          %3205 = vmatpush2.msra.mxu0 0.0
          %3206 = vmatprep.subr.mxu0 0.0
          %3207 = vmatpush2.msra.mxu0 0.0
          %3208 = vmatprep.subr.mxu0 0.0
          %3209 = vmatpush2.msra.mxu0 0.0
          %3210 = vmatprep.subr.mxu0 0.0
          %3211 = vmatpush2.msra.mxu0 0.0
          %3212 = vmatprep.subr.mxu0 0.0
          %3213 = vmatpush2.msra.mxu0 0.0
          %3214 = vmatprep.subr.mxu0 0.0
          %3215 = vmatpush2.msra.mxu0 0.0
          %3216 = vmatprep.subr.mxu0 0.0
          %3217 = vmatpush2.msra.mxu0 0.0
          %3218 = vmatprep.subr.mxu0 0.0
          %3219 = vmatpush2.msra.mxu0 0.0
          %3220 = vmatprep.subr.mxu0 0.0
          %3221 = vmatpush2.msra.mxu0 0.0
          %3222 = vmatprep.subr.mxu0 0.0
          %3223 = vmatpush2.msra.mxu0 0.0
          %3224 = vmatprep.subr.mxu0 0.0
          %3225 = vmatpush2.msra.mxu0 0.0
          %3226 = vmatprep.mubr.f32.mxu0 0.0
          %3227 = vmatmul.mubr.f32.gmra.mxu0 %v3160
          %v3228 = vpop.f32.mrf.mxu0
          %v3229 = vadd.f32 0.0, %v3228
          %v3230 = vpop.f32.mrf.mxu0
          %3231 = vdwg.mxu0
          %3233 = vrot.lane.b32.xlu0 %v3150, 20
          %v3234 = vpop.permute.xlu0 %3233
          %v3235 = vsel %vm884, %v3234, 0
          %3237 = vmatprep.subr.mxu0 0.0
          %3238 = vmatpush1.msra.mxu0 0.0
          %3239 = vmatprep.subr.mxu0 0.0
          %3240 = vmatpush1.msra.mxu0 0.0
          %3241 = vmatprep.subr.mxu0 0.0
          %3242 = vmatpush1.msra.mxu0 0.0
          %3243 = vmatprep.subr.mxu0 0.0
          %3244 = vmatpush1.msra.mxu0 0.0
          %3245 = vmatprep.subr.mxu0 0.0
          %3246 = vmatpush1.msra.mxu0 0.0
          %3247 = vmatprep.subr.mxu0 0.0
          %3248 = vmatpush1.msra.mxu0 0.0
          %3249 = vmatprep.subr.mxu0 0.0
          %3250 = vmatpush1.msra.mxu0 0.0
          %3251 = vmatprep.subr.mxu0 0.0
          %3252 = vmatpush1.msra.mxu0 0.0
          %3253 = vmatprep.subr.mxu0 0.0
          %3254 = vmatpush1.msra.mxu0 0.0
          %3255 = vmatprep.subr.mxu0 0.0
          %3256 = vmatpush1.msra.mxu0 0.0
          %3257 = vmatprep.subr.mxu0 0.0
          %3258 = vmatpush1.msra.mxu0 0.0
          %3259 = vmatprep.subr.mxu0 0.0
          %3260 = vmatpush1.msra.mxu0 0.0
          %3261 = vmatprep.subr.mxu0 0.0
          %3262 = vmatpush1.msra.mxu0 0.0
          %3263 = vmatprep.subr.mxu0 0.0
          %3264 = vmatpush1.msra.mxu0 0.0
          %3265 = vmatprep.subr.mxu0 0.0
          %3266 = vmatpush1.msra.mxu0 %v3152
          %3267 = vmatprep.subr.mxu0 0.0
          %3268 = vmatpush1.msra.mxu0 %v3151
          %3269 = vmatprep.subr.mxu0 0.0
          %3270 = vmatpush2.msra.mxu0 0.0
          %3271 = vmatprep.subr.mxu0 0.0
          %3272 = vmatpush2.msra.mxu0 0.0
          %3273 = vmatprep.subr.mxu0 0.0
          %3274 = vmatpush2.msra.mxu0 0.0
          %3275 = vmatprep.subr.mxu0 0.0
          %3276 = vmatpush2.msra.mxu0 0.0
          %3277 = vmatprep.subr.mxu0 0.0
          %3278 = vmatpush2.msra.mxu0 0.0
          %3279 = vmatprep.subr.mxu0 0.0
          %3280 = vmatpush2.msra.mxu0 0.0
          %3281 = vmatprep.subr.mxu0 0.0
          %3282 = vmatpush2.msra.mxu0 0.0
          %3283 = vmatprep.subr.mxu0 0.0
          %3284 = vmatpush2.msra.mxu0 0.0
          %3285 = vmatprep.subr.mxu0 0.0
          %3286 = vmatpush2.msra.mxu0 0.0
          %3287 = vmatprep.subr.mxu0 0.0
          %3288 = vmatpush2.msra.mxu0 0.0
          %3289 = vmatprep.subr.mxu0 0.0
          %3290 = vmatpush2.msra.mxu0 0.0
          %3291 = vmatprep.subr.mxu0 0.0
          %3292 = vmatpush2.msra.mxu0 0.0
          %3293 = vmatprep.subr.mxu0 0.0
          %3294 = vmatpush2.msra.mxu0 0.0
          %3295 = vmatprep.subr.mxu0 0.0
          %3296 = vmatpush2.msra.mxu0 0.0
          %3297 = vmatprep.subr.mxu0 0.0
          %3298 = vmatpush2.msra.mxu0 0.0
          %3299 = vmatprep.subr.mxu0 0.0
          %3300 = vmatpush2.msra.mxu0 0.0
          %3301 = vmatprep.mubr.f32.mxu0 0.0
          %3302 = vmatmul.mubr.f32.gmra.mxu0 %v3235
          %v3303 = vpop.f32.mrf.mxu0
          %v3304 = vadd.f32 %v3229, %v3303
          %v3305 = vpop.f32.mrf.mxu0
          %3306 = vdwg.mxu0
          %v3309 = vunpack.c.l.s4 1966171168
          %v3310 = vunpack.c.0.s8 %v3309
          %v3311 = vlaneseq
          %v3312 = vshrl.u32 %v3311, 7
          %v3313 = vsub.s32 %v3310, %v3312
          %v3314 = vrot.slane %v3304, %v3313
          %v3315 = vcombine.high %v3314, %v3314
          %v3317 = vunpack.c.l.s4 1966171168
          %v3318 = vunpack.c.0.s8 %v3317
          %v3319 = vlaneseq
          %v3320 = vshrl.u32 %v3319, 7
          %v3321 = vsub.s32 %v3318, %v3320
          %v3322 = vrot.slane %v3314, %v3321
          %v3324 = vunpack.c.l.s4 1966171168
          %v3325 = vunpack.c.0.s8 %v3324
          %v3326 = vlaneseq
          %v3327 = vshrl.u32 %v3326, 7
          %v3328 = vsub.s32 %v3325, %v3327
          %v3329 = vrot.slane %v3315, %v3328
          %v3330 = vcombine.high %v3322, %v3322
          %v3331 = vcombine.high %v3329, %v3329
          %3336 = vst.msk [vmem:[%s266 + $0xc] sm:$0x1] %vm1059, %v3322
          %3337 = vst.msk [vmem:[%s266 + $0x2c] sm:$0x1] %vm1059, %v3329
          %3338 = vst.msk [vmem:[%s266 + $0x4c] sm:$0x1] %vm1059, %v3330
          %3339 = vst.msk [vmem:[%s266 + $0x6c] sm:$0x1] %vm1059, %v3331
          %v3340 = vld [vmem:[#allocation7 + $0x18] sm:$0xf]
          %v3341 = vld [vmem:[%s5] sm:$0xff]
          %v3342 = vld [vmem:[%s5 + $0x8] sm:$0xff]
          %v3343 = vld [vmem:[#allocation7 + $0x18] sm:$0xf0]
          %v3344 = vld [vmem:[%s879] sm:$0xff]
          %v3345 = vld [vmem:[%s879 + $0x8] sm:$0xff]
          %v3347 = vrot.slane %v3343, 4
          %3348 = vrot.lane.b32.xlu0 %v3347, 20
          %v3349 = vpop.permute.xlu0 %3348
          %v3350 = vsel %vm884, %v3349, 0
          %3352 = vmatprep.subr.mxu0 0.0
          %3353 = vmatpush1.msra.mxu0 0.0
          %3354 = vmatprep.subr.mxu0 0.0
          %3355 = vmatpush1.msra.mxu0 0.0
          %3356 = vmatprep.subr.mxu0 0.0
          %3357 = vmatpush1.msra.mxu0 0.0
          %3358 = vmatprep.subr.mxu0 0.0
          %3359 = vmatpush1.msra.mxu0 0.0
          %3360 = vmatprep.subr.mxu0 0.0
          %3361 = vmatpush1.msra.mxu0 0.0
          %3362 = vmatprep.subr.mxu0 0.0
          %3363 = vmatpush1.msra.mxu0 0.0
          %3364 = vmatprep.subr.mxu0 0.0
          %3365 = vmatpush1.msra.mxu0 0.0
          %3366 = vmatprep.subr.mxu0 0.0
          %3367 = vmatpush1.msra.mxu0 0.0
          %3368 = vmatprep.subr.mxu0 0.0
          %3369 = vmatpush1.msra.mxu0 0.0
          %3370 = vmatprep.subr.mxu0 0.0
          %3371 = vmatpush1.msra.mxu0 0.0
          %3372 = vmatprep.subr.mxu0 0.0
          %3373 = vmatpush1.msra.mxu0 0.0
          %3374 = vmatprep.subr.mxu0 0.0
          %3375 = vmatpush1.msra.mxu0 0.0
          %3376 = vmatprep.subr.mxu0 0.0
          %3377 = vmatpush1.msra.mxu0 0.0
          %3378 = vmatprep.subr.mxu0 0.0
          %3379 = vmatpush1.msra.mxu0 0.0
          %3380 = vmatprep.subr.mxu0 0.0
          %3381 = vmatpush1.msra.mxu0 %v3345
          %3382 = vmatprep.subr.mxu0 0.0
          %3383 = vmatpush1.msra.mxu0 %v3344
          %3384 = vmatprep.subr.mxu0 0.0
          %3385 = vmatpush2.msra.mxu0 0.0
          %3386 = vmatprep.subr.mxu0 0.0
          %3387 = vmatpush2.msra.mxu0 0.0
          %3388 = vmatprep.subr.mxu0 0.0
          %3389 = vmatpush2.msra.mxu0 0.0
          %3390 = vmatprep.subr.mxu0 0.0
          %3391 = vmatpush2.msra.mxu0 0.0
          %3392 = vmatprep.subr.mxu0 0.0
          %3393 = vmatpush2.msra.mxu0 0.0
          %3394 = vmatprep.subr.mxu0 0.0
          %3395 = vmatpush2.msra.mxu0 0.0
          %3396 = vmatprep.subr.mxu0 0.0
          %3397 = vmatpush2.msra.mxu0 0.0
          %3398 = vmatprep.subr.mxu0 0.0
          %3399 = vmatpush2.msra.mxu0 0.0
          %3400 = vmatprep.subr.mxu0 0.0
          %3401 = vmatpush2.msra.mxu0 0.0
          %3402 = vmatprep.subr.mxu0 0.0
          %3403 = vmatpush2.msra.mxu0 0.0
          %3404 = vmatprep.subr.mxu0 0.0
          %3405 = vmatpush2.msra.mxu0 0.0
          %3406 = vmatprep.subr.mxu0 0.0
          %3407 = vmatpush2.msra.mxu0 0.0
          %3408 = vmatprep.subr.mxu0 0.0
          %3409 = vmatpush2.msra.mxu0 0.0
          %3410 = vmatprep.subr.mxu0 0.0
          %3411 = vmatpush2.msra.mxu0 0.0
          %3412 = vmatprep.subr.mxu0 0.0
          %3413 = vmatpush2.msra.mxu0 0.0
          %3414 = vmatprep.subr.mxu0 0.0
          %3415 = vmatpush2.msra.mxu0 0.0
          %3416 = vmatprep.mubr.f32.mxu0 0.0
          %3417 = vmatmul.mubr.f32.gmra.mxu0 %v3350
          %v3418 = vpop.f32.mrf.mxu0
          %v3419 = vadd.f32 0.0, %v3418
          %v3420 = vpop.f32.mrf.mxu0
          %3421 = vdwg.mxu0
          %3423 = vrot.lane.b32.xlu0 %v3340, 20
          %v3424 = vpop.permute.xlu0 %3423
          %v3425 = vsel %vm884, %v3424, 0
          %3427 = vmatprep.subr.mxu0 0.0
          %3428 = vmatpush1.msra.mxu0 0.0
          %3429 = vmatprep.subr.mxu0 0.0
          %3430 = vmatpush1.msra.mxu0 0.0
          %3431 = vmatprep.subr.mxu0 0.0
          %3432 = vmatpush1.msra.mxu0 0.0
          %3433 = vmatprep.subr.mxu0 0.0
          %3434 = vmatpush1.msra.mxu0 0.0
          %3435 = vmatprep.subr.mxu0 0.0
          %3436 = vmatpush1.msra.mxu0 0.0
          %3437 = vmatprep.subr.mxu0 0.0
          %3438 = vmatpush1.msra.mxu0 0.0
          %3439 = vmatprep.subr.mxu0 0.0
          %3440 = vmatpush1.msra.mxu0 0.0
          %3441 = vmatprep.subr.mxu0 0.0
          %3442 = vmatpush1.msra.mxu0 0.0
          %3443 = vmatprep.subr.mxu0 0.0
          %3444 = vmatpush1.msra.mxu0 0.0
          %3445 = vmatprep.subr.mxu0 0.0
          %3446 = vmatpush1.msra.mxu0 0.0
          %3447 = vmatprep.subr.mxu0 0.0
          %3448 = vmatpush1.msra.mxu0 0.0
          %3449 = vmatprep.subr.mxu0 0.0
          %3450 = vmatpush1.msra.mxu0 0.0
          %3451 = vmatprep.subr.mxu0 0.0
          %3452 = vmatpush1.msra.mxu0 0.0
          %3453 = vmatprep.subr.mxu0 0.0
          %3454 = vmatpush1.msra.mxu0 0.0
          %3455 = vmatprep.subr.mxu0 0.0
          %3456 = vmatpush1.msra.mxu0 %v3342
          %3457 = vmatprep.subr.mxu0 0.0
          %3458 = vmatpush1.msra.mxu0 %v3341
          %3459 = vmatprep.subr.mxu0 0.0
          %3460 = vmatpush2.msra.mxu0 0.0
          %3461 = vmatprep.subr.mxu0 0.0
          %3462 = vmatpush2.msra.mxu0 0.0
          %3463 = vmatprep.subr.mxu0 0.0
          %3464 = vmatpush2.msra.mxu0 0.0
          %3465 = vmatprep.subr.mxu0 0.0
          %3466 = vmatpush2.msra.mxu0 0.0
          %3467 = vmatprep.subr.mxu0 0.0
          %3468 = vmatpush2.msra.mxu0 0.0
          %3469 = vmatprep.subr.mxu0 0.0
          %3470 = vmatpush2.msra.mxu0 0.0
          %3471 = vmatprep.subr.mxu0 0.0
          %3472 = vmatpush2.msra.mxu0 0.0
          %3473 = vmatprep.subr.mxu0 0.0
          %3474 = vmatpush2.msra.mxu0 0.0
          %3475 = vmatprep.subr.mxu0 0.0
          %3476 = vmatpush2.msra.mxu0 0.0
          %3477 = vmatprep.subr.mxu0 0.0
          %3478 = vmatpush2.msra.mxu0 0.0
          %3479 = vmatprep.subr.mxu0 0.0
          %3480 = vmatpush2.msra.mxu0 0.0
          %3481 = vmatprep.subr.mxu0 0.0
          %3482 = vmatpush2.msra.mxu0 0.0
          %3483 = vmatprep.subr.mxu0 0.0
          %3484 = vmatpush2.msra.mxu0 0.0
          %3485 = vmatprep.subr.mxu0 0.0
          %3486 = vmatpush2.msra.mxu0 0.0
          %3487 = vmatprep.subr.mxu0 0.0
          %3488 = vmatpush2.msra.mxu0 0.0
          %3489 = vmatprep.subr.mxu0 0.0
          %3490 = vmatpush2.msra.mxu0 0.0
          %3491 = vmatprep.mubr.f32.mxu0 0.0
          %3492 = vmatmul.mubr.f32.gmra.mxu0 %v3425
          %v3493 = vpop.f32.mrf.mxu0
          %v3494 = vadd.f32 %v3419, %v3493
          %v3495 = vpop.f32.mrf.mxu0
          %3496 = vdwg.mxu0
          %v3499 = vunpack.c.l.s4 1966171168
          %v3500 = vunpack.c.0.s8 %v3499
          %v3501 = vlaneseq
          %v3502 = vshrl.u32 %v3501, 7
          %v3503 = vsub.s32 %v3500, %v3502
          %v3504 = vrot.slane %v3494, %v3503
          %v3505 = vcombine.high %v3504, %v3504
          %v3507 = vunpack.c.l.s4 1966171168
          %v3508 = vunpack.c.0.s8 %v3507
          %v3509 = vlaneseq
          %v3510 = vshrl.u32 %v3509, 7
          %v3511 = vsub.s32 %v3508, %v3510
          %v3512 = vrot.slane %v3504, %v3511
          %v3514 = vunpack.c.l.s4 1966171168
          %v3515 = vunpack.c.0.s8 %v3514
          %v3516 = vlaneseq
          %v3517 = vshrl.u32 %v3516, 7
          %v3518 = vsub.s32 %v3515, %v3517
          %v3519 = vrot.slane %v3505, %v3518
          %v3520 = vcombine.high %v3512, %v3512
          %v3521 = vcombine.high %v3519, %v3519
          %3526 = vst.msk [vmem:[%s266 + $0xd] sm:$0x1] %vm1059, %v3512
          %3527 = vst.msk [vmem:[%s266 + $0x2d] sm:$0x1] %vm1059, %v3519
          %3528 = vst.msk [vmem:[%s266 + $0x4d] sm:$0x1] %vm1059, %v3520
          %3529 = vst.msk [vmem:[%s266 + $0x6d] sm:$0x1] %vm1059, %v3521
          %v3530 = vld [vmem:[#allocation7] sm:$0xf]
          %v3531 = vld [vmem:[#allocation7 + $0x8] sm:$0xf]
          %v3532 = vld [vmem:[%s5] sm:$0xff]
          %v3533 = vld [vmem:[%s5 + $0x8] sm:$0xff]
          %v3534 = vld [vmem:[#allocation7] sm:$0xf0]
          %v3535 = vld [vmem:[#allocation7 + $0x8] sm:$0xf0]
          %v3536 = vld [vmem:[%s879] sm:$0xff]
          %v3537 = vld [vmem:[%s879 + $0x8] sm:$0xff]
          %v3540 = vrot.slane %v3534, 4
          %v3541 = vrot.slane %v3535, 4
          %3542 = vrot.lane.b32.xlu0 %v3540, 2
          %v3543 = vpop.permute.xlu0 %3542
          %3544 = vrot.lane.b32.xlu0 %v3541, 2
          %v3545 = vpop.permute.xlu0 %3544
          %vm3546 = vcmask 15360
          %v3547 = vsel %vm3546, %v3543, %v3545
          %v3548 = vsel %vm884, %v3547, 0
          %3550 = vmatprep.subr.mxu0 0.0
          %3551 = vmatpush1.msra.mxu0 0.0
          %3552 = vmatprep.subr.mxu0 0.0
          %3553 = vmatpush1.msra.mxu0 0.0
          %3554 = vmatprep.subr.mxu0 0.0
          %3555 = vmatpush1.msra.mxu0 0.0
          %3556 = vmatprep.subr.mxu0 0.0
          %3557 = vmatpush1.msra.mxu0 0.0
          %3558 = vmatprep.subr.mxu0 0.0
          %3559 = vmatpush1.msra.mxu0 0.0
          %3560 = vmatprep.subr.mxu0 0.0
          %3561 = vmatpush1.msra.mxu0 0.0
          %3562 = vmatprep.subr.mxu0 0.0
          %3563 = vmatpush1.msra.mxu0 0.0
          %3564 = vmatprep.subr.mxu0 0.0
          %3565 = vmatpush1.msra.mxu0 0.0
          %3566 = vmatprep.subr.mxu0 0.0
          %3567 = vmatpush1.msra.mxu0 0.0
          %3568 = vmatprep.subr.mxu0 0.0
          %3569 = vmatpush1.msra.mxu0 0.0
          %3570 = vmatprep.subr.mxu0 0.0
          %3571 = vmatpush1.msra.mxu0 0.0
          %3572 = vmatprep.subr.mxu0 0.0
          %3573 = vmatpush1.msra.mxu0 0.0
          %3574 = vmatprep.subr.mxu0 0.0
          %3575 = vmatpush1.msra.mxu0 0.0
          %3576 = vmatprep.subr.mxu0 0.0
          %3577 = vmatpush1.msra.mxu0 0.0
          %3578 = vmatprep.subr.mxu0 0.0
          %3579 = vmatpush1.msra.mxu0 %v3537
          %3580 = vmatprep.subr.mxu0 0.0
          %3581 = vmatpush1.msra.mxu0 %v3536
          %3582 = vmatprep.subr.mxu0 0.0
          %3583 = vmatpush2.msra.mxu0 0.0
          %3584 = vmatprep.subr.mxu0 0.0
          %3585 = vmatpush2.msra.mxu0 0.0
          %3586 = vmatprep.subr.mxu0 0.0
          %3587 = vmatpush2.msra.mxu0 0.0
          %3588 = vmatprep.subr.mxu0 0.0
          %3589 = vmatpush2.msra.mxu0 0.0
          %3590 = vmatprep.subr.mxu0 0.0
          %3591 = vmatpush2.msra.mxu0 0.0
          %3592 = vmatprep.subr.mxu0 0.0
          %3593 = vmatpush2.msra.mxu0 0.0
          %3594 = vmatprep.subr.mxu0 0.0
          %3595 = vmatpush2.msra.mxu0 0.0
          %3596 = vmatprep.subr.mxu0 0.0
          %3597 = vmatpush2.msra.mxu0 0.0
          %3598 = vmatprep.subr.mxu0 0.0
          %3599 = vmatpush2.msra.mxu0 0.0
          %3600 = vmatprep.subr.mxu0 0.0
          %3601 = vmatpush2.msra.mxu0 0.0
          %3602 = vmatprep.subr.mxu0 0.0
          %3603 = vmatpush2.msra.mxu0 0.0
          %3604 = vmatprep.subr.mxu0 0.0
          %3605 = vmatpush2.msra.mxu0 0.0
          %3606 = vmatprep.subr.mxu0 0.0
          %3607 = vmatpush2.msra.mxu0 0.0
          %3608 = vmatprep.subr.mxu0 0.0
          %3609 = vmatpush2.msra.mxu0 0.0
          %3610 = vmatprep.subr.mxu0 0.0
          %3611 = vmatpush2.msra.mxu0 0.0
          %3612 = vmatprep.subr.mxu0 0.0
          %3613 = vmatpush2.msra.mxu0 0.0
          %3614 = vmatprep.mubr.f32.mxu0 0.0
          %3615 = vmatmul.mubr.f32.gmra.mxu0 %v3548
          %v3616 = vpop.f32.mrf.mxu0
          %v3617 = vadd.f32 0.0, %v3616
          %v3618 = vpop.f32.mrf.mxu0
          %3619 = vdwg.mxu0
          %3622 = vrot.lane.b32.xlu0 %v3530, 2
          %v3623 = vpop.permute.xlu0 %3622
          %3624 = vrot.lane.b32.xlu0 %v3531, 2
          %v3625 = vpop.permute.xlu0 %3624
          %v3626 = vsel %vm3546, %v3623, %v3625
          %v3627 = vsel %vm884, %v3626, 0
          %3629 = vmatprep.subr.mxu0 0.0
          %3630 = vmatpush1.msra.mxu0 0.0
          %3631 = vmatprep.subr.mxu0 0.0
          %3632 = vmatpush1.msra.mxu0 0.0
          %3633 = vmatprep.subr.mxu0 0.0
          %3634 = vmatpush1.msra.mxu0 0.0
          %3635 = vmatprep.subr.mxu0 0.0
          %3636 = vmatpush1.msra.mxu0 0.0
          %3637 = vmatprep.subr.mxu0 0.0
          %3638 = vmatpush1.msra.mxu0 0.0
          %3639 = vmatprep.subr.mxu0 0.0
          %3640 = vmatpush1.msra.mxu0 0.0
          %3641 = vmatprep.subr.mxu0 0.0
          %3642 = vmatpush1.msra.mxu0 0.0
          %3643 = vmatprep.subr.mxu0 0.0
          %3644 = vmatpush1.msra.mxu0 0.0
          %3645 = vmatprep.subr.mxu0 0.0
          %3646 = vmatpush1.msra.mxu0 0.0
          %3647 = vmatprep.subr.mxu0 0.0
          %3648 = vmatpush1.msra.mxu0 0.0
          %3649 = vmatprep.subr.mxu0 0.0
          %3650 = vmatpush1.msra.mxu0 0.0
          %3651 = vmatprep.subr.mxu0 0.0
          %3652 = vmatpush1.msra.mxu0 0.0
          %3653 = vmatprep.subr.mxu0 0.0
          %3654 = vmatpush1.msra.mxu0 0.0
          %3655 = vmatprep.subr.mxu0 0.0
          %3656 = vmatpush1.msra.mxu0 0.0
          %3657 = vmatprep.subr.mxu0 0.0
          %3658 = vmatpush1.msra.mxu0 %v3533
          %3659 = vmatprep.subr.mxu0 0.0
          %3660 = vmatpush1.msra.mxu0 %v3532
          %3661 = vmatprep.subr.mxu0 0.0
          %3662 = vmatpush2.msra.mxu0 0.0
          %3663 = vmatprep.subr.mxu0 0.0
          %3664 = vmatpush2.msra.mxu0 0.0
          %3665 = vmatprep.subr.mxu0 0.0
          %3666 = vmatpush2.msra.mxu0 0.0
          %3667 = vmatprep.subr.mxu0 0.0
          %3668 = vmatpush2.msra.mxu0 0.0
          %3669 = vmatprep.subr.mxu0 0.0
          %3670 = vmatpush2.msra.mxu0 0.0
          %3671 = vmatprep.subr.mxu0 0.0
          %3672 = vmatpush2.msra.mxu0 0.0
          %3673 = vmatprep.subr.mxu0 0.0
          %3674 = vmatpush2.msra.mxu0 0.0
          %3675 = vmatprep.subr.mxu0 0.0
          %3676 = vmatpush2.msra.mxu0 0.0
          %3677 = vmatprep.subr.mxu0 0.0
          %3678 = vmatpush2.msra.mxu0 0.0
          %3679 = vmatprep.subr.mxu0 0.0
          %3680 = vmatpush2.msra.mxu0 0.0
          %3681 = vmatprep.subr.mxu0 0.0
          %3682 = vmatpush2.msra.mxu0 0.0
          %3683 = vmatprep.subr.mxu0 0.0
          %3684 = vmatpush2.msra.mxu0 0.0
          %3685 = vmatprep.subr.mxu0 0.0
          %3686 = vmatpush2.msra.mxu0 0.0
          %3687 = vmatprep.subr.mxu0 0.0
          %3688 = vmatpush2.msra.mxu0 0.0
          %3689 = vmatprep.subr.mxu0 0.0
          %3690 = vmatpush2.msra.mxu0 0.0
          %3691 = vmatprep.subr.mxu0 0.0
          %3692 = vmatpush2.msra.mxu0 0.0
          %3693 = vmatprep.mubr.f32.mxu0 0.0
          %3694 = vmatmul.mubr.f32.gmra.mxu0 %v3627
          %v3695 = vpop.f32.mrf.mxu0
          %v3696 = vadd.f32 %v3617, %v3695
          %v3697 = vpop.f32.mrf.mxu0
          %3698 = vdwg.mxu0
          %v3701 = vunpack.c.l.s4 1966171168
          %v3702 = vunpack.c.0.s8 %v3701
          %v3703 = vlaneseq
          %v3704 = vshrl.u32 %v3703, 7
          %v3705 = vsub.s32 %v3702, %v3704
          %v3706 = vrot.slane %v3696, %v3705
          %v3707 = vcombine.high %v3706, %v3706
          %v3709 = vunpack.c.l.s4 1966171168
          %v3710 = vunpack.c.0.s8 %v3709
          %v3711 = vlaneseq
          %v3712 = vshrl.u32 %v3711, 7
          %v3713 = vsub.s32 %v3710, %v3712
          %v3714 = vrot.slane %v3706, %v3713
          %v3716 = vunpack.c.l.s4 1966171168
          %v3717 = vunpack.c.0.s8 %v3716
          %v3718 = vlaneseq
          %v3719 = vshrl.u32 %v3718, 7
          %v3720 = vsub.s32 %v3717, %v3719
          %v3721 = vrot.slane %v3707, %v3720
          %v3722 = vcombine.high %v3714, %v3714
          %v3723 = vcombine.high %v3721, %v3721
          %3728 = vst.msk [vmem:[%s266 + $0xe] sm:$0x1] %vm1059, %v3714
          %3729 = vst.msk [vmem:[%s266 + $0x2e] sm:$0x1] %vm1059, %v3721
          %3730 = vst.msk [vmem:[%s266 + $0x4e] sm:$0x1] %vm1059, %v3722
          %3731 = vst.msk [vmem:[%s266 + $0x6e] sm:$0x1] %vm1059, %v3723
          %v3732 = vld [vmem:[#allocation7 + $0x18] sm:$0xf]
          %v3733 = vld [vmem:[#allocation7 + $0x20] sm:$0xf]
          %v3734 = vld [vmem:[%s5] sm:$0xff]
          %v3735 = vld [vmem:[%s5 + $0x8] sm:$0xff]
          %v3736 = vld [vmem:[#allocation7 + $0x18] sm:$0xf0]
          %v3737 = vld [vmem:[#allocation7 + $0x20] sm:$0xf0]
          %v3738 = vld [vmem:[%s879] sm:$0xff]
          %v3739 = vld [vmem:[%s879 + $0x8] sm:$0xff]
          %v3742 = vrot.slane %v3736, 4
          %v3743 = vrot.slane %v3737, 4
          %3744 = vrot.lane.b32.xlu0 %v3742, 2
          %v3745 = vpop.permute.xlu0 %3744
          %3746 = vrot.lane.b32.xlu0 %v3743, 2
          %v3747 = vpop.permute.xlu0 %3746
          %v3748 = vsel %vm3546, %v3745, %v3747
          %v3749 = vsel %vm884, %v3748, 0
          %3751 = vmatprep.subr.mxu0 0.0
          %3752 = vmatpush1.msra.mxu0 0.0
          %3753 = vmatprep.subr.mxu0 0.0
          %3754 = vmatpush1.msra.mxu0 0.0
          %3755 = vmatprep.subr.mxu0 0.0
          %3756 = vmatpush1.msra.mxu0 0.0
          %3757 = vmatprep.subr.mxu0 0.0
          %3758 = vmatpush1.msra.mxu0 0.0
          %3759 = vmatprep.subr.mxu0 0.0
          %3760 = vmatpush1.msra.mxu0 0.0
          %3761 = vmatprep.subr.mxu0 0.0
          %3762 = vmatpush1.msra.mxu0 0.0
          %3763 = vmatprep.subr.mxu0 0.0
          %3764 = vmatpush1.msra.mxu0 0.0
          %3765 = vmatprep.subr.mxu0 0.0
          %3766 = vmatpush1.msra.mxu0 0.0
          %3767 = vmatprep.subr.mxu0 0.0
          %3768 = vmatpush1.msra.mxu0 0.0
          %3769 = vmatprep.subr.mxu0 0.0
          %3770 = vmatpush1.msra.mxu0 0.0
          %3771 = vmatprep.subr.mxu0 0.0
          %3772 = vmatpush1.msra.mxu0 0.0
          %3773 = vmatprep.subr.mxu0 0.0
          %3774 = vmatpush1.msra.mxu0 0.0
          %3775 = vmatprep.subr.mxu0 0.0
          %3776 = vmatpush1.msra.mxu0 0.0
          %3777 = vmatprep.subr.mxu0 0.0
          %3778 = vmatpush1.msra.mxu0 0.0
          %3779 = vmatprep.subr.mxu0 0.0
          %3780 = vmatpush1.msra.mxu0 %v3739
          %3781 = vmatprep.subr.mxu0 0.0
          %3782 = vmatpush1.msra.mxu0 %v3738
          %3783 = vmatprep.subr.mxu0 0.0
          %3784 = vmatpush2.msra.mxu0 0.0
          %3785 = vmatprep.subr.mxu0 0.0
          %3786 = vmatpush2.msra.mxu0 0.0
          %3787 = vmatprep.subr.mxu0 0.0
          %3788 = vmatpush2.msra.mxu0 0.0
          %3789 = vmatprep.subr.mxu0 0.0
          %3790 = vmatpush2.msra.mxu0 0.0
          %3791 = vmatprep.subr.mxu0 0.0
          %3792 = vmatpush2.msra.mxu0 0.0
          %3793 = vmatprep.subr.mxu0 0.0
          %3794 = vmatpush2.msra.mxu0 0.0
          %3795 = vmatprep.subr.mxu0 0.0
          %3796 = vmatpush2.msra.mxu0 0.0
          %3797 = vmatprep.subr.mxu0 0.0
          %3798 = vmatpush2.msra.mxu0 0.0
          %3799 = vmatprep.subr.mxu0 0.0
          %3800 = vmatpush2.msra.mxu0 0.0
          %3801 = vmatprep.subr.mxu0 0.0
          %3802 = vmatpush2.msra.mxu0 0.0
          %3803 = vmatprep.subr.mxu0 0.0
          %3804 = vmatpush2.msra.mxu0 0.0
          %3805 = vmatprep.subr.mxu0 0.0
          %3806 = vmatpush2.msra.mxu0 0.0
          %3807 = vmatprep.subr.mxu0 0.0
          %3808 = vmatpush2.msra.mxu0 0.0
          %3809 = vmatprep.subr.mxu0 0.0
          %3810 = vmatpush2.msra.mxu0 0.0
          %3811 = vmatprep.subr.mxu0 0.0
          %3812 = vmatpush2.msra.mxu0 0.0
          %3813 = vmatprep.subr.mxu0 0.0
          %3814 = vmatpush2.msra.mxu0 0.0
          %3815 = vmatprep.mubr.f32.mxu0 0.0
          %3816 = vmatmul.mubr.f32.gmra.mxu0 %v3749
          %v3817 = vpop.f32.mrf.mxu0
          %v3818 = vadd.f32 0.0, %v3817
          %v3819 = vpop.f32.mrf.mxu0
          %3820 = vdwg.mxu0
          %3823 = vrot.lane.b32.xlu0 %v3732, 2
          %v3824 = vpop.permute.xlu0 %3823
          %3825 = vrot.lane.b32.xlu0 %v3733, 2
          %v3826 = vpop.permute.xlu0 %3825
          %v3827 = vsel %vm3546, %v3824, %v3826
          %v3828 = vsel %vm884, %v3827, 0
          %3830 = vmatprep.subr.mxu0 0.0
          %3831 = vmatpush1.msra.mxu0 0.0
          %3832 = vmatprep.subr.mxu0 0.0
          %3833 = vmatpush1.msra.mxu0 0.0
          %3834 = vmatprep.subr.mxu0 0.0
          %3835 = vmatpush1.msra.mxu0 0.0
          %3836 = vmatprep.subr.mxu0 0.0
          %3837 = vmatpush1.msra.mxu0 0.0
          %3838 = vmatprep.subr.mxu0 0.0
          %3839 = vmatpush1.msra.mxu0 0.0
          %3840 = vmatprep.subr.mxu0 0.0
          %3841 = vmatpush1.msra.mxu0 0.0
          %3842 = vmatprep.subr.mxu0 0.0
          %3843 = vmatpush1.msra.mxu0 0.0
          %3844 = vmatprep.subr.mxu0 0.0
          %3845 = vmatpush1.msra.mxu0 0.0
          %3846 = vmatprep.subr.mxu0 0.0
          %3847 = vmatpush1.msra.mxu0 0.0
          %3848 = vmatprep.subr.mxu0 0.0
          %3849 = vmatpush1.msra.mxu0 0.0
          %3850 = vmatprep.subr.mxu0 0.0
          %3851 = vmatpush1.msra.mxu0 0.0
          %3852 = vmatprep.subr.mxu0 0.0
          %3853 = vmatpush1.msra.mxu0 0.0
          %3854 = vmatprep.subr.mxu0 0.0
          %3855 = vmatpush1.msra.mxu0 0.0
          %3856 = vmatprep.subr.mxu0 0.0
          %3857 = vmatpush1.msra.mxu0 0.0
          %3858 = vmatprep.subr.mxu0 0.0
          %3859 = vmatpush1.msra.mxu0 %v3735
          %3860 = vmatprep.subr.mxu0 0.0
          %3861 = vmatpush1.msra.mxu0 %v3734
          %3862 = vmatprep.subr.mxu0 0.0
          %3863 = vmatpush2.msra.mxu0 0.0
          %3864 = vmatprep.subr.mxu0 0.0
          %3865 = vmatpush2.msra.mxu0 0.0
          %3866 = vmatprep.subr.mxu0 0.0
          %3867 = vmatpush2.msra.mxu0 0.0
          %3868 = vmatprep.subr.mxu0 0.0
          %3869 = vmatpush2.msra.mxu0 0.0
          %3870 = vmatprep.subr.mxu0 0.0
          %3871 = vmatpush2.msra.mxu0 0.0
          %3872 = vmatprep.subr.mxu0 0.0
          %3873 = vmatpush2.msra.mxu0 0.0
          %3874 = vmatprep.subr.mxu0 0.0
          %3875 = vmatpush2.msra.mxu0 0.0
          %3876 = vmatprep.subr.mxu0 0.0
          %3877 = vmatpush2.msra.mxu0 0.0
          %3878 = vmatprep.subr.mxu0 0.0
          %3879 = vmatpush2.msra.mxu0 0.0
          %3880 = vmatprep.subr.mxu0 0.0
          %3881 = vmatpush2.msra.mxu0 0.0
          %3882 = vmatprep.subr.mxu0 0.0
          %3883 = vmatpush2.msra.mxu0 0.0
          %3884 = vmatprep.subr.mxu0 0.0
          %3885 = vmatpush2.msra.mxu0 0.0
          %3886 = vmatprep.subr.mxu0 0.0
          %3887 = vmatpush2.msra.mxu0 0.0
          %3888 = vmatprep.subr.mxu0 0.0
          %3889 = vmatpush2.msra.mxu0 0.0
          %3890 = vmatprep.subr.mxu0 0.0
          %3891 = vmatpush2.msra.mxu0 0.0
          %3892 = vmatprep.subr.mxu0 0.0
          %3893 = vmatpush2.msra.mxu0 0.0
          %3894 = vmatprep.mubr.f32.mxu0 0.0
          %3895 = vmatmul.mubr.f32.gmra.mxu0 %v3828
          %v3896 = vpop.f32.mrf.mxu0
          %v3897 = vadd.f32 %v3818, %v3896
          %v3898 = vpop.f32.mrf.mxu0
          %3899 = vdwg.mxu0
          %v3902 = vunpack.c.l.s4 1966171168
          %v3903 = vunpack.c.0.s8 %v3902
          %v3904 = vlaneseq
          %v3905 = vshrl.u32 %v3904, 7
          %v3906 = vsub.s32 %v3903, %v3905
          %v3907 = vrot.slane %v3897, %v3906
          %v3908 = vcombine.high %v3907, %v3907
          %v3910 = vunpack.c.l.s4 1966171168
          %v3911 = vunpack.c.0.s8 %v3910
          %v3912 = vlaneseq
          %v3913 = vshrl.u32 %v3912, 7
          %v3914 = vsub.s32 %v3911, %v3913
          %v3915 = vrot.slane %v3907, %v3914
          %v3917 = vunpack.c.l.s4 1966171168
          %v3918 = vunpack.c.0.s8 %v3917
          %v3919 = vlaneseq
          %v3920 = vshrl.u32 %v3919, 7
          %v3921 = vsub.s32 %v3918, %v3920
          %v3922 = vrot.slane %v3908, %v3921
          %v3923 = vcombine.high %v3915, %v3915
          %v3924 = vcombine.high %v3922, %v3922
          %3929 = vst.msk [vmem:[%s266 + $0xf] sm:$0x1] %vm1059, %v3915
          %3930 = vst.msk [vmem:[%s266 + $0x2f] sm:$0x1] %vm1059, %v3922
          %3931 = vst.msk [vmem:[%s266 + $0x4f] sm:$0x1] %vm1059, %v3923
          %3932 = vst.msk [vmem:[%s266 + $0x6f] sm:$0x1] %vm1059, %v3924
          %v3933 = vld [vmem:[#allocation7 + $0x8] sm:$0xf]
          %v3934 = vld [vmem:[%s5] sm:$0xff]
          %v3935 = vld [vmem:[%s5 + $0x8] sm:$0xff]
          %v3936 = vld [vmem:[#allocation7 + $0x8] sm:$0xf0]
          %v3937 = vld [vmem:[%s879] sm:$0xff]
          %v3938 = vld [vmem:[%s879 + $0x8] sm:$0xff]
          %v3940 = vrot.slane %v3936, 4
          %3941 = vrot.lane.b32.xlu0 %v3940, 112
          %v3942 = vpop.permute.xlu0 %3941
          %v3943 = vsel %vm884, %v3942, 0
          %3945 = vmatprep.subr.mxu0 0.0
          %3946 = vmatpush1.msra.mxu0 0.0
          %3947 = vmatprep.subr.mxu0 0.0
          %3948 = vmatpush1.msra.mxu0 0.0
          %3949 = vmatprep.subr.mxu0 0.0
          %3950 = vmatpush1.msra.mxu0 0.0
          %3951 = vmatprep.subr.mxu0 0.0
          %3952 = vmatpush1.msra.mxu0 0.0
          %3953 = vmatprep.subr.mxu0 0.0
          %3954 = vmatpush1.msra.mxu0 0.0
          %3955 = vmatprep.subr.mxu0 0.0
          %3956 = vmatpush1.msra.mxu0 0.0
          %3957 = vmatprep.subr.mxu0 0.0
          %3958 = vmatpush1.msra.mxu0 0.0
          %3959 = vmatprep.subr.mxu0 0.0
          %3960 = vmatpush1.msra.mxu0 0.0
          %3961 = vmatprep.subr.mxu0 0.0
          %3962 = vmatpush1.msra.mxu0 0.0
          %3963 = vmatprep.subr.mxu0 0.0
          %3964 = vmatpush1.msra.mxu0 0.0
          %3965 = vmatprep.subr.mxu0 0.0
          %3966 = vmatpush1.msra.mxu0 0.0
          %3967 = vmatprep.subr.mxu0 0.0
          %3968 = vmatpush1.msra.mxu0 0.0
          %3969 = vmatprep.subr.mxu0 0.0
          %3970 = vmatpush1.msra.mxu0 0.0
          %3971 = vmatprep.subr.mxu0 0.0
          %3972 = vmatpush1.msra.mxu0 0.0
          %3973 = vmatprep.subr.mxu0 0.0
          %3974 = vmatpush1.msra.mxu0 %v3938
          %3975 = vmatprep.subr.mxu0 0.0
          %3976 = vmatpush1.msra.mxu0 %v3937
          %3977 = vmatprep.subr.mxu0 0.0
          %3978 = vmatpush2.msra.mxu0 0.0
          %3979 = vmatprep.subr.mxu0 0.0
          %3980 = vmatpush2.msra.mxu0 0.0
          %3981 = vmatprep.subr.mxu0 0.0
          %3982 = vmatpush2.msra.mxu0 0.0
          %3983 = vmatprep.subr.mxu0 0.0
          %3984 = vmatpush2.msra.mxu0 0.0
          %3985 = vmatprep.subr.mxu0 0.0
          %3986 = vmatpush2.msra.mxu0 0.0
          %3987 = vmatprep.subr.mxu0 0.0
          %3988 = vmatpush2.msra.mxu0 0.0
          %3989 = vmatprep.subr.mxu0 0.0
          %3990 = vmatpush2.msra.mxu0 0.0
          %3991 = vmatprep.subr.mxu0 0.0
          %3992 = vmatpush2.msra.mxu0 0.0
          %3993 = vmatprep.subr.mxu0 0.0
          %3994 = vmatpush2.msra.mxu0 0.0
          %3995 = vmatprep.subr.mxu0 0.0
          %3996 = vmatpush2.msra.mxu0 0.0
          %3997 = vmatprep.subr.mxu0 0.0
          %3998 = vmatpush2.msra.mxu0 0.0
          %3999 = vmatprep.subr.mxu0 0.0
          %4000 = vmatpush2.msra.mxu0 0.0
          %4001 = vmatprep.subr.mxu0 0.0
          %4002 = vmatpush2.msra.mxu0 0.0
          %4003 = vmatprep.subr.mxu0 0.0
          %4004 = vmatpush2.msra.mxu0 0.0
          %4005 = vmatprep.subr.mxu0 0.0
          %4006 = vmatpush2.msra.mxu0 0.0
          %4007 = vmatprep.subr.mxu0 0.0
          %4008 = vmatpush2.msra.mxu0 0.0
          %4009 = vmatprep.mubr.f32.mxu0 0.0
          %4010 = vmatmul.mubr.f32.gmra.mxu0 %v3943
          %v4011 = vpop.f32.mrf.mxu0
          %v4012 = vadd.f32 0.0, %v4011
          %v4013 = vpop.f32.mrf.mxu0
          %4014 = vdwg.mxu0
          %4016 = vrot.lane.b32.xlu0 %v3933, 112
          %v4017 = vpop.permute.xlu0 %4016
          %v4018 = vsel %vm884, %v4017, 0
          %4020 = vmatprep.subr.mxu0 0.0
          %4021 = vmatpush1.msra.mxu0 0.0
          %4022 = vmatprep.subr.mxu0 0.0
          %4023 = vmatpush1.msra.mxu0 0.0
          %4024 = vmatprep.subr.mxu0 0.0
          %4025 = vmatpush1.msra.mxu0 0.0
          %4026 = vmatprep.subr.mxu0 0.0
          %4027 = vmatpush1.msra.mxu0 0.0
          %4028 = vmatprep.subr.mxu0 0.0
          %4029 = vmatpush1.msra.mxu0 0.0
          %4030 = vmatprep.subr.mxu0 0.0
          %4031 = vmatpush1.msra.mxu0 0.0
          %4032 = vmatprep.subr.mxu0 0.0
          %4033 = vmatpush1.msra.mxu0 0.0
          %4034 = vmatprep.subr.mxu0 0.0
          %4035 = vmatpush1.msra.mxu0 0.0
          %4036 = vmatprep.subr.mxu0 0.0
          %4037 = vmatpush1.msra.mxu0 0.0
          %4038 = vmatprep.subr.mxu0 0.0
          %4039 = vmatpush1.msra.mxu0 0.0
          %4040 = vmatprep.subr.mxu0 0.0
          %4041 = vmatpush1.msra.mxu0 0.0
          %4042 = vmatprep.subr.mxu0 0.0
          %4043 = vmatpush1.msra.mxu0 0.0
          %4044 = vmatprep.subr.mxu0 0.0
          %4045 = vmatpush1.msra.mxu0 0.0
          %4046 = vmatprep.subr.mxu0 0.0
          %4047 = vmatpush1.msra.mxu0 0.0
          %4048 = vmatprep.subr.mxu0 0.0
          %4049 = vmatpush1.msra.mxu0 %v3935
          %4050 = vmatprep.subr.mxu0 0.0
          %4051 = vmatpush1.msra.mxu0 %v3934
          %4052 = vmatprep.subr.mxu0 0.0
          %4053 = vmatpush2.msra.mxu0 0.0
          %4054 = vmatprep.subr.mxu0 0.0
          %4055 = vmatpush2.msra.mxu0 0.0
          %4056 = vmatprep.subr.mxu0 0.0
          %4057 = vmatpush2.msra.mxu0 0.0
          %4058 = vmatprep.subr.mxu0 0.0
          %4059 = vmatpush2.msra.mxu0 0.0
          %4060 = vmatprep.subr.mxu0 0.0
          %4061 = vmatpush2.msra.mxu0 0.0
          %4062 = vmatprep.subr.mxu0 0.0
          %4063 = vmatpush2.msra.mxu0 0.0
          %4064 = vmatprep.subr.mxu0 0.0
          %4065 = vmatpush2.msra.mxu0 0.0
          %4066 = vmatprep.subr.mxu0 0.0
          %4067 = vmatpush2.msra.mxu0 0.0
          %4068 = vmatprep.subr.mxu0 0.0
          %4069 = vmatpush2.msra.mxu0 0.0
          %4070 = vmatprep.subr.mxu0 0.0
          %4071 = vmatpush2.msra.mxu0 0.0
          %4072 = vmatprep.subr.mxu0 0.0
          %4073 = vmatpush2.msra.mxu0 0.0
          %4074 = vmatprep.subr.mxu0 0.0
          %4075 = vmatpush2.msra.mxu0 0.0
          %4076 = vmatprep.subr.mxu0 0.0
          %4077 = vmatpush2.msra.mxu0 0.0
          %4078 = vmatprep.subr.mxu0 0.0
          %4079 = vmatpush2.msra.mxu0 0.0
          %4080 = vmatprep.subr.mxu0 0.0
          %4081 = vmatpush2.msra.mxu0 0.0
          %4082 = vmatprep.subr.mxu0 0.0
          %4083 = vmatpush2.msra.mxu0 0.0
          %4084 = vmatprep.mubr.f32.mxu0 0.0
          %4085 = vmatmul.mubr.f32.gmra.mxu0 %v4018
          %v4086 = vpop.f32.mrf.mxu0
          %v4087 = vadd.f32 %v4012, %v4086
          %v4088 = vpop.f32.mrf.mxu0
          %4089 = vdwg.mxu0
          %v4092 = vunpack.c.l.s4 1966171168
          %v4093 = vunpack.c.0.s8 %v4092
          %v4094 = vlaneseq
          %v4095 = vshrl.u32 %v4094, 7
          %v4096 = vsub.s32 %v4093, %v4095
          %v4097 = vrot.slane %v4087, %v4096
          %v4098 = vcombine.high %v4097, %v4097
          %v4100 = vunpack.c.l.s4 1966171168
          %v4101 = vunpack.c.0.s8 %v4100
          %v4102 = vlaneseq
          %v4103 = vshrl.u32 %v4102, 7
          %v4104 = vsub.s32 %v4101, %v4103
          %v4105 = vrot.slane %v4097, %v4104
          %v4107 = vunpack.c.l.s4 1966171168
          %v4108 = vunpack.c.0.s8 %v4107
          %v4109 = vlaneseq
          %v4110 = vshrl.u32 %v4109, 7
          %v4111 = vsub.s32 %v4108, %v4110
          %v4112 = vrot.slane %v4098, %v4111
          %v4113 = vcombine.high %v4105, %v4105
          %v4114 = vcombine.high %v4112, %v4112
          %4119 = vst.msk [vmem:[%s266 + $0x10] sm:$0x1] %vm1059, %v4105
          %4120 = vst.msk [vmem:[%s266 + $0x30] sm:$0x1] %vm1059, %v4112
          %4121 = vst.msk [vmem:[%s266 + $0x50] sm:$0x1] %vm1059, %v4113
          %4122 = vst.msk [vmem:[%s266 + $0x70] sm:$0x1] %vm1059, %v4114
          %v4123 = vld [vmem:[#allocation7 + $0x20] sm:$0xf]
          %v4124 = vld [vmem:[%s5] sm:$0xff]
          %v4125 = vld [vmem:[%s5 + $0x8] sm:$0xff]
          %v4126 = vld [vmem:[#allocation7 + $0x20] sm:$0xf0]
          %v4127 = vld [vmem:[%s879] sm:$0xff]
          %v4128 = vld [vmem:[%s879 + $0x8] sm:$0xff]
          %v4130 = vrot.slane %v4126, 4
          %4131 = vrot.lane.b32.xlu0 %v4130, 112
          %v4132 = vpop.permute.xlu0 %4131
          %v4133 = vsel %vm884, %v4132, 0
          %4135 = vmatprep.subr.mxu0 0.0
          %4136 = vmatpush1.msra.mxu0 0.0
          %4137 = vmatprep.subr.mxu0 0.0
          %4138 = vmatpush1.msra.mxu0 0.0
          %4139 = vmatprep.subr.mxu0 0.0
          %4140 = vmatpush1.msra.mxu0 0.0
          %4141 = vmatprep.subr.mxu0 0.0
          %4142 = vmatpush1.msra.mxu0 0.0
          %4143 = vmatprep.subr.mxu0 0.0
          %4144 = vmatpush1.msra.mxu0 0.0
          %4145 = vmatprep.subr.mxu0 0.0
          %4146 = vmatpush1.msra.mxu0 0.0
          %4147 = vmatprep.subr.mxu0 0.0
          %4148 = vmatpush1.msra.mxu0 0.0
          %4149 = vmatprep.subr.mxu0 0.0
          %4150 = vmatpush1.msra.mxu0 0.0
          %4151 = vmatprep.subr.mxu0 0.0
          %4152 = vmatpush1.msra.mxu0 0.0
          %4153 = vmatprep.subr.mxu0 0.0
          %4154 = vmatpush1.msra.mxu0 0.0
          %4155 = vmatprep.subr.mxu0 0.0
          %4156 = vmatpush1.msra.mxu0 0.0
          %4157 = vmatprep.subr.mxu0 0.0
          %4158 = vmatpush1.msra.mxu0 0.0
          %4159 = vmatprep.subr.mxu0 0.0
          %4160 = vmatpush1.msra.mxu0 0.0
          %4161 = vmatprep.subr.mxu0 0.0
          %4162 = vmatpush1.msra.mxu0 0.0
          %4163 = vmatprep.subr.mxu0 0.0
          %4164 = vmatpush1.msra.mxu0 %v4128
          %4165 = vmatprep.subr.mxu0 0.0
          %4166 = vmatpush1.msra.mxu0 %v4127
          %4167 = vmatprep.subr.mxu0 0.0
          %4168 = vmatpush2.msra.mxu0 0.0
          %4169 = vmatprep.subr.mxu0 0.0
          %4170 = vmatpush2.msra.mxu0 0.0
          %4171 = vmatprep.subr.mxu0 0.0
          %4172 = vmatpush2.msra.mxu0 0.0
          %4173 = vmatprep.subr.mxu0 0.0
          %4174 = vmatpush2.msra.mxu0 0.0
          %4175 = vmatprep.subr.mxu0 0.0
          %4176 = vmatpush2.msra.mxu0 0.0
          %4177 = vmatprep.subr.mxu0 0.0
          %4178 = vmatpush2.msra.mxu0 0.0
          %4179 = vmatprep.subr.mxu0 0.0
          %4180 = vmatpush2.msra.mxu0 0.0
          %4181 = vmatprep.subr.mxu0 0.0
          %4182 = vmatpush2.msra.mxu0 0.0
          %4183 = vmatprep.subr.mxu0 0.0
          %4184 = vmatpush2.msra.mxu0 0.0
          %4185 = vmatprep.subr.mxu0 0.0
          %4186 = vmatpush2.msra.mxu0 0.0
          %4187 = vmatprep.subr.mxu0 0.0
          %4188 = vmatpush2.msra.mxu0 0.0
          %4189 = vmatprep.subr.mxu0 0.0
          %4190 = vmatpush2.msra.mxu0 0.0
          %4191 = vmatprep.subr.mxu0 0.0
          %4192 = vmatpush2.msra.mxu0 0.0
          %4193 = vmatprep.subr.mxu0 0.0
          %4194 = vmatpush2.msra.mxu0 0.0
          %4195 = vmatprep.subr.mxu0 0.0
          %4196 = vmatpush2.msra.mxu0 0.0
          %4197 = vmatprep.subr.mxu0 0.0
          %4198 = vmatpush2.msra.mxu0 0.0
          %4199 = vmatprep.mubr.f32.mxu0 0.0
          %4200 = vmatmul.mubr.f32.gmra.mxu0 %v4133
          %v4201 = vpop.f32.mrf.mxu0
          %v4202 = vadd.f32 0.0, %v4201
          %v4203 = vpop.f32.mrf.mxu0
          %4204 = vdwg.mxu0
          %4206 = vrot.lane.b32.xlu0 %v4123, 112
          %v4207 = vpop.permute.xlu0 %4206
          %v4208 = vsel %vm884, %v4207, 0
          %4210 = vmatprep.subr.mxu0 0.0
          %4211 = vmatpush1.msra.mxu0 0.0
          %4212 = vmatprep.subr.mxu0 0.0
          %4213 = vmatpush1.msra.mxu0 0.0
          %4214 = vmatprep.subr.mxu0 0.0
          %4215 = vmatpush1.msra.mxu0 0.0
          %4216 = vmatprep.subr.mxu0 0.0
          %4217 = vmatpush1.msra.mxu0 0.0
          %4218 = vmatprep.subr.mxu0 0.0
          %4219 = vmatpush1.msra.mxu0 0.0
          %4220 = vmatprep.subr.mxu0 0.0
          %4221 = vmatpush1.msra.mxu0 0.0
          %4222 = vmatprep.subr.mxu0 0.0
          %4223 = vmatpush1.msra.mxu0 0.0
          %4224 = vmatprep.subr.mxu0 0.0
          %4225 = vmatpush1.msra.mxu0 0.0
          %4226 = vmatprep.subr.mxu0 0.0
          %4227 = vmatpush1.msra.mxu0 0.0
          %4228 = vmatprep.subr.mxu0 0.0
          %4229 = vmatpush1.msra.mxu0 0.0
          %4230 = vmatprep.subr.mxu0 0.0
          %4231 = vmatpush1.msra.mxu0 0.0
          %4232 = vmatprep.subr.mxu0 0.0
          %4233 = vmatpush1.msra.mxu0 0.0
          %4234 = vmatprep.subr.mxu0 0.0
          %4235 = vmatpush1.msra.mxu0 0.0
          %4236 = vmatprep.subr.mxu0 0.0
          %4237 = vmatpush1.msra.mxu0 0.0
          %4238 = vmatprep.subr.mxu0 0.0
          %4239 = vmatpush1.msra.mxu0 %v4125
          %4240 = vmatprep.subr.mxu0 0.0
          %4241 = vmatpush1.msra.mxu0 %v4124
          %4242 = vmatprep.subr.mxu0 0.0
          %4243 = vmatpush2.msra.mxu0 0.0
          %4244 = vmatprep.subr.mxu0 0.0
          %4245 = vmatpush2.msra.mxu0 0.0
          %4246 = vmatprep.subr.mxu0 0.0
          %4247 = vmatpush2.msra.mxu0 0.0
          %4248 = vmatprep.subr.mxu0 0.0
          %4249 = vmatpush2.msra.mxu0 0.0
          %4250 = vmatprep.subr.mxu0 0.0
          %4251 = vmatpush2.msra.mxu0 0.0
          %4252 = vmatprep.subr.mxu0 0.0
          %4253 = vmatpush2.msra.mxu0 0.0
          %4254 = vmatprep.subr.mxu0 0.0
          %4255 = vmatpush2.msra.mxu0 0.0
          %4256 = vmatprep.subr.mxu0 0.0
          %4257 = vmatpush2.msra.mxu0 0.0
          %4258 = vmatprep.subr.mxu0 0.0
          %4259 = vmatpush2.msra.mxu0 0.0
          %4260 = vmatprep.subr.mxu0 0.0
          %4261 = vmatpush2.msra.mxu0 0.0
          %4262 = vmatprep.subr.mxu0 0.0
          %4263 = vmatpush2.msra.mxu0 0.0
          %4264 = vmatprep.subr.mxu0 0.0
          %4265 = vmatpush2.msra.mxu0 0.0
          %4266 = vmatprep.subr.mxu0 0.0
          %4267 = vmatpush2.msra.mxu0 0.0
          %4268 = vmatprep.subr.mxu0 0.0
          %4269 = vmatpush2.msra.mxu0 0.0
          %4270 = vmatprep.subr.mxu0 0.0
          %4271 = vmatpush2.msra.mxu0 0.0
          %4272 = vmatprep.subr.mxu0 0.0
          %4273 = vmatpush2.msra.mxu0 0.0
          %4274 = vmatprep.mubr.f32.mxu0 0.0
          %4275 = vmatmul.mubr.f32.gmra.mxu0 %v4208
          %v4276 = vpop.f32.mrf.mxu0
          %v4277 = vadd.f32 %v4202, %v4276
          %v4278 = vpop.f32.mrf.mxu0
          %4279 = vdwg.mxu0
          %v4282 = vunpack.c.l.s4 1966171168
          %v4283 = vunpack.c.0.s8 %v4282
          %v4284 = vlaneseq
          %v4285 = vshrl.u32 %v4284, 7
          %v4286 = vsub.s32 %v4283, %v4285
          %v4287 = vrot.slane %v4277, %v4286
          %v4288 = vcombine.high %v4287, %v4287
          %v4290 = vunpack.c.l.s4 1966171168
          %v4291 = vunpack.c.0.s8 %v4290
          %v4292 = vlaneseq
          %v4293 = vshrl.u32 %v4292, 7
          %v4294 = vsub.s32 %v4291, %v4293
          %v4295 = vrot.slane %v4287, %v4294
          %v4297 = vunpack.c.l.s4 1966171168
          %v4298 = vunpack.c.0.s8 %v4297
          %v4299 = vlaneseq
          %v4300 = vshrl.u32 %v4299, 7
          %v4301 = vsub.s32 %v4298, %v4300
          %v4302 = vrot.slane %v4288, %v4301
          %v4303 = vcombine.high %v4295, %v4295
          %v4304 = vcombine.high %v4302, %v4302
          %4309 = vst.msk [vmem:[%s266 + $0x11] sm:$0x1] %vm1059, %v4295
          %4310 = vst.msk [vmem:[%s266 + $0x31] sm:$0x1] %vm1059, %v4302
          %4311 = vst.msk [vmem:[%s266 + $0x51] sm:$0x1] %vm1059, %v4303
          %4312 = vst.msk [vmem:[%s266 + $0x71] sm:$0x1] %vm1059, %v4304
          %v4313 = vld [vmem:[#allocation7 + $0x8] sm:$0xf]
          %v4314 = vld [vmem:[%s5] sm:$0xff]
          %v4315 = vld [vmem:[%s5 + $0x8] sm:$0xff]
          %v4316 = vld [vmem:[#allocation7 + $0x8] sm:$0xf0]
          %v4317 = vld [vmem:[%s879] sm:$0xff]
          %v4318 = vld [vmem:[%s879 + $0x8] sm:$0xff]
          %v4320 = vrot.slane %v4316, 4
          %4321 = vrot.lane.b32.xlu0 %v4320, 94
          %v4322 = vpop.permute.xlu0 %4321
          %v4323 = vsel %vm884, %v4322, 0
          %4325 = vmatprep.subr.mxu0 0.0
          %4326 = vmatpush1.msra.mxu0 0.0
          %4327 = vmatprep.subr.mxu0 0.0
          %4328 = vmatpush1.msra.mxu0 0.0
          %4329 = vmatprep.subr.mxu0 0.0
          %4330 = vmatpush1.msra.mxu0 0.0
          %4331 = vmatprep.subr.mxu0 0.0
          %4332 = vmatpush1.msra.mxu0 0.0
          %4333 = vmatprep.subr.mxu0 0.0
          %4334 = vmatpush1.msra.mxu0 0.0
          %4335 = vmatprep.subr.mxu0 0.0
          %4336 = vmatpush1.msra.mxu0 0.0
          %4337 = vmatprep.subr.mxu0 0.0
          %4338 = vmatpush1.msra.mxu0 0.0
          %4339 = vmatprep.subr.mxu0 0.0
          %4340 = vmatpush1.msra.mxu0 0.0
          %4341 = vmatprep.subr.mxu0 0.0
          %4342 = vmatpush1.msra.mxu0 0.0
          %4343 = vmatprep.subr.mxu0 0.0
          %4344 = vmatpush1.msra.mxu0 0.0
          %4345 = vmatprep.subr.mxu0 0.0
          %4346 = vmatpush1.msra.mxu0 0.0
          %4347 = vmatprep.subr.mxu0 0.0
          %4348 = vmatpush1.msra.mxu0 0.0
          %4349 = vmatprep.subr.mxu0 0.0
          %4350 = vmatpush1.msra.mxu0 0.0
          %4351 = vmatprep.subr.mxu0 0.0
          %4352 = vmatpush1.msra.mxu0 0.0
          %4353 = vmatprep.subr.mxu0 0.0
          %4354 = vmatpush1.msra.mxu0 %v4318
          %4355 = vmatprep.subr.mxu0 0.0
          %4356 = vmatpush1.msra.mxu0 %v4317
          %4357 = vmatprep.subr.mxu0 0.0
          %4358 = vmatpush2.msra.mxu0 0.0
          %4359 = vmatprep.subr.mxu0 0.0
          %4360 = vmatpush2.msra.mxu0 0.0
          %4361 = vmatprep.subr.mxu0 0.0
          %4362 = vmatpush2.msra.mxu0 0.0
          %4363 = vmatprep.subr.mxu0 0.0
          %4364 = vmatpush2.msra.mxu0 0.0
          %4365 = vmatprep.subr.mxu0 0.0
          %4366 = vmatpush2.msra.mxu0 0.0
          %4367 = vmatprep.subr.mxu0 0.0
          %4368 = vmatpush2.msra.mxu0 0.0
          %4369 = vmatprep.subr.mxu0 0.0
          %4370 = vmatpush2.msra.mxu0 0.0
          %4371 = vmatprep.subr.mxu0 0.0
          %4372 = vmatpush2.msra.mxu0 0.0
          %4373 = vmatprep.subr.mxu0 0.0
          %4374 = vmatpush2.msra.mxu0 0.0
          %4375 = vmatprep.subr.mxu0 0.0
          %4376 = vmatpush2.msra.mxu0 0.0
          %4377 = vmatprep.subr.mxu0 0.0
          %4378 = vmatpush2.msra.mxu0 0.0
          %4379 = vmatprep.subr.mxu0 0.0
          %4380 = vmatpush2.msra.mxu0 0.0
          %4381 = vmatprep.subr.mxu0 0.0
          %4382 = vmatpush2.msra.mxu0 0.0
          %4383 = vmatprep.subr.mxu0 0.0
          %4384 = vmatpush2.msra.mxu0 0.0
          %4385 = vmatprep.subr.mxu0 0.0
          %4386 = vmatpush2.msra.mxu0 0.0
          %4387 = vmatprep.subr.mxu0 0.0
          %4388 = vmatpush2.msra.mxu0 0.0
          %4389 = vmatprep.mubr.f32.mxu0 0.0
          %4390 = vmatmul.mubr.f32.gmra.mxu0 %v4323
          %v4391 = vpop.f32.mrf.mxu0
          %v4392 = vadd.f32 0.0, %v4391
          %v4393 = vpop.f32.mrf.mxu0
          %4394 = vdwg.mxu0
          %4396 = vrot.lane.b32.xlu0 %v4313, 94
          %v4397 = vpop.permute.xlu0 %4396
          %v4398 = vsel %vm884, %v4397, 0
          %4400 = vmatprep.subr.mxu0 0.0
          %4401 = vmatpush1.msra.mxu0 0.0
          %4402 = vmatprep.subr.mxu0 0.0
          %4403 = vmatpush1.msra.mxu0 0.0
          %4404 = vmatprep.subr.mxu0 0.0
          %4405 = vmatpush1.msra.mxu0 0.0
          %4406 = vmatprep.subr.mxu0 0.0
          %4407 = vmatpush1.msra.mxu0 0.0
          %4408 = vmatprep.subr.mxu0 0.0
          %4409 = vmatpush1.msra.mxu0 0.0
          %4410 = vmatprep.subr.mxu0 0.0
          %4411 = vmatpush1.msra.mxu0 0.0
          %4412 = vmatprep.subr.mxu0 0.0
          %4413 = vmatpush1.msra.mxu0 0.0
          %4414 = vmatprep.subr.mxu0 0.0
          %4415 = vmatpush1.msra.mxu0 0.0
          %4416 = vmatprep.subr.mxu0 0.0
          %4417 = vmatpush1.msra.mxu0 0.0
          %4418 = vmatprep.subr.mxu0 0.0
          %4419 = vmatpush1.msra.mxu0 0.0
          %4420 = vmatprep.subr.mxu0 0.0
          %4421 = vmatpush1.msra.mxu0 0.0
          %4422 = vmatprep.subr.mxu0 0.0
          %4423 = vmatpush1.msra.mxu0 0.0
          %4424 = vmatprep.subr.mxu0 0.0
          %4425 = vmatpush1.msra.mxu0 0.0
          %4426 = vmatprep.subr.mxu0 0.0
          %4427 = vmatpush1.msra.mxu0 0.0
          %4428 = vmatprep.subr.mxu0 0.0
          %4429 = vmatpush1.msra.mxu0 %v4315
          %4430 = vmatprep.subr.mxu0 0.0
          %4431 = vmatpush1.msra.mxu0 %v4314
          %4432 = vmatprep.subr.mxu0 0.0
          %4433 = vmatpush2.msra.mxu0 0.0
          %4434 = vmatprep.subr.mxu0 0.0
          %4435 = vmatpush2.msra.mxu0 0.0
          %4436 = vmatprep.subr.mxu0 0.0
          %4437 = vmatpush2.msra.mxu0 0.0
          %4438 = vmatprep.subr.mxu0 0.0
          %4439 = vmatpush2.msra.mxu0 0.0
          %4440 = vmatprep.subr.mxu0 0.0
          %4441 = vmatpush2.msra.mxu0 0.0
          %4442 = vmatprep.subr.mxu0 0.0
          %4443 = vmatpush2.msra.mxu0 0.0
          %4444 = vmatprep.subr.mxu0 0.0
          %4445 = vmatpush2.msra.mxu0 0.0
          %4446 = vmatprep.subr.mxu0 0.0
          %4447 = vmatpush2.msra.mxu0 0.0
          %4448 = vmatprep.subr.mxu0 0.0
          %4449 = vmatpush2.msra.mxu0 0.0
          %4450 = vmatprep.subr.mxu0 0.0
          %4451 = vmatpush2.msra.mxu0 0.0
          %4452 = vmatprep.subr.mxu0 0.0
          %4453 = vmatpush2.msra.mxu0 0.0
          %4454 = vmatprep.subr.mxu0 0.0
          %4455 = vmatpush2.msra.mxu0 0.0
          %4456 = vmatprep.subr.mxu0 0.0
          %4457 = vmatpush2.msra.mxu0 0.0
          %4458 = vmatprep.subr.mxu0 0.0
          %4459 = vmatpush2.msra.mxu0 0.0
          %4460 = vmatprep.subr.mxu0 0.0
          %4461 = vmatpush2.msra.mxu0 0.0
          %4462 = vmatprep.subr.mxu0 0.0
          %4463 = vmatpush2.msra.mxu0 0.0
          %4464 = vmatprep.mubr.f32.mxu0 0.0
          %4465 = vmatmul.mubr.f32.gmra.mxu0 %v4398
          %v4466 = vpop.f32.mrf.mxu0
          %v4467 = vadd.f32 %v4392, %v4466
          %v4468 = vpop.f32.mrf.mxu0
          %4469 = vdwg.mxu0
          %v4472 = vunpack.c.l.s4 1966171168
          %v4473 = vunpack.c.0.s8 %v4472
          %v4474 = vlaneseq
          %v4475 = vshrl.u32 %v4474, 7
          %v4476 = vsub.s32 %v4473, %v4475
          %v4477 = vrot.slane %v4467, %v4476
          %v4478 = vcombine.high %v4477, %v4477
          %v4480 = vunpack.c.l.s4 1966171168
          %v4481 = vunpack.c.0.s8 %v4480
          %v4482 = vlaneseq
          %v4483 = vshrl.u32 %v4482, 7
          %v4484 = vsub.s32 %v4481, %v4483
          %v4485 = vrot.slane %v4477, %v4484
          %v4487 = vunpack.c.l.s4 1966171168
          %v4488 = vunpack.c.0.s8 %v4487
          %v4489 = vlaneseq
          %v4490 = vshrl.u32 %v4489, 7
          %v4491 = vsub.s32 %v4488, %v4490
          %v4492 = vrot.slane %v4478, %v4491
          %v4493 = vcombine.high %v4485, %v4485
          %v4494 = vcombine.high %v4492, %v4492
          %4499 = vst.msk [vmem:[%s266 + $0x12] sm:$0x1] %vm1059, %v4485
          %4500 = vst.msk [vmem:[%s266 + $0x32] sm:$0x1] %vm1059, %v4492
          %4501 = vst.msk [vmem:[%s266 + $0x52] sm:$0x1] %vm1059, %v4493
          %4502 = vst.msk [vmem:[%s266 + $0x72] sm:$0x1] %vm1059, %v4494
          %v4503 = vld [vmem:[#allocation7 + $0x20] sm:$0xf]
          %v4504 = vld [vmem:[%s5] sm:$0xff]
          %v4505 = vld [vmem:[%s5 + $0x8] sm:$0xff]
          %v4506 = vld [vmem:[#allocation7 + $0x20] sm:$0xf0]
          %v4507 = vld [vmem:[%s879] sm:$0xff]
          %v4508 = vld [vmem:[%s879 + $0x8] sm:$0xff]
          %v4510 = vrot.slane %v4506, 4
          %4511 = vrot.lane.b32.xlu0 %v4510, 94
          %v4512 = vpop.permute.xlu0 %4511
          %v4513 = vsel %vm884, %v4512, 0
          %4515 = vmatprep.subr.mxu0 0.0
          %4516 = vmatpush1.msra.mxu0 0.0
          %4517 = vmatprep.subr.mxu0 0.0
          %4518 = vmatpush1.msra.mxu0 0.0
          %4519 = vmatprep.subr.mxu0 0.0
          %4520 = vmatpush1.msra.mxu0 0.0
          %4521 = vmatprep.subr.mxu0 0.0
          %4522 = vmatpush1.msra.mxu0 0.0
          %4523 = vmatprep.subr.mxu0 0.0
          %4524 = vmatpush1.msra.mxu0 0.0
          %4525 = vmatprep.subr.mxu0 0.0
          %4526 = vmatpush1.msra.mxu0 0.0
          %4527 = vmatprep.subr.mxu0 0.0
          %4528 = vmatpush1.msra.mxu0 0.0
          %4529 = vmatprep.subr.mxu0 0.0
          %4530 = vmatpush1.msra.mxu0 0.0
          %4531 = vmatprep.subr.mxu0 0.0
          %4532 = vmatpush1.msra.mxu0 0.0
          %4533 = vmatprep.subr.mxu0 0.0
          %4534 = vmatpush1.msra.mxu0 0.0
          %4535 = vmatprep.subr.mxu0 0.0
          %4536 = vmatpush1.msra.mxu0 0.0
          %4537 = vmatprep.subr.mxu0 0.0
          %4538 = vmatpush1.msra.mxu0 0.0
          %4539 = vmatprep.subr.mxu0 0.0
          %4540 = vmatpush1.msra.mxu0 0.0
          %4541 = vmatprep.subr.mxu0 0.0
          %4542 = vmatpush1.msra.mxu0 0.0
          %4543 = vmatprep.subr.mxu0 0.0
          %4544 = vmatpush1.msra.mxu0 %v4508
          %4545 = vmatprep.subr.mxu0 0.0
          %4546 = vmatpush1.msra.mxu0 %v4507
          %4547 = vmatprep.subr.mxu0 0.0
          %4548 = vmatpush2.msra.mxu0 0.0
          %4549 = vmatprep.subr.mxu0 0.0
          %4550 = vmatpush2.msra.mxu0 0.0
          %4551 = vmatprep.subr.mxu0 0.0
          %4552 = vmatpush2.msra.mxu0 0.0
          %4553 = vmatprep.subr.mxu0 0.0
          %4554 = vmatpush2.msra.mxu0 0.0
          %4555 = vmatprep.subr.mxu0 0.0
          %4556 = vmatpush2.msra.mxu0 0.0
          %4557 = vmatprep.subr.mxu0 0.0
          %4558 = vmatpush2.msra.mxu0 0.0
          %4559 = vmatprep.subr.mxu0 0.0
          %4560 = vmatpush2.msra.mxu0 0.0
          %4561 = vmatprep.subr.mxu0 0.0
          %4562 = vmatpush2.msra.mxu0 0.0
          %4563 = vmatprep.subr.mxu0 0.0
          %4564 = vmatpush2.msra.mxu0 0.0
          %4565 = vmatprep.subr.mxu0 0.0
          %4566 = vmatpush2.msra.mxu0 0.0
          %4567 = vmatprep.subr.mxu0 0.0
          %4568 = vmatpush2.msra.mxu0 0.0
          %4569 = vmatprep.subr.mxu0 0.0
          %4570 = vmatpush2.msra.mxu0 0.0
          %4571 = vmatprep.subr.mxu0 0.0
          %4572 = vmatpush2.msra.mxu0 0.0
          %4573 = vmatprep.subr.mxu0 0.0
          %4574 = vmatpush2.msra.mxu0 0.0
          %4575 = vmatprep.subr.mxu0 0.0
          %4576 = vmatpush2.msra.mxu0 0.0
          %4577 = vmatprep.subr.mxu0 0.0
          %4578 = vmatpush2.msra.mxu0 0.0
          %4579 = vmatprep.mubr.f32.mxu0 0.0
          %4580 = vmatmul.mubr.f32.gmra.mxu0 %v4513
          %v4581 = vpop.f32.mrf.mxu0
          %v4582 = vadd.f32 0.0, %v4581
          %v4583 = vpop.f32.mrf.mxu0
          %4584 = vdwg.mxu0
          %4586 = vrot.lane.b32.xlu0 %v4503, 94
          %v4587 = vpop.permute.xlu0 %4586
          %v4588 = vsel %vm884, %v4587, 0
          %4590 = vmatprep.subr.mxu0 0.0
          %4591 = vmatpush1.msra.mxu0 0.0
          %4592 = vmatprep.subr.mxu0 0.0
          %4593 = vmatpush1.msra.mxu0 0.0
          %4594 = vmatprep.subr.mxu0 0.0
          %4595 = vmatpush1.msra.mxu0 0.0
          %4596 = vmatprep.subr.mxu0 0.0
          %4597 = vmatpush1.msra.mxu0 0.0
          %4598 = vmatprep.subr.mxu0 0.0
          %4599 = vmatpush1.msra.mxu0 0.0
          %4600 = vmatprep.subr.mxu0 0.0
          %4601 = vmatpush1.msra.mxu0 0.0
          %4602 = vmatprep.subr.mxu0 0.0
          %4603 = vmatpush1.msra.mxu0 0.0
          %4604 = vmatprep.subr.mxu0 0.0
          %4605 = vmatpush1.msra.mxu0 0.0
          %4606 = vmatprep.subr.mxu0 0.0
          %4607 = vmatpush1.msra.mxu0 0.0
          %4608 = vmatprep.subr.mxu0 0.0
          %4609 = vmatpush1.msra.mxu0 0.0
          %4610 = vmatprep.subr.mxu0 0.0
          %4611 = vmatpush1.msra.mxu0 0.0
          %4612 = vmatprep.subr.mxu0 0.0
          %4613 = vmatpush1.msra.mxu0 0.0
          %4614 = vmatprep.subr.mxu0 0.0
          %4615 = vmatpush1.msra.mxu0 0.0
          %4616 = vmatprep.subr.mxu0 0.0
          %4617 = vmatpush1.msra.mxu0 0.0
          %4618 = vmatprep.subr.mxu0 0.0
          %4619 = vmatpush1.msra.mxu0 %v4505
          %4620 = vmatprep.subr.mxu0 0.0
          %4621 = vmatpush1.msra.mxu0 %v4504
          %4622 = vmatprep.subr.mxu0 0.0
          %4623 = vmatpush2.msra.mxu0 0.0
          %4624 = vmatprep.subr.mxu0 0.0
          %4625 = vmatpush2.msra.mxu0 0.0
          %4626 = vmatprep.subr.mxu0 0.0
          %4627 = vmatpush2.msra.mxu0 0.0
          %4628 = vmatprep.subr.mxu0 0.0
          %4629 = vmatpush2.msra.mxu0 0.0
          %4630 = vmatprep.subr.mxu0 0.0
          %4631 = vmatpush2.msra.mxu0 0.0
          %4632 = vmatprep.subr.mxu0 0.0
          %4633 = vmatpush2.msra.mxu0 0.0
          %4634 = vmatprep.subr.mxu0 0.0
          %4635 = vmatpush2.msra.mxu0 0.0
          %4636 = vmatprep.subr.mxu0 0.0
          %4637 = vmatpush2.msra.mxu0 0.0
          %4638 = vmatprep.subr.mxu0 0.0
          %4639 = vmatpush2.msra.mxu0 0.0
          %4640 = vmatprep.subr.mxu0 0.0
          %4641 = vmatpush2.msra.mxu0 0.0
          %4642 = vmatprep.subr.mxu0 0.0
          %4643 = vmatpush2.msra.mxu0 0.0
          %4644 = vmatprep.subr.mxu0 0.0
          %4645 = vmatpush2.msra.mxu0 0.0
          %4646 = vmatprep.subr.mxu0 0.0
          %4647 = vmatpush2.msra.mxu0 0.0
          %4648 = vmatprep.subr.mxu0 0.0
          %4649 = vmatpush2.msra.mxu0 0.0
          %4650 = vmatprep.subr.mxu0 0.0
          %4651 = vmatpush2.msra.mxu0 0.0
          %4652 = vmatprep.subr.mxu0 0.0
          %4653 = vmatpush2.msra.mxu0 0.0
          %4654 = vmatprep.mubr.f32.mxu0 0.0
          %4655 = vmatmul.mubr.f32.gmra.mxu0 %v4588
          %v4656 = vpop.f32.mrf.mxu0
          %v4657 = vadd.f32 %v4582, %v4656
          %v4658 = vpop.f32.mrf.mxu0
          %4659 = vdwg.mxu0
          %v4662 = vunpack.c.l.s4 1966171168
          %v4663 = vunpack.c.0.s8 %v4662
          %v4664 = vlaneseq
          %v4665 = vshrl.u32 %v4664, 7
          %v4666 = vsub.s32 %v4663, %v4665
          %v4667 = vrot.slane %v4657, %v4666
          %v4668 = vcombine.high %v4667, %v4667
          %v4670 = vunpack.c.l.s4 1966171168
          %v4671 = vunpack.c.0.s8 %v4670
          %v4672 = vlaneseq
          %v4673 = vshrl.u32 %v4672, 7
          %v4674 = vsub.s32 %v4671, %v4673
          %v4675 = vrot.slane %v4667, %v4674
          %v4677 = vunpack.c.l.s4 1966171168
          %v4678 = vunpack.c.0.s8 %v4677
          %v4679 = vlaneseq
          %v4680 = vshrl.u32 %v4679, 7
          %v4681 = vsub.s32 %v4678, %v4680
          %v4682 = vrot.slane %v4668, %v4681
          %v4683 = vcombine.high %v4675, %v4675
          %v4684 = vcombine.high %v4682, %v4682
          %4689 = vst.msk [vmem:[%s266 + $0x13] sm:$0x1] %vm1059, %v4675
          %4690 = vst.msk [vmem:[%s266 + $0x33] sm:$0x1] %vm1059, %v4682
          %4691 = vst.msk [vmem:[%s266 + $0x53] sm:$0x1] %vm1059, %v4683
          %4692 = vst.msk [vmem:[%s266 + $0x73] sm:$0x1] %vm1059, %v4684
          %v4693 = vld [vmem:[#allocation7 + $0x8] sm:$0xf]
          %v4694 = vld [vmem:[%s5] sm:$0xff]
          %v4695 = vld [vmem:[%s5 + $0x8] sm:$0xff]
          %v4696 = vld [vmem:[#allocation7 + $0x8] sm:$0xf0]
          %v4697 = vld [vmem:[%s879] sm:$0xff]
          %v4698 = vld [vmem:[%s879 + $0x8] sm:$0xff]
          %v4700 = vrot.slane %v4696, 4
          %4701 = vrot.lane.b32.xlu0 %v4700, 76
          %v4702 = vpop.permute.xlu0 %4701
          %v4703 = vsel %vm884, %v4702, 0
          %4705 = vmatprep.subr.mxu0 0.0
          %4706 = vmatpush1.msra.mxu0 0.0
          %4707 = vmatprep.subr.mxu0 0.0
          %4708 = vmatpush1.msra.mxu0 0.0
          %4709 = vmatprep.subr.mxu0 0.0
          %4710 = vmatpush1.msra.mxu0 0.0
          %4711 = vmatprep.subr.mxu0 0.0
          %4712 = vmatpush1.msra.mxu0 0.0
          %4713 = vmatprep.subr.mxu0 0.0
          %4714 = vmatpush1.msra.mxu0 0.0
          %4715 = vmatprep.subr.mxu0 0.0
          %4716 = vmatpush1.msra.mxu0 0.0
          %4717 = vmatprep.subr.mxu0 0.0
          %4718 = vmatpush1.msra.mxu0 0.0
          %4719 = vmatprep.subr.mxu0 0.0
          %4720 = vmatpush1.msra.mxu0 0.0
          %4721 = vmatprep.subr.mxu0 0.0
          %4722 = vmatpush1.msra.mxu0 0.0
          %4723 = vmatprep.subr.mxu0 0.0
          %4724 = vmatpush1.msra.mxu0 0.0
          %4725 = vmatprep.subr.mxu0 0.0
          %4726 = vmatpush1.msra.mxu0 0.0
          %4727 = vmatprep.subr.mxu0 0.0
          %4728 = vmatpush1.msra.mxu0 0.0
          %4729 = vmatprep.subr.mxu0 0.0
          %4730 = vmatpush1.msra.mxu0 0.0
          %4731 = vmatprep.subr.mxu0 0.0
          %4732 = vmatpush1.msra.mxu0 0.0
          %4733 = vmatprep.subr.mxu0 0.0
          %4734 = vmatpush1.msra.mxu0 %v4698
          %4735 = vmatprep.subr.mxu0 0.0
          %4736 = vmatpush1.msra.mxu0 %v4697
          %4737 = vmatprep.subr.mxu0 0.0
          %4738 = vmatpush2.msra.mxu0 0.0
          %4739 = vmatprep.subr.mxu0 0.0
          %4740 = vmatpush2.msra.mxu0 0.0
          %4741 = vmatprep.subr.mxu0 0.0
          %4742 = vmatpush2.msra.mxu0 0.0
          %4743 = vmatprep.subr.mxu0 0.0
          %4744 = vmatpush2.msra.mxu0 0.0
          %4745 = vmatprep.subr.mxu0 0.0
          %4746 = vmatpush2.msra.mxu0 0.0
          %4747 = vmatprep.subr.mxu0 0.0
          %4748 = vmatpush2.msra.mxu0 0.0
          %4749 = vmatprep.subr.mxu0 0.0
          %4750 = vmatpush2.msra.mxu0 0.0
          %4751 = vmatprep.subr.mxu0 0.0
          %4752 = vmatpush2.msra.mxu0 0.0
          %4753 = vmatprep.subr.mxu0 0.0
          %4754 = vmatpush2.msra.mxu0 0.0
          %4755 = vmatprep.subr.mxu0 0.0
          %4756 = vmatpush2.msra.mxu0 0.0
          %4757 = vmatprep.subr.mxu0 0.0
          %4758 = vmatpush2.msra.mxu0 0.0
          %4759 = vmatprep.subr.mxu0 0.0
          %4760 = vmatpush2.msra.mxu0 0.0
          %4761 = vmatprep.subr.mxu0 0.0
          %4762 = vmatpush2.msra.mxu0 0.0
          %4763 = vmatprep.subr.mxu0 0.0
          %4764 = vmatpush2.msra.mxu0 0.0
          %4765 = vmatprep.subr.mxu0 0.0
          %4766 = vmatpush2.msra.mxu0 0.0
          %4767 = vmatprep.subr.mxu0 0.0
          %4768 = vmatpush2.msra.mxu0 0.0
          %4769 = vmatprep.mubr.f32.mxu0 0.0
          %4770 = vmatmul.mubr.f32.gmra.mxu0 %v4703
          %v4771 = vpop.f32.mrf.mxu0
          %v4772 = vadd.f32 0.0, %v4771
          %v4773 = vpop.f32.mrf.mxu0
          %4774 = vdwg.mxu0
          %4776 = vrot.lane.b32.xlu0 %v4693, 76
          %v4777 = vpop.permute.xlu0 %4776
          %v4778 = vsel %vm884, %v4777, 0
          %4780 = vmatprep.subr.mxu0 0.0
          %4781 = vmatpush1.msra.mxu0 0.0
          %4782 = vmatprep.subr.mxu0 0.0
          %4783 = vmatpush1.msra.mxu0 0.0
          %4784 = vmatprep.subr.mxu0 0.0
          %4785 = vmatpush1.msra.mxu0 0.0
          %4786 = vmatprep.subr.mxu0 0.0
          %4787 = vmatpush1.msra.mxu0 0.0
          %4788 = vmatprep.subr.mxu0 0.0
          %4789 = vmatpush1.msra.mxu0 0.0
          %4790 = vmatprep.subr.mxu0 0.0
          %4791 = vmatpush1.msra.mxu0 0.0
          %4792 = vmatprep.subr.mxu0 0.0
          %4793 = vmatpush1.msra.mxu0 0.0
          %4794 = vmatprep.subr.mxu0 0.0
          %4795 = vmatpush1.msra.mxu0 0.0
          %4796 = vmatprep.subr.mxu0 0.0
          %4797 = vmatpush1.msra.mxu0 0.0
          %4798 = vmatprep.subr.mxu0 0.0
          %4799 = vmatpush1.msra.mxu0 0.0
          %4800 = vmatprep.subr.mxu0 0.0
          %4801 = vmatpush1.msra.mxu0 0.0
          %4802 = vmatprep.subr.mxu0 0.0
          %4803 = vmatpush1.msra.mxu0 0.0
          %4804 = vmatprep.subr.mxu0 0.0
          %4805 = vmatpush1.msra.mxu0 0.0
          %4806 = vmatprep.subr.mxu0 0.0
          %4807 = vmatpush1.msra.mxu0 0.0
          %4808 = vmatprep.subr.mxu0 0.0
          %4809 = vmatpush1.msra.mxu0 %v4695
          %4810 = vmatprep.subr.mxu0 0.0
          %4811 = vmatpush1.msra.mxu0 %v4694
          %4812 = vmatprep.subr.mxu0 0.0
          %4813 = vmatpush2.msra.mxu0 0.0
          %4814 = vmatprep.subr.mxu0 0.0
          %4815 = vmatpush2.msra.mxu0 0.0
          %4816 = vmatprep.subr.mxu0 0.0
          %4817 = vmatpush2.msra.mxu0 0.0
          %4818 = vmatprep.subr.mxu0 0.0
          %4819 = vmatpush2.msra.mxu0 0.0
          %4820 = vmatprep.subr.mxu0 0.0
          %4821 = vmatpush2.msra.mxu0 0.0
          %4822 = vmatprep.subr.mxu0 0.0
          %4823 = vmatpush2.msra.mxu0 0.0
          %4824 = vmatprep.subr.mxu0 0.0
          %4825 = vmatpush2.msra.mxu0 0.0
          %4826 = vmatprep.subr.mxu0 0.0
          %4827 = vmatpush2.msra.mxu0 0.0
          %4828 = vmatprep.subr.mxu0 0.0
          %4829 = vmatpush2.msra.mxu0 0.0
          %4830 = vmatprep.subr.mxu0 0.0
          %4831 = vmatpush2.msra.mxu0 0.0
          %4832 = vmatprep.subr.mxu0 0.0
          %4833 = vmatpush2.msra.mxu0 0.0
          %4834 = vmatprep.subr.mxu0 0.0
          %4835 = vmatpush2.msra.mxu0 0.0
          %4836 = vmatprep.subr.mxu0 0.0
          %4837 = vmatpush2.msra.mxu0 0.0
          %4838 = vmatprep.subr.mxu0 0.0
          %4839 = vmatpush2.msra.mxu0 0.0
          %4840 = vmatprep.subr.mxu0 0.0
          %4841 = vmatpush2.msra.mxu0 0.0
          %4842 = vmatprep.subr.mxu0 0.0
          %4843 = vmatpush2.msra.mxu0 0.0
          %4844 = vmatprep.mubr.f32.mxu0 0.0
          %4845 = vmatmul.mubr.f32.gmra.mxu0 %v4778
          %v4846 = vpop.f32.mrf.mxu0
          %v4847 = vadd.f32 %v4772, %v4846
          %v4848 = vpop.f32.mrf.mxu0
          %4849 = vdwg.mxu0
          %v4852 = vunpack.c.l.s4 1966171168
          %v4853 = vunpack.c.0.s8 %v4852
          %v4854 = vlaneseq
          %v4855 = vshrl.u32 %v4854, 7
          %v4856 = vsub.s32 %v4853, %v4855
          %v4857 = vrot.slane %v4847, %v4856
          %v4858 = vcombine.high %v4857, %v4857
          %v4860 = vunpack.c.l.s4 1966171168
          %v4861 = vunpack.c.0.s8 %v4860
          %v4862 = vlaneseq
          %v4863 = vshrl.u32 %v4862, 7
          %v4864 = vsub.s32 %v4861, %v4863
          %v4865 = vrot.slane %v4857, %v4864
          %v4867 = vunpack.c.l.s4 1966171168
          %v4868 = vunpack.c.0.s8 %v4867
          %v4869 = vlaneseq
          %v4870 = vshrl.u32 %v4869, 7
          %v4871 = vsub.s32 %v4868, %v4870
          %v4872 = vrot.slane %v4858, %v4871
          %v4873 = vcombine.high %v4865, %v4865
          %v4874 = vcombine.high %v4872, %v4872
          %4879 = vst.msk [vmem:[%s266 + $0x14] sm:$0x1] %vm1059, %v4865
          %4880 = vst.msk [vmem:[%s266 + $0x34] sm:$0x1] %vm1059, %v4872
          %4881 = vst.msk [vmem:[%s266 + $0x54] sm:$0x1] %vm1059, %v4873
          %4882 = vst.msk [vmem:[%s266 + $0x74] sm:$0x1] %vm1059, %v4874
          %v4883 = vld [vmem:[#allocation7 + $0x20] sm:$0xf]
          %v4884 = vld [vmem:[%s5] sm:$0xff]
          %v4885 = vld [vmem:[%s5 + $0x8] sm:$0xff]
          %v4886 = vld [vmem:[#allocation7 + $0x20] sm:$0xf0]
          %v4887 = vld [vmem:[%s879] sm:$0xff]
          %v4888 = vld [vmem:[%s879 + $0x8] sm:$0xff]
          %v4890 = vrot.slane %v4886, 4
          %4891 = vrot.lane.b32.xlu0 %v4890, 76
          %v4892 = vpop.permute.xlu0 %4891
          %v4893 = vsel %vm884, %v4892, 0
          %4895 = vmatprep.subr.mxu0 0.0
          %4896 = vmatpush1.msra.mxu0 0.0
          %4897 = vmatprep.subr.mxu0 0.0
          %4898 = vmatpush1.msra.mxu0 0.0
          %4899 = vmatprep.subr.mxu0 0.0
          %4900 = vmatpush1.msra.mxu0 0.0
          %4901 = vmatprep.subr.mxu0 0.0
          %4902 = vmatpush1.msra.mxu0 0.0
          %4903 = vmatprep.subr.mxu0 0.0
          %4904 = vmatpush1.msra.mxu0 0.0
          %4905 = vmatprep.subr.mxu0 0.0
          %4906 = vmatpush1.msra.mxu0 0.0
          %4907 = vmatprep.subr.mxu0 0.0
          %4908 = vmatpush1.msra.mxu0 0.0
          %4909 = vmatprep.subr.mxu0 0.0
          %4910 = vmatpush1.msra.mxu0 0.0
          %4911 = vmatprep.subr.mxu0 0.0
          %4912 = vmatpush1.msra.mxu0 0.0
          %4913 = vmatprep.subr.mxu0 0.0
          %4914 = vmatpush1.msra.mxu0 0.0
          %4915 = vmatprep.subr.mxu0 0.0
          %4916 = vmatpush1.msra.mxu0 0.0
          %4917 = vmatprep.subr.mxu0 0.0
          %4918 = vmatpush1.msra.mxu0 0.0
          %4919 = vmatprep.subr.mxu0 0.0
          %4920 = vmatpush1.msra.mxu0 0.0
          %4921 = vmatprep.subr.mxu0 0.0
          %4922 = vmatpush1.msra.mxu0 0.0
          %4923 = vmatprep.subr.mxu0 0.0
          %4924 = vmatpush1.msra.mxu0 %v4888
          %4925 = vmatprep.subr.mxu0 0.0
          %4926 = vmatpush1.msra.mxu0 %v4887
          %4927 = vmatprep.subr.mxu0 0.0
          %4928 = vmatpush2.msra.mxu0 0.0
          %4929 = vmatprep.subr.mxu0 0.0
          %4930 = vmatpush2.msra.mxu0 0.0
          %4931 = vmatprep.subr.mxu0 0.0
          %4932 = vmatpush2.msra.mxu0 0.0
          %4933 = vmatprep.subr.mxu0 0.0
          %4934 = vmatpush2.msra.mxu0 0.0
          %4935 = vmatprep.subr.mxu0 0.0
          %4936 = vmatpush2.msra.mxu0 0.0
          %4937 = vmatprep.subr.mxu0 0.0
          %4938 = vmatpush2.msra.mxu0 0.0
          %4939 = vmatprep.subr.mxu0 0.0
          %4940 = vmatpush2.msra.mxu0 0.0
          %4941 = vmatprep.subr.mxu0 0.0
          %4942 = vmatpush2.msra.mxu0 0.0
          %4943 = vmatprep.subr.mxu0 0.0
          %4944 = vmatpush2.msra.mxu0 0.0
          %4945 = vmatprep.subr.mxu0 0.0
          %4946 = vmatpush2.msra.mxu0 0.0
          %4947 = vmatprep.subr.mxu0 0.0
          %4948 = vmatpush2.msra.mxu0 0.0
          %4949 = vmatprep.subr.mxu0 0.0
          %4950 = vmatpush2.msra.mxu0 0.0
          %4951 = vmatprep.subr.mxu0 0.0
          %4952 = vmatpush2.msra.mxu0 0.0
          %4953 = vmatprep.subr.mxu0 0.0
          %4954 = vmatpush2.msra.mxu0 0.0
          %4955 = vmatprep.subr.mxu0 0.0
          %4956 = vmatpush2.msra.mxu0 0.0
          %4957 = vmatprep.subr.mxu0 0.0
          %4958 = vmatpush2.msra.mxu0 0.0
          %4959 = vmatprep.mubr.f32.mxu0 0.0
          %4960 = vmatmul.mubr.f32.gmra.mxu0 %v4893
          %v4961 = vpop.f32.mrf.mxu0
          %v4962 = vadd.f32 0.0, %v4961
          %v4963 = vpop.f32.mrf.mxu0
          %4964 = vdwg.mxu0
          %4966 = vrot.lane.b32.xlu0 %v4883, 76
          %v4967 = vpop.permute.xlu0 %4966
          %v4968 = vsel %vm884, %v4967, 0
          %4970 = vmatprep.subr.mxu0 0.0
          %4971 = vmatpush1.msra.mxu0 0.0
          %4972 = vmatprep.subr.mxu0 0.0
          %4973 = vmatpush1.msra.mxu0 0.0
          %4974 = vmatprep.subr.mxu0 0.0
          %4975 = vmatpush1.msra.mxu0 0.0
          %4976 = vmatprep.subr.mxu0 0.0
          %4977 = vmatpush1.msra.mxu0 0.0
          %4978 = vmatprep.subr.mxu0 0.0
          %4979 = vmatpush1.msra.mxu0 0.0
          %4980 = vmatprep.subr.mxu0 0.0
          %4981 = vmatpush1.msra.mxu0 0.0
          %4982 = vmatprep.subr.mxu0 0.0
          %4983 = vmatpush1.msra.mxu0 0.0
          %4984 = vmatprep.subr.mxu0 0.0
          %4985 = vmatpush1.msra.mxu0 0.0
          %4986 = vmatprep.subr.mxu0 0.0
          %4987 = vmatpush1.msra.mxu0 0.0
          %4988 = vmatprep.subr.mxu0 0.0
          %4989 = vmatpush1.msra.mxu0 0.0
          %4990 = vmatprep.subr.mxu0 0.0
          %4991 = vmatpush1.msra.mxu0 0.0
          %4992 = vmatprep.subr.mxu0 0.0
          %4993 = vmatpush1.msra.mxu0 0.0
          %4994 = vmatprep.subr.mxu0 0.0
          %4995 = vmatpush1.msra.mxu0 0.0
          %4996 = vmatprep.subr.mxu0 0.0
          %4997 = vmatpush1.msra.mxu0 0.0
          %4998 = vmatprep.subr.mxu0 0.0
          %4999 = vmatpush1.msra.mxu0 %v4885
          %5000 = vmatprep.subr.mxu0 0.0
          %5001 = vmatpush1.msra.mxu0 %v4884
          %5002 = vmatprep.subr.mxu0 0.0
          %5003 = vmatpush2.msra.mxu0 0.0
          %5004 = vmatprep.subr.mxu0 0.0
          %5005 = vmatpush2.msra.mxu0 0.0
          %5006 = vmatprep.subr.mxu0 0.0
          %5007 = vmatpush2.msra.mxu0 0.0
          %5008 = vmatprep.subr.mxu0 0.0
          %5009 = vmatpush2.msra.mxu0 0.0
          %5010 = vmatprep.subr.mxu0 0.0
          %5011 = vmatpush2.msra.mxu0 0.0
          %5012 = vmatprep.subr.mxu0 0.0
          %5013 = vmatpush2.msra.mxu0 0.0
          %5014 = vmatprep.subr.mxu0 0.0
          %5015 = vmatpush2.msra.mxu0 0.0
          %5016 = vmatprep.subr.mxu0 0.0
          %5017 = vmatpush2.msra.mxu0 0.0
          %5018 = vmatprep.subr.mxu0 0.0
          %5019 = vmatpush2.msra.mxu0 0.0
          %5020 = vmatprep.subr.mxu0 0.0
          %5021 = vmatpush2.msra.mxu0 0.0
          %5022 = vmatprep.subr.mxu0 0.0
          %5023 = vmatpush2.msra.mxu0 0.0
          %5024 = vmatprep.subr.mxu0 0.0
          %5025 = vmatpush2.msra.mxu0 0.0
          %5026 = vmatprep.subr.mxu0 0.0
          %5027 = vmatpush2.msra.mxu0 0.0
          %5028 = vmatprep.subr.mxu0 0.0
          %5029 = vmatpush2.msra.mxu0 0.0
          %5030 = vmatprep.subr.mxu0 0.0
          %5031 = vmatpush2.msra.mxu0 0.0
          %5032 = vmatprep.subr.mxu0 0.0
          %5033 = vmatpush2.msra.mxu0 0.0
          %5034 = vmatprep.mubr.f32.mxu0 0.0
          %5035 = vmatmul.mubr.f32.gmra.mxu0 %v4968
          %v5036 = vpop.f32.mrf.mxu0
          %v5037 = vadd.f32 %v4962, %v5036
          %v5038 = vpop.f32.mrf.mxu0
          %5039 = vdwg.mxu0
          %v5042 = vunpack.c.l.s4 1966171168
          %v5043 = vunpack.c.0.s8 %v5042
          %v5044 = vlaneseq
          %v5045 = vshrl.u32 %v5044, 7
          %v5046 = vsub.s32 %v5043, %v5045
          %v5047 = vrot.slane %v5037, %v5046
          %v5048 = vcombine.high %v5047, %v5047
          %v5050 = vunpack.c.l.s4 1966171168
          %v5051 = vunpack.c.0.s8 %v5050
          %v5052 = vlaneseq
          %v5053 = vshrl.u32 %v5052, 7
          %v5054 = vsub.s32 %v5051, %v5053
          %v5055 = vrot.slane %v5047, %v5054
          %v5057 = vunpack.c.l.s4 1966171168
          %v5058 = vunpack.c.0.s8 %v5057
          %v5059 = vlaneseq
          %v5060 = vshrl.u32 %v5059, 7
          %v5061 = vsub.s32 %v5058, %v5060
          %v5062 = vrot.slane %v5048, %v5061
          %v5063 = vcombine.high %v5055, %v5055
          %v5064 = vcombine.high %v5062, %v5062
          %5069 = vst.msk [vmem:[%s266 + $0x15] sm:$0x1] %vm1059, %v5055
          %5070 = vst.msk [vmem:[%s266 + $0x35] sm:$0x1] %vm1059, %v5062
          %5071 = vst.msk [vmem:[%s266 + $0x55] sm:$0x1] %vm1059, %v5063
          %5072 = vst.msk [vmem:[%s266 + $0x75] sm:$0x1] %vm1059, %v5064
          %v5073 = vld [vmem:[#allocation7 + $0x8] sm:$0xf]
          %v5074 = vld [vmem:[%s5] sm:$0xff]
          %v5075 = vld [vmem:[%s5 + $0x8] sm:$0xff]
          %v5076 = vld [vmem:[#allocation7 + $0x8] sm:$0xf0]
          %v5077 = vld [vmem:[%s879] sm:$0xff]
          %v5078 = vld [vmem:[%s879 + $0x8] sm:$0xff]
          %v5080 = vrot.slane %v5076, 4
          %5081 = vrot.lane.b32.xlu0 %v5080, 58
          %v5082 = vpop.permute.xlu0 %5081
          %v5083 = vsel %vm884, %v5082, 0
          %5085 = vmatprep.subr.mxu0 0.0
          %5086 = vmatpush1.msra.mxu0 0.0
          %5087 = vmatprep.subr.mxu0 0.0
          %5088 = vmatpush1.msra.mxu0 0.0
          %5089 = vmatprep.subr.mxu0 0.0
          %5090 = vmatpush1.msra.mxu0 0.0
          %5091 = vmatprep.subr.mxu0 0.0
          %5092 = vmatpush1.msra.mxu0 0.0
          %5093 = vmatprep.subr.mxu0 0.0
          %5094 = vmatpush1.msra.mxu0 0.0
          %5095 = vmatprep.subr.mxu0 0.0
          %5096 = vmatpush1.msra.mxu0 0.0
          %5097 = vmatprep.subr.mxu0 0.0
          %5098 = vmatpush1.msra.mxu0 0.0
          %5099 = vmatprep.subr.mxu0 0.0
          %5100 = vmatpush1.msra.mxu0 0.0
          %5101 = vmatprep.subr.mxu0 0.0
          %5102 = vmatpush1.msra.mxu0 0.0
          %5103 = vmatprep.subr.mxu0 0.0
          %5104 = vmatpush1.msra.mxu0 0.0
          %5105 = vmatprep.subr.mxu0 0.0
          %5106 = vmatpush1.msra.mxu0 0.0
          %5107 = vmatprep.subr.mxu0 0.0
          %5108 = vmatpush1.msra.mxu0 0.0
          %5109 = vmatprep.subr.mxu0 0.0
          %5110 = vmatpush1.msra.mxu0 0.0
          %5111 = vmatprep.subr.mxu0 0.0
          %5112 = vmatpush1.msra.mxu0 0.0
          %5113 = vmatprep.subr.mxu0 0.0
          %5114 = vmatpush1.msra.mxu0 %v5078
          %5115 = vmatprep.subr.mxu0 0.0
          %5116 = vmatpush1.msra.mxu0 %v5077
          %5117 = vmatprep.subr.mxu0 0.0
          %5118 = vmatpush2.msra.mxu0 0.0
          %5119 = vmatprep.subr.mxu0 0.0
          %5120 = vmatpush2.msra.mxu0 0.0
          %5121 = vmatprep.subr.mxu0 0.0
          %5122 = vmatpush2.msra.mxu0 0.0
          %5123 = vmatprep.subr.mxu0 0.0
          %5124 = vmatpush2.msra.mxu0 0.0
          %5125 = vmatprep.subr.mxu0 0.0
          %5126 = vmatpush2.msra.mxu0 0.0
          %5127 = vmatprep.subr.mxu0 0.0
          %5128 = vmatpush2.msra.mxu0 0.0
          %5129 = vmatprep.subr.mxu0 0.0
          %5130 = vmatpush2.msra.mxu0 0.0
          %5131 = vmatprep.subr.mxu0 0.0
          %5132 = vmatpush2.msra.mxu0 0.0
          %5133 = vmatprep.subr.mxu0 0.0
          %5134 = vmatpush2.msra.mxu0 0.0
          %5135 = vmatprep.subr.mxu0 0.0
          %5136 = vmatpush2.msra.mxu0 0.0
          %5137 = vmatprep.subr.mxu0 0.0
          %5138 = vmatpush2.msra.mxu0 0.0
          %5139 = vmatprep.subr.mxu0 0.0
          %5140 = vmatpush2.msra.mxu0 0.0
          %5141 = vmatprep.subr.mxu0 0.0
          %5142 = vmatpush2.msra.mxu0 0.0
          %5143 = vmatprep.subr.mxu0 0.0
          %5144 = vmatpush2.msra.mxu0 0.0
          %5145 = vmatprep.subr.mxu0 0.0
          %5146 = vmatpush2.msra.mxu0 0.0
          %5147 = vmatprep.subr.mxu0 0.0
          %5148 = vmatpush2.msra.mxu0 0.0
          %5149 = vmatprep.mubr.f32.mxu0 0.0
          %5150 = vmatmul.mubr.f32.gmra.mxu0 %v5083
          %v5151 = vpop.f32.mrf.mxu0
          %v5152 = vadd.f32 0.0, %v5151
          %v5153 = vpop.f32.mrf.mxu0
          %5154 = vdwg.mxu0
          %5156 = vrot.lane.b32.xlu0 %v5073, 58
          %v5157 = vpop.permute.xlu0 %5156
          %v5158 = vsel %vm884, %v5157, 0
          %5160 = vmatprep.subr.mxu0 0.0
          %5161 = vmatpush1.msra.mxu0 0.0
          %5162 = vmatprep.subr.mxu0 0.0
          %5163 = vmatpush1.msra.mxu0 0.0
          %5164 = vmatprep.subr.mxu0 0.0
          %5165 = vmatpush1.msra.mxu0 0.0
          %5166 = vmatprep.subr.mxu0 0.0
          %5167 = vmatpush1.msra.mxu0 0.0
          %5168 = vmatprep.subr.mxu0 0.0
          %5169 = vmatpush1.msra.mxu0 0.0
          %5170 = vmatprep.subr.mxu0 0.0
          %5171 = vmatpush1.msra.mxu0 0.0
          %5172 = vmatprep.subr.mxu0 0.0
          %5173 = vmatpush1.msra.mxu0 0.0
          %5174 = vmatprep.subr.mxu0 0.0
          %5175 = vmatpush1.msra.mxu0 0.0
          %5176 = vmatprep.subr.mxu0 0.0
          %5177 = vmatpush1.msra.mxu0 0.0
          %5178 = vmatprep.subr.mxu0 0.0
          %5179 = vmatpush1.msra.mxu0 0.0
          %5180 = vmatprep.subr.mxu0 0.0
          %5181 = vmatpush1.msra.mxu0 0.0
          %5182 = vmatprep.subr.mxu0 0.0
          %5183 = vmatpush1.msra.mxu0 0.0
          %5184 = vmatprep.subr.mxu0 0.0
          %5185 = vmatpush1.msra.mxu0 0.0
          %5186 = vmatprep.subr.mxu0 0.0
          %5187 = vmatpush1.msra.mxu0 0.0
          %5188 = vmatprep.subr.mxu0 0.0
          %5189 = vmatpush1.msra.mxu0 %v5075
          %5190 = vmatprep.subr.mxu0 0.0
          %5191 = vmatpush1.msra.mxu0 %v5074
          %5192 = vmatprep.subr.mxu0 0.0
          %5193 = vmatpush2.msra.mxu0 0.0
          %5194 = vmatprep.subr.mxu0 0.0
          %5195 = vmatpush2.msra.mxu0 0.0
          %5196 = vmatprep.subr.mxu0 0.0
          %5197 = vmatpush2.msra.mxu0 0.0
          %5198 = vmatprep.subr.mxu0 0.0
          %5199 = vmatpush2.msra.mxu0 0.0
          %5200 = vmatprep.subr.mxu0 0.0
          %5201 = vmatpush2.msra.mxu0 0.0
          %5202 = vmatprep.subr.mxu0 0.0
          %5203 = vmatpush2.msra.mxu0 0.0
          %5204 = vmatprep.subr.mxu0 0.0
          %5205 = vmatpush2.msra.mxu0 0.0
          %5206 = vmatprep.subr.mxu0 0.0
          %5207 = vmatpush2.msra.mxu0 0.0
          %5208 = vmatprep.subr.mxu0 0.0
          %5209 = vmatpush2.msra.mxu0 0.0
          %5210 = vmatprep.subr.mxu0 0.0
          %5211 = vmatpush2.msra.mxu0 0.0
          %5212 = vmatprep.subr.mxu0 0.0
          %5213 = vmatpush2.msra.mxu0 0.0
          %5214 = vmatprep.subr.mxu0 0.0
          %5215 = vmatpush2.msra.mxu0 0.0
          %5216 = vmatprep.subr.mxu0 0.0
          %5217 = vmatpush2.msra.mxu0 0.0
          %5218 = vmatprep.subr.mxu0 0.0
          %5219 = vmatpush2.msra.mxu0 0.0
          %5220 = vmatprep.subr.mxu0 0.0
          %5221 = vmatpush2.msra.mxu0 0.0
          %5222 = vmatprep.subr.mxu0 0.0
          %5223 = vmatpush2.msra.mxu0 0.0
          %5224 = vmatprep.mubr.f32.mxu0 0.0
          %5225 = vmatmul.mubr.f32.gmra.mxu0 %v5158
          %v5226 = vpop.f32.mrf.mxu0
          %v5227 = vadd.f32 %v5152, %v5226
          %v5228 = vpop.f32.mrf.mxu0
          %5229 = vdwg.mxu0
          %v5232 = vunpack.c.l.s4 1966171168
          %v5233 = vunpack.c.0.s8 %v5232
          %v5234 = vlaneseq
          %v5235 = vshrl.u32 %v5234, 7
          %v5236 = vsub.s32 %v5233, %v5235
          %v5237 = vrot.slane %v5227, %v5236
          %v5238 = vcombine.high %v5237, %v5237
          %v5240 = vunpack.c.l.s4 1966171168
          %v5241 = vunpack.c.0.s8 %v5240
          %v5242 = vlaneseq
          %v5243 = vshrl.u32 %v5242, 7
          %v5244 = vsub.s32 %v5241, %v5243
          %v5245 = vrot.slane %v5237, %v5244
          %v5247 = vunpack.c.l.s4 1966171168
          %v5248 = vunpack.c.0.s8 %v5247
          %v5249 = vlaneseq
          %v5250 = vshrl.u32 %v5249, 7
          %v5251 = vsub.s32 %v5248, %v5250
          %v5252 = vrot.slane %v5238, %v5251
          %v5253 = vcombine.high %v5245, %v5245
          %v5254 = vcombine.high %v5252, %v5252
          %5259 = vst.msk [vmem:[%s266 + $0x16] sm:$0x1] %vm1059, %v5245
          %5260 = vst.msk [vmem:[%s266 + $0x36] sm:$0x1] %vm1059, %v5252
          %5261 = vst.msk [vmem:[%s266 + $0x56] sm:$0x1] %vm1059, %v5253
          %5262 = vst.msk [vmem:[%s266 + $0x76] sm:$0x1] %vm1059, %v5254
          %v5263 = vld [vmem:[#allocation7 + $0x20] sm:$0xf]
          %v5264 = vld [vmem:[%s5] sm:$0xff]
          %v5265 = vld [vmem:[%s5 + $0x8] sm:$0xff]
          %v5266 = vld [vmem:[#allocation7 + $0x20] sm:$0xf0]
          %v5267 = vld [vmem:[%s879] sm:$0xff]
          %v5268 = vld [vmem:[%s879 + $0x8] sm:$0xff]
          %v5270 = vrot.slane %v5266, 4
          %5271 = vrot.lane.b32.xlu0 %v5270, 58
          %v5272 = vpop.permute.xlu0 %5271
          %v5273 = vsel %vm884, %v5272, 0
          %5275 = vmatprep.subr.mxu0 0.0
          %5276 = vmatpush1.msra.mxu0 0.0
          %5277 = vmatprep.subr.mxu0 0.0
          %5278 = vmatpush1.msra.mxu0 0.0
          %5279 = vmatprep.subr.mxu0 0.0
          %5280 = vmatpush1.msra.mxu0 0.0
          %5281 = vmatprep.subr.mxu0 0.0
          %5282 = vmatpush1.msra.mxu0 0.0
          %5283 = vmatprep.subr.mxu0 0.0
          %5284 = vmatpush1.msra.mxu0 0.0
          %5285 = vmatprep.subr.mxu0 0.0
          %5286 = vmatpush1.msra.mxu0 0.0
          %5287 = vmatprep.subr.mxu0 0.0
          %5288 = vmatpush1.msra.mxu0 0.0
          %5289 = vmatprep.subr.mxu0 0.0
          %5290 = vmatpush1.msra.mxu0 0.0
          %5291 = vmatprep.subr.mxu0 0.0
          %5292 = vmatpush1.msra.mxu0 0.0
          %5293 = vmatprep.subr.mxu0 0.0
          %5294 = vmatpush1.msra.mxu0 0.0
          %5295 = vmatprep.subr.mxu0 0.0
          %5296 = vmatpush1.msra.mxu0 0.0
          %5297 = vmatprep.subr.mxu0 0.0
          %5298 = vmatpush1.msra.mxu0 0.0
          %5299 = vmatprep.subr.mxu0 0.0
          %5300 = vmatpush1.msra.mxu0 0.0
          %5301 = vmatprep.subr.mxu0 0.0
          %5302 = vmatpush1.msra.mxu0 0.0
          %5303 = vmatprep.subr.mxu0 0.0
          %5304 = vmatpush1.msra.mxu0 %v5268
          %5305 = vmatprep.subr.mxu0 0.0
          %5306 = vmatpush1.msra.mxu0 %v5267
          %5307 = vmatprep.subr.mxu0 0.0
          %5308 = vmatpush2.msra.mxu0 0.0
          %5309 = vmatprep.subr.mxu0 0.0
          %5310 = vmatpush2.msra.mxu0 0.0
          %5311 = vmatprep.subr.mxu0 0.0
          %5312 = vmatpush2.msra.mxu0 0.0
          %5313 = vmatprep.subr.mxu0 0.0
          %5314 = vmatpush2.msra.mxu0 0.0
          %5315 = vmatprep.subr.mxu0 0.0
          %5316 = vmatpush2.msra.mxu0 0.0
          %5317 = vmatprep.subr.mxu0 0.0
          %5318 = vmatpush2.msra.mxu0 0.0
          %5319 = vmatprep.subr.mxu0 0.0
          %5320 = vmatpush2.msra.mxu0 0.0
          %5321 = vmatprep.subr.mxu0 0.0
          %5322 = vmatpush2.msra.mxu0 0.0
          %5323 = vmatprep.subr.mxu0 0.0
          %5324 = vmatpush2.msra.mxu0 0.0
          %5325 = vmatprep.subr.mxu0 0.0
          %5326 = vmatpush2.msra.mxu0 0.0
          %5327 = vmatprep.subr.mxu0 0.0
          %5328 = vmatpush2.msra.mxu0 0.0
          %5329 = vmatprep.subr.mxu0 0.0
          %5330 = vmatpush2.msra.mxu0 0.0
          %5331 = vmatprep.subr.mxu0 0.0
          %5332 = vmatpush2.msra.mxu0 0.0
          %5333 = vmatprep.subr.mxu0 0.0
          %5334 = vmatpush2.msra.mxu0 0.0
          %5335 = vmatprep.subr.mxu0 0.0
          %5336 = vmatpush2.msra.mxu0 0.0
          %5337 = vmatprep.subr.mxu0 0.0
          %5338 = vmatpush2.msra.mxu0 0.0
          %5339 = vmatprep.mubr.f32.mxu0 0.0
          %5340 = vmatmul.mubr.f32.gmra.mxu0 %v5273
          %v5341 = vpop.f32.mrf.mxu0
          %v5342 = vadd.f32 0.0, %v5341
          %v5343 = vpop.f32.mrf.mxu0
          %5344 = vdwg.mxu0
          %5346 = vrot.lane.b32.xlu0 %v5263, 58
          %v5347 = vpop.permute.xlu0 %5346
          %v5348 = vsel %vm884, %v5347, 0
          %5350 = vmatprep.subr.mxu0 0.0
          %5351 = vmatpush1.msra.mxu0 0.0
          %5352 = vmatprep.subr.mxu0 0.0
          %5353 = vmatpush1.msra.mxu0 0.0
          %5354 = vmatprep.subr.mxu0 0.0
          %5355 = vmatpush1.msra.mxu0 0.0
          %5356 = vmatprep.subr.mxu0 0.0
          %5357 = vmatpush1.msra.mxu0 0.0
          %5358 = vmatprep.subr.mxu0 0.0
          %5359 = vmatpush1.msra.mxu0 0.0
          %5360 = vmatprep.subr.mxu0 0.0
          %5361 = vmatpush1.msra.mxu0 0.0
          %5362 = vmatprep.subr.mxu0 0.0
          %5363 = vmatpush1.msra.mxu0 0.0
          %5364 = vmatprep.subr.mxu0 0.0
          %5365 = vmatpush1.msra.mxu0 0.0
          %5366 = vmatprep.subr.mxu0 0.0
          %5367 = vmatpush1.msra.mxu0 0.0
          %5368 = vmatprep.subr.mxu0 0.0
          %5369 = vmatpush1.msra.mxu0 0.0
          %5370 = vmatprep.subr.mxu0 0.0
          %5371 = vmatpush1.msra.mxu0 0.0
          %5372 = vmatprep.subr.mxu0 0.0
          %5373 = vmatpush1.msra.mxu0 0.0
          %5374 = vmatprep.subr.mxu0 0.0
          %5375 = vmatpush1.msra.mxu0 0.0
          %5376 = vmatprep.subr.mxu0 0.0
          %5377 = vmatpush1.msra.mxu0 0.0
          %5378 = vmatprep.subr.mxu0 0.0
          %5379 = vmatpush1.msra.mxu0 %v5265
          %5380 = vmatprep.subr.mxu0 0.0
          %5381 = vmatpush1.msra.mxu0 %v5264
          %5382 = vmatprep.subr.mxu0 0.0
          %5383 = vmatpush2.msra.mxu0 0.0
          %5384 = vmatprep.subr.mxu0 0.0
          %5385 = vmatpush2.msra.mxu0 0.0
          %5386 = vmatprep.subr.mxu0 0.0
          %5387 = vmatpush2.msra.mxu0 0.0
          %5388 = vmatprep.subr.mxu0 0.0
          %5389 = vmatpush2.msra.mxu0 0.0
          %5390 = vmatprep.subr.mxu0 0.0
          %5391 = vmatpush2.msra.mxu0 0.0
          %5392 = vmatprep.subr.mxu0 0.0
          %5393 = vmatpush2.msra.mxu0 0.0
          %5394 = vmatprep.subr.mxu0 0.0
          %5395 = vmatpush2.msra.mxu0 0.0
          %5396 = vmatprep.subr.mxu0 0.0
          %5397 = vmatpush2.msra.mxu0 0.0
          %5398 = vmatprep.subr.mxu0 0.0
          %5399 = vmatpush2.msra.mxu0 0.0
          %5400 = vmatprep.subr.mxu0 0.0
          %5401 = vmatpush2.msra.mxu0 0.0
          %5402 = vmatprep.subr.mxu0 0.0
          %5403 = vmatpush2.msra.mxu0 0.0
          %5404 = vmatprep.subr.mxu0 0.0
          %5405 = vmatpush2.msra.mxu0 0.0
          %5406 = vmatprep.subr.mxu0 0.0
          %5407 = vmatpush2.msra.mxu0 0.0
          %5408 = vmatprep.subr.mxu0 0.0
          %5409 = vmatpush2.msra.mxu0 0.0
          %5410 = vmatprep.subr.mxu0 0.0
          %5411 = vmatpush2.msra.mxu0 0.0
          %5412 = vmatprep.subr.mxu0 0.0
          %5413 = vmatpush2.msra.mxu0 0.0
          %5414 = vmatprep.mubr.f32.mxu0 0.0
          %5415 = vmatmul.mubr.f32.gmra.mxu0 %v5348
          %v5416 = vpop.f32.mrf.mxu0
          %v5417 = vadd.f32 %v5342, %v5416
          %v5418 = vpop.f32.mrf.mxu0
          %5419 = vdwg.mxu0
          %v5422 = vunpack.c.l.s4 1966171168
          %v5423 = vunpack.c.0.s8 %v5422
          %v5424 = vlaneseq
          %v5425 = vshrl.u32 %v5424, 7
          %v5426 = vsub.s32 %v5423, %v5425
          %v5427 = vrot.slane %v5417, %v5426
          %v5428 = vcombine.high %v5427, %v5427
          %v5430 = vunpack.c.l.s4 1966171168
          %v5431 = vunpack.c.0.s8 %v5430
          %v5432 = vlaneseq
          %v5433 = vshrl.u32 %v5432, 7
          %v5434 = vsub.s32 %v5431, %v5433
          %v5435 = vrot.slane %v5427, %v5434
          %v5437 = vunpack.c.l.s4 1966171168
          %v5438 = vunpack.c.0.s8 %v5437
          %v5439 = vlaneseq
          %v5440 = vshrl.u32 %v5439, 7
          %v5441 = vsub.s32 %v5438, %v5440
          %v5442 = vrot.slane %v5428, %v5441
          %v5443 = vcombine.high %v5435, %v5435
          %v5444 = vcombine.high %v5442, %v5442
          %5449 = vst.msk [vmem:[%s266 + $0x17] sm:$0x1] %vm1059, %v5435
          %5450 = vst.msk [vmem:[%s266 + $0x37] sm:$0x1] %vm1059, %v5442
          %5451 = vst.msk [vmem:[%s266 + $0x57] sm:$0x1] %vm1059, %v5443
          %5452 = vst.msk [vmem:[%s266 + $0x77] sm:$0x1] %vm1059, %v5444
          %v5453 = vld [vmem:[#allocation7 + $0x8] sm:$0xf]
          %v5454 = vld [vmem:[%s5] sm:$0xff]
          %v5455 = vld [vmem:[%s5 + $0x8] sm:$0xff]
          %v5456 = vld [vmem:[#allocation7 + $0x8] sm:$0xf0]
          %v5457 = vld [vmem:[%s879] sm:$0xff]
          %v5458 = vld [vmem:[%s879 + $0x8] sm:$0xff]
          %v5460 = vrot.slane %v5456, 4
          %5461 = vrot.lane.b32.xlu0 %v5460, 40
          %v5462 = vpop.permute.xlu0 %5461
          %v5463 = vsel %vm884, %v5462, 0
          %5465 = vmatprep.subr.mxu0 0.0
          %5466 = vmatpush1.msra.mxu0 0.0
          %5467 = vmatprep.subr.mxu0 0.0
          %5468 = vmatpush1.msra.mxu0 0.0
          %5469 = vmatprep.subr.mxu0 0.0
          %5470 = vmatpush1.msra.mxu0 0.0
          %5471 = vmatprep.subr.mxu0 0.0
          %5472 = vmatpush1.msra.mxu0 0.0
          %5473 = vmatprep.subr.mxu0 0.0
          %5474 = vmatpush1.msra.mxu0 0.0
          %5475 = vmatprep.subr.mxu0 0.0
          %5476 = vmatpush1.msra.mxu0 0.0
          %5477 = vmatprep.subr.mxu0 0.0
          %5478 = vmatpush1.msra.mxu0 0.0
          %5479 = vmatprep.subr.mxu0 0.0
          %5480 = vmatpush1.msra.mxu0 0.0
          %5481 = vmatprep.subr.mxu0 0.0
          %5482 = vmatpush1.msra.mxu0 0.0
          %5483 = vmatprep.subr.mxu0 0.0
          %5484 = vmatpush1.msra.mxu0 0.0
          %5485 = vmatprep.subr.mxu0 0.0
          %5486 = vmatpush1.msra.mxu0 0.0
          %5487 = vmatprep.subr.mxu0 0.0
          %5488 = vmatpush1.msra.mxu0 0.0
          %5489 = vmatprep.subr.mxu0 0.0
          %5490 = vmatpush1.msra.mxu0 0.0
          %5491 = vmatprep.subr.mxu0 0.0
          %5492 = vmatpush1.msra.mxu0 0.0
          %5493 = vmatprep.subr.mxu0 0.0
          %5494 = vmatpush1.msra.mxu0 %v5458
          %5495 = vmatprep.subr.mxu0 0.0
          %5496 = vmatpush1.msra.mxu0 %v5457
          %5497 = vmatprep.subr.mxu0 0.0
          %5498 = vmatpush2.msra.mxu0 0.0
          %5499 = vmatprep.subr.mxu0 0.0
          %5500 = vmatpush2.msra.mxu0 0.0
          %5501 = vmatprep.subr.mxu0 0.0
          %5502 = vmatpush2.msra.mxu0 0.0
          %5503 = vmatprep.subr.mxu0 0.0
          %5504 = vmatpush2.msra.mxu0 0.0
          %5505 = vmatprep.subr.mxu0 0.0
          %5506 = vmatpush2.msra.mxu0 0.0
          %5507 = vmatprep.subr.mxu0 0.0
          %5508 = vmatpush2.msra.mxu0 0.0
          %5509 = vmatprep.subr.mxu0 0.0
          %5510 = vmatpush2.msra.mxu0 0.0
          %5511 = vmatprep.subr.mxu0 0.0
          %5512 = vmatpush2.msra.mxu0 0.0
          %5513 = vmatprep.subr.mxu0 0.0
          %5514 = vmatpush2.msra.mxu0 0.0
          %5515 = vmatprep.subr.mxu0 0.0
          %5516 = vmatpush2.msra.mxu0 0.0
          %5517 = vmatprep.subr.mxu0 0.0
          %5518 = vmatpush2.msra.mxu0 0.0
          %5519 = vmatprep.subr.mxu0 0.0
          %5520 = vmatpush2.msra.mxu0 0.0
          %5521 = vmatprep.subr.mxu0 0.0
          %5522 = vmatpush2.msra.mxu0 0.0
          %5523 = vmatprep.subr.mxu0 0.0
          %5524 = vmatpush2.msra.mxu0 0.0
          %5525 = vmatprep.subr.mxu0 0.0
          %5526 = vmatpush2.msra.mxu0 0.0
          %5527 = vmatprep.subr.mxu0 0.0
          %5528 = vmatpush2.msra.mxu0 0.0
          %5529 = vmatprep.mubr.f32.mxu0 0.0
          %5530 = vmatmul.mubr.f32.gmra.mxu0 %v5463
          %v5531 = vpop.f32.mrf.mxu0
          %v5532 = vadd.f32 0.0, %v5531
          %v5533 = vpop.f32.mrf.mxu0
          %5534 = vdwg.mxu0
          %5536 = vrot.lane.b32.xlu0 %v5453, 40
          %v5537 = vpop.permute.xlu0 %5536
          %v5538 = vsel %vm884, %v5537, 0
          %5540 = vmatprep.subr.mxu0 0.0
          %5541 = vmatpush1.msra.mxu0 0.0
          %5542 = vmatprep.subr.mxu0 0.0
          %5543 = vmatpush1.msra.mxu0 0.0
          %5544 = vmatprep.subr.mxu0 0.0
          %5545 = vmatpush1.msra.mxu0 0.0
          %5546 = vmatprep.subr.mxu0 0.0
          %5547 = vmatpush1.msra.mxu0 0.0
          %5548 = vmatprep.subr.mxu0 0.0
          %5549 = vmatpush1.msra.mxu0 0.0
          %5550 = vmatprep.subr.mxu0 0.0
          %5551 = vmatpush1.msra.mxu0 0.0
          %5552 = vmatprep.subr.mxu0 0.0
          %5553 = vmatpush1.msra.mxu0 0.0
          %5554 = vmatprep.subr.mxu0 0.0
          %5555 = vmatpush1.msra.mxu0 0.0
          %5556 = vmatprep.subr.mxu0 0.0
          %5557 = vmatpush1.msra.mxu0 0.0
          %5558 = vmatprep.subr.mxu0 0.0
          %5559 = vmatpush1.msra.mxu0 0.0
          %5560 = vmatprep.subr.mxu0 0.0
          %5561 = vmatpush1.msra.mxu0 0.0
          %5562 = vmatprep.subr.mxu0 0.0
          %5563 = vmatpush1.msra.mxu0 0.0
          %5564 = vmatprep.subr.mxu0 0.0
          %5565 = vmatpush1.msra.mxu0 0.0
          %5566 = vmatprep.subr.mxu0 0.0
          %5567 = vmatpush1.msra.mxu0 0.0
          %5568 = vmatprep.subr.mxu0 0.0
          %5569 = vmatpush1.msra.mxu0 %v5455
          %5570 = vmatprep.subr.mxu0 0.0
          %5571 = vmatpush1.msra.mxu0 %v5454
          %5572 = vmatprep.subr.mxu0 0.0
          %5573 = vmatpush2.msra.mxu0 0.0
          %5574 = vmatprep.subr.mxu0 0.0
          %5575 = vmatpush2.msra.mxu0 0.0
          %5576 = vmatprep.subr.mxu0 0.0
          %5577 = vmatpush2.msra.mxu0 0.0
          %5578 = vmatprep.subr.mxu0 0.0
          %5579 = vmatpush2.msra.mxu0 0.0
          %5580 = vmatprep.subr.mxu0 0.0
          %5581 = vmatpush2.msra.mxu0 0.0
          %5582 = vmatprep.subr.mxu0 0.0
          %5583 = vmatpush2.msra.mxu0 0.0
          %5584 = vmatprep.subr.mxu0 0.0
          %5585 = vmatpush2.msra.mxu0 0.0
          %5586 = vmatprep.subr.mxu0 0.0
          %5587 = vmatpush2.msra.mxu0 0.0
          %5588 = vmatprep.subr.mxu0 0.0
          %5589 = vmatpush2.msra.mxu0 0.0
          %5590 = vmatprep.subr.mxu0 0.0
          %5591 = vmatpush2.msra.mxu0 0.0
          %5592 = vmatprep.subr.mxu0 0.0
          %5593 = vmatpush2.msra.mxu0 0.0
          %5594 = vmatprep.subr.mxu0 0.0
          %5595 = vmatpush2.msra.mxu0 0.0
          %5596 = vmatprep.subr.mxu0 0.0
          %5597 = vmatpush2.msra.mxu0 0.0
          %5598 = vmatprep.subr.mxu0 0.0
          %5599 = vmatpush2.msra.mxu0 0.0
          %5600 = vmatprep.subr.mxu0 0.0
          %5601 = vmatpush2.msra.mxu0 0.0
          %5602 = vmatprep.subr.mxu0 0.0
          %5603 = vmatpush2.msra.mxu0 0.0
          %5604 = vmatprep.mubr.f32.mxu0 0.0
          %5605 = vmatmul.mubr.f32.gmra.mxu0 %v5538
          %v5606 = vpop.f32.mrf.mxu0
          %v5607 = vadd.f32 %v5532, %v5606
          %v5608 = vpop.f32.mrf.mxu0
          %5609 = vdwg.mxu0
          %v5612 = vunpack.c.l.s4 1966171168
          %v5613 = vunpack.c.0.s8 %v5612
          %v5614 = vlaneseq
          %v5615 = vshrl.u32 %v5614, 7
          %v5616 = vsub.s32 %v5613, %v5615
          %v5617 = vrot.slane %v5607, %v5616
          %v5618 = vcombine.high %v5617, %v5617
          %v5620 = vunpack.c.l.s4 1966171168
          %v5621 = vunpack.c.0.s8 %v5620
          %v5622 = vlaneseq
          %v5623 = vshrl.u32 %v5622, 7
          %v5624 = vsub.s32 %v5621, %v5623
          %v5625 = vrot.slane %v5617, %v5624
          %v5627 = vunpack.c.l.s4 1966171168
          %v5628 = vunpack.c.0.s8 %v5627
          %v5629 = vlaneseq
          %v5630 = vshrl.u32 %v5629, 7
          %v5631 = vsub.s32 %v5628, %v5630
          %v5632 = vrot.slane %v5618, %v5631
          %v5633 = vcombine.high %v5625, %v5625
          %v5634 = vcombine.high %v5632, %v5632
          %5639 = vst.msk [vmem:[%s266 + $0x18] sm:$0x1] %vm1059, %v5625
          %5640 = vst.msk [vmem:[%s266 + $0x38] sm:$0x1] %vm1059, %v5632
          %5641 = vst.msk [vmem:[%s266 + $0x58] sm:$0x1] %vm1059, %v5633
          %5642 = vst.msk [vmem:[%s266 + $0x78] sm:$0x1] %vm1059, %v5634
          %v5643 = vld [vmem:[#allocation7 + $0x20] sm:$0xf]
          %v5644 = vld [vmem:[%s5] sm:$0xff]
          %v5645 = vld [vmem:[%s5 + $0x8] sm:$0xff]
          %v5646 = vld [vmem:[#allocation7 + $0x20] sm:$0xf0]
          %v5647 = vld [vmem:[%s879] sm:$0xff]
          %v5648 = vld [vmem:[%s879 + $0x8] sm:$0xff]
          %v5650 = vrot.slane %v5646, 4
          %5651 = vrot.lane.b32.xlu0 %v5650, 40
          %v5652 = vpop.permute.xlu0 %5651
          %v5653 = vsel %vm884, %v5652, 0
          %5655 = vmatprep.subr.mxu0 0.0
          %5656 = vmatpush1.msra.mxu0 0.0
          %5657 = vmatprep.subr.mxu0 0.0
          %5658 = vmatpush1.msra.mxu0 0.0
          %5659 = vmatprep.subr.mxu0 0.0
          %5660 = vmatpush1.msra.mxu0 0.0
          %5661 = vmatprep.subr.mxu0 0.0
          %5662 = vmatpush1.msra.mxu0 0.0
          %5663 = vmatprep.subr.mxu0 0.0
          %5664 = vmatpush1.msra.mxu0 0.0
          %5665 = vmatprep.subr.mxu0 0.0
          %5666 = vmatpush1.msra.mxu0 0.0
          %5667 = vmatprep.subr.mxu0 0.0
          %5668 = vmatpush1.msra.mxu0 0.0
          %5669 = vmatprep.subr.mxu0 0.0
          %5670 = vmatpush1.msra.mxu0 0.0
          %5671 = vmatprep.subr.mxu0 0.0
          %5672 = vmatpush1.msra.mxu0 0.0
          %5673 = vmatprep.subr.mxu0 0.0
          %5674 = vmatpush1.msra.mxu0 0.0
          %5675 = vmatprep.subr.mxu0 0.0
          %5676 = vmatpush1.msra.mxu0 0.0
          %5677 = vmatprep.subr.mxu0 0.0
          %5678 = vmatpush1.msra.mxu0 0.0
          %5679 = vmatprep.subr.mxu0 0.0
          %5680 = vmatpush1.msra.mxu0 0.0
          %5681 = vmatprep.subr.mxu0 0.0
          %5682 = vmatpush1.msra.mxu0 0.0
          %5683 = vmatprep.subr.mxu0 0.0
          %5684 = vmatpush1.msra.mxu0 %v5648
          %5685 = vmatprep.subr.mxu0 0.0
          %5686 = vmatpush1.msra.mxu0 %v5647
          %5687 = vmatprep.subr.mxu0 0.0
          %5688 = vmatpush2.msra.mxu0 0.0
          %5689 = vmatprep.subr.mxu0 0.0
          %5690 = vmatpush2.msra.mxu0 0.0
          %5691 = vmatprep.subr.mxu0 0.0
          %5692 = vmatpush2.msra.mxu0 0.0
          %5693 = vmatprep.subr.mxu0 0.0
          %5694 = vmatpush2.msra.mxu0 0.0
          %5695 = vmatprep.subr.mxu0 0.0
          %5696 = vmatpush2.msra.mxu0 0.0
          %5697 = vmatprep.subr.mxu0 0.0
          %5698 = vmatpush2.msra.mxu0 0.0
          %5699 = vmatprep.subr.mxu0 0.0
          %5700 = vmatpush2.msra.mxu0 0.0
          %5701 = vmatprep.subr.mxu0 0.0
          %5702 = vmatpush2.msra.mxu0 0.0
          %5703 = vmatprep.subr.mxu0 0.0
          %5704 = vmatpush2.msra.mxu0 0.0
          %5705 = vmatprep.subr.mxu0 0.0
          %5706 = vmatpush2.msra.mxu0 0.0
          %5707 = vmatprep.subr.mxu0 0.0
          %5708 = vmatpush2.msra.mxu0 0.0
          %5709 = vmatprep.subr.mxu0 0.0
          %5710 = vmatpush2.msra.mxu0 0.0
          %5711 = vmatprep.subr.mxu0 0.0
          %5712 = vmatpush2.msra.mxu0 0.0
          %5713 = vmatprep.subr.mxu0 0.0
          %5714 = vmatpush2.msra.mxu0 0.0
          %5715 = vmatprep.subr.mxu0 0.0
          %5716 = vmatpush2.msra.mxu0 0.0
          %5717 = vmatprep.subr.mxu0 0.0
          %5718 = vmatpush2.msra.mxu0 0.0
          %5719 = vmatprep.mubr.f32.mxu0 0.0
          %5720 = vmatmul.mubr.f32.gmra.mxu0 %v5653
          %v5721 = vpop.f32.mrf.mxu0
          %v5722 = vadd.f32 0.0, %v5721
          %v5723 = vpop.f32.mrf.mxu0
          %5724 = vdwg.mxu0
          %5726 = vrot.lane.b32.xlu0 %v5643, 40
          %v5727 = vpop.permute.xlu0 %5726
          %v5728 = vsel %vm884, %v5727, 0
          %5730 = vmatprep.subr.mxu0 0.0
          %5731 = vmatpush1.msra.mxu0 0.0
          %5732 = vmatprep.subr.mxu0 0.0
          %5733 = vmatpush1.msra.mxu0 0.0
          %5734 = vmatprep.subr.mxu0 0.0
          %5735 = vmatpush1.msra.mxu0 0.0
          %5736 = vmatprep.subr.mxu0 0.0
          %5737 = vmatpush1.msra.mxu0 0.0
          %5738 = vmatprep.subr.mxu0 0.0
          %5739 = vmatpush1.msra.mxu0 0.0
          %5740 = vmatprep.subr.mxu0 0.0
          %5741 = vmatpush1.msra.mxu0 0.0
          %5742 = vmatprep.subr.mxu0 0.0
          %5743 = vmatpush1.msra.mxu0 0.0
          %5744 = vmatprep.subr.mxu0 0.0
          %5745 = vmatpush1.msra.mxu0 0.0
          %5746 = vmatprep.subr.mxu0 0.0
          %5747 = vmatpush1.msra.mxu0 0.0
          %5748 = vmatprep.subr.mxu0 0.0
          %5749 = vmatpush1.msra.mxu0 0.0
          %5750 = vmatprep.subr.mxu0 0.0
          %5751 = vmatpush1.msra.mxu0 0.0
          %5752 = vmatprep.subr.mxu0 0.0
          %5753 = vmatpush1.msra.mxu0 0.0
          %5754 = vmatprep.subr.mxu0 0.0
          %5755 = vmatpush1.msra.mxu0 0.0
          %5756 = vmatprep.subr.mxu0 0.0
          %5757 = vmatpush1.msra.mxu0 0.0
          %5758 = vmatprep.subr.mxu0 0.0
          %5759 = vmatpush1.msra.mxu0 %v5645
          %5760 = vmatprep.subr.mxu0 0.0
          %5761 = vmatpush1.msra.mxu0 %v5644
          %5762 = vmatprep.subr.mxu0 0.0
          %5763 = vmatpush2.msra.mxu0 0.0
          %5764 = vmatprep.subr.mxu0 0.0
          %5765 = vmatpush2.msra.mxu0 0.0
          %5766 = vmatprep.subr.mxu0 0.0
          %5767 = vmatpush2.msra.mxu0 0.0
          %5768 = vmatprep.subr.mxu0 0.0
          %5769 = vmatpush2.msra.mxu0 0.0
          %5770 = vmatprep.subr.mxu0 0.0
          %5771 = vmatpush2.msra.mxu0 0.0
          %5772 = vmatprep.subr.mxu0 0.0
          %5773 = vmatpush2.msra.mxu0 0.0
          %5774 = vmatprep.subr.mxu0 0.0
          %5775 = vmatpush2.msra.mxu0 0.0
          %5776 = vmatprep.subr.mxu0 0.0
          %5777 = vmatpush2.msra.mxu0 0.0
          %5778 = vmatprep.subr.mxu0 0.0
          %5779 = vmatpush2.msra.mxu0 0.0
          %5780 = vmatprep.subr.mxu0 0.0
          %5781 = vmatpush2.msra.mxu0 0.0
          %5782 = vmatprep.subr.mxu0 0.0
          %5783 = vmatpush2.msra.mxu0 0.0
          %5784 = vmatprep.subr.mxu0 0.0
          %5785 = vmatpush2.msra.mxu0 0.0
          %5786 = vmatprep.subr.mxu0 0.0
          %5787 = vmatpush2.msra.mxu0 0.0
          %5788 = vmatprep.subr.mxu0 0.0
          %5789 = vmatpush2.msra.mxu0 0.0
          %5790 = vmatprep.subr.mxu0 0.0
          %5791 = vmatpush2.msra.mxu0 0.0
          %5792 = vmatprep.subr.mxu0 0.0
          %5793 = vmatpush2.msra.mxu0 0.0
          %5794 = vmatprep.mubr.f32.mxu0 0.0
          %5795 = vmatmul.mubr.f32.gmra.mxu0 %v5728
          %v5796 = vpop.f32.mrf.mxu0
          %v5797 = vadd.f32 %v5722, %v5796
          %v5798 = vpop.f32.mrf.mxu0
          %5799 = vdwg.mxu0
          %v5802 = vunpack.c.l.s4 1966171168
          %v5803 = vunpack.c.0.s8 %v5802
          %v5804 = vlaneseq
          %v5805 = vshrl.u32 %v5804, 7
          %v5806 = vsub.s32 %v5803, %v5805
          %v5807 = vrot.slane %v5797, %v5806
          %v5808 = vcombine.high %v5807, %v5807
          %v5810 = vunpack.c.l.s4 1966171168
          %v5811 = vunpack.c.0.s8 %v5810
          %v5812 = vlaneseq
          %v5813 = vshrl.u32 %v5812, 7
          %v5814 = vsub.s32 %v5811, %v5813
          %v5815 = vrot.slane %v5807, %v5814
          %v5817 = vunpack.c.l.s4 1966171168
          %v5818 = vunpack.c.0.s8 %v5817
          %v5819 = vlaneseq
          %v5820 = vshrl.u32 %v5819, 7
          %v5821 = vsub.s32 %v5818, %v5820
          %v5822 = vrot.slane %v5808, %v5821
          %v5823 = vcombine.high %v5815, %v5815
          %v5824 = vcombine.high %v5822, %v5822
          %5829 = vst.msk [vmem:[%s266 + $0x19] sm:$0x1] %vm1059, %v5815
          %5830 = vst.msk [vmem:[%s266 + $0x39] sm:$0x1] %vm1059, %v5822
          %5831 = vst.msk [vmem:[%s266 + $0x59] sm:$0x1] %vm1059, %v5823
          %5832 = vst.msk [vmem:[%s266 + $0x79] sm:$0x1] %vm1059, %v5824
          %v5833 = vld [vmem:[#allocation7 + $0x8] sm:$0xf]
          %v5834 = vld [vmem:[%s5] sm:$0xff]
          %v5835 = vld [vmem:[%s5 + $0x8] sm:$0xff]
          %v5836 = vld [vmem:[#allocation7 + $0x8] sm:$0xf0]
          %v5837 = vld [vmem:[%s879] sm:$0xff]
          %v5838 = vld [vmem:[%s879 + $0x8] sm:$0xff]
          %v5840 = vrot.slane %v5836, 4
          %5841 = vrot.lane.b32.xlu0 %v5840, 22
          %v5842 = vpop.permute.xlu0 %5841
          %v5843 = vsel %vm884, %v5842, 0
          %5845 = vmatprep.subr.mxu0 0.0
          %5846 = vmatpush1.msra.mxu0 0.0
          %5847 = vmatprep.subr.mxu0 0.0
          %5848 = vmatpush1.msra.mxu0 0.0
          %5849 = vmatprep.subr.mxu0 0.0
          %5850 = vmatpush1.msra.mxu0 0.0
          %5851 = vmatprep.subr.mxu0 0.0
          %5852 = vmatpush1.msra.mxu0 0.0
          %5853 = vmatprep.subr.mxu0 0.0
          %5854 = vmatpush1.msra.mxu0 0.0
          %5855 = vmatprep.subr.mxu0 0.0
          %5856 = vmatpush1.msra.mxu0 0.0
          %5857 = vmatprep.subr.mxu0 0.0
          %5858 = vmatpush1.msra.mxu0 0.0
          %5859 = vmatprep.subr.mxu0 0.0
          %5860 = vmatpush1.msra.mxu0 0.0
          %5861 = vmatprep.subr.mxu0 0.0
          %5862 = vmatpush1.msra.mxu0 0.0
          %5863 = vmatprep.subr.mxu0 0.0
          %5864 = vmatpush1.msra.mxu0 0.0
          %5865 = vmatprep.subr.mxu0 0.0
          %5866 = vmatpush1.msra.mxu0 0.0
          %5867 = vmatprep.subr.mxu0 0.0
          %5868 = vmatpush1.msra.mxu0 0.0
          %5869 = vmatprep.subr.mxu0 0.0
          %5870 = vmatpush1.msra.mxu0 0.0
          %5871 = vmatprep.subr.mxu0 0.0
          %5872 = vmatpush1.msra.mxu0 0.0
          %5873 = vmatprep.subr.mxu0 0.0
          %5874 = vmatpush1.msra.mxu0 %v5838
          %5875 = vmatprep.subr.mxu0 0.0
          %5876 = vmatpush1.msra.mxu0 %v5837
          %5877 = vmatprep.subr.mxu0 0.0
          %5878 = vmatpush2.msra.mxu0 0.0
          %5879 = vmatprep.subr.mxu0 0.0
          %5880 = vmatpush2.msra.mxu0 0.0
          %5881 = vmatprep.subr.mxu0 0.0
          %5882 = vmatpush2.msra.mxu0 0.0
          %5883 = vmatprep.subr.mxu0 0.0
          %5884 = vmatpush2.msra.mxu0 0.0
          %5885 = vmatprep.subr.mxu0 0.0
          %5886 = vmatpush2.msra.mxu0 0.0
          %5887 = vmatprep.subr.mxu0 0.0
          %5888 = vmatpush2.msra.mxu0 0.0
          %5889 = vmatprep.subr.mxu0 0.0
          %5890 = vmatpush2.msra.mxu0 0.0
          %5891 = vmatprep.subr.mxu0 0.0
          %5892 = vmatpush2.msra.mxu0 0.0
          %5893 = vmatprep.subr.mxu0 0.0
          %5894 = vmatpush2.msra.mxu0 0.0
          %5895 = vmatprep.subr.mxu0 0.0
          %5896 = vmatpush2.msra.mxu0 0.0
          %5897 = vmatprep.subr.mxu0 0.0
          %5898 = vmatpush2.msra.mxu0 0.0
          %5899 = vmatprep.subr.mxu0 0.0
          %5900 = vmatpush2.msra.mxu0 0.0
          %5901 = vmatprep.subr.mxu0 0.0
          %5902 = vmatpush2.msra.mxu0 0.0
          %5903 = vmatprep.subr.mxu0 0.0
          %5904 = vmatpush2.msra.mxu0 0.0
          %5905 = vmatprep.subr.mxu0 0.0
          %5906 = vmatpush2.msra.mxu0 0.0
          %5907 = vmatprep.subr.mxu0 0.0
          %5908 = vmatpush2.msra.mxu0 0.0
          %5909 = vmatprep.mubr.f32.mxu0 0.0
          %5910 = vmatmul.mubr.f32.gmra.mxu0 %v5843
          %v5911 = vpop.f32.mrf.mxu0
          %v5912 = vadd.f32 0.0, %v5911
          %v5913 = vpop.f32.mrf.mxu0
          %5914 = vdwg.mxu0
          %5916 = vrot.lane.b32.xlu0 %v5833, 22
          %v5917 = vpop.permute.xlu0 %5916
          %v5918 = vsel %vm884, %v5917, 0
          %5920 = vmatprep.subr.mxu0 0.0
          %5921 = vmatpush1.msra.mxu0 0.0
          %5922 = vmatprep.subr.mxu0 0.0
          %5923 = vmatpush1.msra.mxu0 0.0
          %5924 = vmatprep.subr.mxu0 0.0
          %5925 = vmatpush1.msra.mxu0 0.0
          %5926 = vmatprep.subr.mxu0 0.0
          %5927 = vmatpush1.msra.mxu0 0.0
          %5928 = vmatprep.subr.mxu0 0.0
          %5929 = vmatpush1.msra.mxu0 0.0
          %5930 = vmatprep.subr.mxu0 0.0
          %5931 = vmatpush1.msra.mxu0 0.0
          %5932 = vmatprep.subr.mxu0 0.0
          %5933 = vmatpush1.msra.mxu0 0.0
          %5934 = vmatprep.subr.mxu0 0.0
          %5935 = vmatpush1.msra.mxu0 0.0
          %5936 = vmatprep.subr.mxu0 0.0
          %5937 = vmatpush1.msra.mxu0 0.0
          %5938 = vmatprep.subr.mxu0 0.0
          %5939 = vmatpush1.msra.mxu0 0.0
          %5940 = vmatprep.subr.mxu0 0.0
          %5941 = vmatpush1.msra.mxu0 0.0
          %5942 = vmatprep.subr.mxu0 0.0
          %5943 = vmatpush1.msra.mxu0 0.0
          %5944 = vmatprep.subr.mxu0 0.0
          %5945 = vmatpush1.msra.mxu0 0.0
          %5946 = vmatprep.subr.mxu0 0.0
          %5947 = vmatpush1.msra.mxu0 0.0
          %5948 = vmatprep.subr.mxu0 0.0
          %5949 = vmatpush1.msra.mxu0 %v5835
          %5950 = vmatprep.subr.mxu0 0.0
          %5951 = vmatpush1.msra.mxu0 %v5834
          %5952 = vmatprep.subr.mxu0 0.0
          %5953 = vmatpush2.msra.mxu0 0.0
          %5954 = vmatprep.subr.mxu0 0.0
          %5955 = vmatpush2.msra.mxu0 0.0
          %5956 = vmatprep.subr.mxu0 0.0
          %5957 = vmatpush2.msra.mxu0 0.0
          %5958 = vmatprep.subr.mxu0 0.0
          %5959 = vmatpush2.msra.mxu0 0.0
          %5960 = vmatprep.subr.mxu0 0.0
          %5961 = vmatpush2.msra.mxu0 0.0
          %5962 = vmatprep.subr.mxu0 0.0
          %5963 = vmatpush2.msra.mxu0 0.0
          %5964 = vmatprep.subr.mxu0 0.0
          %5965 = vmatpush2.msra.mxu0 0.0
          %5966 = vmatprep.subr.mxu0 0.0
          %5967 = vmatpush2.msra.mxu0 0.0
          %5968 = vmatprep.subr.mxu0 0.0
          %5969 = vmatpush2.msra.mxu0 0.0
          %5970 = vmatprep.subr.mxu0 0.0
          %5971 = vmatpush2.msra.mxu0 0.0
          %5972 = vmatprep.subr.mxu0 0.0
          %5973 = vmatpush2.msra.mxu0 0.0
          %5974 = vmatprep.subr.mxu0 0.0
          %5975 = vmatpush2.msra.mxu0 0.0
          %5976 = vmatprep.subr.mxu0 0.0
          %5977 = vmatpush2.msra.mxu0 0.0
          %5978 = vmatprep.subr.mxu0 0.0
          %5979 = vmatpush2.msra.mxu0 0.0
          %5980 = vmatprep.subr.mxu0 0.0
          %5981 = vmatpush2.msra.mxu0 0.0
          %5982 = vmatprep.subr.mxu0 0.0
          %5983 = vmatpush2.msra.mxu0 0.0
          %5984 = vmatprep.mubr.f32.mxu0 0.0
          %5985 = vmatmul.mubr.f32.gmra.mxu0 %v5918
          %v5986 = vpop.f32.mrf.mxu0
          %v5987 = vadd.f32 %v5912, %v5986
          %v5988 = vpop.f32.mrf.mxu0
          %5989 = vdwg.mxu0
          %v5992 = vunpack.c.l.s4 1966171168
          %v5993 = vunpack.c.0.s8 %v5992
          %v5994 = vlaneseq
          %v5995 = vshrl.u32 %v5994, 7
          %v5996 = vsub.s32 %v5993, %v5995
          %v5997 = vrot.slane %v5987, %v5996
          %v5998 = vcombine.high %v5997, %v5997
          %v6000 = vunpack.c.l.s4 1966171168
          %v6001 = vunpack.c.0.s8 %v6000
          %v6002 = vlaneseq
          %v6003 = vshrl.u32 %v6002, 7
          %v6004 = vsub.s32 %v6001, %v6003
          %v6005 = vrot.slane %v5997, %v6004
          %v6007 = vunpack.c.l.s4 1966171168
          %v6008 = vunpack.c.0.s8 %v6007
          %v6009 = vlaneseq
          %v6010 = vshrl.u32 %v6009, 7
          %v6011 = vsub.s32 %v6008, %v6010
          %v6012 = vrot.slane %v5998, %v6011
          %v6013 = vcombine.high %v6005, %v6005
          %v6014 = vcombine.high %v6012, %v6012
          %6019 = vst.msk [vmem:[%s266 + $0x1a] sm:$0x1] %vm1059, %v6005
          %6020 = vst.msk [vmem:[%s266 + $0x3a] sm:$0x1] %vm1059, %v6012
          %6021 = vst.msk [vmem:[%s266 + $0x5a] sm:$0x1] %vm1059, %v6013
          %6022 = vst.msk [vmem:[%s266 + $0x7a] sm:$0x1] %vm1059, %v6014
          %v6023 = vld [vmem:[#allocation7 + $0x20] sm:$0xf]
          %v6024 = vld [vmem:[%s5] sm:$0xff]
          %v6025 = vld [vmem:[%s5 + $0x8] sm:$0xff]
          %v6026 = vld [vmem:[#allocation7 + $0x20] sm:$0xf0]
          %v6027 = vld [vmem:[%s879] sm:$0xff]
          %v6028 = vld [vmem:[%s879 + $0x8] sm:$0xff]
          %v6030 = vrot.slane %v6026, 4
          %6031 = vrot.lane.b32.xlu0 %v6030, 22
          %v6032 = vpop.permute.xlu0 %6031
          %v6033 = vsel %vm884, %v6032, 0
          %6035 = vmatprep.subr.mxu0 0.0
          %6036 = vmatpush1.msra.mxu0 0.0
          %6037 = vmatprep.subr.mxu0 0.0
          %6038 = vmatpush1.msra.mxu0 0.0
          %6039 = vmatprep.subr.mxu0 0.0
          %6040 = vmatpush1.msra.mxu0 0.0
          %6041 = vmatprep.subr.mxu0 0.0
          %6042 = vmatpush1.msra.mxu0 0.0
          %6043 = vmatprep.subr.mxu0 0.0
          %6044 = vmatpush1.msra.mxu0 0.0
          %6045 = vmatprep.subr.mxu0 0.0
          %6046 = vmatpush1.msra.mxu0 0.0
          %6047 = vmatprep.subr.mxu0 0.0
          %6048 = vmatpush1.msra.mxu0 0.0
          %6049 = vmatprep.subr.mxu0 0.0
          %6050 = vmatpush1.msra.mxu0 0.0
          %6051 = vmatprep.subr.mxu0 0.0
          %6052 = vmatpush1.msra.mxu0 0.0
          %6053 = vmatprep.subr.mxu0 0.0
          %6054 = vmatpush1.msra.mxu0 0.0
          %6055 = vmatprep.subr.mxu0 0.0
          %6056 = vmatpush1.msra.mxu0 0.0
          %6057 = vmatprep.subr.mxu0 0.0
          %6058 = vmatpush1.msra.mxu0 0.0
          %6059 = vmatprep.subr.mxu0 0.0
          %6060 = vmatpush1.msra.mxu0 0.0
          %6061 = vmatprep.subr.mxu0 0.0
          %6062 = vmatpush1.msra.mxu0 0.0
          %6063 = vmatprep.subr.mxu0 0.0
          %6064 = vmatpush1.msra.mxu0 %v6028
          %6065 = vmatprep.subr.mxu0 0.0
          %6066 = vmatpush1.msra.mxu0 %v6027
          %6067 = vmatprep.subr.mxu0 0.0
          %6068 = vmatpush2.msra.mxu0 0.0
          %6069 = vmatprep.subr.mxu0 0.0
          %6070 = vmatpush2.msra.mxu0 0.0
          %6071 = vmatprep.subr.mxu0 0.0
          %6072 = vmatpush2.msra.mxu0 0.0
          %6073 = vmatprep.subr.mxu0 0.0
          %6074 = vmatpush2.msra.mxu0 0.0
          %6075 = vmatprep.subr.mxu0 0.0
          %6076 = vmatpush2.msra.mxu0 0.0
          %6077 = vmatprep.subr.mxu0 0.0
          %6078 = vmatpush2.msra.mxu0 0.0
          %6079 = vmatprep.subr.mxu0 0.0
          %6080 = vmatpush2.msra.mxu0 0.0
          %6081 = vmatprep.subr.mxu0 0.0
          %6082 = vmatpush2.msra.mxu0 0.0
          %6083 = vmatprep.subr.mxu0 0.0
          %6084 = vmatpush2.msra.mxu0 0.0
          %6085 = vmatprep.subr.mxu0 0.0
          %6086 = vmatpush2.msra.mxu0 0.0
          %6087 = vmatprep.subr.mxu0 0.0
          %6088 = vmatpush2.msra.mxu0 0.0
          %6089 = vmatprep.subr.mxu0 0.0
          %6090 = vmatpush2.msra.mxu0 0.0
          %6091 = vmatprep.subr.mxu0 0.0
          %6092 = vmatpush2.msra.mxu0 0.0
          %6093 = vmatprep.subr.mxu0 0.0
          %6094 = vmatpush2.msra.mxu0 0.0
          %6095 = vmatprep.subr.mxu0 0.0
          %6096 = vmatpush2.msra.mxu0 0.0
          %6097 = vmatprep.subr.mxu0 0.0
          %6098 = vmatpush2.msra.mxu0 0.0
          %6099 = vmatprep.mubr.f32.mxu0 0.0
          %6100 = vmatmul.mubr.f32.gmra.mxu0 %v6033
          %v6101 = vpop.f32.mrf.mxu0
          %v6102 = vadd.f32 0.0, %v6101
          %v6103 = vpop.f32.mrf.mxu0
          %6104 = vdwg.mxu0
          %6106 = vrot.lane.b32.xlu0 %v6023, 22
          %v6107 = vpop.permute.xlu0 %6106
          %v6108 = vsel %vm884, %v6107, 0
          %6110 = vmatprep.subr.mxu0 0.0
          %6111 = vmatpush1.msra.mxu0 0.0
          %6112 = vmatprep.subr.mxu0 0.0
          %6113 = vmatpush1.msra.mxu0 0.0
          %6114 = vmatprep.subr.mxu0 0.0
          %6115 = vmatpush1.msra.mxu0 0.0
          %6116 = vmatprep.subr.mxu0 0.0
          %6117 = vmatpush1.msra.mxu0 0.0
          %6118 = vmatprep.subr.mxu0 0.0
          %6119 = vmatpush1.msra.mxu0 0.0
          %6120 = vmatprep.subr.mxu0 0.0
          %6121 = vmatpush1.msra.mxu0 0.0
          %6122 = vmatprep.subr.mxu0 0.0
          %6123 = vmatpush1.msra.mxu0 0.0
          %6124 = vmatprep.subr.mxu0 0.0
          %6125 = vmatpush1.msra.mxu0 0.0
          %6126 = vmatprep.subr.mxu0 0.0
          %6127 = vmatpush1.msra.mxu0 0.0
          %6128 = vmatprep.subr.mxu0 0.0
          %6129 = vmatpush1.msra.mxu0 0.0
          %6130 = vmatprep.subr.mxu0 0.0
          %6131 = vmatpush1.msra.mxu0 0.0
          %6132 = vmatprep.subr.mxu0 0.0
          %6133 = vmatpush1.msra.mxu0 0.0
          %6134 = vmatprep.subr.mxu0 0.0
          %6135 = vmatpush1.msra.mxu0 0.0
          %6136 = vmatprep.subr.mxu0 0.0
          %6137 = vmatpush1.msra.mxu0 0.0
          %6138 = vmatprep.subr.mxu0 0.0
          %6139 = vmatpush1.msra.mxu0 %v6025
          %6140 = vmatprep.subr.mxu0 0.0
          %6141 = vmatpush1.msra.mxu0 %v6024
          %6142 = vmatprep.subr.mxu0 0.0
          %6143 = vmatpush2.msra.mxu0 0.0
          %6144 = vmatprep.subr.mxu0 0.0
          %6145 = vmatpush2.msra.mxu0 0.0
          %6146 = vmatprep.subr.mxu0 0.0
          %6147 = vmatpush2.msra.mxu0 0.0
          %6148 = vmatprep.subr.mxu0 0.0
          %6149 = vmatpush2.msra.mxu0 0.0
          %6150 = vmatprep.subr.mxu0 0.0
          %6151 = vmatpush2.msra.mxu0 0.0
          %6152 = vmatprep.subr.mxu0 0.0
          %6153 = vmatpush2.msra.mxu0 0.0
          %6154 = vmatprep.subr.mxu0 0.0
          %6155 = vmatpush2.msra.mxu0 0.0
          %6156 = vmatprep.subr.mxu0 0.0
          %6157 = vmatpush2.msra.mxu0 0.0
          %6158 = vmatprep.subr.mxu0 0.0
          %6159 = vmatpush2.msra.mxu0 0.0
          %6160 = vmatprep.subr.mxu0 0.0
          %6161 = vmatpush2.msra.mxu0 0.0
          %6162 = vmatprep.subr.mxu0 0.0
          %6163 = vmatpush2.msra.mxu0 0.0
          %6164 = vmatprep.subr.mxu0 0.0
          %6165 = vmatpush2.msra.mxu0 0.0
          %6166 = vmatprep.subr.mxu0 0.0
          %6167 = vmatpush2.msra.mxu0 0.0
          %6168 = vmatprep.subr.mxu0 0.0
          %6169 = vmatpush2.msra.mxu0 0.0
          %6170 = vmatprep.subr.mxu0 0.0
          %6171 = vmatpush2.msra.mxu0 0.0
          %6172 = vmatprep.subr.mxu0 0.0
          %6173 = vmatpush2.msra.mxu0 0.0
          %6174 = vmatprep.mubr.f32.mxu0 0.0
          %6175 = vmatmul.mubr.f32.gmra.mxu0 %v6108
          %v6176 = vpop.f32.mrf.mxu0
          %v6177 = vadd.f32 %v6102, %v6176
          %v6178 = vpop.f32.mrf.mxu0
          %6179 = vdwg.mxu0
          %v6182 = vunpack.c.l.s4 1966171168
          %v6183 = vunpack.c.0.s8 %v6182
          %v6184 = vlaneseq
          %v6185 = vshrl.u32 %v6184, 7
          %v6186 = vsub.s32 %v6183, %v6185
          %v6187 = vrot.slane %v6177, %v6186
          %v6188 = vcombine.high %v6187, %v6187
          %v6190 = vunpack.c.l.s4 1966171168
          %v6191 = vunpack.c.0.s8 %v6190
          %v6192 = vlaneseq
          %v6193 = vshrl.u32 %v6192, 7
          %v6194 = vsub.s32 %v6191, %v6193
          %v6195 = vrot.slane %v6187, %v6194
          %v6197 = vunpack.c.l.s4 1966171168
          %v6198 = vunpack.c.0.s8 %v6197
          %v6199 = vlaneseq
          %v6200 = vshrl.u32 %v6199, 7
          %v6201 = vsub.s32 %v6198, %v6200
          %v6202 = vrot.slane %v6188, %v6201
          %v6203 = vcombine.high %v6195, %v6195
          %v6204 = vcombine.high %v6202, %v6202
          %6209 = vst.msk [vmem:[%s266 + $0x1b] sm:$0x1] %vm1059, %v6195
          %6210 = vst.msk [vmem:[%s266 + $0x3b] sm:$0x1] %vm1059, %v6202
          %6211 = vst.msk [vmem:[%s266 + $0x5b] sm:$0x1] %vm1059, %v6203
          %6212 = vst.msk [vmem:[%s266 + $0x7b] sm:$0x1] %vm1059, %v6204
          %v6213 = vld [vmem:[#allocation7 + $0x8] sm:$0xf]
          %v6214 = vld [vmem:[#allocation7 + $0x10] sm:$0xf]
          %v6215 = vld [vmem:[%s5] sm:$0xff]
          %v6216 = vld [vmem:[%s5 + $0x8] sm:$0xff]
          %v6217 = vld [vmem:[#allocation7 + $0x8] sm:$0xf0]
          %v6218 = vld [vmem:[#allocation7 + $0x10] sm:$0xf0]
          %v6219 = vld [vmem:[%s879] sm:$0xff]
          %v6220 = vld [vmem:[%s879 + $0x8] sm:$0xff]
          %v6223 = vrot.slane %v6217, 4
          %v6224 = vrot.slane %v6218, 4
          %6225 = vrot.lane.b32.xlu0 %v6223, 4
          %v6226 = vpop.permute.xlu0 %6225
          %6227 = vrot.lane.b32.xlu0 %v6224, 4
          %v6228 = vpop.permute.xlu0 %6227
          %vm6229 = vcmask 31744
          %v6230 = vsel %vm6229, %v6226, %v6228
          %v6231 = vsel %vm884, %v6230, 0
          %6233 = vmatprep.subr.mxu0 0.0
          %6234 = vmatpush1.msra.mxu0 0.0
          %6235 = vmatprep.subr.mxu0 0.0
          %6236 = vmatpush1.msra.mxu0 0.0
          %6237 = vmatprep.subr.mxu0 0.0
          %6238 = vmatpush1.msra.mxu0 0.0
          %6239 = vmatprep.subr.mxu0 0.0
          %6240 = vmatpush1.msra.mxu0 0.0
          %6241 = vmatprep.subr.mxu0 0.0
          %6242 = vmatpush1.msra.mxu0 0.0
          %6243 = vmatprep.subr.mxu0 0.0
          %6244 = vmatpush1.msra.mxu0 0.0
          %6245 = vmatprep.subr.mxu0 0.0
          %6246 = vmatpush1.msra.mxu0 0.0
          %6247 = vmatprep.subr.mxu0 0.0
          %6248 = vmatpush1.msra.mxu0 0.0
          %6249 = vmatprep.subr.mxu0 0.0
          %6250 = vmatpush1.msra.mxu0 0.0
          %6251 = vmatprep.subr.mxu0 0.0
          %6252 = vmatpush1.msra.mxu0 0.0
          %6253 = vmatprep.subr.mxu0 0.0
          %6254 = vmatpush1.msra.mxu0 0.0
          %6255 = vmatprep.subr.mxu0 0.0
          %6256 = vmatpush1.msra.mxu0 0.0
          %6257 = vmatprep.subr.mxu0 0.0
          %6258 = vmatpush1.msra.mxu0 0.0
          %6259 = vmatprep.subr.mxu0 0.0
          %6260 = vmatpush1.msra.mxu0 0.0
          %6261 = vmatprep.subr.mxu0 0.0
          %6262 = vmatpush1.msra.mxu0 %v6220
          %6263 = vmatprep.subr.mxu0 0.0
          %6264 = vmatpush1.msra.mxu0 %v6219
          %6265 = vmatprep.subr.mxu0 0.0
          %6266 = vmatpush2.msra.mxu0 0.0
          %6267 = vmatprep.subr.mxu0 0.0
          %6268 = vmatpush2.msra.mxu0 0.0
          %6269 = vmatprep.subr.mxu0 0.0
          %6270 = vmatpush2.msra.mxu0 0.0
          %6271 = vmatprep.subr.mxu0 0.0
          %6272 = vmatpush2.msra.mxu0 0.0
          %6273 = vmatprep.subr.mxu0 0.0
          %6274 = vmatpush2.msra.mxu0 0.0
          %6275 = vmatprep.subr.mxu0 0.0
          %6276 = vmatpush2.msra.mxu0 0.0
          %6277 = vmatprep.subr.mxu0 0.0
          %6278 = vmatpush2.msra.mxu0 0.0
          %6279 = vmatprep.subr.mxu0 0.0
          %6280 = vmatpush2.msra.mxu0 0.0
          %6281 = vmatprep.subr.mxu0 0.0
          %6282 = vmatpush2.msra.mxu0 0.0
          %6283 = vmatprep.subr.mxu0 0.0
          %6284 = vmatpush2.msra.mxu0 0.0
          %6285 = vmatprep.subr.mxu0 0.0
          %6286 = vmatpush2.msra.mxu0 0.0
          %6287 = vmatprep.subr.mxu0 0.0
          %6288 = vmatpush2.msra.mxu0 0.0
          %6289 = vmatprep.subr.mxu0 0.0
          %6290 = vmatpush2.msra.mxu0 0.0
          %6291 = vmatprep.subr.mxu0 0.0
          %6292 = vmatpush2.msra.mxu0 0.0
          %6293 = vmatprep.subr.mxu0 0.0
          %6294 = vmatpush2.msra.mxu0 0.0
          %6295 = vmatprep.subr.mxu0 0.0
          %6296 = vmatpush2.msra.mxu0 0.0
          %6297 = vmatprep.mubr.f32.mxu0 0.0
          %6298 = vmatmul.mubr.f32.gmra.mxu0 %v6231
          %v6299 = vpop.f32.mrf.mxu0
          %v6300 = vadd.f32 0.0, %v6299
          %v6301 = vpop.f32.mrf.mxu0
          %6302 = vdwg.mxu0
          %6305 = vrot.lane.b32.xlu0 %v6213, 4
          %v6306 = vpop.permute.xlu0 %6305
          %6307 = vrot.lane.b32.xlu0 %v6214, 4
          %v6308 = vpop.permute.xlu0 %6307
          %v6309 = vsel %vm6229, %v6306, %v6308
          %v6310 = vsel %vm884, %v6309, 0
          %6312 = vmatprep.subr.mxu0 0.0
          %6313 = vmatpush1.msra.mxu0 0.0
          %6314 = vmatprep.subr.mxu0 0.0
          %6315 = vmatpush1.msra.mxu0 0.0
          %6316 = vmatprep.subr.mxu0 0.0
          %6317 = vmatpush1.msra.mxu0 0.0
          %6318 = vmatprep.subr.mxu0 0.0
          %6319 = vmatpush1.msra.mxu0 0.0
          %6320 = vmatprep.subr.mxu0 0.0
          %6321 = vmatpush1.msra.mxu0 0.0
          %6322 = vmatprep.subr.mxu0 0.0
          %6323 = vmatpush1.msra.mxu0 0.0
          %6324 = vmatprep.subr.mxu0 0.0
          %6325 = vmatpush1.msra.mxu0 0.0
          %6326 = vmatprep.subr.mxu0 0.0
          %6327 = vmatpush1.msra.mxu0 0.0
          %6328 = vmatprep.subr.mxu0 0.0
          %6329 = vmatpush1.msra.mxu0 0.0
          %6330 = vmatprep.subr.mxu0 0.0
          %6331 = vmatpush1.msra.mxu0 0.0
          %6332 = vmatprep.subr.mxu0 0.0
          %6333 = vmatpush1.msra.mxu0 0.0
          %6334 = vmatprep.subr.mxu0 0.0
          %6335 = vmatpush1.msra.mxu0 0.0
          %6336 = vmatprep.subr.mxu0 0.0
          %6337 = vmatpush1.msra.mxu0 0.0
          %6338 = vmatprep.subr.mxu0 0.0
          %6339 = vmatpush1.msra.mxu0 0.0
          %6340 = vmatprep.subr.mxu0 0.0
          %6341 = vmatpush1.msra.mxu0 %v6216
          %6342 = vmatprep.subr.mxu0 0.0
          %6343 = vmatpush1.msra.mxu0 %v6215
          %6344 = vmatprep.subr.mxu0 0.0
          %6345 = vmatpush2.msra.mxu0 0.0
          %6346 = vmatprep.subr.mxu0 0.0
          %6347 = vmatpush2.msra.mxu0 0.0
          %6348 = vmatprep.subr.mxu0 0.0
          %6349 = vmatpush2.msra.mxu0 0.0
          %6350 = vmatprep.subr.mxu0 0.0
          %6351 = vmatpush2.msra.mxu0 0.0
          %6352 = vmatprep.subr.mxu0 0.0
          %6353 = vmatpush2.msra.mxu0 0.0
          %6354 = vmatprep.subr.mxu0 0.0
          %6355 = vmatpush2.msra.mxu0 0.0
          %6356 = vmatprep.subr.mxu0 0.0
          %6357 = vmatpush2.msra.mxu0 0.0
          %6358 = vmatprep.subr.mxu0 0.0
          %6359 = vmatpush2.msra.mxu0 0.0
          %6360 = vmatprep.subr.mxu0 0.0
          %6361 = vmatpush2.msra.mxu0 0.0
          %6362 = vmatprep.subr.mxu0 0.0
          %6363 = vmatpush2.msra.mxu0 0.0
          %6364 = vmatprep.subr.mxu0 0.0
          %6365 = vmatpush2.msra.mxu0 0.0
          %6366 = vmatprep.subr.mxu0 0.0
          %6367 = vmatpush2.msra.mxu0 0.0
          %6368 = vmatprep.subr.mxu0 0.0
          %6369 = vmatpush2.msra.mxu0 0.0
          %6370 = vmatprep.subr.mxu0 0.0
          %6371 = vmatpush2.msra.mxu0 0.0
          %6372 = vmatprep.subr.mxu0 0.0
          %6373 = vmatpush2.msra.mxu0 0.0
          %6374 = vmatprep.subr.mxu0 0.0
          %6375 = vmatpush2.msra.mxu0 0.0
          %6376 = vmatprep.mubr.f32.mxu0 0.0
          %6377 = vmatmul.mubr.f32.gmra.mxu0 %v6310
          %v6378 = vpop.f32.mrf.mxu0
          %v6379 = vadd.f32 %v6300, %v6378
          %v6380 = vpop.f32.mrf.mxu0
          %6381 = vdwg.mxu0
          %v6384 = vunpack.c.l.s4 1966171168
          %v6385 = vunpack.c.0.s8 %v6384
          %v6386 = vlaneseq
          %v6387 = vshrl.u32 %v6386, 7
          %v6388 = vsub.s32 %v6385, %v6387
          %v6389 = vrot.slane %v6379, %v6388
          %v6390 = vcombine.high %v6389, %v6389
          %v6392 = vunpack.c.l.s4 1966171168
          %v6393 = vunpack.c.0.s8 %v6392
          %v6394 = vlaneseq
          %v6395 = vshrl.u32 %v6394, 7
          %v6396 = vsub.s32 %v6393, %v6395
          %v6397 = vrot.slane %v6389, %v6396
          %v6399 = vunpack.c.l.s4 1966171168
          %v6400 = vunpack.c.0.s8 %v6399
          %v6401 = vlaneseq
          %v6402 = vshrl.u32 %v6401, 7
          %v6403 = vsub.s32 %v6400, %v6402
          %v6404 = vrot.slane %v6390, %v6403
          %v6405 = vcombine.high %v6397, %v6397
          %v6406 = vcombine.high %v6404, %v6404
          %6411 = vst.msk [vmem:[%s266 + $0x1c] sm:$0x1] %vm1059, %v6397
          %6412 = vst.msk [vmem:[%s266 + $0x3c] sm:$0x1] %vm1059, %v6404
          %6413 = vst.msk [vmem:[%s266 + $0x5c] sm:$0x1] %vm1059, %v6405
          %6414 = vst.msk [vmem:[%s266 + $0x7c] sm:$0x1] %vm1059, %v6406
          %v6415 = vld [vmem:[#allocation7 + $0x20] sm:$0xf]
          %v6416 = vld [vmem:[#allocation7 + $0x28] sm:$0xf]
          %v6417 = vld [vmem:[%s5] sm:$0xff]
          %v6418 = vld [vmem:[%s5 + $0x8] sm:$0xff]
          %v6419 = vld [vmem:[#allocation7 + $0x20] sm:$0xf0]
          %v6420 = vld [vmem:[#allocation7 + $0x28] sm:$0xf0]
          %v6421 = vld [vmem:[%s879] sm:$0xff]
          %v6422 = vld [vmem:[%s879 + $0x8] sm:$0xff]
          %v6425 = vrot.slane %v6419, 4
          %v6426 = vrot.slane %v6420, 4
          %6427 = vrot.lane.b32.xlu0 %v6425, 4
          %v6428 = vpop.permute.xlu0 %6427
          %6429 = vrot.lane.b32.xlu0 %v6426, 4
          %v6430 = vpop.permute.xlu0 %6429
          %v6431 = vsel %vm6229, %v6428, %v6430
          %v6432 = vsel %vm884, %v6431, 0
          %6434 = vmatprep.subr.mxu0 0.0
          %6435 = vmatpush1.msra.mxu0 0.0
          %6436 = vmatprep.subr.mxu0 0.0
          %6437 = vmatpush1.msra.mxu0 0.0
          %6438 = vmatprep.subr.mxu0 0.0
          %6439 = vmatpush1.msra.mxu0 0.0
          %6440 = vmatprep.subr.mxu0 0.0
          %6441 = vmatpush1.msra.mxu0 0.0
          %6442 = vmatprep.subr.mxu0 0.0
          %6443 = vmatpush1.msra.mxu0 0.0
          %6444 = vmatprep.subr.mxu0 0.0
          %6445 = vmatpush1.msra.mxu0 0.0
          %6446 = vmatprep.subr.mxu0 0.0
          %6447 = vmatpush1.msra.mxu0 0.0
          %6448 = vmatprep.subr.mxu0 0.0
          %6449 = vmatpush1.msra.mxu0 0.0
          %6450 = vmatprep.subr.mxu0 0.0
          %6451 = vmatpush1.msra.mxu0 0.0
          %6452 = vmatprep.subr.mxu0 0.0
          %6453 = vmatpush1.msra.mxu0 0.0
          %6454 = vmatprep.subr.mxu0 0.0
          %6455 = vmatpush1.msra.mxu0 0.0
          %6456 = vmatprep.subr.mxu0 0.0
          %6457 = vmatpush1.msra.mxu0 0.0
          %6458 = vmatprep.subr.mxu0 0.0
          %6459 = vmatpush1.msra.mxu0 0.0
          %6460 = vmatprep.subr.mxu0 0.0
          %6461 = vmatpush1.msra.mxu0 0.0
          %6462 = vmatprep.subr.mxu0 0.0
          %6463 = vmatpush1.msra.mxu0 %v6422
          %6464 = vmatprep.subr.mxu0 0.0
          %6465 = vmatpush1.msra.mxu0 %v6421
          %6466 = vmatprep.subr.mxu0 0.0
          %6467 = vmatpush2.msra.mxu0 0.0
          %6468 = vmatprep.subr.mxu0 0.0
          %6469 = vmatpush2.msra.mxu0 0.0
          %6470 = vmatprep.subr.mxu0 0.0
          %6471 = vmatpush2.msra.mxu0 0.0
          %6472 = vmatprep.subr.mxu0 0.0
          %6473 = vmatpush2.msra.mxu0 0.0
          %6474 = vmatprep.subr.mxu0 0.0
          %6475 = vmatpush2.msra.mxu0 0.0
          %6476 = vmatprep.subr.mxu0 0.0
          %6477 = vmatpush2.msra.mxu0 0.0
          %6478 = vmatprep.subr.mxu0 0.0
          %6479 = vmatpush2.msra.mxu0 0.0
          %6480 = vmatprep.subr.mxu0 0.0
          %6481 = vmatpush2.msra.mxu0 0.0
          %6482 = vmatprep.subr.mxu0 0.0
          %6483 = vmatpush2.msra.mxu0 0.0
          %6484 = vmatprep.subr.mxu0 0.0
          %6485 = vmatpush2.msra.mxu0 0.0
          %6486 = vmatprep.subr.mxu0 0.0
          %6487 = vmatpush2.msra.mxu0 0.0
          %6488 = vmatprep.subr.mxu0 0.0
          %6489 = vmatpush2.msra.mxu0 0.0
          %6490 = vmatprep.subr.mxu0 0.0
          %6491 = vmatpush2.msra.mxu0 0.0
          %6492 = vmatprep.subr.mxu0 0.0
          %6493 = vmatpush2.msra.mxu0 0.0
          %6494 = vmatprep.subr.mxu0 0.0
          %6495 = vmatpush2.msra.mxu0 0.0
          %6496 = vmatprep.subr.mxu0 0.0
          %6497 = vmatpush2.msra.mxu0 0.0
          %6498 = vmatprep.mubr.f32.mxu0 0.0
          %6499 = vmatmul.mubr.f32.gmra.mxu0 %v6432
          %v6500 = vpop.f32.mrf.mxu0
          %v6501 = vadd.f32 0.0, %v6500
          %v6502 = vpop.f32.mrf.mxu0
          %6503 = vdwg.mxu0
          %6506 = vrot.lane.b32.xlu0 %v6415, 4
          %v6507 = vpop.permute.xlu0 %6506
          %6508 = vrot.lane.b32.xlu0 %v6416, 4
          %v6509 = vpop.permute.xlu0 %6508
          %v6510 = vsel %vm6229, %v6507, %v6509
          %v6511 = vsel %vm884, %v6510, 0
          %6513 = vmatprep.subr.mxu0 0.0
          %6514 = vmatpush1.msra.mxu0 0.0
          %6515 = vmatprep.subr.mxu0 0.0
          %6516 = vmatpush1.msra.mxu0 0.0
          %6517 = vmatprep.subr.mxu0 0.0
          %6518 = vmatpush1.msra.mxu0 0.0
          %6519 = vmatprep.subr.mxu0 0.0
          %6520 = vmatpush1.msra.mxu0 0.0
          %6521 = vmatprep.subr.mxu0 0.0
          %6522 = vmatpush1.msra.mxu0 0.0
          %6523 = vmatprep.subr.mxu0 0.0
          %6524 = vmatpush1.msra.mxu0 0.0
          %6525 = vmatprep.subr.mxu0 0.0
          %6526 = vmatpush1.msra.mxu0 0.0
          %6527 = vmatprep.subr.mxu0 0.0
          %6528 = vmatpush1.msra.mxu0 0.0
          %6529 = vmatprep.subr.mxu0 0.0
          %6530 = vmatpush1.msra.mxu0 0.0
          %6531 = vmatprep.subr.mxu0 0.0
          %6532 = vmatpush1.msra.mxu0 0.0
          %6533 = vmatprep.subr.mxu0 0.0
          %6534 = vmatpush1.msra.mxu0 0.0
          %6535 = vmatprep.subr.mxu0 0.0
          %6536 = vmatpush1.msra.mxu0 0.0
          %6537 = vmatprep.subr.mxu0 0.0
          %6538 = vmatpush1.msra.mxu0 0.0
          %6539 = vmatprep.subr.mxu0 0.0
          %6540 = vmatpush1.msra.mxu0 0.0
          %6541 = vmatprep.subr.mxu0 0.0
          %6542 = vmatpush1.msra.mxu0 %v6418
          %6543 = vmatprep.subr.mxu0 0.0
          %6544 = vmatpush1.msra.mxu0 %v6417
          %6545 = vmatprep.subr.mxu0 0.0
          %6546 = vmatpush2.msra.mxu0 0.0
          %6547 = vmatprep.subr.mxu0 0.0
          %6548 = vmatpush2.msra.mxu0 0.0
          %6549 = vmatprep.subr.mxu0 0.0
          %6550 = vmatpush2.msra.mxu0 0.0
          %6551 = vmatprep.subr.mxu0 0.0
          %6552 = vmatpush2.msra.mxu0 0.0
          %6553 = vmatprep.subr.mxu0 0.0
          %6554 = vmatpush2.msra.mxu0 0.0
          %6555 = vmatprep.subr.mxu0 0.0
          %6556 = vmatpush2.msra.mxu0 0.0
          %6557 = vmatprep.subr.mxu0 0.0
          %6558 = vmatpush2.msra.mxu0 0.0
          %6559 = vmatprep.subr.mxu0 0.0
          %6560 = vmatpush2.msra.mxu0 0.0
          %6561 = vmatprep.subr.mxu0 0.0
          %6562 = vmatpush2.msra.mxu0 0.0
          %6563 = vmatprep.subr.mxu0 0.0
          %6564 = vmatpush2.msra.mxu0 0.0
          %6565 = vmatprep.subr.mxu0 0.0
          %6566 = vmatpush2.msra.mxu0 0.0
          %6567 = vmatprep.subr.mxu0 0.0
          %6568 = vmatpush2.msra.mxu0 0.0
          %6569 = vmatprep.subr.mxu0 0.0
          %6570 = vmatpush2.msra.mxu0 0.0
          %6571 = vmatprep.subr.mxu0 0.0
          %6572 = vmatpush2.msra.mxu0 0.0
          %6573 = vmatprep.subr.mxu0 0.0
          %6574 = vmatpush2.msra.mxu0 0.0
          %6575 = vmatprep.subr.mxu0 0.0
          %6576 = vmatpush2.msra.mxu0 0.0
          %6577 = vmatprep.mubr.f32.mxu0 0.0
          %6578 = vmatmul.mubr.f32.gmra.mxu0 %v6511
          %v6579 = vpop.f32.mrf.mxu0
          %v6580 = vadd.f32 %v6501, %v6579
          %v6581 = vpop.f32.mrf.mxu0
          %6582 = vdwg.mxu0
          %v6585 = vunpack.c.l.s4 1966171168
          %v6586 = vunpack.c.0.s8 %v6585
          %v6587 = vlaneseq
          %v6588 = vshrl.u32 %v6587, 7
          %v6589 = vsub.s32 %v6586, %v6588
          %v6590 = vrot.slane %v6580, %v6589
          %v6591 = vcombine.high %v6590, %v6590
          %v6593 = vunpack.c.l.s4 1966171168
          %v6594 = vunpack.c.0.s8 %v6593
          %v6595 = vlaneseq
          %v6596 = vshrl.u32 %v6595, 7
          %v6597 = vsub.s32 %v6594, %v6596
          %v6598 = vrot.slane %v6590, %v6597
          %v6600 = vunpack.c.l.s4 1966171168
          %v6601 = vunpack.c.0.s8 %v6600
          %v6602 = vlaneseq
          %v6603 = vshrl.u32 %v6602, 7
          %v6604 = vsub.s32 %v6601, %v6603
          %v6605 = vrot.slane %v6591, %v6604
          %v6606 = vcombine.high %v6598, %v6598
          %v6607 = vcombine.high %v6605, %v6605
          %6612 = vst.msk [vmem:[%s266 + $0x1d] sm:$0x1] %vm1059, %v6598
          %6613 = vst.msk [vmem:[%s266 + $0x3d] sm:$0x1] %vm1059, %v6605
          %6614 = vst.msk [vmem:[%s266 + $0x5d] sm:$0x1] %vm1059, %v6606
          %6615 = vst.msk [vmem:[%s266 + $0x7d] sm:$0x1] %vm1059, %v6607
          %v6616 = vld [vmem:[#allocation7 + $0x10] sm:$0xf]
          %v6617 = vld [vmem:[%s5] sm:$0xff]
          %v6618 = vld [vmem:[%s5 + $0x8] sm:$0xff]
          %v6619 = vld [vmem:[#allocation7 + $0x10] sm:$0xf0]
          %v6620 = vld [vmem:[%s879] sm:$0xff]
          %v6621 = vld [vmem:[%s879 + $0x8] sm:$0xff]
          %v6623 = vrot.slane %v6619, 4
          %6624 = vrot.lane.b32.xlu0 %v6623, 114
          %v6625 = vpop.permute.xlu0 %6624
          %v6626 = vsel %vm884, %v6625, 0
          %6628 = vmatprep.subr.mxu0 0.0
          %6629 = vmatpush1.msra.mxu0 0.0
          %6630 = vmatprep.subr.mxu0 0.0
          %6631 = vmatpush1.msra.mxu0 0.0
          %6632 = vmatprep.subr.mxu0 0.0
          %6633 = vmatpush1.msra.mxu0 0.0
          %6634 = vmatprep.subr.mxu0 0.0
          %6635 = vmatpush1.msra.mxu0 0.0
          %6636 = vmatprep.subr.mxu0 0.0
          %6637 = vmatpush1.msra.mxu0 0.0
          %6638 = vmatprep.subr.mxu0 0.0
          %6639 = vmatpush1.msra.mxu0 0.0
          %6640 = vmatprep.subr.mxu0 0.0
          %6641 = vmatpush1.msra.mxu0 0.0
          %6642 = vmatprep.subr.mxu0 0.0
          %6643 = vmatpush1.msra.mxu0 0.0
          %6644 = vmatprep.subr.mxu0 0.0
          %6645 = vmatpush1.msra.mxu0 0.0
          %6646 = vmatprep.subr.mxu0 0.0
          %6647 = vmatpush1.msra.mxu0 0.0
          %6648 = vmatprep.subr.mxu0 0.0
          %6649 = vmatpush1.msra.mxu0 0.0
          %6650 = vmatprep.subr.mxu0 0.0
          %6651 = vmatpush1.msra.mxu0 0.0
          %6652 = vmatprep.subr.mxu0 0.0
          %6653 = vmatpush1.msra.mxu0 0.0
          %6654 = vmatprep.subr.mxu0 0.0
          %6655 = vmatpush1.msra.mxu0 0.0
          %6656 = vmatprep.subr.mxu0 0.0
          %6657 = vmatpush1.msra.mxu0 %v6621
          %6658 = vmatprep.subr.mxu0 0.0
          %6659 = vmatpush1.msra.mxu0 %v6620
          %6660 = vmatprep.subr.mxu0 0.0
          %6661 = vmatpush2.msra.mxu0 0.0
          %6662 = vmatprep.subr.mxu0 0.0
          %6663 = vmatpush2.msra.mxu0 0.0
          %6664 = vmatprep.subr.mxu0 0.0
          %6665 = vmatpush2.msra.mxu0 0.0
          %6666 = vmatprep.subr.mxu0 0.0
          %6667 = vmatpush2.msra.mxu0 0.0
          %6668 = vmatprep.subr.mxu0 0.0
          %6669 = vmatpush2.msra.mxu0 0.0
          %6670 = vmatprep.subr.mxu0 0.0
          %6671 = vmatpush2.msra.mxu0 0.0
          %6672 = vmatprep.subr.mxu0 0.0
          %6673 = vmatpush2.msra.mxu0 0.0
          %6674 = vmatprep.subr.mxu0 0.0
          %6675 = vmatpush2.msra.mxu0 0.0
          %6676 = vmatprep.subr.mxu0 0.0
          %6677 = vmatpush2.msra.mxu0 0.0
          %6678 = vmatprep.subr.mxu0 0.0
          %6679 = vmatpush2.msra.mxu0 0.0
          %6680 = vmatprep.subr.mxu0 0.0
          %6681 = vmatpush2.msra.mxu0 0.0
          %6682 = vmatprep.subr.mxu0 0.0
          %6683 = vmatpush2.msra.mxu0 0.0
          %6684 = vmatprep.subr.mxu0 0.0
          %6685 = vmatpush2.msra.mxu0 0.0
          %6686 = vmatprep.subr.mxu0 0.0
          %6687 = vmatpush2.msra.mxu0 0.0
          %6688 = vmatprep.subr.mxu0 0.0
          %6689 = vmatpush2.msra.mxu0 0.0
          %6690 = vmatprep.subr.mxu0 0.0
          %6691 = vmatpush2.msra.mxu0 0.0
          %6692 = vmatprep.mubr.f32.mxu0 0.0
          %6693 = vmatmul.mubr.f32.gmra.mxu0 %v6626
          %v6694 = vpop.f32.mrf.mxu0
          %v6695 = vadd.f32 0.0, %v6694
          %v6696 = vpop.f32.mrf.mxu0
          %6697 = vdwg.mxu0
          %6699 = vrot.lane.b32.xlu0 %v6616, 114
          %v6700 = vpop.permute.xlu0 %6699
          %v6701 = vsel %vm884, %v6700, 0
          %6703 = vmatprep.subr.mxu0 0.0
          %6704 = vmatpush1.msra.mxu0 0.0
          %6705 = vmatprep.subr.mxu0 0.0
          %6706 = vmatpush1.msra.mxu0 0.0
          %6707 = vmatprep.subr.mxu0 0.0
          %6708 = vmatpush1.msra.mxu0 0.0
          %6709 = vmatprep.subr.mxu0 0.0
          %6710 = vmatpush1.msra.mxu0 0.0
          %6711 = vmatprep.subr.mxu0 0.0
          %6712 = vmatpush1.msra.mxu0 0.0
          %6713 = vmatprep.subr.mxu0 0.0
          %6714 = vmatpush1.msra.mxu0 0.0
          %6715 = vmatprep.subr.mxu0 0.0
          %6716 = vmatpush1.msra.mxu0 0.0
          %6717 = vmatprep.subr.mxu0 0.0
          %6718 = vmatpush1.msra.mxu0 0.0
          %6719 = vmatprep.subr.mxu0 0.0
          %6720 = vmatpush1.msra.mxu0 0.0
          %6721 = vmatprep.subr.mxu0 0.0
          %6722 = vmatpush1.msra.mxu0 0.0
          %6723 = vmatprep.subr.mxu0 0.0
          %6724 = vmatpush1.msra.mxu0 0.0
          %6725 = vmatprep.subr.mxu0 0.0
          %6726 = vmatpush1.msra.mxu0 0.0
          %6727 = vmatprep.subr.mxu0 0.0
          %6728 = vmatpush1.msra.mxu0 0.0
          %6729 = vmatprep.subr.mxu0 0.0
          %6730 = vmatpush1.msra.mxu0 0.0
          %6731 = vmatprep.subr.mxu0 0.0
          %6732 = vmatpush1.msra.mxu0 %v6618
          %6733 = vmatprep.subr.mxu0 0.0
          %6734 = vmatpush1.msra.mxu0 %v6617
          %6735 = vmatprep.subr.mxu0 0.0
          %6736 = vmatpush2.msra.mxu0 0.0
          %6737 = vmatprep.subr.mxu0 0.0
          %6738 = vmatpush2.msra.mxu0 0.0
          %6739 = vmatprep.subr.mxu0 0.0
          %6740 = vmatpush2.msra.mxu0 0.0
          %6741 = vmatprep.subr.mxu0 0.0
          %6742 = vmatpush2.msra.mxu0 0.0
          %6743 = vmatprep.subr.mxu0 0.0
          %6744 = vmatpush2.msra.mxu0 0.0
          %6745 = vmatprep.subr.mxu0 0.0
          %6746 = vmatpush2.msra.mxu0 0.0
          %6747 = vmatprep.subr.mxu0 0.0
          %6748 = vmatpush2.msra.mxu0 0.0
          %6749 = vmatprep.subr.mxu0 0.0
          %6750 = vmatpush2.msra.mxu0 0.0
          %6751 = vmatprep.subr.mxu0 0.0
          %6752 = vmatpush2.msra.mxu0 0.0
          %6753 = vmatprep.subr.mxu0 0.0
          %6754 = vmatpush2.msra.mxu0 0.0
          %6755 = vmatprep.subr.mxu0 0.0
          %6756 = vmatpush2.msra.mxu0 0.0
          %6757 = vmatprep.subr.mxu0 0.0
          %6758 = vmatpush2.msra.mxu0 0.0
          %6759 = vmatprep.subr.mxu0 0.0
          %6760 = vmatpush2.msra.mxu0 0.0
          %6761 = vmatprep.subr.mxu0 0.0
          %6762 = vmatpush2.msra.mxu0 0.0
          %6763 = vmatprep.subr.mxu0 0.0
          %6764 = vmatpush2.msra.mxu0 0.0
          %6765 = vmatprep.subr.mxu0 0.0
          %6766 = vmatpush2.msra.mxu0 0.0
          %6767 = vmatprep.mubr.f32.mxu0 0.0
          %6768 = vmatmul.mubr.f32.gmra.mxu0 %v6701
          %v6769 = vpop.f32.mrf.mxu0
          %v6770 = vadd.f32 %v6695, %v6769
          %v6771 = vpop.f32.mrf.mxu0
          %6772 = vdwg.mxu0
          %v6775 = vunpack.c.l.s4 1966171168
          %v6776 = vunpack.c.0.s8 %v6775
          %v6777 = vlaneseq
          %v6778 = vshrl.u32 %v6777, 7
          %v6779 = vsub.s32 %v6776, %v6778
          %v6780 = vrot.slane %v6770, %v6779
          %v6781 = vcombine.high %v6780, %v6780
          %v6783 = vunpack.c.l.s4 1966171168
          %v6784 = vunpack.c.0.s8 %v6783
          %v6785 = vlaneseq
          %v6786 = vshrl.u32 %v6785, 7
          %v6787 = vsub.s32 %v6784, %v6786
          %v6788 = vrot.slane %v6780, %v6787
          %v6790 = vunpack.c.l.s4 1966171168
          %v6791 = vunpack.c.0.s8 %v6790
          %v6792 = vlaneseq
          %v6793 = vshrl.u32 %v6792, 7
          %v6794 = vsub.s32 %v6791, %v6793
          %v6795 = vrot.slane %v6781, %v6794
          %v6796 = vcombine.high %v6788, %v6788
          %v6797 = vcombine.high %v6795, %v6795
          %6802 = vst.msk [vmem:[%s266 + $0x1e] sm:$0x1] %vm1059, %v6788
          %6803 = vst.msk [vmem:[%s266 + $0x3e] sm:$0x1] %vm1059, %v6795
          %6804 = vst.msk [vmem:[%s266 + $0x5e] sm:$0x1] %vm1059, %v6796
          %6805 = vst.msk [vmem:[%s266 + $0x7e] sm:$0x1] %vm1059, %v6797
          %v6806 = vld [vmem:[#allocation7 + $0x28] sm:$0xf]
          %v6807 = vld [vmem:[%s5] sm:$0xff]
          %v6808 = vld [vmem:[%s5 + $0x8] sm:$0xff]
          %v6809 = vld [vmem:[#allocation7 + $0x28] sm:$0xf0]
          %v6810 = vld [vmem:[%s879] sm:$0xff]
          %v6811 = vld [vmem:[%s879 + $0x8] sm:$0xff]
          %v6813 = vrot.slane %v6809, 4
          %6814 = vrot.lane.b32.xlu0 %v6813, 114
          %v6815 = vpop.permute.xlu0 %6814
          %v6816 = vsel %vm884, %v6815, 0
          %6818 = vmatprep.subr.mxu0 0.0
          %6819 = vmatpush1.msra.mxu0 0.0
          %6820 = vmatprep.subr.mxu0 0.0
          %6821 = vmatpush1.msra.mxu0 0.0
          %6822 = vmatprep.subr.mxu0 0.0
          %6823 = vmatpush1.msra.mxu0 0.0
          %6824 = vmatprep.subr.mxu0 0.0
          %6825 = vmatpush1.msra.mxu0 0.0
          %6826 = vmatprep.subr.mxu0 0.0
          %6827 = vmatpush1.msra.mxu0 0.0
          %6828 = vmatprep.subr.mxu0 0.0
          %6829 = vmatpush1.msra.mxu0 0.0
          %6830 = vmatprep.subr.mxu0 0.0
          %6831 = vmatpush1.msra.mxu0 0.0
          %6832 = vmatprep.subr.mxu0 0.0
          %6833 = vmatpush1.msra.mxu0 0.0
          %6834 = vmatprep.subr.mxu0 0.0
          %6835 = vmatpush1.msra.mxu0 0.0
          %6836 = vmatprep.subr.mxu0 0.0
          %6837 = vmatpush1.msra.mxu0 0.0
          %6838 = vmatprep.subr.mxu0 0.0
          %6839 = vmatpush1.msra.mxu0 0.0
          %6840 = vmatprep.subr.mxu0 0.0
          %6841 = vmatpush1.msra.mxu0 0.0
          %6842 = vmatprep.subr.mxu0 0.0
          %6843 = vmatpush1.msra.mxu0 0.0
          %6844 = vmatprep.subr.mxu0 0.0
          %6845 = vmatpush1.msra.mxu0 0.0
          %6846 = vmatprep.subr.mxu0 0.0
          %6847 = vmatpush1.msra.mxu0 %v6811
          %6848 = vmatprep.subr.mxu0 0.0
          %6849 = vmatpush1.msra.mxu0 %v6810
          %6850 = vmatprep.subr.mxu0 0.0
          %6851 = vmatpush2.msra.mxu0 0.0
          %6852 = vmatprep.subr.mxu0 0.0
          %6853 = vmatpush2.msra.mxu0 0.0
          %6854 = vmatprep.subr.mxu0 0.0
          %6855 = vmatpush2.msra.mxu0 0.0
          %6856 = vmatprep.subr.mxu0 0.0
          %6857 = vmatpush2.msra.mxu0 0.0
          %6858 = vmatprep.subr.mxu0 0.0
          %6859 = vmatpush2.msra.mxu0 0.0
          %6860 = vmatprep.subr.mxu0 0.0
          %6861 = vmatpush2.msra.mxu0 0.0
          %6862 = vmatprep.subr.mxu0 0.0
          %6863 = vmatpush2.msra.mxu0 0.0
          %6864 = vmatprep.subr.mxu0 0.0
          %6865 = vmatpush2.msra.mxu0 0.0
          %6866 = vmatprep.subr.mxu0 0.0
          %6867 = vmatpush2.msra.mxu0 0.0
          %6868 = vmatprep.subr.mxu0 0.0
          %6869 = vmatpush2.msra.mxu0 0.0
          %6870 = vmatprep.subr.mxu0 0.0
          %6871 = vmatpush2.msra.mxu0 0.0
          %6872 = vmatprep.subr.mxu0 0.0
          %6873 = vmatpush2.msra.mxu0 0.0
          %6874 = vmatprep.subr.mxu0 0.0
          %6875 = vmatpush2.msra.mxu0 0.0
          %6876 = vmatprep.subr.mxu0 0.0
          %6877 = vmatpush2.msra.mxu0 0.0
          %6878 = vmatprep.subr.mxu0 0.0
          %6879 = vmatpush2.msra.mxu0 0.0
          %6880 = vmatprep.subr.mxu0 0.0
          %6881 = vmatpush2.msra.mxu0 0.0
          %6882 = vmatprep.mubr.f32.mxu0 0.0
          %6883 = vmatmul.mubr.f32.gmra.mxu0 %v6816
          %v6884 = vpop.f32.mrf.mxu0
          %v6885 = vadd.f32 0.0, %v6884
          %v6886 = vpop.f32.mrf.mxu0
          %6887 = vdwg.mxu0
          %6889 = vrot.lane.b32.xlu0 %v6806, 114
          %v6890 = vpop.permute.xlu0 %6889
          %v6891 = vsel %vm884, %v6890, 0
          %6893 = vmatprep.subr.mxu0 0.0
          %6894 = vmatpush1.msra.mxu0 0.0
          %6895 = vmatprep.subr.mxu0 0.0
          %6896 = vmatpush1.msra.mxu0 0.0
          %6897 = vmatprep.subr.mxu0 0.0
          %6898 = vmatpush1.msra.mxu0 0.0
          %6899 = vmatprep.subr.mxu0 0.0
          %6900 = vmatpush1.msra.mxu0 0.0
          %6901 = vmatprep.subr.mxu0 0.0
          %6902 = vmatpush1.msra.mxu0 0.0
          %6903 = vmatprep.subr.mxu0 0.0
          %6904 = vmatpush1.msra.mxu0 0.0
          %6905 = vmatprep.subr.mxu0 0.0
          %6906 = vmatpush1.msra.mxu0 0.0
          %6907 = vmatprep.subr.mxu0 0.0
          %6908 = vmatpush1.msra.mxu0 0.0
          %6909 = vmatprep.subr.mxu0 0.0
          %6910 = vmatpush1.msra.mxu0 0.0
          %6911 = vmatprep.subr.mxu0 0.0
          %6912 = vmatpush1.msra.mxu0 0.0
          %6913 = vmatprep.subr.mxu0 0.0
          %6914 = vmatpush1.msra.mxu0 0.0
          %6915 = vmatprep.subr.mxu0 0.0
          %6916 = vmatpush1.msra.mxu0 0.0
          %6917 = vmatprep.subr.mxu0 0.0
          %6918 = vmatpush1.msra.mxu0 0.0
          %6919 = vmatprep.subr.mxu0 0.0
          %6920 = vmatpush1.msra.mxu0 0.0
          %6921 = vmatprep.subr.mxu0 0.0
          %6922 = vmatpush1.msra.mxu0 %v6808
          %6923 = vmatprep.subr.mxu0 0.0
          %6924 = vmatpush1.msra.mxu0 %v6807
          %6925 = vmatprep.subr.mxu0 0.0
          %6926 = vmatpush2.msra.mxu0 0.0
          %6927 = vmatprep.subr.mxu0 0.0
          %6928 = vmatpush2.msra.mxu0 0.0
          %6929 = vmatprep.subr.mxu0 0.0
          %6930 = vmatpush2.msra.mxu0 0.0
          %6931 = vmatprep.subr.mxu0 0.0
          %6932 = vmatpush2.msra.mxu0 0.0
          %6933 = vmatprep.subr.mxu0 0.0
          %6934 = vmatpush2.msra.mxu0 0.0
          %6935 = vmatprep.subr.mxu0 0.0
          %6936 = vmatpush2.msra.mxu0 0.0
          %6937 = vmatprep.subr.mxu0 0.0
          %6938 = vmatpush2.msra.mxu0 0.0
          %6939 = vmatprep.subr.mxu0 0.0
          %6940 = vmatpush2.msra.mxu0 0.0
          %6941 = vmatprep.subr.mxu0 0.0
          %6942 = vmatpush2.msra.mxu0 0.0
          %6943 = vmatprep.subr.mxu0 0.0
          %6944 = vmatpush2.msra.mxu0 0.0
          %6945 = vmatprep.subr.mxu0 0.0
          %6946 = vmatpush2.msra.mxu0 0.0
          %6947 = vmatprep.subr.mxu0 0.0
          %6948 = vmatpush2.msra.mxu0 0.0
          %6949 = vmatprep.subr.mxu0 0.0
          %6950 = vmatpush2.msra.mxu0 0.0
          %6951 = vmatprep.subr.mxu0 0.0
          %6952 = vmatpush2.msra.mxu0 0.0
          %6953 = vmatprep.subr.mxu0 0.0
          %6954 = vmatpush2.msra.mxu0 0.0
          %6955 = vmatprep.subr.mxu0 0.0
          %6956 = vmatpush2.msra.mxu0 0.0
          %6957 = vmatprep.mubr.f32.mxu0 0.0
          %6958 = vmatmul.mubr.f32.gmra.mxu0 %v6891
          %v6959 = vpop.f32.mrf.mxu0
          %v6960 = vadd.f32 %v6885, %v6959
          %v6961 = vpop.f32.mrf.mxu0
          %6962 = vdwg.mxu0
          %v6965 = vunpack.c.l.s4 1966171168
          %v6966 = vunpack.c.0.s8 %v6965
          %v6967 = vlaneseq
          %v6968 = vshrl.u32 %v6967, 7
          %v6969 = vsub.s32 %v6966, %v6968
          %v6970 = vrot.slane %v6960, %v6969
          %v6971 = vcombine.high %v6970, %v6970
          %v6973 = vunpack.c.l.s4 1966171168
          %v6974 = vunpack.c.0.s8 %v6973
          %v6975 = vlaneseq
          %v6976 = vshrl.u32 %v6975, 7
          %v6977 = vsub.s32 %v6974, %v6976
          %v6978 = vrot.slane %v6970, %v6977
          %v6980 = vunpack.c.l.s4 1966171168
          %v6981 = vunpack.c.0.s8 %v6980
          %v6982 = vlaneseq
          %v6983 = vshrl.u32 %v6982, 7
          %v6984 = vsub.s32 %v6981, %v6983
          %v6985 = vrot.slane %v6971, %v6984
          %v6986 = vcombine.high %v6978, %v6978
          %v6987 = vcombine.high %v6985, %v6985
          %6992 = vst.msk [vmem:[%s266 + $0x1f] sm:$0x1] %vm1059, %v6978
          %6993 = vst.msk [vmem:[%s266 + $0x3f] sm:$0x1] %vm1059, %v6985
          %6994 = vst.msk [vmem:[%s266 + $0x5f] sm:$0x1] %vm1059, %v6986
          %6995 = vst.msk [vmem:[%s266 + $0x7f] sm:$0x1] %vm1059, %v6987
        $region56: #{upsample_block_pixel_shuffle.1} parent=43 // pred_fallthru
          _
        %s6996 = sand.u32 %s175, 1
        %s6997 = scalar_lea.sflag [#allocation9], %s6996
        %s6998 = sand.u32 %s175, 1
        %s6999 = smul.addr %s6998, 128
        %s7000 = scalar_lea.vmem [#allocation8], %s6999
        // Predicated region
        $region61: #{upsample_block_pixel_shuffle.1} parent=43 // pred_check
          %p7001 = pneg %p185
        $region62: #{upsample_block_pixel_shuffle.1} parent=43 // pred_check_branch
          %7003 = sbr.rel (%p7001) target = $region64
        $region63: #{upsample_block_pixel_shuffle.1} parent=43 // pred_region
          %s7005 = ssub.s32 2048, 2048
          %7006 = vsyncadd %s6997, %s7005
          %s7007 = smul.addr %s25, 16
          %s7008 = smul.addr %s7007, 128
          %s7009 = scalar_lea.hbm %s6, %s7008
          %s7010 = sshll.u32 %s7000, 4
          %s7011 = int_to_ptr.vmem [resolvable:$true] %s7010
          %7016 = dma.vmem_to_hbm [thread:$0]  %s7011, 2048, %s7009, %s6997, 128, 128, 8
        $region64: #{upsample_block_pixel_shuffle.1} parent=43 // pred_fallthru
          _
      $region44: #{upsample_block_pixel_shuffle.1} parent=5 // pred_fallthru
        _
      %p7017 = scmp.le.s32.totalorder 2, %s15
      // Predicated region
      $region65: #{upsample_block_pixel_shuffle.1} parent=5 // pred_check
        %p7018 = pneg %p7017
      $region66: #{upsample_block_pixel_shuffle.1} parent=5 // pred_check_branch
        %7020 = sbr.rel (%p7018) target = $region68
      $region67: #{upsample_block_pixel_shuffle.1} parent=5 // pred_region
        %s7021 = ssub.s32 %s15, 2
        // Predicated region
        $region69: #{upsample_block_pixel_shuffle.1} parent=67 // pred_check
          %p7022 = pneg %p191
        $region70: #{upsample_block_pixel_shuffle.1} parent=67 // pred_check_branch
          %7024 = sbr.rel (%p7022) target = $region72
        $region71: #{upsample_block_pixel_shuffle.1} parent=67 // pred_region
          %s7025 = sand.u32 %s176, 1
          %s7026 = scalar_lea.sflag [#allocation9], %s7025
          %s7027 = sand.u32 %s176, 1
          %s7028 = smul.addr %s7027, 128
          %s7029 = scalar_lea.vmem [#allocation8], %s7028
          %7030 = dma.done %s7026, 2048
        $region72: #{upsample_block_pixel_shuffle.1} parent=67 // pred_fallthru
          _
      $region68: #{upsample_block_pixel_shuffle.1} parent=5 // pred_fallthru
        _
    $region6: #{upsample_block_pixel_shuffle.1} parent=1 // loop_footer
      %s19 = sadd.s32 1, %s15
    $region7: #{upsample_block_pixel_shuffle.1} parent=1 // loop_footer_branch
      %14 = sbr.rel target = $region3
    $region8: #{upsample_block_pixel_shuffle.1} parent=1 // loop_exit
      _
    %7031 = vsyncpa [#allocation9], 1
    %s7032 = scalar_lea.sflag [#allocation9], 1
    %7033 = vsyncpa %s7032, 1

</llo_original>
